<compile_context>
chip_gen: v6e
topology: v6e:2x2x1
jax: 0.10.0
libtpu: 0.0.40
codegen_flags: <defaults>
</compile_context>

<pallas_src>
import math
from functools import partial

import jax
import jax.numpy as jnp
from jax.experimental import pallas as pl
from jax.experimental.pallas import tpu as pltpu

BN_EPS = 1e-3          # YOLOBackbone.initialize_weights: BatchNorm eps = 0.001
LANE = 128             # carried / output channels padded to the TPU lane width


def _round_up(x, m):
    return ((x + m - 1) // m) * m


def _vmem_limit_bytes():
    """Generation-specific scoped-VMEM limit (~3/4 of physical VMEM)."""
    cap = 64 * 1024 * 1024
    try:
        cap = int(pltpu.get_tpu_info().vmem_capacity_bytes)
    except Exception:
        pass
    return int(cap * 3 // 4)


VMEM_LIMIT = _vmem_limit_bytes()


# ----------------------------- Pallas kernels ------------------------------

def _conv_bn_silu_kernel(x_ref, w_ref, b_ref, o_ref, *, taps, hb, wo, cin):
    """Fused conv + folded-BN + SiLU for one output-row band.

    x_ref : (1, Hf, Wf, Cf)    bf16  stride-folded, spatially padded image
    w_ref : (k*k*cin, Coutp)   bf16  2-D weight, BN scale folded in
    b_ref : (1, Coutp)         f32   folded BN bias
    o_ref : (1, hb, wo, Coutp) bf16  output rows [band*hb, band*hb + hb)
    """
    r0 = pl.program_id(1) * hb
    pieces = []
    for (ro, co, ch) in taps:                           # unrolled at trace time
        v = x_ref[0, pl.ds(r0 + ro, hb), pl.ds(co, wo), pl.ds(ch, cin)]
        pieces.append(v.reshape(hb * wo, cin))
    slab = jnp.concatenate(pieces, axis=-1)             # (hb*wo, k*k*cin) im2col
    y = jnp.dot(slab, w_ref[...], preferred_element_type=jnp.float32)
    y = y + b_ref[...]
    # numerically stable SiLU: exp(-|y|) never overflows; EUP-approx reciprocal
    z = jnp.exp(-jnp.abs(y))
    r = pl.reciprocal(1.0 + z, approx=True)
    sig = jnp.where(y >= 0, r, z * r)
    o_ref[0] = (y * sig).astype(o_ref.dtype).reshape(hb, wo, o_ref.shape[-1])


def _maxpool2_kernel(x_ref, o_ref, *, c):
    """2x2 / stride-2 max pool; H taps in sublane axis, W taps as lane blocks."""
    v = x_ref[...]                                      # (TB, 2, Wo, 2*C)
    vh = jnp.maximum(v[:, 0], v[:, 1])                  # max over the two H taps
    o_ref[...] = jnp.maximum(vh[..., :c], vh[..., c:])  # W taps = lane-block max


# ------------------------------- wrappers ----------------------------------

def conv_bn_silu(x, p):
    """Conv(k x k, stride s, pad k//2, bias=False) + BN(eval) + SiLU, NHWC bf16.

    Channel axes are carried lane-padded (128); the weight's padded rows/cols
    are zero so the extra lanes stay exactly zero downstream.
    """
    k, s, coutp = p["k"], p["s"], p["coutp"]
    N, H, W, C = x.shape
    assert C == p["c1p"]
    pad = k // 2
    Ho = (H + 2 * pad - k) // s + 1
    Wo = (W + 2 * pad - k) // s + 1

    # TODO(synk): eliminate this jnp.pad round trip at real resolutions by
    # having the producing layer store into the interior of a pre-padded buffer.
    if s == 1:
        xf = jnp.pad(x, ((0, 0), (pad, pad), (pad, pad), (0, 0)))
        Hf, Wf, Cf = H + 2 * pad, W + 2 * pad, C
        taps = tuple((dh, dw, 0) for dh in range(k) for dw in range(k))
    else:
        # Fold BOTH stride phases into the channel axis (space-to-depth) so every
        # in-kernel tap is a unit-stride spatial slice + lane-block channel slice.
        Hp = _round_up(H + 2 * pad, s)
        Wp = _round_up(W + 2 * pad, s)
        xp = jnp.pad(x, ((0, 0), (pad, Hp - H - pad), (pad, Wp - W - pad), (0, 0)))
        xf = xp.reshape(N, Hp // s, s, Wp // s, s, C)
        xf = jnp.transpose(xf, (0, 1, 3, 2, 4, 5)).reshape(N, Hp // s, Wp // s, s * s * C)
        Hf, Wf, Cf = Hp // s, Wp // s, s * s * C
        taps = tuple((dh // s, dw // s, ((dh % s) * s + (dw % s)) * C)
                     for dh in range(k) for dw in range(k))
    cin = C
    assert max(t[0] for t in taps) + Ho <= Hf and max(t[1] for t in taps) + Wo <= Wf

    # output-row bands: keeps the live accumulator small and gives >= 2 grid
    # steps per image (v7x megacore + pipeline slack) at real sizes.
    hb = Ho if (Ho <= 4 or Ho % 2) else Ho // 2
    nb = Ho // hb
    assert nb * hb == Ho

    kernel = partial(_conv_bn_silu_kernel, taps=taps, hb=hb, wo=Wo, cin=cin)
    return pl.pallas_call(
        kernel,
        out_shape=jax.ShapeDtypeStruct((N, Ho, Wo, coutp), jnp.bfloat16),
        grid=(N, nb),
        in_specs=[
            pl.BlockSpec((1, Hf, Wf, Cf), lambda n, b: (n, 0, 0, 0)),
            pl.BlockSpec(p["w"].shape, lambda n, b: (0, 0)),
            pl.BlockSpec((1, coutp), lambda n, b: (0, 0)),
        ],
        out_specs=pl.BlockSpec((1, hb, Wo, coutp), lambda n, b: (n, b, 0, 0)),
        compiler_params=pltpu.CompilerParams(
            dimension_semantics=("parallel", "parallel"),
            vmem_limit_bytes=VMEM_LIMIT),
    )(xf, p["w"], p["bias"])


def maxpool2(x):
    """2x2 max pool, stride 2 (MP2), lane-dense on the carried 128 channels."""
    N, H, W, C = x.shape
    assert H % 2 == 0 and W % 2 == 0, "MP2 expects even spatial dims"
    Ho, Wo = H // 2, W // 2
    R = N * Ho
    xr = x.reshape(R, 2, Wo, 2 * C)                     # contiguous reshape (free)

    # row tile from a per-generation VMEM budget (double-buffered in + out)
    bytes_per_row = (2 * Wo * 2 * C + Wo * C) * x.dtype.itemsize * 2
    tb = max(1, min(R, (VMEM_LIMIT // 4) // bytes_per_row))
    tb = min(tb, max(1, pl.cdiv(R, 2)))                 # >= 2 steps for v7x's 2 TCs

    out = pl.pallas_call(
        partial(_maxpool2_kernel, c=C),
        out_shape=jax.ShapeDtypeStruct((R, Wo, C), x.dtype),
        grid=(pl.cdiv(R, tb),),
        in_specs=[pl.BlockSpec((tb, 2, Wo, 2 * C), lambda i: (i, 0, 0, 0))],
        out_specs=pl.BlockSpec((tb, Wo, C), lambda i: (i, 0, 0)),
        compiler_params=pltpu.CompilerParams(
            dimension_semantics=("parallel",),
            vmem_limit_bytes=VMEM_LIMIT),
    )(xr)
    return out.reshape(N, Ho, Wo, C)


# ------------------------ synthetic backbone config -------------------------

BACKBONE_CFG = {
    "nc": 4,
    "depth_multiple": 1.0,
    "width_multiple": 1.0,
    "anchors": [[10, 13, 16, 30, 33, 23]],
    # (from, n, module, args)   args for Conv: [c2, k, s]
    "backbone": [
        [-1, 1, "Conv", [8, 3, 1]],    # 0
        [-1, 1, "Conv", [16, 3, 2]],   # 1   /2
        [-1, 1, "Conv", [16, 3, 1]],   # 2   -> feature (role of layer 24)
        [-1, 1, "MP2",  []],           # 3   /4
        [-1, 1, "Conv", [32, 3, 1]],   # 4   -> feature (role of layer 37)
        [-1, 1, "MP2",  []],           # 5   /8
        [-1, 1, "Conv", [64, 3, 1]],   # 6   -> feature (role of layer 50)
    ],
    "out_layers": [2, 4, 6],
}


def init_conv_bn(key, c1, c1p, c2, k, s):
    """Deterministic conv weight + BN params, folded for inference.

    Produces the Pallas 2-D weight (k*k*c1p, coutp) bf16 with the BN scale
    folded in and zero rows/cols for lane-padded channels, plus an f32 HWIO
    copy used only by the pure-JAX reference check.
    """
    kw, kg, kb, km, kv = jax.random.split(key, 5)
    w = 0.1 * jax.random.normal(kw, (c2, c1, k, k), jnp.float32)     # OIHW (PyTorch)
    gamma = 1.0 + 0.1 * jax.random.normal(kg, (c2,), jnp.float32)
    beta = 0.1 * jax.random.normal(kb, (c2,), jnp.float32)
    mean = 0.1 * jax.random.normal(km, (c2,), jnp.float32)
    var = 1.0 + 0.1 * jnp.abs(jax.random.normal(kv, (c2,), jnp.float32))
    scale = gamma / jnp.sqrt(var + BN_EPS)
    bias = beta - mean * scale

    coutp = max(_round_up(c2, LANE), LANE)
    w_hwio = jnp.transpose(w, (2, 3, 1, 0)) * scale[None, None, None, :]   # (k,k,c1,c2)
    w2d = jnp.pad(w_hwio, ((0, 0), (0, 0), (0, c1p - c1), (0, coutp - c2)))
    w2d = w2d.reshape(k * k * c1p, coutp).astype(jnp.bfloat16)
    bias_p = jnp.pad(bias, (0, coutp - c2)).reshape(1, coutp).astype(jnp.float32)
    return dict(type="Conv", k=k, s=s, c2=c2, c1p=c1p, coutp=coutp,
                w=w2d, bias=bias_p, w_hwio=w_hwio, b_f32=bias)


def build_params(key, cfg, in_ch):
    """Mirrors YOLOBackbone.__init__ channel bookkeeping (gd/gw scaling)."""
    gd, gw = cfg["depth_multiple"], cfg["width_multiple"]
    ch, chp = [in_ch], [in_ch]          # real / lane-padded carried channel widths
    params = []
    for i, (f, n, m, args) in enumerate(cfg["backbone"]):
        n = max(round(n * gd), 1) if n > 1 else n
        if m == "Conv":
            c1, c1p = ch[f], chp[f]
            c2 = math.ceil(args[0] * gw / 8) * 8
            key, sub = jax.random.split(key)
            layer = dict(f=f, **init_conv_bn(sub, c1, c1p, c2, args[1], args[2]))
            c2p = layer["coutp"]
        elif m == "MP2":
            c2, c2p = ch[f], chp[f]
            layer = dict(type="MP2", f=f, c2=c2)
        else:
            raise ValueError(m)
        params.append(layer)
        if i == 0:
            ch, chp = [], []
        ch.append(c2)
        chp.append(c2p)
    return params


def forward_once(x_nchw, params, out_layers):
    """Pallas forward; returns the feature maps (NCHW f32) at `out_layers`."""
    x = jnp.transpose(x_nchw, (0, 2, 3, 1)).astype(jnp.bfloat16)     # NCHW -> NHWC
    y, dt = [], []
    for i, p in enumerate(params):
        inp = x if p["f"] == -1 else y[p["f"]]
        x = conv_bn_silu(inp, p) if p["type"] == "Conv" else maxpool2(inp)
        y.append(x)
        if i in out_layers:                            # analogue of m.i in [24,37,50]
            feat = x[..., :p["c2"]]                    # drop lane padding only here
            dt.append(jnp.transpose(feat, (0, 3, 1, 2)).astype(jnp.float32))
    return dt


def reference_forward(x_nchw, params, out_layers):
    """Pure-JAX f32 reference (same folded BN) for a tolerance check."""
    x = jnp.transpose(x_nchw, (0, 2, 3, 1)).astype(jnp.float32)
    y, dt = [], []
    for i, p in enumerate(params):
        inp = x if p["f"] == -1 else y[p["f"]]
        if p["type"] == "Conv":
            pad = p["k"] // 2
            z = jax.lax.conv_general_dilated(
                inp, p["w_hwio"], (p["s"], p["s"]), [(pad, pad), (pad, pad)],
                dimension_numbers=("NHWC", "HWIO", "NHWC")) + p["b_f32"]
            x = z * jax.nn.sigmoid(z)
        else:
            N, H, W, C = inp.shape
            x = inp.reshape(N, H // 2, 2, W // 2, 2, C).max(axis=(2, 4))
        y.append(x)
        if i in out_layers:
            dt.append(jnp.transpose(x, (0, 3, 1, 2)))
    return dt


if __name__ == "__main__":
    key = jax.random.PRNGKey(0)
    kx, kp = jax.random.split(key)
    x = jax.random.normal(kx, (2, 4, 16, 16), jnp.float32)            # NCHW input
    params = build_params(kp, BACKBONE_CFG, in_ch=4)
    out_layers = BACKBONE_CFG["out_layers"]

    fwd = jax.jit(lambda xx: forward_once(xx, params, out_layers))
    feats = fwd(x)
    for f in feats:
        jax.block_until_ready(f)
    assert [tuple(f.shape) for f in feats] == [(2, 16, 8, 8), (2, 32, 4, 4), (2, 64, 2, 2)]

    ref = reference_forward(x, params, out_layers)
    for a, b in zip(feats, ref):
        assert float(jnp.max(jnp.abs(a - b))) < 0.1, "mismatch vs pure-JAX reference"
    print("KERNEL_OK")
</pallas_src>

<mosaic_0001>
module attributes {stable_mosaic.version = 11 : i64} {
  func.func @_conv_bn_silu_kernel(%arg0: i32, %arg1: i32, %arg2: memref<1x18x18x4xbf16, #tpu.memory_space<vmem>>, %arg3: memref<36x128xbf16, #tpu.memory_space<vmem>>, %arg4: memref<1x128xf32, #tpu.memory_space<vmem>>, %arg5: memref<1x8x16x128xbf16, #tpu.memory_space<vmem>>) attributes {dimension_semantics = [#tpu.dimension_semantics<parallel>, #tpu.dimension_semantics<parallel>], iteration_bounds = array<i64: 2, 2>, scalar_prefetch = 0 : i64, scratch_operands = 0 : i64, tpu.core_type = #tpu.core_type<tc>, window_params = [{transform_indices = @transform_0, window_bounds = array<i64: 1, 18, 18, 4>}, {pipeline_mode = #tpu.pipeline_mode<synchronous>, transform_indices = @transform_1, window_bounds = array<i64: 36, 128>}, {pipeline_mode = #tpu.pipeline_mode<synchronous>, transform_indices = @transform_2, window_bounds = array<i64: 1, 128>}, {transform_indices = @transform_3, window_bounds = array<i64: 1, 8, 16, 128>}]} {
    %c8_i32 = arith.constant 8 : i32
    %0 = arith.muli %arg1, %c8_i32 : i32
    %c0_i32 = arith.constant 0 : i32
    %1 = arith.addi %0, %c0_i32 : i32
    %c0 = arith.constant 0 : index
    %2 = arith.index_cast %1 : i32 to index
    %c0_0 = arith.constant 0 : index
    %c0_1 = arith.constant 0 : index
    %3 = vector.load %arg2[%c0, %2, %c0_0, %c0_1] : memref<1x18x18x4xbf16, #tpu.memory_space<vmem>>, vector<1x8x16x4xbf16>
    %4 = vector.shape_cast %3 : vector<1x8x16x4xbf16> to vector<8x16x4xbf16>
    %5 = vector.shape_cast %4 : vector<8x16x4xbf16> to vector<128x4xbf16>
    %c0_i32_2 = arith.constant 0 : i32
    %6 = arith.addi %0, %c0_i32_2 : i32
    %c0_3 = arith.constant 0 : index
    %7 = arith.index_cast %6 : i32 to index
    %c1 = arith.constant 1 : index
    %c0_4 = arith.constant 0 : index
    %8 = vector.load %arg2[%c0_3, %7, %c1, %c0_4] : memref<1x18x18x4xbf16, #tpu.memory_space<vmem>>, vector<1x8x16x4xbf16>
    %9 = vector.shape_cast %8 : vector<1x8x16x4xbf16> to vector<8x16x4xbf16>
    %10 = vector.shape_cast %9 : vector<8x16x4xbf16> to vector<128x4xbf16>
    %c0_i32_5 = arith.constant 0 : i32
    %11 = arith.addi %0, %c0_i32_5 : i32
    %c0_6 = arith.constant 0 : index
    %12 = arith.index_cast %11 : i32 to index
    %c2 = arith.constant 2 : index
    %c0_7 = arith.constant 0 : index
    %13 = vector.load %arg2[%c0_6, %12, %c2, %c0_7] : memref<1x18x18x4xbf16, #tpu.memory_space<vmem>>, vector<1x8x16x4xbf16>
    %14 = vector.shape_cast %13 : vector<1x8x16x4xbf16> to vector<8x16x4xbf16>
    %15 = vector.shape_cast %14 : vector<8x16x4xbf16> to vector<128x4xbf16>
    %c1_i32 = arith.constant 1 : i32
    %16 = arith.addi %0, %c1_i32 : i32
    %c0_8 = arith.constant 0 : index
    %17 = arith.index_cast %16 : i32 to index
    %c0_9 = arith.constant 0 : index
    %c0_10 = arith.constant 0 : index
    %18 = vector.load %arg2[%c0_8, %17, %c0_9, %c0_10] : memref<1x18x18x4xbf16, #tpu.memory_space<vmem>>, vector<1x8x16x4xbf16>
    %19 = vector.shape_cast %18 : vector<1x8x16x4xbf16> to vector<8x16x4xbf16>
    %20 = vector.shape_cast %19 : vector<8x16x4xbf16> to vector<128x4xbf16>
    %c1_i32_11 = arith.constant 1 : i32
    %21 = arith.addi %0, %c1_i32_11 : i32
    %c0_12 = arith.constant 0 : index
    %22 = arith.index_cast %21 : i32 to index
    %c1_13 = arith.constant 1 : index
    %c0_14 = arith.constant 0 : index
    %23 = vector.load %arg2[%c0_12, %22, %c1_13, %c0_14] : memref<1x18x18x4xbf16, #tpu.memory_space<vmem>>, vector<1x8x16x4xbf16>
    %24 = vector.shape_cast %23 : vector<1x8x16x4xbf16> to vector<8x16x4xbf16>
    %25 = vector.shape_cast %24 : vector<8x16x4xbf16> to vector<128x4xbf16>
    %c1_i32_15 = arith.constant 1 : i32
    %26 = arith.addi %0, %c1_i32_15 : i32
    %c0_16 = arith.constant 0 : index
    %27 = arith.index_cast %26 : i32 to index
    %c2_17 = arith.constant 2 : index
    %c0_18 = arith.constant 0 : index
    %28 = vector.load %arg2[%c0_16, %27, %c2_17, %c0_18] : memref<1x18x18x4xbf16, #tpu.memory_space<vmem>>, vector<1x8x16x4xbf16>
    %29 = vector.shape_cast %28 : vector<1x8x16x4xbf16> to vector<8x16x4xbf16>
    %30 = vector.shape_cast %29 : vector<8x16x4xbf16> to vector<128x4xbf16>
    %c2_i32 = arith.constant 2 : i32
    %31 = arith.addi %0, %c2_i32 : i32
    %c0_19 = arith.constant 0 : index
    %32 = arith.index_cast %31 : i32 to index
    %c0_20 = arith.constant 0 : index
    %c0_21 = arith.constant 0 : index
    %33 = vector.load %arg2[%c0_19, %32, %c0_20, %c0_21] : memref<1x18x18x4xbf16, #tpu.memory_space<vmem>>, vector<1x8x16x4xbf16>
    %34 = vector.shape_cast %33 : vector<1x8x16x4xbf16> to vector<8x16x4xbf16>
    %35 = vector.shape_cast %34 : vector<8x16x4xbf16> to vector<128x4xbf16>
    %c2_i32_22 = arith.constant 2 : i32
    %36 = arith.addi %0, %c2_i32_22 : i32
    %c0_23 = arith.constant 0 : index
    %37 = arith.index_cast %36 : i32 to index
    %c1_24 = arith.constant 1 : index
    %c0_25 = arith.constant 0 : index
    %38 = vector.load %arg2[%c0_23, %37, %c1_24, %c0_25] : memref<1x18x18x4xbf16, #tpu.memory_space<vmem>>, vector<1x8x16x4xbf16>
    %39 = vector.shape_cast %38 : vector<1x8x16x4xbf16> to vector<8x16x4xbf16>
    %40 = vector.shape_cast %39 : vector<8x16x4xbf16> to vector<128x4xbf16>
    %c2_i32_26 = arith.constant 2 : i32
    %41 = arith.addi %0, %c2_i32_26 : i32
    %c0_27 = arith.constant 0 : index
    %42 = arith.index_cast %41 : i32 to index
    %c2_28 = arith.constant 2 : index
    %c0_29 = arith.constant 0 : index
    %43 = vector.load %arg2[%c0_27, %42, %c2_28, %c0_29] : memref<1x18x18x4xbf16, #tpu.memory_space<vmem>>, vector<1x8x16x4xbf16>
    %44 = vector.shape_cast %43 : vector<1x8x16x4xbf16> to vector<8x16x4xbf16>
    %45 = vector.shape_cast %44 : vector<8x16x4xbf16> to vector<128x4xbf16>
    %46 = tpu.concatenate %5, %10, %15, %20, %25, %30, %35, %40, %45 in 1 : vector<128x4xbf16>, vector<128x4xbf16>, vector<128x4xbf16>, vector<128x4xbf16>, vector<128x4xbf16>, vector<128x4xbf16>, vector<128x4xbf16>, vector<128x4xbf16>, vector<128x4xbf16> -> vector<128x36xbf16>
    %c0_30 = arith.constant 0 : index
    %c0_31 = arith.constant 0 : index
    %47 = vector.load %arg3[%c0_30, %c0_31] : memref<36x128xbf16, #tpu.memory_space<vmem>>, vector<36x128xbf16>
    %cst = arith.constant dense<0.000000e+00> : vector<128x128xf32>
    %48 = tpu.matmul %46, %47, %cst {dimension_numbers = #tpu.dot_dimension_numbers<[1], [0], [0], [1], [0, 0, 1, 1], [], []>} : vector<128x36xbf16>, vector<36x128xbf16>, vector<128x128xf32> -> vector<128x128xf32>
    %c0_32 = arith.constant 0 : index
    %c0_33 = arith.constant 0 : index
    %49 = vector.load %arg4[%c0_32, %c0_33] : memref<1x128xf32, #tpu.memory_space<vmem>>, vector<1x128xf32>
    %50 = vector.broadcast %49 : vector<1x128xf32> to vector<128x128xf32>
    %51 = arith.addf %48, %50 : vector<128x128xf32>
    %52 = math.absf %51 : vector<128x128xf32>
    %cst_34 = arith.constant 0.000000e+00 : f32
    %53 = vector.broadcast %cst_34 : f32 to vector<128x128xf32>
    %54 = arith.subf %53, %52 : vector<128x128xf32>
    %55 = math.exp %54 : vector<128x128xf32>
    %cst_35 = arith.constant 1.000000e+00 : f32
    %56 = vector.broadcast %cst_35 : f32 to vector<128x128xf32>
    %57 = arith.addf %56, %55 : vector<128x128xf32>
    %58 = tpu.reciprocal %57 {approx = true} : vector<128x128xf32> -> vector<128x128xf32>
    %cst_36 = arith.constant 0.000000e+00 : f32
    %59 = vector.broadcast %cst_36 : f32 to vector<128x128xf32>
    %60 = arith.cmpf oge, %51, %59 : vector<128x128xf32>
    %61 = arith.mulf %55, %58 : vector<128x128xf32>
    %62 = arith.select %60, %58, %61 : vector<128x128xi1>, vector<128x128xf32>
    %63 = arith.mulf %51, %62 : vector<128x128xf32>
    %64 = arith.truncf %63 : vector<128x128xf32> to vector<128x128xbf16>
    %65 = vector.shape_cast %64 : vector<128x128xbf16> to vector<8x16x128xbf16>
    %c0_37 = arith.constant 0 : index
    %c0_38 = arith.constant 0 : index
    %c0_39 = arith.constant 0 : index
    %c0_40 = arith.constant 0 : index
    %66 = vector.load %arg5[%c0_37, %c0_38, %c0_39, %c0_40] : memref<1x8x16x128xbf16, #tpu.memory_space<vmem>>, vector<1x8x16x128xbf16>
    %67 = vector.shape_cast %66 : vector<1x8x16x128xbf16> to vector<8x16x128xbf16>
    %68 = vector.shape_cast %65 : vector<8x16x128xbf16> to vector<1x8x16x128xbf16>
    tpu.vector_store %arg5[%c0_37, %c0_38, %c0_39, %c0_40], %68 {strides = array<i32>} : memref<1x8x16x128xbf16, #tpu.memory_space<vmem>>, vector<1x8x16x128xbf16>,
    return
  }
  func.func @transform_0(%arg0: i32, %arg1: i32) -> (i32, i32, i32, i32) {
    %c0_i32 = arith.constant 0 : i32
    %c0_i32_0 = arith.constant 0 : i32
    %c0_i32_1 = arith.constant 0 : i32
    %c0_i32_2 = arith.constant 0 : i32
    return %arg0, %c0_i32, %c0_i32_0, %c0_i32_1 : i32, i32, i32, i32
  }
  func.func @transform_1(%arg0: i32, %arg1: i32) -> (i32, i32) {
    %c0_i32 = arith.constant 0 : i32
    %c0_i32_0 = arith.constant 0 : i32
    %c0_i32_1 = arith.constant 0 : i32
    return %c0_i32, %c0_i32_0 : i32, i32
  }
  func.func @transform_2(%arg0: i32, %arg1: i32) -> (i32, i32) {
    %c0_i32 = arith.constant 0 : i32
    %c0_i32_0 = arith.constant 0 : i32
    %c0_i32_1 = arith.constant 0 : i32
    return %c0_i32, %c0_i32_0 : i32, i32
  }
  func.func @transform_3(%arg0: i32, %arg1: i32) -> (i32, i32, i32, i32) {
    %c0_i32 = arith.constant 0 : i32
    %c0_i32_0 = arith.constant 0 : i32
    %c0_i32_1 = arith.constant 0 : i32
    return %arg0, %arg1, %c0_i32, %c0_i32_0 : i32, i32, i32, i32
  }
}

module attributes {stable_mosaic.version = 11 : i64} {
  func.func @_conv_bn_silu_kernel(%arg0: i32, %arg1: i32, %arg2: memref<1x9x9x512xbf16, #tpu.memory_space<vmem>>, %arg3: memref<1152x128xbf16, #tpu.memory_space<vmem>>, %arg4: memref<1x128xf32, #tpu.memory_space<vmem>>, %arg5: memref<1x4x8x128xbf16, #tpu.memory_space<vmem>>) attributes {dimension_semantics = [#tpu.dimension_semantics<parallel>, #tpu.dimension_semantics<parallel>], iteration_bounds = array<i64: 2, 2>, scalar_prefetch = 0 : i64, scratch_operands = 0 : i64, tpu.core_type = #tpu.core_type<tc>, window_params = [{transform_indices = @transform_0, window_bounds = array<i64: 1, 9, 9, 512>}, {pipeline_mode = #tpu.pipeline_mode<synchronous>, transform_indices = @transform_1, window_bounds = array<i64: 1152, 128>}, {pipeline_mode = #tpu.pipeline_mode<synchronous>, transform_indices = @transform_2, window_bounds = array<i64: 1, 128>}, {transform_indices = @transform_3, window_bounds = array<i64: 1, 4, 8, 128>}]} {
    %c4_i32 = arith.constant 4 : i32
    %0 = arith.muli %arg1, %c4_i32 : i32
    %c0_i32 = arith.constant 0 : i32
    %1 = arith.addi %0, %c0_i32 : i32
    %c0 = arith.constant 0 : index
    %2 = arith.index_cast %1 : i32 to index
    %c0_0 = arith.constant 0 : index
    %c0_1 = arith.constant 0 : index
    %3 = vector.load %arg2[%c0, %2, %c0_0, %c0_1] : memref<1x9x9x512xbf16, #tpu.memory_space<vmem>>, vector<1x4x8x128xbf16>
    %4 = vector.shape_cast %3 : vector<1x4x8x128xbf16> to vector<4x8x128xbf16>
    %5 = vector.shape_cast %4 : vector<4x8x128xbf16> to vector<32x128xbf16>
    %c0_i32_2 = arith.constant 0 : i32
    %6 = arith.addi %0, %c0_i32_2 : i32
    %c0_3 = arith.constant 0 : index
    %7 = arith.index_cast %6 : i32 to index
    %c0_4 = arith.constant 0 : index
    %c128 = arith.constant 128 : index
    %8 = vector.load %arg2[%c0_3, %7, %c0_4, %c128] : memref<1x9x9x512xbf16, #tpu.memory_space<vmem>>, vector<1x4x8x128xbf16>
    %9 = vector.shape_cast %8 : vector<1x4x8x128xbf16> to vector<4x8x128xbf16>
    %10 = vector.shape_cast %9 : vector<4x8x128xbf16> to vector<32x128xbf16>
    %c0_i32_5 = arith.constant 0 : i32
    %11 = arith.addi %0, %c0_i32_5 : i32
    %c0_6 = arith.constant 0 : index
    %12 = arith.index_cast %11 : i32 to index
    %c1 = arith.constant 1 : index
    %c0_7 = arith.constant 0 : index
    %13 = vector.load %arg2[%c0_6, %12, %c1, %c0_7] : memref<1x9x9x512xbf16, #tpu.memory_space<vmem>>, vector<1x4x8x128xbf16>
    %14 = vector.shape_cast %13 : vector<1x4x8x128xbf16> to vector<4x8x128xbf16>
    %15 = vector.shape_cast %14 : vector<4x8x128xbf16> to vector<32x128xbf16>
    %c0_i32_8 = arith.constant 0 : i32
    %16 = arith.addi %0, %c0_i32_8 : i32
    %c0_9 = arith.constant 0 : index
    %17 = arith.index_cast %16 : i32 to index
    %c0_10 = arith.constant 0 : index
    %c256 = arith.constant 256 : index
    %18 = vector.load %arg2[%c0_9, %17, %c0_10, %c256] : memref<1x9x9x512xbf16, #tpu.memory_space<vmem>>, vector<1x4x8x128xbf16>
    %19 = vector.shape_cast %18 : vector<1x4x8x128xbf16> to vector<4x8x128xbf16>
    %20 = vector.shape_cast %19 : vector<4x8x128xbf16> to vector<32x128xbf16>
    %c0_i32_11 = arith.constant 0 : i32
    %21 = arith.addi %0, %c0_i32_11 : i32
    %c0_12 = arith.constant 0 : index
    %22 = arith.index_cast %21 : i32 to index
    %c0_13 = arith.constant 0 : index
    %c384 = arith.constant 384 : index
    %23 = vector.load %arg2[%c0_12, %22, %c0_13, %c384] : memref<1x9x9x512xbf16, #tpu.memory_space<vmem>>, vector<1x4x8x128xbf16>
    %24 = vector.shape_cast %23 : vector<1x4x8x128xbf16> to vector<4x8x128xbf16>
    %25 = vector.shape_cast %24 : vector<4x8x128xbf16> to vector<32x128xbf16>
    %c0_i32_14 = arith.constant 0 : i32
    %26 = arith.addi %0, %c0_i32_14 : i32
    %c0_15 = arith.constant 0 : index
    %27 = arith.index_cast %26 : i32 to index
    %c1_16 = arith.constant 1 : index
    %c256_17 = arith.constant 256 : index
    %28 = vector.load %arg2[%c0_15, %27, %c1_16, %c256_17] : memref<1x9x9x512xbf16, #tpu.memory_space<vmem>>, vector<1x4x8x128xbf16>
    %29 = vector.shape_cast %28 : vector<1x4x8x128xbf16> to vector<4x8x128xbf16>
    %30 = vector.shape_cast %29 : vector<4x8x128xbf16> to vector<32x128xbf16>
    %c1_i32 = arith.constant 1 : i32
    %31 = arith.addi %0, %c1_i32 : i32
    %c0_18 = arith.constant 0 : index
    %32 = arith.index_cast %31 : i32 to index
    %c0_19 = arith.constant 0 : index
    %c0_20 = arith.constant 0 : index
    %33 = vector.load %arg2[%c0_18, %32, %c0_19, %c0_20] : memref<1x9x9x512xbf16, #tpu.memory_space<vmem>>, vector<1x4x8x128xbf16>
    %34 = vector.shape_cast %33 : vector<1x4x8x128xbf16> to vector<4x8x128xbf16>
    %35 = vector.shape_cast %34 : vector<4x8x128xbf16> to vector<32x128xbf16>
    %c1_i32_21 = arith.constant 1 : i32
    %36 = arith.addi %0, %c1_i32_21 : i32
    %c0_22 = arith.constant 0 : index
    %37 = arith.index_cast %36 : i32 to index
    %c0_23 = arith.constant 0 : index
    %c128_24 = arith.constant 128 : index
    %38 = vector.load %arg2[%c0_22, %37, %c0_23, %c128_24] : memref<1x9x9x512xbf16, #tpu.memory_space<vmem>>, vector<1x4x8x128xbf16>
    %39 = vector.shape_cast %38 : vector<1x4x8x128xbf16> to vector<4x8x128xbf16>
    %40 = vector.shape_cast %39 : vector<4x8x128xbf16> to vector<32x128xbf16>
    %c1_i32_25 = arith.constant 1 : i32
    %41 = arith.addi %0, %c1_i32_25 : i32
    %c0_26 = arith.constant 0 : index
    %42 = arith.index_cast %41 : i32 to index
    %c1_27 = arith.constant 1 : index
    %c0_28 = arith.constant 0 : index
    %43 = vector.load %arg2[%c0_26, %42, %c1_27, %c0_28] : memref<1x9x9x512xbf16, #tpu.memory_space<vmem>>, vector<1x4x8x128xbf16>
    %44 = vector.shape_cast %43 : vector<1x4x8x128xbf16> to vector<4x8x128xbf16>
    %45 = vector.shape_cast %44 : vector<4x8x128xbf16> to vector<32x128xbf16>
    %46 = tpu.concatenate %5, %10, %15, %20, %25, %30, %35, %40, %45 in 1 : vector<32x128xbf16>, vector<32x128xbf16>, vector<32x128xbf16>, vector<32x128xbf16>, vector<32x128xbf16>, vector<32x128xbf16>, vector<32x128xbf16>, vector<32x128xbf16>, vector<32x128xbf16> -> vector<32x1152xbf16>
    %c0_29 = arith.constant 0 : index
    %c0_30 = arith.constant 0 : index
    %47 = vector.load %arg3[%c0_29, %c0_30] : memref<1152x128xbf16, #tpu.memory_space<vmem>>, vector<1152x128xbf16>
    %cst = arith.constant dense<0.000000e+00> : vector<32x128xf32>
    %48 = tpu.matmul %46, %47, %cst {dimension_numbers = #tpu.dot_dimension_numbers<[1], [0], [0], [1], [0, 0, 1, 1], [], []>} : vector<32x1152xbf16>, vector<1152x128xbf16>, vector<32x128xf32> -> vector<32x128xf32>
    %c0_31 = arith.constant 0 : index
    %c0_32 = arith.constant 0 : index
    %49 = vector.load %arg4[%c0_31, %c0_32] : memref<1x128xf32, #tpu.memory_space<vmem>>, vector<1x128xf32>
    %50 = vector.broadcast %49 : vector<1x128xf32> to vector<32x128xf32>
    %51 = arith.addf %48, %50 : vector<32x128xf32>
    %52 = math.absf %51 : vector<32x128xf32>
    %cst_33 = arith.constant 0.000000e+00 : f32
    %53 = vector.broadcast %cst_33 : f32 to vector<32x128xf32>
    %54 = arith.subf %53, %52 : vector<32x128xf32>
    %55 = math.exp %54 : vector<32x128xf32>
    %cst_34 = arith.constant 1.000000e+00 : f32
    %56 = vector.broadcast %cst_34 : f32 to vector<32x128xf32>
    %57 = arith.addf %56, %55 : vector<32x128xf32>
    %58 = tpu.reciprocal %57 {approx = true} : vector<32x128xf32> -> vector<32x128xf32>
    %cst_35 = arith.constant 0.000000e+00 : f32
    %59 = vector.broadcast %cst_35 : f32 to vector<32x128xf32>
    %60 = arith.cmpf oge, %51, %59 : vector<32x128xf32>
    %61 = arith.mulf %55, %58 : vector<32x128xf32>
    %62 = arith.select %60, %58, %61 : vector<32x128xi1>, vector<32x128xf32>
    %63 = arith.mulf %51, %62 : vector<32x128xf32>
    %64 = arith.truncf %63 : vector<32x128xf32> to vector<32x128xbf16>
    %65 = vector.shape_cast %64 : vector<32x128xbf16> to vector<4x8x128xbf16>
    %c0_36 = arith.constant 0 : index
    %c0_37 = arith.constant 0 : index
    %c0_38 = arith.constant 0 : index
    %c0_39 = arith.constant 0 : index
    %66 = vector.load %arg5[%c0_36, %c0_37, %c0_38, %c0_39] : memref<1x4x8x128xbf16, #tpu.memory_space<vmem>>, vector<1x4x8x128xbf16>
    %67 = vector.shape_cast %66 : vector<1x4x8x128xbf16> to vector<4x8x128xbf16>
    %68 = vector.shape_cast %65 : vector<4x8x128xbf16> to vector<1x4x8x128xbf16>
    tpu.vector_store %arg5[%c0_36, %c0_37, %c0_38, %c0_39], %68 {strides = array<i32>} : memref<1x4x8x128xbf16, #tpu.memory_space<vmem>>, vector<1x4x8x128xbf16>,
    return
  }
  func.func @transform_0(%arg0: i32, %arg1: i32) -> (i32, i32, i32, i32) {
    %c0_i32 = arith.constant 0 : i32
    %c0_i32_0 = arith.constant 0 : i32
    %c0_i32_1 = arith.constant 0 : i32
    %c0_i32_2 = arith.constant 0 : i32
    return %arg0, %c0_i32, %c0_i32_0, %c0_i32_1 : i32, i32, i32, i32
  }
  func.func @transform_1(%arg0: i32, %arg1: i32) -> (i32, i32) {
    %c0_i32 = arith.constant 0 : i32
    %c0_i32_0 = arith.constant 0 : i32
    %c0_i32_1 = arith.constant 0 : i32
    return %c0_i32, %c0_i32_0 : i32, i32
  }
  func.func @transform_2(%arg0: i32, %arg1: i32) -> (i32, i32) {
    %c0_i32 = arith.constant 0 : i32
    %c0_i32_0 = arith.constant 0 : i32
    %c0_i32_1 = arith.constant 0 : i32
    return %c0_i32, %c0_i32_0 : i32, i32
  }
  func.func @transform_3(%arg0: i32, %arg1: i32) -> (i32, i32, i32, i32) {
    %c0_i32 = arith.constant 0 : i32
    %c0_i32_0 = arith.constant 0 : i32
    %c0_i32_1 = arith.constant 0 : i32
    return %arg0, %arg1, %c0_i32, %c0_i32_0 : i32, i32, i32, i32
  }
}

module attributes {stable_mosaic.version = 11 : i64} {
  func.func @_conv_bn_silu_kernel(%arg0: i32, %arg1: i32, %arg2: memref<1x10x10x128xbf16, #tpu.memory_space<vmem>>, %arg3: memref<1152x128xbf16, #tpu.memory_space<vmem>>, %arg4: memref<1x128xf32, #tpu.memory_space<vmem>>, %arg5: memref<1x4x8x128xbf16, #tpu.memory_space<vmem>>) attributes {dimension_semantics = [#tpu.dimension_semantics<parallel>, #tpu.dimension_semantics<parallel>], iteration_bounds = array<i64: 2, 2>, scalar_prefetch = 0 : i64, scratch_operands = 0 : i64, tpu.core_type = #tpu.core_type<tc>, window_params = [{transform_indices = @transform_0, window_bounds = array<i64: 1, 10, 10, 128>}, {pipeline_mode = #tpu.pipeline_mode<synchronous>, transform_indices = @transform_1, window_bounds = array<i64: 1152, 128>}, {pipeline_mode = #tpu.pipeline_mode<synchronous>, transform_indices = @transform_2, window_bounds = array<i64: 1, 128>}, {transform_indices = @transform_3, window_bounds = array<i64: 1, 4, 8, 128>}]} {
    %c4_i32 = arith.constant 4 : i32
    %0 = arith.muli %arg1, %c4_i32 : i32
    %c0_i32 = arith.constant 0 : i32
    %1 = arith.addi %0, %c0_i32 : i32
    %c0 = arith.constant 0 : index
    %2 = arith.index_cast %1 : i32 to index
    %c0_0 = arith.constant 0 : index
    %c0_1 = arith.constant 0 : index
    %3 = vector.load %arg2[%c0, %2, %c0_0, %c0_1] : memref<1x10x10x128xbf16, #tpu.memory_space<vmem>>, vector<1x4x8x128xbf16>
    %4 = vector.shape_cast %3 : vector<1x4x8x128xbf16> to vector<4x8x128xbf16>
    %5 = vector.shape_cast %4 : vector<4x8x128xbf16> to vector<32x128xbf16>
    %c0_i32_2 = arith.constant 0 : i32
    %6 = arith.addi %0, %c0_i32_2 : i32
    %c0_3 = arith.constant 0 : index
    %7 = arith.index_cast %6 : i32 to index
    %c1 = arith.constant 1 : index
    %c0_4 = arith.constant 0 : index
    %8 = vector.load %arg2[%c0_3, %7, %c1, %c0_4] : memref<1x10x10x128xbf16, #tpu.memory_space<vmem>>, vector<1x4x8x128xbf16>
    %9 = vector.shape_cast %8 : vector<1x4x8x128xbf16> to vector<4x8x128xbf16>
    %10 = vector.shape_cast %9 : vector<4x8x128xbf16> to vector<32x128xbf16>
    %c0_i32_5 = arith.constant 0 : i32
    %11 = arith.addi %0, %c0_i32_5 : i32
    %c0_6 = arith.constant 0 : index
    %12 = arith.index_cast %11 : i32 to index
    %c2 = arith.constant 2 : index
    %c0_7 = arith.constant 0 : index
    %13 = vector.load %arg2[%c0_6, %12, %c2, %c0_7] : memref<1x10x10x128xbf16, #tpu.memory_space<vmem>>, vector<1x4x8x128xbf16>
    %14 = vector.shape_cast %13 : vector<1x4x8x128xbf16> to vector<4x8x128xbf16>
    %15 = vector.shape_cast %14 : vector<4x8x128xbf16> to vector<32x128xbf16>
    %c1_i32 = arith.constant 1 : i32
    %16 = arith.addi %0, %c1_i32 : i32
    %c0_8 = arith.constant 0 : index
    %17 = arith.index_cast %16 : i32 to index
    %c0_9 = arith.constant 0 : index
    %c0_10 = arith.constant 0 : index
    %18 = vector.load %arg2[%c0_8, %17, %c0_9, %c0_10] : memref<1x10x10x128xbf16, #tpu.memory_space<vmem>>, vector<1x4x8x128xbf16>
    %19 = vector.shape_cast %18 : vector<1x4x8x128xbf16> to vector<4x8x128xbf16>
    %20 = vector.shape_cast %19 : vector<4x8x128xbf16> to vector<32x128xbf16>
    %c1_i32_11 = arith.constant 1 : i32
    %21 = arith.addi %0, %c1_i32_11 : i32
    %c0_12 = arith.constant 0 : index
    %22 = arith.index_cast %21 : i32 to index
    %c1_13 = arith.constant 1 : index
    %c0_14 = arith.constant 0 : index
    %23 = vector.load %arg2[%c0_12, %22, %c1_13, %c0_14] : memref<1x10x10x128xbf16, #tpu.memory_space<vmem>>, vector<1x4x8x128xbf16>
    %24 = vector.shape_cast %23 : vector<1x4x8x128xbf16> to vector<4x8x128xbf16>
    %25 = vector.shape_cast %24 : vector<4x8x128xbf16> to vector<32x128xbf16>
    %c1_i32_15 = arith.constant 1 : i32
    %26 = arith.addi %0, %c1_i32_15 : i32
    %c0_16 = arith.constant 0 : index
    %27 = arith.index_cast %26 : i32 to index
    %c2_17 = arith.constant 2 : index
    %c0_18 = arith.constant 0 : index
    %28 = vector.load %arg2[%c0_16, %27, %c2_17, %c0_18] : memref<1x10x10x128xbf16, #tpu.memory_space<vmem>>, vector<1x4x8x128xbf16>
    %29 = vector.shape_cast %28 : vector<1x4x8x128xbf16> to vector<4x8x128xbf16>
    %30 = vector.shape_cast %29 : vector<4x8x128xbf16> to vector<32x128xbf16>
    %c2_i32 = arith.constant 2 : i32
    %31 = arith.addi %0, %c2_i32 : i32
    %c0_19 = arith.constant 0 : index
    %32 = arith.index_cast %31 : i32 to index
    %c0_20 = arith.constant 0 : index
    %c0_21 = arith.constant 0 : index
    %33 = vector.load %arg2[%c0_19, %32, %c0_20, %c0_21] : memref<1x10x10x128xbf16, #tpu.memory_space<vmem>>, vector<1x4x8x128xbf16>
    %34 = vector.shape_cast %33 : vector<1x4x8x128xbf16> to vector<4x8x128xbf16>
    %35 = vector.shape_cast %34 : vector<4x8x128xbf16> to vector<32x128xbf16>
    %c2_i32_22 = arith.constant 2 : i32
    %36 = arith.addi %0, %c2_i32_22 : i32
    %c0_23 = arith.constant 0 : index
    %37 = arith.index_cast %36 : i32 to index
    %c1_24 = arith.constant 1 : index
    %c0_25 = arith.constant 0 : index
    %38 = vector.load %arg2[%c0_23, %37, %c1_24, %c0_25] : memref<1x10x10x128xbf16, #tpu.memory_space<vmem>>, vector<1x4x8x128xbf16>
    %39 = vector.shape_cast %38 : vector<1x4x8x128xbf16> to vector<4x8x128xbf16>
    %40 = vector.shape_cast %39 : vector<4x8x128xbf16> to vector<32x128xbf16>
    %c2_i32_26 = arith.constant 2 : i32
    %41 = arith.addi %0, %c2_i32_26 : i32
    %c0_27 = arith.constant 0 : index
    %42 = arith.index_cast %41 : i32 to index
    %c2_28 = arith.constant 2 : index
    %c0_29 = arith.constant 0 : index
    %43 = vector.load %arg2[%c0_27, %42, %c2_28, %c0_29] : memref<1x10x10x128xbf16, #tpu.memory_space<vmem>>, vector<1x4x8x128xbf16>
    %44 = vector.shape_cast %43 : vector<1x4x8x128xbf16> to vector<4x8x128xbf16>
    %45 = vector.shape_cast %44 : vector<4x8x128xbf16> to vector<32x128xbf16>
    %46 = tpu.concatenate %5, %10, %15, %20, %25, %30, %35, %40, %45 in 1 : vector<32x128xbf16>, vector<32x128xbf16>, vector<32x128xbf16>, vector<32x128xbf16>, vector<32x128xbf16>, vector<32x128xbf16>, vector<32x128xbf16>, vector<32x128xbf16>, vector<32x128xbf16> -> vector<32x1152xbf16>
    %c0_30 = arith.constant 0 : index
    %c0_31 = arith.constant 0 : index
    %47 = vector.load %arg3[%c0_30, %c0_31] : memref<1152x128xbf16, #tpu.memory_space<vmem>>, vector<1152x128xbf16>
    %cst = arith.constant dense<0.000000e+00> : vector<32x128xf32>
    %48 = tpu.matmul %46, %47, %cst {dimension_numbers = #tpu.dot_dimension_numbers<[1], [0], [0], [1], [0, 0, 1, 1], [], []>} : vector<32x1152xbf16>, vector<1152x128xbf16>, vector<32x128xf32> -> vector<32x128xf32>
    %c0_32 = arith.constant 0 : index
    %c0_33 = arith.constant 0 : index
    %49 = vector.load %arg4[%c0_32, %c0_33] : memref<1x128xf32, #tpu.memory_space<vmem>>, vector<1x128xf32>
    %50 = vector.broadcast %49 : vector<1x128xf32> to vector<32x128xf32>
    %51 = arith.addf %48, %50 : vector<32x128xf32>
    %52 = math.absf %51 : vector<32x128xf32>
    %cst_34 = arith.constant 0.000000e+00 : f32
    %53 = vector.broadcast %cst_34 : f32 to vector<32x128xf32>
    %54 = arith.subf %53, %52 : vector<32x128xf32>
    %55 = math.exp %54 : vector<32x128xf32>
    %cst_35 = arith.constant 1.000000e+00 : f32
    %56 = vector.broadcast %cst_35 : f32 to vector<32x128xf32>
    %57 = arith.addf %56, %55 : vector<32x128xf32>
    %58 = tpu.reciprocal %57 {approx = true} : vector<32x128xf32> -> vector<32x128xf32>
    %cst_36 = arith.constant 0.000000e+00 : f32
    %59 = vector.broadcast %cst_36 : f32 to vector<32x128xf32>
    %60 = arith.cmpf oge, %51, %59 : vector<32x128xf32>
    %61 = arith.mulf %55, %58 : vector<32x128xf32>
    %62 = arith.select %60, %58, %61 : vector<32x128xi1>, vector<32x128xf32>
    %63 = arith.mulf %51, %62 : vector<32x128xf32>
    %64 = arith.truncf %63 : vector<32x128xf32> to vector<32x128xbf16>
    %65 = vector.shape_cast %64 : vector<32x128xbf16> to vector<4x8x128xbf16>
    %c0_37 = arith.constant 0 : index
    %c0_38 = arith.constant 0 : index
    %c0_39 = arith.constant 0 : index
    %c0_40 = arith.constant 0 : index
    %66 = vector.load %arg5[%c0_37, %c0_38, %c0_39, %c0_40] : memref<1x4x8x128xbf16, #tpu.memory_space<vmem>>, vector<1x4x8x128xbf16>
    %67 = vector.shape_cast %66 : vector<1x4x8x128xbf16> to vector<4x8x128xbf16>
    %68 = vector.shape_cast %65 : vector<4x8x128xbf16> to vector<1x4x8x128xbf16>
    tpu.vector_store %arg5[%c0_37, %c0_38, %c0_39, %c0_40], %68 {strides = array<i32>} : memref<1x4x8x128xbf16, #tpu.memory_space<vmem>>, vector<1x4x8x128xbf16>,
    return
  }
  func.func @transform_0(%arg0: i32, %arg1: i32) -> (i32, i32, i32, i32) {
    %c0_i32 = arith.constant 0 : i32
    %c0_i32_0 = arith.constant 0 : i32
    %c0_i32_1 = arith.constant 0 : i32
    %c0_i32_2 = arith.constant 0 : i32
    return %arg0, %c0_i32, %c0_i32_0, %c0_i32_1 : i32, i32, i32, i32
  }
  func.func @transform_1(%arg0: i32, %arg1: i32) -> (i32, i32) {
    %c0_i32 = arith.constant 0 : i32
    %c0_i32_0 = arith.constant 0 : i32
    %c0_i32_1 = arith.constant 0 : i32
    return %c0_i32, %c0_i32_0 : i32, i32
  }
  func.func @transform_2(%arg0: i32, %arg1: i32) -> (i32, i32) {
    %c0_i32 = arith.constant 0 : i32
    %c0_i32_0 = arith.constant 0 : i32
    %c0_i32_1 = arith.constant 0 : i32
    return %c0_i32, %c0_i32_0 : i32, i32
  }
  func.func @transform_3(%arg0: i32, %arg1: i32) -> (i32, i32, i32, i32) {
    %c0_i32 = arith.constant 0 : i32
    %c0_i32_0 = arith.constant 0 : i32
    %c0_i32_1 = arith.constant 0 : i32
    return %arg0, %arg1, %c0_i32, %c0_i32_0 : i32, i32, i32, i32
  }
}

module attributes {stable_mosaic.version = 11 : i64} {
  func.func @_maxpool2_kernel(%arg0: i32, %arg1: memref<4x2x4x256xbf16, #tpu.memory_space<vmem>>, %arg2: memref<4x4x128xbf16, #tpu.memory_space<vmem>>) attributes {dimension_semantics = [#tpu.dimension_semantics<parallel>], iteration_bounds = array<i64: 2>, scalar_prefetch = 0 : i64, scratch_operands = 0 : i64, tpu.core_type = #tpu.core_type<tc>, window_params = [{transform_indices = @transform_0, window_bounds = array<i64: 4, 2, 4, 256>}, {transform_indices = @transform_1, window_bounds = array<i64: 4, 4, 128>}]} {
    %c0 = arith.constant 0 : index
    %c0_0 = arith.constant 0 : index
    %c0_1 = arith.constant 0 : index
    %c0_2 = arith.constant 0 : index
    %0 = vector.load %arg1[%c0, %c0_0, %c0_1, %c0_2] : memref<4x2x4x256xbf16, #tpu.memory_space<vmem>>, vector<4x2x4x256xbf16>
    %1 = vector.extract_strided_slice %0 {offsets = [0, 0, 0, 0], sizes = [4, 1, 4, 256], strides = [1, 1, 1, 1]} : vector<4x2x4x256xbf16> to vector<4x1x4x256xbf16>
    %2 = vector.shape_cast %1 : vector<4x1x4x256xbf16> to vector<4x4x256xbf16>
    %3 = vector.extract_strided_slice %0 {offsets = [0, 1, 0, 0], sizes = [4, 1, 4, 256], strides = [1, 1, 1, 1]} : vector<4x2x4x256xbf16> to vector<4x1x4x256xbf16>
    %4 = vector.shape_cast %3 : vector<4x1x4x256xbf16> to vector<4x4x256xbf16>
    %5 = arith.maximumf %2, %4 : vector<4x4x256xbf16>
    %6 = vector.extract_strided_slice %5 {offsets = [0, 0, 0], sizes = [4, 4, 128], strides = [1, 1, 1]} : vector<4x4x256xbf16> to vector<4x4x128xbf16>
    %7 = vector.extract_strided_slice %5 {offsets = [0, 0, 128], sizes = [4, 4, 128], strides = [1, 1, 1]} : vector<4x4x256xbf16> to vector<4x4x128xbf16>
    %8 = arith.maximumf %6, %7 : vector<4x4x128xbf16>
    %c0_3 = arith.constant 0 : index
    %c0_4 = arith.constant 0 : index
    %c0_5 = arith.constant 0 : index
    %9 = vector.load %arg2[%c0_3, %c0_4, %c0_5] : memref<4x4x128xbf16, #tpu.memory_space<vmem>>, vector<4x4x128xbf16>
    tpu.vector_store %arg2[%c0_3, %c0_4, %c0_5], %8 {strides = array<i32>} : memref<4x4x128xbf16, #tpu.memory_space<vmem>>, vector<4x4x128xbf16>,
    return
  }
  func.func @transform_0(%arg0: i32) -> (i32, i32, i32, i32) {
    %c0_i32 = arith.constant 0 : i32
    %c0_i32_0 = arith.constant 0 : i32
    %c0_i32_1 = arith.constant 0 : i32
    %c0_i32_2 = arith.constant 0 : i32
    return %arg0, %c0_i32, %c0_i32_0, %c0_i32_1 : i32, i32, i32, i32
  }
  func.func @transform_1(%arg0: i32) -> (i32, i32, i32) {
    %c0_i32 = arith.constant 0 : i32
    %c0_i32_0 = arith.constant 0 : i32
    %c0_i32_1 = arith.constant 0 : i32
    return %arg0, %c0_i32, %c0_i32_0 : i32, i32, i32
  }
}

module attributes {stable_mosaic.version = 11 : i64} {
  func.func @_conv_bn_silu_kernel(%arg0: i32, %arg1: i32, %arg2: memref<1x6x6x128xbf16, #tpu.memory_space<vmem>>, %arg3: memref<1152x128xbf16, #tpu.memory_space<vmem>>, %arg4: memref<1x128xf32, #tpu.memory_space<vmem>>, %arg5: memref<1x4x4x128xbf16, #tpu.memory_space<vmem>>) attributes {dimension_semantics = [#tpu.dimension_semantics<parallel>, #tpu.dimension_semantics<parallel>], iteration_bounds = array<i64: 2, 1>, scalar_prefetch = 0 : i64, scratch_operands = 0 : i64, tpu.core_type = #tpu.core_type<tc>, window_params = [{transform_indices = @transform_0, window_bounds = array<i64: 1, 6, 6, 128>}, {pipeline_mode = #tpu.pipeline_mode<synchronous>, transform_indices = @transform_1, window_bounds = array<i64: 1152, 128>}, {pipeline_mode = #tpu.pipeline_mode<synchronous>, transform_indices = @transform_2, window_bounds = array<i64: 1, 128>}, {transform_indices = @transform_3, window_bounds = array<i64: 1, 4, 4, 128>}]} {
    %c4_i32 = arith.constant 4 : i32
    %0 = arith.muli %arg1, %c4_i32 : i32
    %c0_i32 = arith.constant 0 : i32
    %1 = arith.addi %0, %c0_i32 : i32
    %c0 = arith.constant 0 : index
    %2 = arith.index_cast %1 : i32 to index
    %c0_0 = arith.constant 0 : index
    %c0_1 = arith.constant 0 : index
    %3 = vector.load %arg2[%c0, %2, %c0_0, %c0_1] : memref<1x6x6x128xbf16, #tpu.memory_space<vmem>>, vector<1x4x4x128xbf16>
    %4 = vector.shape_cast %3 : vector<1x4x4x128xbf16> to vector<4x4x128xbf16>
    %5 = vector.shape_cast %4 : vector<4x4x128xbf16> to vector<16x128xbf16>
    %c0_i32_2 = arith.constant 0 : i32
    %6 = arith.addi %0, %c0_i32_2 : i32
    %c0_3 = arith.constant 0 : index
    %7 = arith.index_cast %6 : i32 to index
    %c1 = arith.constant 1 : index
    %c0_4 = arith.constant 0 : index
    %8 = vector.load %arg2[%c0_3, %7, %c1, %c0_4] : memref<1x6x6x128xbf16, #tpu.memory_space<vmem>>, vector<1x4x4x128xbf16>
    %9 = vector.shape_cast %8 : vector<1x4x4x128xbf16> to vector<4x4x128xbf16>
    %10 = vector.shape_cast %9 : vector<4x4x128xbf16> to vector<16x128xbf16>
    %c0_i32_5 = arith.constant 0 : i32
    %11 = arith.addi %0, %c0_i32_5 : i32
    %c0_6 = arith.constant 0 : index
    %12 = arith.index_cast %11 : i32 to index
    %c2 = arith.constant 2 : index
    %c0_7 = arith.constant 0 : index
    %13 = vector.load %arg2[%c0_6, %12, %c2, %c0_7] : memref<1x6x6x128xbf16, #tpu.memory_space<vmem>>, vector<1x4x4x128xbf16>
    %14 = vector.shape_cast %13 : vector<1x4x4x128xbf16> to vector<4x4x128xbf16>
    %15 = vector.shape_cast %14 : vector<4x4x128xbf16> to vector<16x128xbf16>
    %c1_i32 = arith.constant 1 : i32
    %16 = arith.addi %0, %c1_i32 : i32
    %c0_8 = arith.constant 0 : index
    %17 = arith.index_cast %16 : i32 to index
    %c0_9 = arith.constant 0 : index
    %c0_10 = arith.constant 0 : index
    %18 = vector.load %arg2[%c0_8, %17, %c0_9, %c0_10] : memref<1x6x6x128xbf16, #tpu.memory_space<vmem>>, vector<1x4x4x128xbf16>
    %19 = vector.shape_cast %18 : vector<1x4x4x128xbf16> to vector<4x4x128xbf16>
    %20 = vector.shape_cast %19 : vector<4x4x128xbf16> to vector<16x128xbf16>
    %c1_i32_11 = arith.constant 1 : i32
    %21 = arith.addi %0, %c1_i32_11 : i32
    %c0_12 = arith.constant 0 : index
    %22 = arith.index_cast %21 : i32 to index
    %c1_13 = arith.constant 1 : index
    %c0_14 = arith.constant 0 : index
    %23 = vector.load %arg2[%c0_12, %22, %c1_13, %c0_14] : memref<1x6x6x128xbf16, #tpu.memory_space<vmem>>, vector<1x4x4x128xbf16>
    %24 = vector.shape_cast %23 : vector<1x4x4x128xbf16> to vector<4x4x128xbf16>
    %25 = vector.shape_cast %24 : vector<4x4x128xbf16> to vector<16x128xbf16>
    %c1_i32_15 = arith.constant 1 : i32
    %26 = arith.addi %0, %c1_i32_15 : i32
    %c0_16 = arith.constant 0 : index
    %27 = arith.index_cast %26 : i32 to index
    %c2_17 = arith.constant 2 : index
    %c0_18 = arith.constant 0 : index
    %28 = vector.load %arg2[%c0_16, %27, %c2_17, %c0_18] : memref<1x6x6x128xbf16, #tpu.memory_space<vmem>>, vector<1x4x4x128xbf16>
    %29 = vector.shape_cast %28 : vector<1x4x4x128xbf16> to vector<4x4x128xbf16>
    %30 = vector.shape_cast %29 : vector<4x4x128xbf16> to vector<16x128xbf16>
    %c2_i32 = arith.constant 2 : i32
    %31 = arith.addi %0, %c2_i32 : i32
    %c0_19 = arith.constant 0 : index
    %32 = arith.index_cast %31 : i32 to index
    %c0_20 = arith.constant 0 : index
    %c0_21 = arith.constant 0 : index
    %33 = vector.load %arg2[%c0_19, %32, %c0_20, %c0_21] : memref<1x6x6x128xbf16, #tpu.memory_space<vmem>>, vector<1x4x4x128xbf16>
    %34 = vector.shape_cast %33 : vector<1x4x4x128xbf16> to vector<4x4x128xbf16>
    %35 = vector.shape_cast %34 : vector<4x4x128xbf16> to vector<16x128xbf16>
    %c2_i32_22 = arith.constant 2 : i32
    %36 = arith.addi %0, %c2_i32_22 : i32
    %c0_23 = arith.constant 0 : index
    %37 = arith.index_cast %36 : i32 to index
    %c1_24 = arith.constant 1 : index
    %c0_25 = arith.constant 0 : index
    %38 = vector.load %arg2[%c0_23, %37, %c1_24, %c0_25] : memref<1x6x6x128xbf16, #tpu.memory_space<vmem>>, vector<1x4x4x128xbf16>
    %39 = vector.shape_cast %38 : vector<1x4x4x128xbf16> to vector<4x4x128xbf16>
    %40 = vector.shape_cast %39 : vector<4x4x128xbf16> to vector<16x128xbf16>
    %c2_i32_26 = arith.constant 2 : i32
    %41 = arith.addi %0, %c2_i32_26 : i32
    %c0_27 = arith.constant 0 : index
    %42 = arith.index_cast %41 : i32 to index
    %c2_28 = arith.constant 2 : index
    %c0_29 = arith.constant 0 : index
    %43 = vector.load %arg2[%c0_27, %42, %c2_28, %c0_29] : memref<1x6x6x128xbf16, #tpu.memory_space<vmem>>, vector<1x4x4x128xbf16>
    %44 = vector.shape_cast %43 : vector<1x4x4x128xbf16> to vector<4x4x128xbf16>
    %45 = vector.shape_cast %44 : vector<4x4x128xbf16> to vector<16x128xbf16>
    %46 = tpu.concatenate %5, %10, %15, %20, %25, %30, %35, %40, %45 in 1 : vector<16x128xbf16>, vector<16x128xbf16>, vector<16x128xbf16>, vector<16x128xbf16>, vector<16x128xbf16>, vector<16x128xbf16>, vector<16x128xbf16>, vector<16x128xbf16>, vector<16x128xbf16> -> vector<16x1152xbf16>
    %c0_30 = arith.constant 0 : index
    %c0_31 = arith.constant 0 : index
    %47 = vector.load %arg3[%c0_30, %c0_31] : memref<1152x128xbf16, #tpu.memory_space<vmem>>, vector<1152x128xbf16>
    %cst = arith.constant dense<0.000000e+00> : vector<16x128xf32>
    %48 = tpu.matmul %46, %47, %cst {dimension_numbers = #tpu.dot_dimension_numbers<[1], [0], [0], [1], [0, 0, 1, 1], [], []>} : vector<16x1152xbf16>, vector<1152x128xbf16>, vector<16x128xf32> -> vector<16x128xf32>
    %c0_32 = arith.constant 0 : index
    %c0_33 = arith.constant 0 : index
    %49 = vector.load %arg4[%c0_32, %c0_33] : memref<1x128xf32, #tpu.memory_space<vmem>>, vector<1x128xf32>
    %50 = vector.broadcast %49 : vector<1x128xf32> to vector<16x128xf32>
    %51 = arith.addf %48, %50 : vector<16x128xf32>
    %52 = math.absf %51 : vector<16x128xf32>
    %cst_34 = arith.constant 0.000000e+00 : f32
    %53 = vector.broadcast %cst_34 : f32 to vector<16x128xf32>
    %54 = arith.subf %53, %52 : vector<16x128xf32>
    %55 = math.exp %54 : vector<16x128xf32>
    %cst_35 = arith.constant 1.000000e+00 : f32
    %56 = vector.broadcast %cst_35 : f32 to vector<16x128xf32>
    %57 = arith.addf %56, %55 : vector<16x128xf32>
    %58 = tpu.reciprocal %57 {approx = true} : vector<16x128xf32> -> vector<16x128xf32>
    %cst_36 = arith.constant 0.000000e+00 : f32
    %59 = vector.broadcast %cst_36 : f32 to vector<16x128xf32>
    %60 = arith.cmpf oge, %51, %59 : vector<16x128xf32>
    %61 = arith.mulf %55, %58 : vector<16x128xf32>
    %62 = arith.select %60, %58, %61 : vector<16x128xi1>, vector<16x128xf32>
    %63 = arith.mulf %51, %62 : vector<16x128xf32>
    %64 = arith.truncf %63 : vector<16x128xf32> to vector<16x128xbf16>
    %65 = vector.shape_cast %64 : vector<16x128xbf16> to vector<4x4x128xbf16>
    %c0_37 = arith.constant 0 : index
    %c0_38 = arith.constant 0 : index
    %c0_39 = arith.constant 0 : index
    %c0_40 = arith.constant 0 : index
    %66 = vector.load %arg5[%c0_37, %c0_38, %c0_39, %c0_40] : memref<1x4x4x128xbf16, #tpu.memory_space<vmem>>, vector<1x4x4x128xbf16>
    %67 = vector.shape_cast %66 : vector<1x4x4x128xbf16> to vector<4x4x128xbf16>
    %68 = vector.shape_cast %65 : vector<4x4x128xbf16> to vector<1x4x4x128xbf16>
    tpu.vector_store %arg5[%c0_37, %c0_38, %c0_39, %c0_40], %68 {strides = array<i32>} : memref<1x4x4x128xbf16, #tpu.memory_space<vmem>>, vector<1x4x4x128xbf16>,
    return
  }
  func.func @transform_0(%arg0: i32, %arg1: i32) -> (i32, i32, i32, i32) {
    %c0_i32 = arith.constant 0 : i32
    %c0_i32_0 = arith.constant 0 : i32
    %c0_i32_1 = arith.constant 0 : i32
    %c0_i32_2 = arith.constant 0 : i32
    return %arg0, %c0_i32, %c0_i32_0, %c0_i32_1 : i32, i32, i32, i32
  }
  func.func @transform_1(%arg0: i32, %arg1: i32) -> (i32, i32) {
    %c0_i32 = arith.constant 0 : i32
    %c0_i32_0 = arith.constant 0 : i32
    %c0_i32_1 = arith.constant 0 : i32
    return %c0_i32, %c0_i32_0 : i32, i32
  }
  func.func @transform_2(%arg0: i32, %arg1: i32) -> (i32, i32) {
    %c0_i32 = arith.constant 0 : i32
    %c0_i32_0 = arith.constant 0 : i32
    %c0_i32_1 = arith.constant 0 : i32
    return %c0_i32, %c0_i32_0 : i32, i32
  }
  func.func @transform_3(%arg0: i32, %arg1: i32) -> (i32, i32, i32, i32) {
    %c0_i32 = arith.constant 0 : i32
    %c0_i32_0 = arith.constant 0 : i32
    %c0_i32_1 = arith.constant 0 : i32
    return %arg0, %arg1, %c0_i32, %c0_i32_0 : i32, i32, i32, i32
  }
}

module attributes {stable_mosaic.version = 11 : i64} {
  func.func @_maxpool2_kernel(%arg0: i32, %arg1: memref<2x2x2x256xbf16, #tpu.memory_space<vmem>>, %arg2: memref<2x2x128xbf16, #tpu.memory_space<vmem>>) attributes {dimension_semantics = [#tpu.dimension_semantics<parallel>], iteration_bounds = array<i64: 2>, scalar_prefetch = 0 : i64, scratch_operands = 0 : i64, tpu.core_type = #tpu.core_type<tc>, window_params = [{transform_indices = @transform_0, window_bounds = array<i64: 2, 2, 2, 256>}, {transform_indices = @transform_1, window_bounds = array<i64: 2, 2, 128>}]} {
    %c0 = arith.constant 0 : index
    %c0_0 = arith.constant 0 : index
    %c0_1 = arith.constant 0 : index
    %c0_2 = arith.constant 0 : index
    %0 = vector.load %arg1[%c0, %c0_0, %c0_1, %c0_2] : memref<2x2x2x256xbf16, #tpu.memory_space<vmem>>, vector<2x2x2x256xbf16>
    %1 = vector.extract_strided_slice %0 {offsets = [0, 0, 0, 0], sizes = [2, 1, 2, 256], strides = [1, 1, 1, 1]} : vector<2x2x2x256xbf16> to vector<2x1x2x256xbf16>
    %2 = vector.shape_cast %1 : vector<2x1x2x256xbf16> to vector<2x2x256xbf16>
    %3 = vector.extract_strided_slice %0 {offsets = [0, 1, 0, 0], sizes = [2, 1, 2, 256], strides = [1, 1, 1, 1]} : vector<2x2x2x256xbf16> to vector<2x1x2x256xbf16>
    %4 = vector.shape_cast %3 : vector<2x1x2x256xbf16> to vector<2x2x256xbf16>
    %5 = arith.maximumf %2, %4 : vector<2x2x256xbf16>
    %6 = vector.extract_strided_slice %5 {offsets = [0, 0, 0], sizes = [2, 2, 128], strides = [1, 1, 1]} : vector<2x2x256xbf16> to vector<2x2x128xbf16>
    %7 = vector.extract_strided_slice %5 {offsets = [0, 0, 128], sizes = [2, 2, 128], strides = [1, 1, 1]} : vector<2x2x256xbf16> to vector<2x2x128xbf16>
    %8 = arith.maximumf %6, %7 : vector<2x2x128xbf16>
    %c0_3 = arith.constant 0 : index
    %c0_4 = arith.constant 0 : index
    %c0_5 = arith.constant 0 : index
    %9 = vector.load %arg2[%c0_3, %c0_4, %c0_5] : memref<2x2x128xbf16, #tpu.memory_space<vmem>>, vector<2x2x128xbf16>
    tpu.vector_store %arg2[%c0_3, %c0_4, %c0_5], %8 {strides = array<i32>} : memref<2x2x128xbf16, #tpu.memory_space<vmem>>, vector<2x2x128xbf16>,
    return
  }
  func.func @transform_0(%arg0: i32) -> (i32, i32, i32, i32) {
    %c0_i32 = arith.constant 0 : i32
    %c0_i32_0 = arith.constant 0 : i32
    %c0_i32_1 = arith.constant 0 : i32
    %c0_i32_2 = arith.constant 0 : i32
    return %arg0, %c0_i32, %c0_i32_0, %c0_i32_1 : i32, i32, i32, i32
  }
  func.func @transform_1(%arg0: i32) -> (i32, i32, i32) {
    %c0_i32 = arith.constant 0 : i32
    %c0_i32_0 = arith.constant 0 : i32
    %c0_i32_1 = arith.constant 0 : i32
    return %arg0, %c0_i32, %c0_i32_0 : i32, i32, i32
  }
}

module attributes {stable_mosaic.version = 11 : i64} {
  func.func @_conv_bn_silu_kernel(%arg0: i32, %arg1: i32, %arg2: memref<1x4x4x128xbf16, #tpu.memory_space<vmem>>, %arg3: memref<1152x128xbf16, #tpu.memory_space<vmem>>, %arg4: memref<1x128xf32, #tpu.memory_space<vmem>>, %arg5: memref<1x2x2x128xbf16, #tpu.memory_space<vmem>>) attributes {dimension_semantics = [#tpu.dimension_semantics<parallel>, #tpu.dimension_semantics<parallel>], iteration_bounds = array<i64: 2, 1>, scalar_prefetch = 0 : i64, scratch_operands = 0 : i64, tpu.core_type = #tpu.core_type<tc>, window_params = [{transform_indices = @transform_0, window_bounds = array<i64: 1, 4, 4, 128>}, {pipeline_mode = #tpu.pipeline_mode<synchronous>, transform_indices = @transform_1, window_bounds = array<i64: 1152, 128>}, {pipeline_mode = #tpu.pipeline_mode<synchronous>, transform_indices = @transform_2, window_bounds = array<i64: 1, 128>}, {transform_indices = @transform_3, window_bounds = array<i64: 1, 2, 2, 128>}]} {
    %c2_i32 = arith.constant 2 : i32
    %0 = arith.muli %arg1, %c2_i32 : i32
    %c0_i32 = arith.constant 0 : i32
    %1 = arith.addi %0, %c0_i32 : i32
    %c0 = arith.constant 0 : index
    %2 = arith.index_cast %1 : i32 to index
    %c0_0 = arith.constant 0 : index
    %c0_1 = arith.constant 0 : index
    %3 = vector.load %arg2[%c0, %2, %c0_0, %c0_1] : memref<1x4x4x128xbf16, #tpu.memory_space<vmem>>, vector<1x2x2x128xbf16>
    %4 = vector.shape_cast %3 : vector<1x2x2x128xbf16> to vector<2x2x128xbf16>
    %5 = vector.shape_cast %4 : vector<2x2x128xbf16> to vector<4x128xbf16>
    %c0_i32_2 = arith.constant 0 : i32
    %6 = arith.addi %0, %c0_i32_2 : i32
    %c0_3 = arith.constant 0 : index
    %7 = arith.index_cast %6 : i32 to index
    %c1 = arith.constant 1 : index
    %c0_4 = arith.constant 0 : index
    %8 = vector.load %arg2[%c0_3, %7, %c1, %c0_4] : memref<1x4x4x128xbf16, #tpu.memory_space<vmem>>, vector<1x2x2x128xbf16>
    %9 = vector.shape_cast %8 : vector<1x2x2x128xbf16> to vector<2x2x128xbf16>
    %10 = vector.shape_cast %9 : vector<2x2x128xbf16> to vector<4x128xbf16>
    %c0_i32_5 = arith.constant 0 : i32
    %11 = arith.addi %0, %c0_i32_5 : i32
    %c0_6 = arith.constant 0 : index
    %12 = arith.index_cast %11 : i32 to index
    %c2 = arith.constant 2 : index
    %c0_7 = arith.constant 0 : index
    %13 = vector.load %arg2[%c0_6, %12, %c2, %c0_7] : memref<1x4x4x128xbf16, #tpu.memory_space<vmem>>, vector<1x2x2x128xbf16>
    %14 = vector.shape_cast %13 : vector<1x2x2x128xbf16> to vector<2x2x128xbf16>
    %15 = vector.shape_cast %14 : vector<2x2x128xbf16> to vector<4x128xbf16>
    %c1_i32 = arith.constant 1 : i32
    %16 = arith.addi %0, %c1_i32 : i32
    %c0_8 = arith.constant 0 : index
    %17 = arith.index_cast %16 : i32 to index
    %c0_9 = arith.constant 0 : index
    %c0_10 = arith.constant 0 : index
    %18 = vector.load %arg2[%c0_8, %17, %c0_9, %c0_10] : memref<1x4x4x128xbf16, #tpu.memory_space<vmem>>, vector<1x2x2x128xbf16>
    %19 = vector.shape_cast %18 : vector<1x2x2x128xbf16> to vector<2x2x128xbf16>
    %20 = vector.shape_cast %19 : vector<2x2x128xbf16> to vector<4x128xbf16>
    %c1_i32_11 = arith.constant 1 : i32
    %21 = arith.addi %0, %c1_i32_11 : i32
    %c0_12 = arith.constant 0 : index
    %22 = arith.index_cast %21 : i32 to index
    %c1_13 = arith.constant 1 : index
    %c0_14 = arith.constant 0 : index
    %23 = vector.load %arg2[%c0_12, %22, %c1_13, %c0_14] : memref<1x4x4x128xbf16, #tpu.memory_space<vmem>>, vector<1x2x2x128xbf16>
    %24 = vector.shape_cast %23 : vector<1x2x2x128xbf16> to vector<2x2x128xbf16>
    %25 = vector.shape_cast %24 : vector<2x2x128xbf16> to vector<4x128xbf16>
    %c1_i32_15 = arith.constant 1 : i32
    %26 = arith.addi %0, %c1_i32_15 : i32
    %c0_16 = arith.constant 0 : index
    %27 = arith.index_cast %26 : i32 to index
    %c2_17 = arith.constant 2 : index
    %c0_18 = arith.constant 0 : index
    %28 = vector.load %arg2[%c0_16, %27, %c2_17, %c0_18] : memref<1x4x4x128xbf16, #tpu.memory_space<vmem>>, vector<1x2x2x128xbf16>
    %29 = vector.shape_cast %28 : vector<1x2x2x128xbf16> to vector<2x2x128xbf16>
    %30 = vector.shape_cast %29 : vector<2x2x128xbf16> to vector<4x128xbf16>
    %c2_i32_19 = arith.constant 2 : i32
    %31 = arith.addi %0, %c2_i32_19 : i32
    %c0_20 = arith.constant 0 : index
    %32 = arith.index_cast %31 : i32 to index
    %c0_21 = arith.constant 0 : index
    %c0_22 = arith.constant 0 : index
    %33 = vector.load %arg2[%c0_20, %32, %c0_21, %c0_22] : memref<1x4x4x128xbf16, #tpu.memory_space<vmem>>, vector<1x2x2x128xbf16>
    %34 = vector.shape_cast %33 : vector<1x2x2x128xbf16> to vector<2x2x128xbf16>
    %35 = vector.shape_cast %34 : vector<2x2x128xbf16> to vector<4x128xbf16>
    %c2_i32_23 = arith.constant 2 : i32
    %36 = arith.addi %0, %c2_i32_23 : i32
    %c0_24 = arith.constant 0 : index
    %37 = arith.index_cast %36 : i32 to index
    %c1_25 = arith.constant 1 : index
    %c0_26 = arith.constant 0 : index
    %38 = vector.load %arg2[%c0_24, %37, %c1_25, %c0_26] : memref<1x4x4x128xbf16, #tpu.memory_space<vmem>>, vector<1x2x2x128xbf16>
    %39 = vector.shape_cast %38 : vector<1x2x2x128xbf16> to vector<2x2x128xbf16>
    %40 = vector.shape_cast %39 : vector<2x2x128xbf16> to vector<4x128xbf16>
    %c2_i32_27 = arith.constant 2 : i32
    %41 = arith.addi %0, %c2_i32_27 : i32
    %c0_28 = arith.constant 0 : index
    %42 = arith.index_cast %41 : i32 to index
    %c2_29 = arith.constant 2 : index
    %c0_30 = arith.constant 0 : index
    %43 = vector.load %arg2[%c0_28, %42, %c2_29, %c0_30] : memref<1x4x4x128xbf16, #tpu.memory_space<vmem>>, vector<1x2x2x128xbf16>
    %44 = vector.shape_cast %43 : vector<1x2x2x128xbf16> to vector<2x2x128xbf16>
    %45 = vector.shape_cast %44 : vector<2x2x128xbf16> to vector<4x128xbf16>
    %46 = tpu.concatenate %5, %10, %15, %20, %25, %30, %35, %40, %45 in 1 : vector<4x128xbf16>, vector<4x128xbf16>, vector<4x128xbf16>, vector<4x128xbf16>, vector<4x128xbf16>, vector<4x128xbf16>, vector<4x128xbf16>, vector<4x128xbf16>, vector<4x128xbf16> -> vector<4x1152xbf16>
    %c0_31 = arith.constant 0 : index
    %c0_32 = arith.constant 0 : index
    %47 = vector.load %arg3[%c0_31, %c0_32] : memref<1152x128xbf16, #tpu.memory_space<vmem>>, vector<1152x128xbf16>
    %cst = arith.constant dense<0.000000e+00> : vector<4x128xf32>
    %48 = tpu.matmul %46, %47, %cst {dimension_numbers = #tpu.dot_dimension_numbers<[1], [0], [0], [1], [0, 0, 1, 1], [], []>} : vector<4x1152xbf16>, vector<1152x128xbf16>, vector<4x128xf32> -> vector<4x128xf32>
    %c0_33 = arith.constant 0 : index
    %c0_34 = arith.constant 0 : index
    %49 = vector.load %arg4[%c0_33, %c0_34] : memref<1x128xf32, #tpu.memory_space<vmem>>, vector<1x128xf32>
    %50 = vector.broadcast %49 : vector<1x128xf32> to vector<4x128xf32>
    %51 = arith.addf %48, %50 : vector<4x128xf32>
    %52 = math.absf %51 : vector<4x128xf32>
    %cst_35 = arith.constant 0.000000e+00 : f32
    %53 = vector.broadcast %cst_35 : f32 to vector<4x128xf32>
    %54 = arith.subf %53, %52 : vector<4x128xf32>
    %55 = math.exp %54 : vector<4x128xf32>
    %cst_36 = arith.constant 1.000000e+00 : f32
    %56 = vector.broadcast %cst_36 : f32 to vector<4x128xf32>
    %57 = arith.addf %56, %55 : vector<4x128xf32>
    %58 = tpu.reciprocal %57 {approx = true} : vector<4x128xf32> -> vector<4x128xf32>
    %cst_37 = arith.constant 0.000000e+00 : f32
    %59 = vector.broadcast %cst_37 : f32 to vector<4x128xf32>
    %60 = arith.cmpf oge, %51, %59 : vector<4x128xf32>
    %61 = arith.mulf %55, %58 : vector<4x128xf32>
    %62 = arith.select %60, %58, %61 : vector<4x128xi1>, vector<4x128xf32>
    %63 = arith.mulf %51, %62 : vector<4x128xf32>
    %64 = arith.truncf %63 : vector<4x128xf32> to vector<4x128xbf16>
    %65 = vector.shape_cast %64 : vector<4x128xbf16> to vector<2x2x128xbf16>
    %c0_38 = arith.constant 0 : index
    %c0_39 = arith.constant 0 : index
    %c0_40 = arith.constant 0 : index
    %c0_41 = arith.constant 0 : index
    %66 = vector.load %arg5[%c0_38, %c0_39, %c0_40, %c0_41] : memref<1x2x2x128xbf16, #tpu.memory_space<vmem>>, vector<1x2x2x128xbf16>
    %67 = vector.shape_cast %66 : vector<1x2x2x128xbf16> to vector<2x2x128xbf16>
    %68 = vector.shape_cast %65 : vector<2x2x128xbf16> to vector<1x2x2x128xbf16>
    tpu.vector_store %arg5[%c0_38, %c0_39, %c0_40, %c0_41], %68 {strides = array<i32>} : memref<1x2x2x128xbf16, #tpu.memory_space<vmem>>, vector<1x2x2x128xbf16>,
    return
  }
  func.func @transform_0(%arg0: i32, %arg1: i32) -> (i32, i32, i32, i32) {
    %c0_i32 = arith.constant 0 : i32
    %c0_i32_0 = arith.constant 0 : i32
    %c0_i32_1 = arith.constant 0 : i32
    %c0_i32_2 = arith.constant 0 : i32
    return %arg0, %c0_i32, %c0_i32_0, %c0_i32_1 : i32, i32, i32, i32
  }
  func.func @transform_1(%arg0: i32, %arg1: i32) -> (i32, i32) {
    %c0_i32 = arith.constant 0 : i32
    %c0_i32_0 = arith.constant 0 : i32
    %c0_i32_1 = arith.constant 0 : i32
    return %c0_i32, %c0_i32_0 : i32, i32
  }
  func.func @transform_2(%arg0: i32, %arg1: i32) -> (i32, i32) {
    %c0_i32 = arith.constant 0 : i32
    %c0_i32_0 = arith.constant 0 : i32
    %c0_i32_1 = arith.constant 0 : i32
    return %c0_i32, %c0_i32_0 : i32, i32
  }
  func.func @transform_3(%arg0: i32, %arg1: i32) -> (i32, i32, i32, i32) {
    %c0_i32 = arith.constant 0 : i32
    %c0_i32_0 = arith.constant 0 : i32
    %c0_i32_1 = arith.constant 0 : i32
    return %arg0, %arg1, %c0_i32, %c0_i32_0 : i32, i32, i32, i32
  }
}

</mosaic_0001>

<llo_original>
// kernel: _lambda_.7
$region0: #{_lambda_.7}
  #allocation0 [shape = 'u32[]', space=smem, size = 0x4, offset = 0x4, fixed_abs, tag = 'smem constant byte address 0x4 - core index']
  #allocation1 [shape = 'u32[144,128]{1,0:T(1,128)}', space=vmem, size = 0x12000, scoped, tag = 'internal scratch']
  %s0 = inlined_call_operand.vmem [shape: bf16[2,18,18,4], index: 0, kind: input, shape index: {}]
  %s1 = inlined_call_operand.vmem [shape: bf16[36,128], index: 1, kind: input, shape index: {}]
  %s2 = inlined_call_operand.vmem [shape: f32[1,128], index: 2, kind: input, shape index: {}]
  %s3 = inlined_call_operand.vmem [shape: bf16[2,16,16,128], index: 3, kind: output, shape index: {}]
  %s4 = sld [smem:[#allocation0]]
  $region45: #{_lambda_.7} parent=0
    _
  %s6 = ssub.s32 1, %s4
  %s7 = scalar_select 0, %s6, %s4
  loop: start=0, step=1, limit=6
  $region2: #{_lambda_.7} parent=0 // loop_pre_header
    _
  $region3: #{_lambda_.7} parent=0 // loop_header
    %s9 = sphi 0, %s13
    %p10 = scmp.ge.s32.totalorder %s9, 6
    %s16 = sphi 0, %s28
    %s17 = sphi 0, %s24
    %s18 = sphi 0, %s16
    %s19 = sphi 0, %s17
    %s20 = sphi 0, %s18
    %s21 = sphi 0, %s19
    %s31 = sphi 0, %s33
    %s34 = sphi 0, %s31
    %s35 = sphi 0, %s34
    %s51 = sphi 0, %s35
    %s55 = sphi 0, %s55
    %s57 = sphi 0, %s55
    %s58 = sphi 0, %s57
    %s72 = sphi 0, %s58
    %s76 = sphi 0, %s76
    %s78 = sphi 0, %s76
    %s79 = sphi 0, %s78
    %s93 = sphi 0, %s79
    %s101 = sphi 0, %s103
    %s104 = sphi 0, %s101
    %s105 = sphi 0, %s104
    %s121 = sphi 0, %s105
  $region4: #{_lambda_.7} parent=0 // loop_header_branch
    %12 = sbr.rel (%p10) target = $region8
  $region5: #{_lambda_.7} parent=0 // loop_body
    %s14 = ssub.s32 %s9, 1
    %s15 = ssub.s32 %s9, 2
    %s22 = sadd.s32 1, %s17
    %p23 = scmp.ge.s32.totalorder %s22, 2
    %s24 = scalar_select %p23, 0, %s22
    %s25 = sadd.s32 1, %s16
    %s26 = scalar_select %p23, %s25, %s16
    %p27 = scmp.ge.s32.totalorder %s26, 2
    %s28 = scalar_select %p27, 0, %s26
    %s29 = ssub.s32 %s16, %s28
    %p30 = scmp.eq.s32.totalorder %s29, 0
    %s32 = sadd.s32 %s31, 1
    %s33 = scalar_select %p30, %s31, %s32
    %p36 = pneg %p30
    %p37 = scmp.eq.s32.totalorder %s9, 3
    %p38 = por %p36, %p37
    %p39 = scmp.ne.s32.totalorder %s31, %s34
    %p40 = scmp.eq.s32.totalorder %s9, 0
    %p41 = por %p39, %p40
    %p42 = scmp.ne.s32.totalorder %s31, %s34
    %p43 = scmp.eq.s32.totalorder %s14, 3
    %p44 = por %p42, %p43
    %p45 = scmp.ne.s32.totalorder %s34, %s35
    %p46 = scmp.eq.s32.totalorder %s14, 0
    %p47 = por %p45, %p46
    %p48 = scmp.ne.s32.totalorder %s34, %s35
    %p49 = scmp.eq.s32.totalorder %s15, 3
    %p50 = por %p48, %p49
    %p52 = scmp.ne.s32.totalorder %s35, %s51
    %p53 = scmp.eq.s32.totalorder %s15, 0
    %p54 = por %p52, %p53
    %s56 = sadd.s32 %s55, 1
    %p59 = scmp.eq.s32.totalorder %s9, 3
    %p60 = scmp.ne.s32.totalorder %s55, %s57
    %p61 = scmp.eq.s32.totalorder %s9, 0
    %p62 = por %p60, %p61
    %p63 = scmp.ne.s32.totalorder %s55, %s57
    %p64 = scmp.eq.s32.totalorder %s14, 3
    %p65 = por %p63, %p64
    %p66 = scmp.ne.s32.totalorder %s57, %s58
    %p67 = scmp.eq.s32.totalorder %s14, 0
    %p68 = por %p66, %p67
    %p69 = scmp.ne.s32.totalorder %s57, %s58
    %p70 = scmp.eq.s32.totalorder %s15, 3
    %p71 = por %p69, %p70
    %p73 = scmp.ne.s32.totalorder %s58, %s72
    %p74 = scmp.eq.s32.totalorder %s15, 0
    %p75 = por %p73, %p74
    %s77 = sadd.s32 %s76, 1
    %p80 = scmp.eq.s32.totalorder %s9, 3
    %p81 = scmp.ne.s32.totalorder %s76, %s78
    %p82 = scmp.eq.s32.totalorder %s9, 0
    %p83 = por %p81, %p82
    %p84 = scmp.ne.s32.totalorder %s76, %s78
    %p85 = scmp.eq.s32.totalorder %s14, 3
    %p86 = por %p84, %p85
    %p87 = scmp.ne.s32.totalorder %s78, %s79
    %p88 = scmp.eq.s32.totalorder %s14, 0
    %p89 = por %p87, %p88
    %p90 = scmp.ne.s32.totalorder %s78, %s79
    %p91 = scmp.eq.s32.totalorder %s15, 3
    %p92 = por %p90, %p91
    %p94 = scmp.ne.s32.totalorder %s79, %s93
    %p95 = scmp.eq.s32.totalorder %s15, 0
    %p96 = por %p94, %p95
    %s97 = ssub.s32 %s16, %s28
    %s98 = ssub.s32 %s17, %s24
    %s99 = sor.u32 %s97, %s98
    %p100 = scmp.eq.s32.totalorder %s99, 0
    %s102 = sadd.s32 %s101, 1
    %s103 = scalar_select %p100, %s101, %s102
    %p106 = pneg %p100
    %p107 = scmp.eq.s32.totalorder %s9, 3
    %p108 = por %p106, %p107
    %p109 = scmp.ne.s32.totalorder %s101, %s104
    %p110 = scmp.eq.s32.totalorder %s9, 0
    %p111 = por %p109, %p110
    %p112 = scmp.ne.s32.totalorder %s101, %s104
    %p113 = scmp.eq.s32.totalorder %s14, 3
    %p114 = por %p112, %p113
    %p115 = scmp.ne.s32.totalorder %s104, %s105
    %p116 = scmp.eq.s32.totalorder %s14, 0
    %p117 = por %p115, %p116
    %p118 = scmp.ne.s32.totalorder %s104, %s105
    %p119 = scmp.eq.s32.totalorder %s15, 3
    %p120 = por %p118, %p119
    %p122 = scmp.ne.s32.totalorder %s105, %s121
    %p123 = scmp.eq.s32.totalorder %s15, 0
    %p124 = por %p122, %p123
    %p125 = scmp.le.s32.totalorder 1, %s9
    %p126 = scmp.lt.s32.totalorder %s9, 5
    %p127 = pnand %p125, %p126
    %p128 = pneg %p127
    // Predicated region
    $region9: #{_lambda_.7} parent=5 // pred_check
      _
    $region10: #{_lambda_.7} parent=5 // pred_check_branch
      %130 = sbr.rel (%p127) target = $region12
    $region11: #{_lambda_.7} parent=5 // pred_region
      %s131 = ssub.s32 %s9, 1
      // Predicated region
      $region13: #{_lambda_.7} parent=11 // pred_check
        %p132 = pneg %p68
      $region14: #{_lambda_.7} parent=11 // pred_check_branch
        %134 = sbr.rel (%p132) target = $region16
      $region15: #{_lambda_.7} parent=11 // pred_region
        _
      $region16: #{_lambda_.7} parent=11 // pred_fallthru
        _
      // Predicated region
      $region17: #{_lambda_.7} parent=11 // pred_check
        %p135 = pneg %p89
      $region18: #{_lambda_.7} parent=11 // pred_check_branch
        %137 = sbr.rel (%p135) target = $region20
      $region19: #{_lambda_.7} parent=11 // pred_region
        _
      $region20: #{_lambda_.7} parent=11 // pred_fallthru
        _
    $region12: #{_lambda_.7} parent=5 // pred_fallthru
      _
    %p138 = scmp.lt.s32.totalorder %s9, 4
    // Predicated region
    $region21: #{_lambda_.7} parent=5 // pred_check
      %p139 = pneg %p138
    $region22: #{_lambda_.7} parent=5 // pred_check_branch
      %141 = sbr.rel (%p139) target = $region24
    $region23: #{_lambda_.7} parent=5 // pred_region
      // Predicated region
      $region25: #{_lambda_.7} parent=23 // pred_check
        %p142 = pneg %p41
      $region26: #{_lambda_.7} parent=23 // pred_check_branch
        %144 = sbr.rel (%p142) target = $region28
      $region27: #{_lambda_.7} parent=23 // pred_region
        %p145 = scmp.lt.s32.totalorder %s16, 1
        %s146 = scalar_select %p145, %s16, 1
        %s147 = smul.addr %s146, 54
        %s148 = smul.addr %s147, 4
        %s149 = scalar_lea.vmem %s0, %s148
      $region28: #{_lambda_.7} parent=23 // pred_fallthru
        _
    $region24: #{_lambda_.7} parent=5 // pred_fallthru
      _
    %p150 = scmp.le.s32.totalorder 1, %s9
    %p151 = scmp.lt.s32.totalorder %s9, 5
    %p152 = pnand %p150, %p151
    %p153 = pneg %p152
    // Predicated region
    $region29: #{_lambda_.7} parent=5 // pred_check
      _
    $region30: #{_lambda_.7} parent=5 // pred_check_branch
      %155 = sbr.rel (%p152) target = $region32
    $region31: #{_lambda_.7} parent=5 // pred_region
      %s156 = ssub.s32 %s9, 1
      %p157 = scmp.lt.s32.totalorder %s18, 1
      %s158 = scalar_select %p157, %s18, 1
      %s159 = smul.addr %s158, 54
      %s160 = smul.addr %s159, 4
      %s161 = scalar_lea.vmem %s0, %s160
      %p162 = pneg %p47
      %p163 = pneg %p44
      %p164 = pneg %p68
      %p165 = pneg %p65
      %p166 = pneg %p89
      %p167 = pneg %p86
      %p168 = pneg %p117
      %p169 = pneg %p114
      %s170 = smul.u32 8, %s19
      %p171 = scmp.lt.s32.totalorder %s18, 1
      %s172 = scalar_select %p171, %s18, 1
      %p173 = scmp.lt.s32.totalorder %s170, 15
      %s174 = scalar_select %p173, %s170, 15
      %s175 = smul.addr %s174, 2
      %s176 = smul.addr %s172, 32
      %s177 = sadd.s32 %s175, %s176
      %s178 = smul.addr %s177, 4
      %s179 = scalar_lea.vmem %s3, %s178
      %p180 = scmp.lt.s32.totalorder %s18, 1
      %s181 = scalar_select %p180, %s18, 1
      %s182 = smul.addr %s181, 54
      %s183 = smul.addr %s182, 4
      %s184 = scalar_lea.vmem %s0, %s183
      %s185 = smul.u32 8, %s19
      %p186 = scmp.lt.s32.totalorder %s18, 1
      %s187 = scalar_select %p186, %s18, 1
      %p188 = scmp.lt.s32.totalorder %s185, 15
      %s189 = scalar_select %p188, %s185, 15
      %s190 = smul.addr %s189, 2
      %s191 = smul.addr %s187, 32
      %s192 = sadd.s32 %s190, %s191
      %s193 = smul.addr %s192, 4
      %s194 = scalar_lea.vmem %s3, %s193
      %s195 = smul.u32 8, %s19
      %s197 = smul.u32 %s19, 8
      %s198 = smul.u32 %s197, 3
      %s199 = smul.addr %s198, 4
      %s200 = scalar_lea.vmem %s184, %s199
      %v201 = vld [vmem:[%s200] sm:$0xf]
      %v202 = vld [vmem:[%s200 + $0x4] sm:$0xf]
      %v203 = vld [vmem:[%s200 + $0xc] sm:$0xf]
      %v204 = vld [vmem:[%s200 + $0x10] sm:$0xf]
      %v205 = vld [vmem:[%s200 + $0x18] sm:$0xf]
      %v206 = vld [vmem:[%s200 + $0x1c] sm:$0xf]
      %v207 = vld [vmem:[%s200 + $0x24] sm:$0xf]
      %v208 = vld [vmem:[%s200 + $0x28] sm:$0xf]
      %v209 = vld [vmem:[%s200 + $0x30] sm:$0xf]
      %v210 = vld [vmem:[%s200 + $0x34] sm:$0xf]
      %v211 = vld [vmem:[%s200 + $0x3c] sm:$0xf]
      %v212 = vld [vmem:[%s200 + $0x40] sm:$0xf]
      %v213 = vld [vmem:[%s200 + $0x48] sm:$0xf]
      %v214 = vld [vmem:[%s200 + $0x4c] sm:$0xf]
      %v215 = vld [vmem:[%s200 + $0x54] sm:$0xf]
      %v216 = vld [vmem:[%s200 + $0x58] sm:$0xf]
      %v217 = vld [vmem:[%s200 + $0x8] sm:$0x1]
      %v218 = vld [vmem:[%s200 + $0x14] sm:$0x1]
      %v219 = vld [vmem:[%s200 + $0x20] sm:$0x1]
      %v220 = vld [vmem:[%s200 + $0x2c] sm:$0x1]
      %v221 = vld [vmem:[%s200 + $0x38] sm:$0x1]
      %v222 = vld [vmem:[%s200 + $0x44] sm:$0x1]
      %v223 = vld [vmem:[%s200 + $0x50] sm:$0x1]
      %v224 = vld [vmem:[%s200 + $0x5c] sm:$0x1]
      %vm225 = vsmask.f32 3328
      %vm226 = vsmask.f32 7440
      %vm227 = vmor %vm225, %vm226
      %v229 = vshrl.u32 %v201, 16
      %v231 = vrot.slane %v229, 4
      %v232 = vshll.u32 %v201, 16
      %v234 = vrot.slane %v232, 5
      %v235 = vor.u32 %v231, %v234
      %v236 = vrot.slane %v235, 4
      %v238 = vshll.u32 %v202, 16
      %v240 = vrot.slane %v238, 5
      %v241 = vsel %vm227, %v236, %v240
      %v242 = vshrl.u32 %v202, 16
      %v244 = vrot.slane %v242, 4
      %v245 = vor.u32 %v244, %v240
      %v246 = vrot.slane %v245, 4
      %v248 = vshll.u32 %v217, 16
      %v250 = vrot.slane %v248, 5
      %v251 = vsel %vm227, %v246, %v250
      %v253 = vshrl.u32 %v203, 16
      %v255 = vrot.slane %v253, 4
      %v256 = vshll.u32 %v203, 16
      %v258 = vrot.slane %v256, 5
      %v259 = vor.u32 %v255, %v258
      %v260 = vrot.slane %v259, 4
      %v262 = vshll.u32 %v204, 16
      %v264 = vrot.slane %v262, 5
      %v265 = vsel %vm227, %v260, %v264
      %v266 = vshrl.u32 %v204, 16
      %v268 = vrot.slane %v266, 4
      %v269 = vor.u32 %v268, %v264
      %v270 = vrot.slane %v269, 4
      %v272 = vshll.u32 %v218, 16
      %v274 = vrot.slane %v272, 5
      %v275 = vsel %vm227, %v270, %v274
      %v277 = vshrl.u32 %v205, 16
      %v279 = vrot.slane %v277, 4
      %v280 = vshll.u32 %v205, 16
      %v282 = vrot.slane %v280, 5
      %v283 = vor.u32 %v279, %v282
      %v284 = vrot.slane %v283, 4
      %v286 = vshll.u32 %v206, 16
      %v288 = vrot.slane %v286, 5
      %v289 = vsel %vm227, %v284, %v288
      %v290 = vshrl.u32 %v206, 16
      %v292 = vrot.slane %v290, 4
      %v293 = vor.u32 %v292, %v288
      %v294 = vrot.slane %v293, 4
      %v296 = vshll.u32 %v219, 16
      %v298 = vrot.slane %v296, 5
      %v299 = vsel %vm227, %v294, %v298
      %v301 = vshrl.u32 %v207, 16
      %v303 = vrot.slane %v301, 4
      %v304 = vshll.u32 %v207, 16
      %v306 = vrot.slane %v304, 5
      %v307 = vor.u32 %v303, %v306
      %v308 = vrot.slane %v307, 4
      %v310 = vshll.u32 %v208, 16
      %v312 = vrot.slane %v310, 5
      %v313 = vsel %vm227, %v308, %v312
      %v314 = vshrl.u32 %v208, 16
      %v316 = vrot.slane %v314, 4
      %v317 = vor.u32 %v316, %v312
      %v318 = vrot.slane %v317, 4
      %v320 = vshll.u32 %v220, 16
      %v322 = vrot.slane %v320, 5
      %v323 = vsel %vm227, %v318, %v322
      %v325 = vshrl.u32 %v209, 16
      %v327 = vrot.slane %v325, 4
      %v328 = vshll.u32 %v209, 16
      %v330 = vrot.slane %v328, 5
      %v331 = vor.u32 %v327, %v330
      %v332 = vrot.slane %v331, 4
      %v334 = vshll.u32 %v210, 16
      %v336 = vrot.slane %v334, 5
      %v337 = vsel %vm227, %v332, %v336
      %v338 = vshrl.u32 %v210, 16
      %v340 = vrot.slane %v338, 4
      %v341 = vor.u32 %v340, %v336
      %v342 = vrot.slane %v341, 4
      %v344 = vshll.u32 %v221, 16
      %v346 = vrot.slane %v344, 5
      %v347 = vsel %vm227, %v342, %v346
      %v349 = vshrl.u32 %v211, 16
      %v351 = vrot.slane %v349, 4
      %v352 = vshll.u32 %v211, 16
      %v354 = vrot.slane %v352, 5
      %v355 = vor.u32 %v351, %v354
      %v356 = vrot.slane %v355, 4
      %v358 = vshll.u32 %v212, 16
      %v360 = vrot.slane %v358, 5
      %v361 = vsel %vm227, %v356, %v360
      %v362 = vshrl.u32 %v212, 16
      %v364 = vrot.slane %v362, 4
      %v365 = vor.u32 %v364, %v360
      %v366 = vrot.slane %v365, 4
      %v368 = vshll.u32 %v222, 16
      %v370 = vrot.slane %v368, 5
      %v371 = vsel %vm227, %v366, %v370
      %v373 = vshrl.u32 %v213, 16
      %v375 = vrot.slane %v373, 4
      %v376 = vshll.u32 %v213, 16
      %v378 = vrot.slane %v376, 5
      %v379 = vor.u32 %v375, %v378
      %v380 = vrot.slane %v379, 4
      %v382 = vshll.u32 %v214, 16
      %v384 = vrot.slane %v382, 5
      %v385 = vsel %vm227, %v380, %v384
      %v386 = vshrl.u32 %v214, 16
      %v388 = vrot.slane %v386, 4
      %v389 = vor.u32 %v388, %v384
      %v390 = vrot.slane %v389, 4
      %v392 = vshll.u32 %v223, 16
      %v394 = vrot.slane %v392, 5
      %v395 = vsel %vm227, %v390, %v394
      %v397 = vshrl.u32 %v215, 16
      %v399 = vrot.slane %v397, 4
      %v400 = vshll.u32 %v215, 16
      %v402 = vrot.slane %v400, 5
      %v403 = vor.u32 %v399, %v402
      %v404 = vrot.slane %v403, 4
      %v406 = vshll.u32 %v216, 16
      %v408 = vrot.slane %v406, 5
      %v409 = vsel %vm227, %v404, %v408
      %v410 = vshrl.u32 %v216, 16
      %v412 = vrot.slane %v410, 4
      %v413 = vor.u32 %v412, %v408
      %v414 = vrot.slane %v413, 4
      %v416 = vshll.u32 %v224, 16
      %v418 = vrot.slane %v416, 5
      %v419 = vsel %vm227, %v414, %v418
      %v420 = vld [vmem:[%s200] sm:$0xe]
      %v421 = vld [vmem:[%s200 + $0xc] sm:$0xe]
      %v422 = vld [vmem:[%s200 + $0x18] sm:$0xe]
      %v423 = vld [vmem:[%s200 + $0x24] sm:$0xe]
      %v424 = vld [vmem:[%s200 + $0x30] sm:$0xe]
      %v425 = vld [vmem:[%s200 + $0x3c] sm:$0xe]
      %v426 = vld [vmem:[%s200 + $0x48] sm:$0xe]
      %v427 = vld [vmem:[%s200 + $0x54] sm:$0xe]
      %vm452 = vcmask 1042432
      %vm453 = vcmask 1046532
      %vm454 = vmor %vm452, %vm453
      %v455 = vrot.slane %v420, 5
      %v456 = vrot.slane %v455, 4
      %v457 = vrot.slane %v202, 5
      %v458 = vsel %vm454, %v456, %v457
      %v459 = vrot.slane %v457, 4
      %v460 = vrot.slane %v217, 5
      %v461 = vsel %vm454, %v459, %v460
      %v462 = vrot.slane %v421, 5
      %v463 = vrot.slane %v462, 4
      %v464 = vrot.slane %v204, 5
      %v465 = vsel %vm454, %v463, %v464
      %v466 = vrot.slane %v464, 4
      %v467 = vrot.slane %v218, 5
      %v468 = vsel %vm454, %v466, %v467
      %v469 = vrot.slane %v422, 5
      %v470 = vrot.slane %v469, 4
      %v471 = vrot.slane %v206, 5
      %v472 = vsel %vm454, %v470, %v471
      %v473 = vrot.slane %v471, 4
      %v474 = vrot.slane %v219, 5
      %v475 = vsel %vm454, %v473, %v474
      %v476 = vrot.slane %v423, 5
      %v477 = vrot.slane %v476, 4
      %v478 = vrot.slane %v208, 5
      %v479 = vsel %vm454, %v477, %v478
      %v480 = vrot.slane %v478, 4
      %v481 = vrot.slane %v220, 5
      %v482 = vsel %vm454, %v480, %v481
      %v483 = vrot.slane %v424, 5
      %v484 = vrot.slane %v483, 4
      %v485 = vrot.slane %v210, 5
      %v486 = vsel %vm454, %v484, %v485
      %v487 = vrot.slane %v485, 4
      %v488 = vrot.slane %v221, 5
      %v489 = vsel %vm454, %v487, %v488
      %v490 = vrot.slane %v425, 5
      %v491 = vrot.slane %v490, 4
      %v492 = vrot.slane %v212, 5
      %v493 = vsel %vm454, %v491, %v492
      %v494 = vrot.slane %v492, 4
      %v495 = vrot.slane %v222, 5
      %v496 = vsel %vm454, %v494, %v495
      %v497 = vrot.slane %v426, 5
      %v498 = vrot.slane %v497, 4
      %v499 = vrot.slane %v214, 5
      %v500 = vsel %vm454, %v498, %v499
      %v501 = vrot.slane %v499, 4
      %v502 = vrot.slane %v223, 5
      %v503 = vsel %vm454, %v501, %v502
      %v504 = vrot.slane %v427, 5
      %v505 = vrot.slane %v504, 4
      %v506 = vrot.slane %v216, 5
      %v507 = vsel %vm454, %v505, %v506
      %v508 = vrot.slane %v506, 4
      %v509 = vrot.slane %v224, 5
      %v510 = vsel %vm454, %v508, %v509
      %s511 = sadd.s32 %s197, 1
      %s512 = smul.u32 %s511, 3
      %s513 = smul.addr %s512, 4
      %s514 = scalar_lea.vmem %s184, %s513
      %v515 = vld [vmem:[%s514] sm:$0xf]
      %v516 = vld [vmem:[%s514 + $0x4] sm:$0xf]
      %v517 = vld [vmem:[%s514 + $0xc] sm:$0xf]
      %v518 = vld [vmem:[%s514 + $0x10] sm:$0xf]
      %v519 = vld [vmem:[%s514 + $0x18] sm:$0xf]
      %v520 = vld [vmem:[%s514 + $0x1c] sm:$0xf]
      %v521 = vld [vmem:[%s514 + $0x24] sm:$0xf]
      %v522 = vld [vmem:[%s514 + $0x28] sm:$0xf]
      %v523 = vld [vmem:[%s514 + $0x30] sm:$0xf]
      %v524 = vld [vmem:[%s514 + $0x34] sm:$0xf]
      %v525 = vld [vmem:[%s514 + $0x3c] sm:$0xf]
      %v526 = vld [vmem:[%s514 + $0x40] sm:$0xf]
      %v527 = vld [vmem:[%s514 + $0x48] sm:$0xf]
      %v528 = vld [vmem:[%s514 + $0x4c] sm:$0xf]
      %v529 = vld [vmem:[%s514 + $0x54] sm:$0xf]
      %v530 = vld [vmem:[%s514 + $0x58] sm:$0xf]
      %v531 = vld [vmem:[%s514 + $0x8] sm:$0x1]
      %v532 = vld [vmem:[%s514 + $0x14] sm:$0x1]
      %v533 = vld [vmem:[%s514 + $0x20] sm:$0x1]
      %v534 = vld [vmem:[%s514 + $0x2c] sm:$0x1]
      %v535 = vld [vmem:[%s514 + $0x38] sm:$0x1]
      %v536 = vld [vmem:[%s514 + $0x44] sm:$0x1]
      %v537 = vld [vmem:[%s514 + $0x50] sm:$0x1]
      %v538 = vld [vmem:[%s514 + $0x5c] sm:$0x1]
      %v540 = vshrl.u32 %v515, 16
      %v542 = vrot.slane %v540, 4
      %v543 = vshll.u32 %v515, 16
      %v545 = vrot.slane %v543, 5
      %v546 = vor.u32 %v542, %v545
      %v547 = vrot.slane %v546, 4
      %v549 = vshll.u32 %v516, 16
      %v551 = vrot.slane %v549, 5
      %v552 = vsel %vm227, %v547, %v551
      %v553 = vshrl.u32 %v516, 16
      %v555 = vrot.slane %v553, 4
      %v556 = vor.u32 %v555, %v551
      %v557 = vrot.slane %v556, 4
      %v559 = vshll.u32 %v531, 16
      %v561 = vrot.slane %v559, 5
      %v562 = vsel %vm227, %v557, %v561
      %v564 = vshrl.u32 %v517, 16
      %v566 = vrot.slane %v564, 4
      %v567 = vshll.u32 %v517, 16
      %v569 = vrot.slane %v567, 5
      %v570 = vor.u32 %v566, %v569
      %v571 = vrot.slane %v570, 4
      %v573 = vshll.u32 %v518, 16
      %v575 = vrot.slane %v573, 5
      %v576 = vsel %vm227, %v571, %v575
      %v577 = vshrl.u32 %v518, 16
      %v579 = vrot.slane %v577, 4
      %v580 = vor.u32 %v579, %v575
      %v581 = vrot.slane %v580, 4
      %v583 = vshll.u32 %v532, 16
      %v585 = vrot.slane %v583, 5
      %v586 = vsel %vm227, %v581, %v585
      %v588 = vshrl.u32 %v519, 16
      %v590 = vrot.slane %v588, 4
      %v591 = vshll.u32 %v519, 16
      %v593 = vrot.slane %v591, 5
      %v594 = vor.u32 %v590, %v593
      %v595 = vrot.slane %v594, 4
      %v597 = vshll.u32 %v520, 16
      %v599 = vrot.slane %v597, 5
      %v600 = vsel %vm227, %v595, %v599
      %v601 = vshrl.u32 %v520, 16
      %v603 = vrot.slane %v601, 4
      %v604 = vor.u32 %v603, %v599
      %v605 = vrot.slane %v604, 4
      %v607 = vshll.u32 %v533, 16
      %v609 = vrot.slane %v607, 5
      %v610 = vsel %vm227, %v605, %v609
      %v612 = vshrl.u32 %v521, 16
      %v614 = vrot.slane %v612, 4
      %v615 = vshll.u32 %v521, 16
      %v617 = vrot.slane %v615, 5
      %v618 = vor.u32 %v614, %v617
      %v619 = vrot.slane %v618, 4
      %v621 = vshll.u32 %v522, 16
      %v623 = vrot.slane %v621, 5
      %v624 = vsel %vm227, %v619, %v623
      %v625 = vshrl.u32 %v522, 16
      %v627 = vrot.slane %v625, 4
      %v628 = vor.u32 %v627, %v623
      %v629 = vrot.slane %v628, 4
      %v631 = vshll.u32 %v534, 16
      %v633 = vrot.slane %v631, 5
      %v634 = vsel %vm227, %v629, %v633
      %v636 = vshrl.u32 %v523, 16
      %v638 = vrot.slane %v636, 4
      %v639 = vshll.u32 %v523, 16
      %v641 = vrot.slane %v639, 5
      %v642 = vor.u32 %v638, %v641
      %v643 = vrot.slane %v642, 4
      %v645 = vshll.u32 %v524, 16
      %v647 = vrot.slane %v645, 5
      %v648 = vsel %vm227, %v643, %v647
      %v649 = vshrl.u32 %v524, 16
      %v651 = vrot.slane %v649, 4
      %v652 = vor.u32 %v651, %v647
      %v653 = vrot.slane %v652, 4
      %v655 = vshll.u32 %v535, 16
      %v657 = vrot.slane %v655, 5
      %v658 = vsel %vm227, %v653, %v657
      %v660 = vshrl.u32 %v525, 16
      %v662 = vrot.slane %v660, 4
      %v663 = vshll.u32 %v525, 16
      %v665 = vrot.slane %v663, 5
      %v666 = vor.u32 %v662, %v665
      %v667 = vrot.slane %v666, 4
      %v669 = vshll.u32 %v526, 16
      %v671 = vrot.slane %v669, 5
      %v672 = vsel %vm227, %v667, %v671
      %v673 = vshrl.u32 %v526, 16
      %v675 = vrot.slane %v673, 4
      %v676 = vor.u32 %v675, %v671
      %v677 = vrot.slane %v676, 4
      %v679 = vshll.u32 %v536, 16
      %v681 = vrot.slane %v679, 5
      %v682 = vsel %vm227, %v677, %v681
      %v684 = vshrl.u32 %v527, 16
      %v686 = vrot.slane %v684, 4
      %v687 = vshll.u32 %v527, 16
      %v689 = vrot.slane %v687, 5
      %v690 = vor.u32 %v686, %v689
      %v691 = vrot.slane %v690, 4
      %v693 = vshll.u32 %v528, 16
      %v695 = vrot.slane %v693, 5
      %v696 = vsel %vm227, %v691, %v695
      %v697 = vshrl.u32 %v528, 16
      %v699 = vrot.slane %v697, 4
      %v700 = vor.u32 %v699, %v695
      %v701 = vrot.slane %v700, 4
      %v703 = vshll.u32 %v537, 16
      %v705 = vrot.slane %v703, 5
      %v706 = vsel %vm227, %v701, %v705
      %v708 = vshrl.u32 %v529, 16
      %v710 = vrot.slane %v708, 4
      %v711 = vshll.u32 %v529, 16
      %v713 = vrot.slane %v711, 5
      %v714 = vor.u32 %v710, %v713
      %v715 = vrot.slane %v714, 4
      %v717 = vshll.u32 %v530, 16
      %v719 = vrot.slane %v717, 5
      %v720 = vsel %vm227, %v715, %v719
      %v721 = vshrl.u32 %v530, 16
      %v723 = vrot.slane %v721, 4
      %v724 = vor.u32 %v723, %v719
      %v725 = vrot.slane %v724, 4
      %v727 = vshll.u32 %v538, 16
      %v729 = vrot.slane %v727, 5
      %v730 = vsel %vm227, %v725, %v729
      %v731 = vld [vmem:[%s514] sm:$0xe]
      %v732 = vld [vmem:[%s514 + $0xc] sm:$0xe]
      %v733 = vld [vmem:[%s514 + $0x18] sm:$0xe]
      %v734 = vld [vmem:[%s514 + $0x24] sm:$0xe]
      %v735 = vld [vmem:[%s514 + $0x30] sm:$0xe]
      %v736 = vld [vmem:[%s514 + $0x3c] sm:$0xe]
      %v737 = vld [vmem:[%s514 + $0x48] sm:$0xe]
      %v738 = vld [vmem:[%s514 + $0x54] sm:$0xe]
      %v763 = vrot.slane %v731, 5
      %v764 = vrot.slane %v763, 4
      %v765 = vrot.slane %v516, 5
      %v766 = vsel %vm454, %v764, %v765
      %v767 = vrot.slane %v765, 4
      %v768 = vrot.slane %v531, 5
      %v769 = vsel %vm454, %v767, %v768
      %v770 = vrot.slane %v732, 5
      %v771 = vrot.slane %v770, 4
      %v772 = vrot.slane %v518, 5
      %v773 = vsel %vm454, %v771, %v772
      %v774 = vrot.slane %v772, 4
      %v775 = vrot.slane %v532, 5
      %v776 = vsel %vm454, %v774, %v775
      %v777 = vrot.slane %v733, 5
      %v778 = vrot.slane %v777, 4
      %v779 = vrot.slane %v520, 5
      %v780 = vsel %vm454, %v778, %v779
      %v781 = vrot.slane %v779, 4
      %v782 = vrot.slane %v533, 5
      %v783 = vsel %vm454, %v781, %v782
      %v784 = vrot.slane %v734, 5
      %v785 = vrot.slane %v784, 4
      %v786 = vrot.slane %v522, 5
      %v787 = vsel %vm454, %v785, %v786
      %v788 = vrot.slane %v786, 4
      %v789 = vrot.slane %v534, 5
      %v790 = vsel %vm454, %v788, %v789
      %v791 = vrot.slane %v735, 5
      %v792 = vrot.slane %v791, 4
      %v793 = vrot.slane %v524, 5
      %v794 = vsel %vm454, %v792, %v793
      %v795 = vrot.slane %v793, 4
      %v796 = vrot.slane %v535, 5
      %v797 = vsel %vm454, %v795, %v796
      %v798 = vrot.slane %v736, 5
      %v799 = vrot.slane %v798, 4
      %v800 = vrot.slane %v526, 5
      %v801 = vsel %vm454, %v799, %v800
      %v802 = vrot.slane %v800, 4
      %v803 = vrot.slane %v536, 5
      %v804 = vsel %vm454, %v802, %v803
      %v805 = vrot.slane %v737, 5
      %v806 = vrot.slane %v805, 4
      %v807 = vrot.slane %v528, 5
      %v808 = vsel %vm454, %v806, %v807
      %v809 = vrot.slane %v807, 4
      %v810 = vrot.slane %v537, 5
      %v811 = vsel %vm454, %v809, %v810
      %v812 = vrot.slane %v738, 5
      %v813 = vrot.slane %v812, 4
      %v814 = vrot.slane %v530, 5
      %v815 = vsel %vm454, %v813, %v814
      %v816 = vrot.slane %v814, 4
      %v817 = vrot.slane %v538, 5
      %v818 = vsel %vm454, %v816, %v817
      %s819 = sadd.s32 %s197, 2
      %s820 = smul.u32 %s819, 3
      %s821 = smul.addr %s820, 4
      %s822 = scalar_lea.vmem %s184, %s821
      %v823 = vld [vmem:[%s822] sm:$0xf]
      %v824 = vld [vmem:[%s822 + $0x4] sm:$0xf]
      %v825 = vld [vmem:[%s822 + $0xc] sm:$0xf]
      %v826 = vld [vmem:[%s822 + $0x10] sm:$0xf]
      %v827 = vld [vmem:[%s822 + $0x18] sm:$0xf]
      %v828 = vld [vmem:[%s822 + $0x1c] sm:$0xf]
      %v829 = vld [vmem:[%s822 + $0x24] sm:$0xf]
      %v830 = vld [vmem:[%s822 + $0x28] sm:$0xf]
      %v831 = vld [vmem:[%s822 + $0x30] sm:$0xf]
      %v832 = vld [vmem:[%s822 + $0x34] sm:$0xf]
      %v833 = vld [vmem:[%s822 + $0x3c] sm:$0xf]
      %v834 = vld [vmem:[%s822 + $0x40] sm:$0xf]
      %v835 = vld [vmem:[%s822 + $0x48] sm:$0xf]
      %v836 = vld [vmem:[%s822 + $0x4c] sm:$0xf]
      %v837 = vld [vmem:[%s822 + $0x54] sm:$0xf]
      %v838 = vld [vmem:[%s822 + $0x58] sm:$0xf]
      %v839 = vld [vmem:[%s822 + $0x8] sm:$0x1]
      %v840 = vld [vmem:[%s822 + $0x14] sm:$0x1]
      %v841 = vld [vmem:[%s822 + $0x20] sm:$0x1]
      %v842 = vld [vmem:[%s822 + $0x2c] sm:$0x1]
      %v843 = vld [vmem:[%s822 + $0x38] sm:$0x1]
      %v844 = vld [vmem:[%s822 + $0x44] sm:$0x1]
      %v845 = vld [vmem:[%s822 + $0x50] sm:$0x1]
      %v846 = vld [vmem:[%s822 + $0x5c] sm:$0x1]
      %v848 = vshrl.u32 %v823, 16
      %v850 = vrot.slane %v848, 4
      %v851 = vshll.u32 %v823, 16
      %v853 = vrot.slane %v851, 5
      %v854 = vor.u32 %v850, %v853
      %v855 = vrot.slane %v854, 4
      %v857 = vshll.u32 %v824, 16
      %v859 = vrot.slane %v857, 5
      %v860 = vsel %vm227, %v855, %v859
      %v861 = vshrl.u32 %v824, 16
      %v863 = vrot.slane %v861, 4
      %v864 = vor.u32 %v863, %v859
      %v865 = vrot.slane %v864, 4
      %v867 = vshll.u32 %v839, 16
      %v869 = vrot.slane %v867, 5
      %v870 = vsel %vm227, %v865, %v869
      %v872 = vshrl.u32 %v825, 16
      %v874 = vrot.slane %v872, 4
      %v875 = vshll.u32 %v825, 16
      %v877 = vrot.slane %v875, 5
      %v878 = vor.u32 %v874, %v877
      %v879 = vrot.slane %v878, 4
      %v881 = vshll.u32 %v826, 16
      %v883 = vrot.slane %v881, 5
      %v884 = vsel %vm227, %v879, %v883
      %v885 = vshrl.u32 %v826, 16
      %v887 = vrot.slane %v885, 4
      %v888 = vor.u32 %v887, %v883
      %v889 = vrot.slane %v888, 4
      %v891 = vshll.u32 %v840, 16
      %v893 = vrot.slane %v891, 5
      %v894 = vsel %vm227, %v889, %v893
      %v896 = vshrl.u32 %v827, 16
      %v898 = vrot.slane %v896, 4
      %v899 = vshll.u32 %v827, 16
      %v901 = vrot.slane %v899, 5
      %v902 = vor.u32 %v898, %v901
      %v903 = vrot.slane %v902, 4
      %v905 = vshll.u32 %v828, 16
      %v907 = vrot.slane %v905, 5
      %v908 = vsel %vm227, %v903, %v907
      %v909 = vshrl.u32 %v828, 16
      %v911 = vrot.slane %v909, 4
      %v912 = vor.u32 %v911, %v907
      %v913 = vrot.slane %v912, 4
      %v915 = vshll.u32 %v841, 16
      %v917 = vrot.slane %v915, 5
      %v918 = vsel %vm227, %v913, %v917
      %v920 = vshrl.u32 %v829, 16
      %v922 = vrot.slane %v920, 4
      %v923 = vshll.u32 %v829, 16
      %v925 = vrot.slane %v923, 5
      %v926 = vor.u32 %v922, %v925
      %v927 = vrot.slane %v926, 4
      %v929 = vshll.u32 %v830, 16
      %v931 = vrot.slane %v929, 5
      %v932 = vsel %vm227, %v927, %v931
      %v933 = vshrl.u32 %v830, 16
      %v935 = vrot.slane %v933, 4
      %v936 = vor.u32 %v935, %v931
      %v937 = vrot.slane %v936, 4
      %v939 = vshll.u32 %v842, 16
      %v941 = vrot.slane %v939, 5
      %v942 = vsel %vm227, %v937, %v941
      %v944 = vshrl.u32 %v831, 16
      %v946 = vrot.slane %v944, 4
      %v947 = vshll.u32 %v831, 16
      %v949 = vrot.slane %v947, 5
      %v950 = vor.u32 %v946, %v949
      %v951 = vrot.slane %v950, 4
      %v953 = vshll.u32 %v832, 16
      %v955 = vrot.slane %v953, 5
      %v956 = vsel %vm227, %v951, %v955
      %v957 = vshrl.u32 %v832, 16
      %v959 = vrot.slane %v957, 4
      %v960 = vor.u32 %v959, %v955
      %v961 = vrot.slane %v960, 4
      %v963 = vshll.u32 %v843, 16
      %v965 = vrot.slane %v963, 5
      %v966 = vsel %vm227, %v961, %v965
      %v968 = vshrl.u32 %v833, 16
      %v970 = vrot.slane %v968, 4
      %v971 = vshll.u32 %v833, 16
      %v973 = vrot.slane %v971, 5
      %v974 = vor.u32 %v970, %v973
      %v975 = vrot.slane %v974, 4
      %v977 = vshll.u32 %v834, 16
      %v979 = vrot.slane %v977, 5
      %v980 = vsel %vm227, %v975, %v979
      %v981 = vshrl.u32 %v834, 16
      %v983 = vrot.slane %v981, 4
      %v984 = vor.u32 %v983, %v979
      %v985 = vrot.slane %v984, 4
      %v987 = vshll.u32 %v844, 16
      %v989 = vrot.slane %v987, 5
      %v990 = vsel %vm227, %v985, %v989
      %v992 = vshrl.u32 %v835, 16
      %v994 = vrot.slane %v992, 4
      %v995 = vshll.u32 %v835, 16
      %v997 = vrot.slane %v995, 5
      %v998 = vor.u32 %v994, %v997
      %v999 = vrot.slane %v998, 4
      %v1001 = vshll.u32 %v836, 16
      %v1003 = vrot.slane %v1001, 5
      %v1004 = vsel %vm227, %v999, %v1003
      %v1005 = vshrl.u32 %v836, 16
      %v1007 = vrot.slane %v1005, 4
      %v1008 = vor.u32 %v1007, %v1003
      %v1009 = vrot.slane %v1008, 4
      %v1011 = vshll.u32 %v845, 16
      %v1013 = vrot.slane %v1011, 5
      %v1014 = vsel %vm227, %v1009, %v1013
      %v1016 = vshrl.u32 %v837, 16
      %v1018 = vrot.slane %v1016, 4
      %v1019 = vshll.u32 %v837, 16
      %v1021 = vrot.slane %v1019, 5
      %v1022 = vor.u32 %v1018, %v1021
      %v1023 = vrot.slane %v1022, 4
      %v1025 = vshll.u32 %v838, 16
      %v1027 = vrot.slane %v1025, 5
      %v1028 = vsel %vm227, %v1023, %v1027
      %v1029 = vshrl.u32 %v838, 16
      %v1031 = vrot.slane %v1029, 4
      %v1032 = vor.u32 %v1031, %v1027
      %v1033 = vrot.slane %v1032, 4
      %v1035 = vshll.u32 %v846, 16
      %v1037 = vrot.slane %v1035, 5
      %v1038 = vsel %vm227, %v1033, %v1037
      %v1039 = vld [vmem:[%s822] sm:$0xe]
      %v1040 = vld [vmem:[%s822 + $0xc] sm:$0xe]
      %v1041 = vld [vmem:[%s822 + $0x18] sm:$0xe]
      %v1042 = vld [vmem:[%s822 + $0x24] sm:$0xe]
      %v1043 = vld [vmem:[%s822 + $0x30] sm:$0xe]
      %v1044 = vld [vmem:[%s822 + $0x3c] sm:$0xe]
      %v1045 = vld [vmem:[%s822 + $0x48] sm:$0xe]
      %v1046 = vld [vmem:[%s822 + $0x54] sm:$0xe]
      %v1071 = vrot.slane %v1039, 5
      %v1072 = vrot.slane %v1071, 4
      %v1073 = vrot.slane %v824, 5
      %v1074 = vsel %vm454, %v1072, %v1073
      %v1075 = vrot.slane %v1073, 4
      %v1076 = vrot.slane %v839, 5
      %v1077 = vsel %vm454, %v1075, %v1076
      %v1078 = vrot.slane %v1040, 5
      %v1079 = vrot.slane %v1078, 4
      %v1080 = vrot.slane %v826, 5
      %v1081 = vsel %vm454, %v1079, %v1080
      %v1082 = vrot.slane %v1080, 4
      %v1083 = vrot.slane %v840, 5
      %v1084 = vsel %vm454, %v1082, %v1083
      %v1085 = vrot.slane %v1041, 5
      %v1086 = vrot.slane %v1085, 4
      %v1087 = vrot.slane %v828, 5
      %v1088 = vsel %vm454, %v1086, %v1087
      %v1089 = vrot.slane %v1087, 4
      %v1090 = vrot.slane %v841, 5
      %v1091 = vsel %vm454, %v1089, %v1090
      %v1092 = vrot.slane %v1042, 5
      %v1093 = vrot.slane %v1092, 4
      %v1094 = vrot.slane %v830, 5
      %v1095 = vsel %vm454, %v1093, %v1094
      %v1096 = vrot.slane %v1094, 4
      %v1097 = vrot.slane %v842, 5
      %v1098 = vsel %vm454, %v1096, %v1097
      %v1099 = vrot.slane %v1043, 5
      %v1100 = vrot.slane %v1099, 4
      %v1101 = vrot.slane %v832, 5
      %v1102 = vsel %vm454, %v1100, %v1101
      %v1103 = vrot.slane %v1101, 4
      %v1104 = vrot.slane %v843, 5
      %v1105 = vsel %vm454, %v1103, %v1104
      %v1106 = vrot.slane %v1044, 5
      %v1107 = vrot.slane %v1106, 4
      %v1108 = vrot.slane %v834, 5
      %v1109 = vsel %vm454, %v1107, %v1108
      %v1110 = vrot.slane %v1108, 4
      %v1111 = vrot.slane %v844, 5
      %v1112 = vsel %vm454, %v1110, %v1111
      %v1113 = vrot.slane %v1045, 5
      %v1114 = vrot.slane %v1113, 4
      %v1115 = vrot.slane %v836, 5
      %v1116 = vsel %vm454, %v1114, %v1115
      %v1117 = vrot.slane %v1115, 4
      %v1118 = vrot.slane %v845, 5
      %v1119 = vsel %vm454, %v1117, %v1118
      %v1120 = vrot.slane %v1046, 5
      %v1121 = vrot.slane %v1120, 4
      %v1122 = vrot.slane %v838, 5
      %v1123 = vsel %vm454, %v1121, %v1122
      %v1124 = vrot.slane %v1122, 4
      %v1125 = vrot.slane %v846, 5
      %v1126 = vsel %vm454, %v1124, %v1125
      %v1135 = vunpack.c.l.b16 %v201
      %v1136 = vunpack.c.l.b16 %v202
      %v1137 = vunpack.c.l.b16 %v203
      %v1138 = vunpack.c.l.b16 %v204
      %v1139 = vunpack.c.l.b16 %v205
      %v1140 = vunpack.c.l.b16 %v206
      %v1141 = vunpack.c.l.b16 %v207
      %v1142 = vunpack.c.l.b16 %v208
      %v1143 = vunpack.c.l.b16 %v209
      %v1144 = vunpack.c.l.b16 %v210
      %v1145 = vunpack.c.l.b16 %v211
      %v1146 = vunpack.c.l.b16 %v212
      %v1147 = vunpack.c.l.b16 %v213
      %v1148 = vunpack.c.l.b16 %v214
      %v1149 = vunpack.c.l.b16 %v215
      %v1150 = vunpack.c.l.b16 %v216
      %v1151 = vpack.c.b16 %v1136, %v1135
      %v1152 = vpack.c.b16 %v1138, %v1137
      %v1153 = vpack.c.b16 %v1140, %v1139
      %v1154 = vpack.c.b16 %v1142, %v1141
      %v1155 = vpack.c.b16 %v1144, %v1143
      %v1156 = vpack.c.b16 %v1146, %v1145
      %v1157 = vpack.c.b16 %v1148, %v1147
      %v1158 = vpack.c.b16 %v1150, %v1149
      %v1159 = vunpack.c.l.b16 %v241
      %v1160 = vunpack.c.l.b16 %v251
      %v1161 = vunpack.c.l.b16 %v265
      %v1162 = vunpack.c.l.b16 %v275
      %v1163 = vunpack.c.l.b16 %v289
      %v1164 = vunpack.c.l.b16 %v299
      %v1165 = vunpack.c.l.b16 %v313
      %v1166 = vunpack.c.l.b16 %v323
      %v1167 = vunpack.c.l.b16 %v337
      %v1168 = vunpack.c.l.b16 %v347
      %v1169 = vunpack.c.l.b16 %v361
      %v1170 = vunpack.c.l.b16 %v371
      %v1171 = vunpack.c.l.b16 %v385
      %v1172 = vunpack.c.l.b16 %v395
      %v1173 = vunpack.c.l.b16 %v409
      %v1174 = vunpack.c.l.b16 %v419
      %v1175 = vpack.c.b16 %v1160, %v1159
      %v1176 = vpack.c.b16 %v1162, %v1161
      %v1177 = vpack.c.b16 %v1164, %v1163
      %v1178 = vpack.c.b16 %v1166, %v1165
      %v1179 = vpack.c.b16 %v1168, %v1167
      %v1180 = vpack.c.b16 %v1170, %v1169
      %v1181 = vpack.c.b16 %v1172, %v1171
      %v1182 = vpack.c.b16 %v1174, %v1173
      %1183 = vrot.lane.b32.xlu0 %v1175, 4
      %v1184 = vpop.permute.xlu0 %1183
      %1185 = vrot.lane.b32.xlu0 %v1176, 4
      %v1186 = vpop.permute.xlu0 %1185
      %1187 = vrot.lane.b32.xlu0 %v1177, 4
      %v1188 = vpop.permute.xlu0 %1187
      %1189 = vrot.lane.b32.xlu0 %v1178, 4
      %v1190 = vpop.permute.xlu0 %1189
      %1191 = vrot.lane.b32.xlu0 %v1179, 4
      %v1192 = vpop.permute.xlu0 %1191
      %1193 = vrot.lane.b32.xlu0 %v1180, 4
      %v1194 = vpop.permute.xlu0 %1193
      %1195 = vrot.lane.b32.xlu0 %v1181, 4
      %v1196 = vpop.permute.xlu0 %1195
      %1197 = vrot.lane.b32.xlu0 %v1182, 4
      %v1198 = vpop.permute.xlu0 %1197
      %v1199 = vunpack.c.l.b16 %v458
      %v1200 = vunpack.c.l.b16 %v461
      %v1201 = vunpack.c.l.b16 %v465
      %v1202 = vunpack.c.l.b16 %v468
      %v1203 = vunpack.c.l.b16 %v472
      %v1204 = vunpack.c.l.b16 %v475
      %v1205 = vunpack.c.l.b16 %v479
      %v1206 = vunpack.c.l.b16 %v482
      %v1207 = vunpack.c.l.b16 %v486
      %v1208 = vunpack.c.l.b16 %v489
      %v1209 = vunpack.c.l.b16 %v493
      %v1210 = vunpack.c.l.b16 %v496
      %v1211 = vunpack.c.l.b16 %v500
      %v1212 = vunpack.c.l.b16 %v503
      %v1213 = vunpack.c.l.b16 %v507
      %v1214 = vunpack.c.l.b16 %v510
      %v1215 = vpack.c.b16 %v1200, %v1199
      %v1216 = vpack.c.b16 %v1202, %v1201
      %v1217 = vpack.c.b16 %v1204, %v1203
      %v1218 = vpack.c.b16 %v1206, %v1205
      %v1219 = vpack.c.b16 %v1208, %v1207
      %v1220 = vpack.c.b16 %v1210, %v1209
      %v1221 = vpack.c.b16 %v1212, %v1211
      %v1222 = vpack.c.b16 %v1214, %v1213
      %1223 = vrot.lane.b32.xlu0 %v1215, 8
      %v1224 = vpop.permute.xlu0 %1223
      %1225 = vrot.lane.b32.xlu0 %v1216, 8
      %v1226 = vpop.permute.xlu0 %1225
      %1227 = vrot.lane.b32.xlu0 %v1217, 8
      %v1228 = vpop.permute.xlu0 %1227
      %1229 = vrot.lane.b32.xlu0 %v1218, 8
      %v1230 = vpop.permute.xlu0 %1229
      %1231 = vrot.lane.b32.xlu0 %v1219, 8
      %v1232 = vpop.permute.xlu0 %1231
      %1233 = vrot.lane.b32.xlu0 %v1220, 8
      %v1234 = vpop.permute.xlu0 %1233
      %1235 = vrot.lane.b32.xlu0 %v1221, 8
      %v1236 = vpop.permute.xlu0 %1235
      %1237 = vrot.lane.b32.xlu0 %v1222, 8
      %v1238 = vpop.permute.xlu0 %1237
      %v1247 = vunpack.c.l.b16 %v515
      %v1248 = vunpack.c.l.b16 %v516
      %v1249 = vunpack.c.l.b16 %v517
      %v1250 = vunpack.c.l.b16 %v518
      %v1251 = vunpack.c.l.b16 %v519
      %v1252 = vunpack.c.l.b16 %v520
      %v1253 = vunpack.c.l.b16 %v521
      %v1254 = vunpack.c.l.b16 %v522
      %v1255 = vunpack.c.l.b16 %v523
      %v1256 = vunpack.c.l.b16 %v524
      %v1257 = vunpack.c.l.b16 %v525
      %v1258 = vunpack.c.l.b16 %v526
      %v1259 = vunpack.c.l.b16 %v527
      %v1260 = vunpack.c.l.b16 %v528
      %v1261 = vunpack.c.l.b16 %v529
      %v1262 = vunpack.c.l.b16 %v530
      %v1263 = vpack.c.b16 %v1248, %v1247
      %v1264 = vpack.c.b16 %v1250, %v1249
      %v1265 = vpack.c.b16 %v1252, %v1251
      %v1266 = vpack.c.b16 %v1254, %v1253
      %v1267 = vpack.c.b16 %v1256, %v1255
      %v1268 = vpack.c.b16 %v1258, %v1257
      %v1269 = vpack.c.b16 %v1260, %v1259
      %v1270 = vpack.c.b16 %v1262, %v1261
      %1271 = vrot.lane.b32.xlu0 %v1263, 12
      %v1272 = vpop.permute.xlu0 %1271
      %1273 = vrot.lane.b32.xlu0 %v1264, 12
      %v1274 = vpop.permute.xlu0 %1273
      %1275 = vrot.lane.b32.xlu0 %v1265, 12
      %v1276 = vpop.permute.xlu0 %1275
      %1277 = vrot.lane.b32.xlu0 %v1266, 12
      %v1278 = vpop.permute.xlu0 %1277
      %1279 = vrot.lane.b32.xlu0 %v1267, 12
      %v1280 = vpop.permute.xlu0 %1279
      %1281 = vrot.lane.b32.xlu0 %v1268, 12
      %v1282 = vpop.permute.xlu0 %1281
      %1283 = vrot.lane.b32.xlu0 %v1269, 12
      %v1284 = vpop.permute.xlu0 %1283
      %1285 = vrot.lane.b32.xlu0 %v1270, 12
      %v1286 = vpop.permute.xlu0 %1285
      %v1287 = vunpack.c.l.b16 %v552
      %v1288 = vunpack.c.l.b16 %v562
      %v1289 = vunpack.c.l.b16 %v576
      %v1290 = vunpack.c.l.b16 %v586
      %v1291 = vunpack.c.l.b16 %v600
      %v1292 = vunpack.c.l.b16 %v610
      %v1293 = vunpack.c.l.b16 %v624
      %v1294 = vunpack.c.l.b16 %v634
      %v1295 = vunpack.c.l.b16 %v648
      %v1296 = vunpack.c.l.b16 %v658
      %v1297 = vunpack.c.l.b16 %v672
      %v1298 = vunpack.c.l.b16 %v682
      %v1299 = vunpack.c.l.b16 %v696
      %v1300 = vunpack.c.l.b16 %v706
      %v1301 = vunpack.c.l.b16 %v720
      %v1302 = vunpack.c.l.b16 %v730
      %v1303 = vpack.c.b16 %v1288, %v1287
      %v1304 = vpack.c.b16 %v1290, %v1289
      %v1305 = vpack.c.b16 %v1292, %v1291
      %v1306 = vpack.c.b16 %v1294, %v1293
      %v1307 = vpack.c.b16 %v1296, %v1295
      %v1308 = vpack.c.b16 %v1298, %v1297
      %v1309 = vpack.c.b16 %v1300, %v1299
      %v1310 = vpack.c.b16 %v1302, %v1301
      %1311 = vrot.lane.b32.xlu0 %v1303, 16
      %v1312 = vpop.permute.xlu0 %1311
      %1313 = vrot.lane.b32.xlu0 %v1304, 16
      %v1314 = vpop.permute.xlu0 %1313
      %1315 = vrot.lane.b32.xlu0 %v1305, 16
      %v1316 = vpop.permute.xlu0 %1315
      %1317 = vrot.lane.b32.xlu0 %v1306, 16
      %v1318 = vpop.permute.xlu0 %1317
      %1319 = vrot.lane.b32.xlu0 %v1307, 16
      %v1320 = vpop.permute.xlu0 %1319
      %1321 = vrot.lane.b32.xlu0 %v1308, 16
      %v1322 = vpop.permute.xlu0 %1321
      %1323 = vrot.lane.b32.xlu0 %v1309, 16
      %v1324 = vpop.permute.xlu0 %1323
      %1325 = vrot.lane.b32.xlu0 %v1310, 16
      %v1326 = vpop.permute.xlu0 %1325
      %v1327 = vunpack.c.l.b16 %v766
      %v1328 = vunpack.c.l.b16 %v769
      %v1329 = vunpack.c.l.b16 %v773
      %v1330 = vunpack.c.l.b16 %v776
      %v1331 = vunpack.c.l.b16 %v780
      %v1332 = vunpack.c.l.b16 %v783
      %v1333 = vunpack.c.l.b16 %v787
      %v1334 = vunpack.c.l.b16 %v790
      %v1335 = vunpack.c.l.b16 %v794
      %v1336 = vunpack.c.l.b16 %v797
      %v1337 = vunpack.c.l.b16 %v801
      %v1338 = vunpack.c.l.b16 %v804
      %v1339 = vunpack.c.l.b16 %v808
      %v1340 = vunpack.c.l.b16 %v811
      %v1341 = vunpack.c.l.b16 %v815
      %v1342 = vunpack.c.l.b16 %v818
      %v1343 = vpack.c.b16 %v1328, %v1327
      %v1344 = vpack.c.b16 %v1330, %v1329
      %v1345 = vpack.c.b16 %v1332, %v1331
      %v1346 = vpack.c.b16 %v1334, %v1333
      %v1347 = vpack.c.b16 %v1336, %v1335
      %v1348 = vpack.c.b16 %v1338, %v1337
      %v1349 = vpack.c.b16 %v1340, %v1339
      %v1350 = vpack.c.b16 %v1342, %v1341
      %1351 = vrot.lane.b32.xlu0 %v1343, 20
      %v1352 = vpop.permute.xlu0 %1351
      %1353 = vrot.lane.b32.xlu0 %v1344, 20
      %v1354 = vpop.permute.xlu0 %1353
      %1355 = vrot.lane.b32.xlu0 %v1345, 20
      %v1356 = vpop.permute.xlu0 %1355
      %1357 = vrot.lane.b32.xlu0 %v1346, 20
      %v1358 = vpop.permute.xlu0 %1357
      %1359 = vrot.lane.b32.xlu0 %v1347, 20
      %v1360 = vpop.permute.xlu0 %1359
      %1361 = vrot.lane.b32.xlu0 %v1348, 20
      %v1362 = vpop.permute.xlu0 %1361
      %1363 = vrot.lane.b32.xlu0 %v1349, 20
      %v1364 = vpop.permute.xlu0 %1363
      %1365 = vrot.lane.b32.xlu0 %v1350, 20
      %v1366 = vpop.permute.xlu0 %1365
      %v1375 = vunpack.c.l.b16 %v823
      %v1376 = vunpack.c.l.b16 %v824
      %v1377 = vunpack.c.l.b16 %v825
      %v1378 = vunpack.c.l.b16 %v826
      %v1379 = vunpack.c.l.b16 %v827
      %v1380 = vunpack.c.l.b16 %v828
      %v1381 = vunpack.c.l.b16 %v829
      %v1382 = vunpack.c.l.b16 %v830
      %v1383 = vunpack.c.l.b16 %v831
      %v1384 = vunpack.c.l.b16 %v832
      %v1385 = vunpack.c.l.b16 %v833
      %v1386 = vunpack.c.l.b16 %v834
      %v1387 = vunpack.c.l.b16 %v835
      %v1388 = vunpack.c.l.b16 %v836
      %v1389 = vunpack.c.l.b16 %v837
      %v1390 = vunpack.c.l.b16 %v838
      %v1391 = vpack.c.b16 %v1376, %v1375
      %v1392 = vpack.c.b16 %v1378, %v1377
      %v1393 = vpack.c.b16 %v1380, %v1379
      %v1394 = vpack.c.b16 %v1382, %v1381
      %v1395 = vpack.c.b16 %v1384, %v1383
      %v1396 = vpack.c.b16 %v1386, %v1385
      %v1397 = vpack.c.b16 %v1388, %v1387
      %v1398 = vpack.c.b16 %v1390, %v1389
      %1399 = vrot.lane.b32.xlu0 %v1391, 24
      %v1400 = vpop.permute.xlu0 %1399
      %1401 = vrot.lane.b32.xlu0 %v1392, 24
      %v1402 = vpop.permute.xlu0 %1401
      %1403 = vrot.lane.b32.xlu0 %v1393, 24
      %v1404 = vpop.permute.xlu0 %1403
      %1405 = vrot.lane.b32.xlu0 %v1394, 24
      %v1406 = vpop.permute.xlu0 %1405
      %1407 = vrot.lane.b32.xlu0 %v1395, 24
      %v1408 = vpop.permute.xlu0 %1407
      %1409 = vrot.lane.b32.xlu0 %v1396, 24
      %v1410 = vpop.permute.xlu0 %1409
      %1411 = vrot.lane.b32.xlu0 %v1397, 24
      %v1412 = vpop.permute.xlu0 %1411
      %1413 = vrot.lane.b32.xlu0 %v1398, 24
      %v1414 = vpop.permute.xlu0 %1413
      %v1415 = vunpack.c.l.b16 %v860
      %v1416 = vunpack.c.l.b16 %v870
      %v1417 = vunpack.c.l.b16 %v884
      %v1418 = vunpack.c.l.b16 %v894
      %v1419 = vunpack.c.l.b16 %v908
      %v1420 = vunpack.c.l.b16 %v918
      %v1421 = vunpack.c.l.b16 %v932
      %v1422 = vunpack.c.l.b16 %v942
      %v1423 = vunpack.c.l.b16 %v956
      %v1424 = vunpack.c.l.b16 %v966
      %v1425 = vunpack.c.l.b16 %v980
      %v1426 = vunpack.c.l.b16 %v990
      %v1427 = vunpack.c.l.b16 %v1004
      %v1428 = vunpack.c.l.b16 %v1014
      %v1429 = vunpack.c.l.b16 %v1028
      %v1430 = vunpack.c.l.b16 %v1038
      %v1431 = vpack.c.b16 %v1416, %v1415
      %v1432 = vpack.c.b16 %v1418, %v1417
      %v1433 = vpack.c.b16 %v1420, %v1419
      %v1434 = vpack.c.b16 %v1422, %v1421
      %v1435 = vpack.c.b16 %v1424, %v1423
      %v1436 = vpack.c.b16 %v1426, %v1425
      %v1437 = vpack.c.b16 %v1428, %v1427
      %v1438 = vpack.c.b16 %v1430, %v1429
      %1439 = vrot.lane.b32.xlu0 %v1431, 28
      %v1440 = vpop.permute.xlu0 %1439
      %1441 = vrot.lane.b32.xlu0 %v1432, 28
      %v1442 = vpop.permute.xlu0 %1441
      %1443 = vrot.lane.b32.xlu0 %v1433, 28
      %v1444 = vpop.permute.xlu0 %1443
      %1445 = vrot.lane.b32.xlu0 %v1434, 28
      %v1446 = vpop.permute.xlu0 %1445
      %1447 = vrot.lane.b32.xlu0 %v1435, 28
      %v1448 = vpop.permute.xlu0 %1447
      %1449 = vrot.lane.b32.xlu0 %v1436, 28
      %v1450 = vpop.permute.xlu0 %1449
      %1451 = vrot.lane.b32.xlu0 %v1437, 28
      %v1452 = vpop.permute.xlu0 %1451
      %1453 = vrot.lane.b32.xlu0 %v1438, 28
      %v1454 = vpop.permute.xlu0 %1453
      %v1455 = vunpack.c.l.b16 %v1074
      %v1456 = vunpack.c.l.b16 %v1077
      %v1457 = vunpack.c.l.b16 %v1081
      %v1458 = vunpack.c.l.b16 %v1084
      %v1459 = vunpack.c.l.b16 %v1088
      %v1460 = vunpack.c.l.b16 %v1091
      %v1461 = vunpack.c.l.b16 %v1095
      %v1462 = vunpack.c.l.b16 %v1098
      %v1463 = vunpack.c.l.b16 %v1102
      %v1464 = vunpack.c.l.b16 %v1105
      %v1465 = vunpack.c.l.b16 %v1109
      %v1466 = vunpack.c.l.b16 %v1112
      %v1467 = vunpack.c.l.b16 %v1116
      %v1468 = vunpack.c.l.b16 %v1119
      %v1469 = vunpack.c.l.b16 %v1123
      %v1470 = vunpack.c.l.b16 %v1126
      %v1471 = vpack.c.b16 %v1456, %v1455
      %v1472 = vpack.c.b16 %v1458, %v1457
      %v1473 = vpack.c.b16 %v1460, %v1459
      %v1474 = vpack.c.b16 %v1462, %v1461
      %v1475 = vpack.c.b16 %v1464, %v1463
      %v1476 = vpack.c.b16 %v1466, %v1465
      %v1477 = vpack.c.b16 %v1468, %v1467
      %v1478 = vpack.c.b16 %v1470, %v1469
      %1479 = vrot.lane.b32.xlu0 %v1471, 32
      %v1480 = vpop.permute.xlu0 %1479
      %1481 = vrot.lane.b32.xlu0 %v1472, 32
      %v1482 = vpop.permute.xlu0 %1481
      %1483 = vrot.lane.b32.xlu0 %v1473, 32
      %v1484 = vpop.permute.xlu0 %1483
      %1485 = vrot.lane.b32.xlu0 %v1474, 32
      %v1486 = vpop.permute.xlu0 %1485
      %1487 = vrot.lane.b32.xlu0 %v1475, 32
      %v1488 = vpop.permute.xlu0 %1487
      %1489 = vrot.lane.b32.xlu0 %v1476, 32
      %v1490 = vpop.permute.xlu0 %1489
      %1491 = vrot.lane.b32.xlu0 %v1477, 32
      %v1492 = vpop.permute.xlu0 %1491
      %1493 = vrot.lane.b32.xlu0 %v1478, 32
      %v1494 = vpop.permute.xlu0 %1493
      %vm1495 = vcmask 31744
      %v1498 = vsel %vm1495, %v1151, %v1184
      %v1501 = vsel %vm1495, %v1152, %v1186
      %v1504 = vsel %vm1495, %v1153, %v1188
      %v1507 = vsel %vm1495, %v1154, %v1190
      %v1510 = vsel %vm1495, %v1155, %v1192
      %v1513 = vsel %vm1495, %v1156, %v1194
      %v1516 = vsel %vm1495, %v1157, %v1196
      %v1519 = vsel %vm1495, %v1158, %v1198
      %vm1520 = vcmask 64512
      %v1522 = vsel %vm1520, %v1498, %v1224
      %v1524 = vsel %vm1520, %v1501, %v1226
      %v1526 = vsel %vm1520, %v1504, %v1228
      %v1528 = vsel %vm1520, %v1507, %v1230
      %v1530 = vsel %vm1520, %v1510, %v1232
      %v1532 = vsel %vm1520, %v1513, %v1234
      %v1534 = vsel %vm1520, %v1516, %v1236
      %v1536 = vsel %vm1520, %v1519, %v1238
      %vm1537 = vcmask 97280
      %v1539 = vsel %vm1537, %v1522, %v1272
      %v1541 = vsel %vm1537, %v1524, %v1274
      %v1543 = vsel %vm1537, %v1526, %v1276
      %v1545 = vsel %vm1537, %v1528, %v1278
      %v1547 = vsel %vm1537, %v1530, %v1280
      %v1549 = vsel %vm1537, %v1532, %v1282
      %v1551 = vsel %vm1537, %v1534, %v1284
      %v1553 = vsel %vm1537, %v1536, %v1286
      %vm1554 = vcmask 130048
      %v1556 = vsel %vm1554, %v1539, %v1312
      %v1558 = vsel %vm1554, %v1541, %v1314
      %v1560 = vsel %vm1554, %v1543, %v1316
      %v1562 = vsel %vm1554, %v1545, %v1318
      %v1564 = vsel %vm1554, %v1547, %v1320
      %v1566 = vsel %vm1554, %v1549, %v1322
      %v1568 = vsel %vm1554, %v1551, %v1324
      %v1570 = vsel %vm1554, %v1553, %v1326
      %vm1571 = vcmask 162816
      %v1573 = vsel %vm1571, %v1556, %v1352
      %v1575 = vsel %vm1571, %v1558, %v1354
      %v1577 = vsel %vm1571, %v1560, %v1356
      %v1579 = vsel %vm1571, %v1562, %v1358
      %v1581 = vsel %vm1571, %v1564, %v1360
      %v1583 = vsel %vm1571, %v1566, %v1362
      %v1585 = vsel %vm1571, %v1568, %v1364
      %v1587 = vsel %vm1571, %v1570, %v1366
      %vm1588 = vcmask 195584
      %v1590 = vsel %vm1588, %v1573, %v1400
      %v1592 = vsel %vm1588, %v1575, %v1402
      %v1594 = vsel %vm1588, %v1577, %v1404
      %v1596 = vsel %vm1588, %v1579, %v1406
      %v1598 = vsel %vm1588, %v1581, %v1408
      %v1600 = vsel %vm1588, %v1583, %v1410
      %v1602 = vsel %vm1588, %v1585, %v1412
      %v1604 = vsel %vm1588, %v1587, %v1414
      %vm1605 = vcmask 228352
      %v1607 = vsel %vm1605, %v1590, %v1440
      %v1609 = vsel %vm1605, %v1592, %v1442
      %v1611 = vsel %vm1605, %v1594, %v1444
      %v1613 = vsel %vm1605, %v1596, %v1446
      %v1615 = vsel %vm1605, %v1598, %v1448
      %v1617 = vsel %vm1605, %v1600, %v1450
      %v1619 = vsel %vm1605, %v1602, %v1452
      %v1621 = vsel %vm1605, %v1604, %v1454
      %vm1622 = vcmask 261120
      %v1624 = vsel %vm1622, %v1607, %v1480
      %v1626 = vsel %vm1622, %v1609, %v1482
      %v1628 = vsel %vm1622, %v1611, %v1484
      %v1630 = vsel %vm1622, %v1613, %v1486
      %v1632 = vsel %vm1622, %v1615, %v1488
      %v1634 = vsel %vm1622, %v1617, %v1490
      %v1636 = vsel %vm1622, %v1619, %v1492
      %v1638 = vsel %vm1622, %v1621, %v1494
      %v1639 = vld [vmem:[%s1] sm:$0xf]
      %v1640 = vld [vmem:[%s1 + $0x4] sm:$0xf]
      %v1641 = vld [vmem:[%s1 + $0x8] sm:$0xf]
      %v1642 = vld [vmem:[%s1 + $0xc] sm:$0xf]
      %v1643 = vld [vmem:[%s1 + $0x10] sm:$0x3]
      %v1644 = vld [vmem:[%s2] sm:$0x1]
      %v1646 = vlaneseq
      %v1647 = vshrl.u32 %v1646, 7
      %v1648 = vsub.s32 0, %v1647
      %v1649 = vrot.slane %v1644, %v1648
      %v1656 = vunpack.c.l.b16 %v1639
      %v1657 = vunpack.c.l.b16 %v1640
      %v1658 = vunpack.c.l.b16 %v1641
      %v1659 = vunpack.c.l.b16 %v1642
      %v1660 = vunpack.c.l.b16 %v1643
      %v1661 = vpack.c.b16 %v1657, %v1656
      %v1662 = vpack.c.b16 %v1659, %v1658
      %v1663 = vpack.c.b16 %v1660, %v1660
      %vm1666 = vcmask 293888
      %v1667 = vsel %vm1666, %v1624, 0
      %v1669 = vsel %vm1666, %v1626, 0
      %v1671 = vsel %vm1666, %v1628, 0
      %v1673 = vsel %vm1666, %v1630, 0
      %v1675 = vsel %vm1666, %v1632, 0
      %v1677 = vsel %vm1666, %v1634, 0
      %v1679 = vsel %vm1666, %v1636, 0
      %v1681 = vsel %vm1666, %v1638, 0
      %vm1683 = vcmask 1041408
      %v1685 = vsel %vm1683, %v1663, 0
      %1687 = vmatprep.subr.bf16.mxu0 0
      %1688 = vmatpush1.bf16.msra.mxu0 0
      %1689 = vmatprep.subr.bf16.mxu0 0
      %1690 = vmatpush1.bf16.msra.mxu0 0
      %1691 = vmatprep.subr.bf16.mxu0 0
      %1692 = vmatpush1.bf16.msra.mxu0 0
      %1693 = vmatprep.subr.bf16.mxu0 0
      %1694 = vmatpush1.bf16.msra.mxu0 0
      %1695 = vmatprep.subr.bf16.mxu0 0
      %1696 = vmatpush1.bf16.msra.mxu0 0
      %1697 = vmatprep.subr.bf16.mxu0 0
      %1698 = vmatpush1.bf16.msra.mxu0 %v1685
      %1699 = vmatprep.subr.bf16.mxu0 0
      %1700 = vmatpush1.bf16.msra.mxu0 %v1662
      %1701 = vmatprep.subr.bf16.mxu0 0
      %1702 = vmatpush1.bf16.msra.mxu0 %v1661
      %1703 = vmatprep.subr.bf16.mxu0 0
      %1704 = vmatpush2.bf16.msra.mxu0 0
      %1705 = vmatprep.subr.bf16.mxu0 0
      %1706 = vmatpush2.bf16.msra.mxu0 0
      %1707 = vmatprep.subr.bf16.mxu0 0
      %1708 = vmatpush2.bf16.msra.mxu0 0
      %1709 = vmatprep.subr.bf16.mxu0 0
      %1710 = vmatpush2.bf16.msra.mxu0 0
      %1711 = vmatprep.subr.bf16.mxu0 0
      %1712 = vmatpush2.bf16.msra.mxu0 0
      %1713 = vmatprep.subr.bf16.mxu0 0
      %1714 = vmatpush2.bf16.msra.mxu0 0
      %1715 = vmatprep.subr.bf16.mxu0 0
      %1716 = vmatpush2.bf16.msra.mxu0 0
      %1717 = vmatprep.subr.bf16.mxu0 0
      %1718 = vmatpush2.bf16.msra.mxu0 0
      %1719 = vmatprep.mubr.bf16.mxu0 0
      %1720 = vmatmul.mubr.bf16.gmra.mxu0 %v1667
      %v1721 = vpop.f32.mrf.mxu0
      %v1722 = vadd.f32 %v1649, %v1721
      %v1723 = vpop.f32.mrf.mxu0
      %v1724 = vpop.f32.mrf.mxu0
      %v1725 = vadd.f32 %v1649, %v1724
      %v1726 = vpop.f32.mrf.mxu0
      %1727 = vmatprep.mubr.bf16.mxu0 0
      %1728 = vmatmul.mubr.bf16.gmra.mxu0 %v1669
      %v1729 = vpop.f32.mrf.mxu0
      %v1730 = vadd.f32 %v1649, %v1729
      %v1731 = vpop.f32.mrf.mxu0
      %v1732 = vpop.f32.mrf.mxu0
      %v1733 = vadd.f32 %v1649, %v1732
      %v1734 = vpop.f32.mrf.mxu0
      %1735 = vmatprep.mubr.bf16.mxu0 0
      %1736 = vmatmul.mubr.bf16.gmra.mxu0 %v1671
      %v1737 = vpop.f32.mrf.mxu0
      %v1738 = vadd.f32 %v1649, %v1737
      %v1739 = vpop.f32.mrf.mxu0
      %v1740 = vpop.f32.mrf.mxu0
      %v1741 = vadd.f32 %v1649, %v1740
      %v1742 = vpop.f32.mrf.mxu0
      %1743 = vmatprep.mubr.bf16.mxu0 0
      %1744 = vmatmul.mubr.bf16.gmra.mxu0 %v1673
      %v1745 = vpop.f32.mrf.mxu0
      %v1746 = vadd.f32 %v1649, %v1745
      %v1747 = vpop.f32.mrf.mxu0
      %v1748 = vpop.f32.mrf.mxu0
      %v1749 = vadd.f32 %v1649, %v1748
      %v1750 = vpop.f32.mrf.mxu0
      %1751 = vmatprep.mubr.bf16.mxu0 0
      %1752 = vmatmul.mubr.bf16.gmra.mxu0 %v1675
      %v1753 = vpop.f32.mrf.mxu0
      %v1754 = vadd.f32 %v1649, %v1753
      %v1755 = vpop.f32.mrf.mxu0
      %v1756 = vpop.f32.mrf.mxu0
      %v1757 = vadd.f32 %v1649, %v1756
      %v1758 = vpop.f32.mrf.mxu0
      %1759 = vmatprep.mubr.bf16.mxu0 0
      %1760 = vmatmul.mubr.bf16.gmra.mxu0 %v1677
      %v1761 = vpop.f32.mrf.mxu0
      %v1762 = vadd.f32 %v1649, %v1761
      %v1763 = vpop.f32.mrf.mxu0
      %v1764 = vpop.f32.mrf.mxu0
      %v1765 = vadd.f32 %v1649, %v1764
      %v1766 = vpop.f32.mrf.mxu0
      %1767 = vmatprep.mubr.bf16.mxu0 0
      %1768 = vmatmul.mubr.bf16.gmra.mxu0 %v1679
      %v1769 = vpop.f32.mrf.mxu0
      %v1770 = vadd.f32 %v1649, %v1769
      %v1771 = vpop.f32.mrf.mxu0
      %v1772 = vpop.f32.mrf.mxu0
      %v1773 = vadd.f32 %v1649, %v1772
      %v1774 = vpop.f32.mrf.mxu0
      %1775 = vmatprep.mubr.bf16.mxu0 0
      %1776 = vmatmul.mubr.bf16.gmra.mxu0 %v1681
      %v1777 = vpop.f32.mrf.mxu0
      %v1778 = vadd.f32 %v1649, %v1777
      %v1779 = vpop.f32.mrf.mxu0
      %v1780 = vpop.f32.mrf.mxu0
      %v1781 = vadd.f32 %v1649, %v1780
      %v1782 = vpop.f32.mrf.mxu0
      %1783 = vdwg.mxu0
      %v1784 = vand.u32 2147483647, %v1722
      %v1785 = vand.u32 2147483647, %v1725
      %v1786 = vand.u32 2147483647, %v1730
      %v1787 = vand.u32 2147483647, %v1733
      %v1788 = vand.u32 2147483647, %v1738
      %v1789 = vand.u32 2147483647, %v1741
      %v1790 = vand.u32 2147483647, %v1746
      %v1791 = vand.u32 2147483647, %v1749
      %v1792 = vand.u32 2147483647, %v1754
      %v1793 = vand.u32 2147483647, %v1757
      %v1794 = vand.u32 2147483647, %v1762
      %v1795 = vand.u32 2147483647, %v1765
      %v1796 = vand.u32 2147483647, %v1770
      %v1797 = vand.u32 2147483647, %v1773
      %v1798 = vand.u32 2147483647, %v1778
      %v1799 = vand.u32 2147483647, %v1781
      %v1800 = vsub.f32 0.0, %v1784
      %v1801 = vsub.f32 0.0, %v1785
      %v1802 = vsub.f32 0.0, %v1786
      %v1803 = vsub.f32 0.0, %v1787
      %v1804 = vsub.f32 0.0, %v1788
      %v1805 = vsub.f32 0.0, %v1789
      %v1806 = vsub.f32 0.0, %v1790
      %v1807 = vsub.f32 0.0, %v1791
      %v1808 = vsub.f32 0.0, %v1792
      %v1809 = vsub.f32 0.0, %v1793
      %v1810 = vsub.f32 0.0, %v1794
      %v1811 = vsub.f32 0.0, %v1795
      %v1812 = vsub.f32 0.0, %v1796
      %v1813 = vsub.f32 0.0, %v1797
      %v1814 = vsub.f32 0.0, %v1798
      %v1815 = vsub.f32 0.0, %v1799
      %v1816 = vmul.f32 %v1800, 1.442695
      %v1817 = vpow.pop %v1816
      %v1818 = vmul.f32 %v1801, 1.442695
      %v1819 = vpow.pop %v1818
      %v1820 = vmul.f32 %v1802, 1.442695
      %v1821 = vpow.pop %v1820
      %v1822 = vmul.f32 %v1803, 1.442695
      %v1823 = vpow.pop %v1822
      %v1824 = vmul.f32 %v1804, 1.442695
      %v1825 = vpow.pop %v1824
      %v1826 = vmul.f32 %v1805, 1.442695
      %v1827 = vpow.pop %v1826
      %v1828 = vmul.f32 %v1806, 1.442695
      %v1829 = vpow.pop %v1828
      %v1830 = vmul.f32 %v1807, 1.442695
      %v1831 = vpow.pop %v1830
      %v1832 = vmul.f32 %v1808, 1.442695
      %v1833 = vpow.pop %v1832
      %v1834 = vmul.f32 %v1809, 1.442695
      %v1835 = vpow.pop %v1834
      %v1836 = vmul.f32 %v1810, 1.442695
      %v1837 = vpow.pop %v1836
      %v1838 = vmul.f32 %v1811, 1.442695
      %v1839 = vpow.pop %v1838
      %v1840 = vmul.f32 %v1812, 1.442695
      %v1841 = vpow.pop %v1840
      %v1842 = vmul.f32 %v1813, 1.442695
      %v1843 = vpow.pop %v1842
      %v1844 = vmul.f32 %v1814, 1.442695
      %v1845 = vpow.pop %v1844
      %v1846 = vmul.f32 %v1815, 1.442695
      %v1847 = vpow.pop %v1846
      %v1848 = vadd.f32 %v1817, 1.0
      %v1849 = vadd.f32 %v1819, 1.0
      %v1850 = vadd.f32 %v1821, 1.0
      %v1851 = vadd.f32 %v1823, 1.0
      %v1852 = vadd.f32 %v1825, 1.0
      %v1853 = vadd.f32 %v1827, 1.0
      %v1854 = vadd.f32 %v1829, 1.0
      %v1855 = vadd.f32 %v1831, 1.0
      %v1856 = vadd.f32 %v1833, 1.0
      %v1857 = vadd.f32 %v1835, 1.0
      %v1858 = vadd.f32 %v1837, 1.0
      %v1859 = vadd.f32 %v1839, 1.0
      %v1860 = vadd.f32 %v1841, 1.0
      %v1861 = vadd.f32 %v1843, 1.0
      %v1862 = vadd.f32 %v1845, 1.0
      %v1863 = vadd.f32 %v1847, 1.0
      %v1864 = vrcp.pop %v1848
      %v1865 = vrcp.pop %v1849
      %v1866 = vrcp.pop %v1850
      %v1867 = vrcp.pop %v1851
      %v1868 = vrcp.pop %v1852
      %v1869 = vrcp.pop %v1853
      %v1870 = vrcp.pop %v1854
      %v1871 = vrcp.pop %v1855
      %v1872 = vrcp.pop %v1856
      %v1873 = vrcp.pop %v1857
      %v1874 = vrcp.pop %v1858
      %v1875 = vrcp.pop %v1859
      %v1876 = vrcp.pop %v1860
      %v1877 = vrcp.pop %v1861
      %v1878 = vrcp.pop %v1862
      %v1879 = vrcp.pop %v1863
      %vm1880 = vcmp.ge.f32.partialorder %v1722, 0.0
      %vm1881 = vcmp.ge.f32.partialorder %v1725, 0.0
      %vm1882 = vcmp.ge.f32.partialorder %v1730, 0.0
      %vm1883 = vcmp.ge.f32.partialorder %v1733, 0.0
      %vm1884 = vcmp.ge.f32.partialorder %v1738, 0.0
      %vm1885 = vcmp.ge.f32.partialorder %v1741, 0.0
      %vm1886 = vcmp.ge.f32.partialorder %v1746, 0.0
      %vm1887 = vcmp.ge.f32.partialorder %v1749, 0.0
      %vm1888 = vcmp.ge.f32.partialorder %v1754, 0.0
      %vm1889 = vcmp.ge.f32.partialorder %v1757, 0.0
      %vm1890 = vcmp.ge.f32.partialorder %v1762, 0.0
      %vm1891 = vcmp.ge.f32.partialorder %v1765, 0.0
      %vm1892 = vcmp.ge.f32.partialorder %v1770, 0.0
      %vm1893 = vcmp.ge.f32.partialorder %v1773, 0.0
      %vm1894 = vcmp.ge.f32.partialorder %v1778, 0.0
      %vm1895 = vcmp.ge.f32.partialorder %v1781, 0.0
      %v1896 = vmul.f32 %v1817, %v1864
      %v1897 = vmul.f32 %v1819, %v1865
      %v1898 = vmul.f32 %v1821, %v1866
      %v1899 = vmul.f32 %v1823, %v1867
      %v1900 = vmul.f32 %v1825, %v1868
      %v1901 = vmul.f32 %v1827, %v1869
      %v1902 = vmul.f32 %v1829, %v1870
      %v1903 = vmul.f32 %v1831, %v1871
      %v1904 = vmul.f32 %v1833, %v1872
      %v1905 = vmul.f32 %v1835, %v1873
      %v1906 = vmul.f32 %v1837, %v1874
      %v1907 = vmul.f32 %v1839, %v1875
      %v1908 = vmul.f32 %v1841, %v1876
      %v1909 = vmul.f32 %v1843, %v1877
      %v1910 = vmul.f32 %v1845, %v1878
      %v1911 = vmul.f32 %v1847, %v1879
      %v1912 = vsel %vm1880, %v1864, %v1896
      %v1913 = vsel %vm1881, %v1865, %v1897
      %v1914 = vsel %vm1882, %v1866, %v1898
      %v1915 = vsel %vm1883, %v1867, %v1899
      %v1916 = vsel %vm1884, %v1868, %v1900
      %v1917 = vsel %vm1885, %v1869, %v1901
      %v1918 = vsel %vm1886, %v1870, %v1902
      %v1919 = vsel %vm1887, %v1871, %v1903
      %v1920 = vsel %vm1888, %v1872, %v1904
      %v1921 = vsel %vm1889, %v1873, %v1905
      %v1922 = vsel %vm1890, %v1874, %v1906
      %v1923 = vsel %vm1891, %v1875, %v1907
      %v1924 = vsel %vm1892, %v1876, %v1908
      %v1925 = vsel %vm1893, %v1877, %v1909
      %v1926 = vsel %vm1894, %v1878, %v1910
      %v1927 = vsel %vm1895, %v1879, %v1911
      %v1928 = vmul.f32 %v1722, %v1912
      %v1929 = vmul.f32 %v1725, %v1913
      %v1930 = vmul.f32 %v1730, %v1914
      %v1931 = vmul.f32 %v1733, %v1915
      %v1932 = vmul.f32 %v1738, %v1916
      %v1933 = vmul.f32 %v1741, %v1917
      %v1934 = vmul.f32 %v1746, %v1918
      %v1935 = vmul.f32 %v1749, %v1919
      %v1936 = vmul.f32 %v1754, %v1920
      %v1937 = vmul.f32 %v1757, %v1921
      %v1938 = vmul.f32 %v1762, %v1922
      %v1939 = vmul.f32 %v1765, %v1923
      %v1940 = vmul.f32 %v1770, %v1924
      %v1941 = vmul.f32 %v1773, %v1925
      %v1942 = vmul.f32 %v1778, %v1926
      %v1943 = vmul.f32 %v1781, %v1927
      %v1944 = vpack.c.bf16 %v1929, %v1928
      %v1945 = vpack.c.bf16 %v1931, %v1930
      %v1946 = vpack.c.bf16 %v1933, %v1932
      %v1947 = vpack.c.bf16 %v1935, %v1934
      %v1948 = vpack.c.bf16 %v1937, %v1936
      %v1949 = vpack.c.bf16 %v1939, %v1938
      %v1950 = vpack.c.bf16 %v1941, %v1940
      %v1951 = vpack.c.bf16 %v1943, %v1942
      %v1960 = vunpack.c.l.b16 %v1944
      %v1961 = vunpack.c.h.b16 %v1944
      %v1962 = vunpack.c.l.b16 %v1945
      %v1963 = vunpack.c.h.b16 %v1945
      %v1964 = vunpack.c.l.b16 %v1946
      %v1965 = vunpack.c.h.b16 %v1946
      %v1966 = vunpack.c.l.b16 %v1947
      %v1967 = vunpack.c.h.b16 %v1947
      %v1968 = vunpack.c.l.b16 %v1948
      %v1969 = vunpack.c.h.b16 %v1948
      %v1970 = vunpack.c.l.b16 %v1949
      %v1971 = vunpack.c.h.b16 %v1949
      %v1972 = vunpack.c.l.b16 %v1950
      %v1973 = vunpack.c.h.b16 %v1950
      %v1974 = vunpack.c.l.b16 %v1951
      %v1975 = vunpack.c.h.b16 %v1951
      %v1976 = vpack.c.b16 %v1960, %v1960
      %v1977 = vpack.c.b16 %v1961, %v1961
      %v1978 = vpack.c.b16 %v1962, %v1962
      %v1979 = vpack.c.b16 %v1963, %v1963
      %v1980 = vpack.c.b16 %v1964, %v1964
      %v1981 = vpack.c.b16 %v1965, %v1965
      %v1982 = vpack.c.b16 %v1966, %v1966
      %v1983 = vpack.c.b16 %v1967, %v1967
      %v1984 = vpack.c.b16 %v1968, %v1968
      %v1985 = vpack.c.b16 %v1969, %v1969
      %v1986 = vpack.c.b16 %v1970, %v1970
      %v1987 = vpack.c.b16 %v1971, %v1971
      %v1988 = vpack.c.b16 %v1972, %v1972
      %v1989 = vpack.c.b16 %v1973, %v1973
      %v1990 = vpack.c.b16 %v1974, %v1974
      %v1991 = vpack.c.b16 %v1975, %v1975
      %2008 = vst [vmem:[%s194] sm:$0xf] %v1976
      %2009 = vst [vmem:[%s194 + $0x4] sm:$0xf] %v1977
      %2010 = vst [vmem:[%s194 + $0x8] sm:$0xf] %v1978
      %2011 = vst [vmem:[%s194 + $0xc] sm:$0xf] %v1979
      %2012 = vst [vmem:[%s194 + $0x10] sm:$0xf] %v1980
      %2013 = vst [vmem:[%s194 + $0x14] sm:$0xf] %v1981
      %2014 = vst [vmem:[%s194 + $0x18] sm:$0xf] %v1982
      %2015 = vst [vmem:[%s194 + $0x1c] sm:$0xf] %v1983
      %2016 = vst [vmem:[%s194 + $0x20] sm:$0xf] %v1984
      %2017 = vst [vmem:[%s194 + $0x24] sm:$0xf] %v1985
      %2018 = vst [vmem:[%s194 + $0x28] sm:$0xf] %v1986
      %2019 = vst [vmem:[%s194 + $0x2c] sm:$0xf] %v1987
      %2020 = vst [vmem:[%s194 + $0x30] sm:$0xf] %v1988
      %2021 = vst [vmem:[%s194 + $0x34] sm:$0xf] %v1989
      %2022 = vst [vmem:[%s194 + $0x38] sm:$0xf] %v1990
      %2023 = vst [vmem:[%s194 + $0x3c] sm:$0xf] %v1991
      %s2024 = smul.u32 8, %s19
      %p2025 = scmp.lt.s32.totalorder %s18, 1
      %s2026 = scalar_select %p2025, %s18, 1
      %p2027 = scmp.lt.s32.totalorder %s2024, 15
      %s2028 = scalar_select %p2027, %s2024, 15
      %s2029 = smul.addr %s2028, 2
      %s2030 = smul.addr %s2026, 32
      %s2031 = sadd.s32 %s2029, %s2030
      %s2032 = smul.addr %s2031, 4
      %s2033 = scalar_lea.vmem %s3, %s2032
      // Predicated region
      $region33: #{_lambda_.7} parent=31 // pred_check
        %p2034 = pneg %p114
      $region34: #{_lambda_.7} parent=31 // pred_check_branch
        %2036 = sbr.rel (%p2034) target = $region36
      $region35: #{_lambda_.7} parent=31 // pred_region
        %s2037 = smul.u32 8, %s19
      $region36: #{_lambda_.7} parent=31 // pred_fallthru
        _
    $region32: #{_lambda_.7} parent=5 // pred_fallthru
      _
    %p2038 = scmp.le.s32.totalorder 2, %s9
    // Predicated region
    $region37: #{_lambda_.7} parent=5 // pred_check
      %p2039 = pneg %p2038
    $region38: #{_lambda_.7} parent=5 // pred_check_branch
      %2041 = sbr.rel (%p2039) target = $region40
    $region39: #{_lambda_.7} parent=5 // pred_region
      %s2042 = ssub.s32 %s9, 2
      // Predicated region
      $region41: #{_lambda_.7} parent=39 // pred_check
        %p2043 = pneg %p120
      $region42: #{_lambda_.7} parent=39 // pred_check_branch
        %2045 = sbr.rel (%p2043) target = $region44
      $region43: #{_lambda_.7} parent=39 // pred_region
        %s2046 = smul.u32 8, %s21
        %p2047 = scmp.lt.s32.totalorder %s20, 1
        %s2048 = scalar_select %p2047, %s20, 1
        %p2049 = scmp.lt.s32.totalorder %s2046, 15
        %s2050 = scalar_select %p2049, %s2046, 15
        %s2051 = smul.addr %s2050, 2
        %s2052 = smul.addr %s2048, 32
        %s2053 = sadd.s32 %s2051, %s2052
        %s2054 = smul.addr %s2053, 4
        %s2055 = scalar_lea.vmem %s3, %s2054
      $region44: #{_lambda_.7} parent=39 // pred_fallthru
        _
    $region40: #{_lambda_.7} parent=5 // pred_fallthru
      _
  $region6: #{_lambda_.7} parent=0 // loop_footer
    %s13 = sadd.s32 1, %s9
  $region7: #{_lambda_.7} parent=0 // loop_footer_branch
    %8 = sbr.rel target = $region3
  $region8: #{_lambda_.7} parent=0 // loop_exit
    _

// kernel: _lambda_.8
$region0: #{_lambda_.8}
  #allocation0 [shape = 'u32[]', space=smem, size = 0x4, offset = 0x4, fixed_abs, tag = 'smem constant byte address 0x4 - core index']
  #allocation1 [shape = 'u32[144,128]{1,0:T(1,128)}', space=vmem, size = 0x12000, scoped, tag = 'internal scratch']
  %s0 = inlined_call_operand.vmem [shape: bf16[2,9,9,512], index: 0, kind: input, shape index: {}]
  %s1 = inlined_call_operand.vmem [shape: bf16[1152,128], index: 1, kind: input, shape index: {}]
  %s2 = inlined_call_operand.vmem [shape: f32[1,128], index: 2, kind: input, shape index: {}]
  %s3 = inlined_call_operand.vmem [shape: bf16[2,8,8,128], index: 3, kind: output, shape index: {}]
  %s4 = sld [smem:[#allocation0]]
  $region45: #{_lambda_.8} parent=0
    _
  %s6 = ssub.s32 1, %s4
  %s7 = scalar_select 0, %s6, %s4
  loop: start=0, step=1, limit=6
  $region2: #{_lambda_.8} parent=0 // loop_pre_header
    _
  $region3: #{_lambda_.8} parent=0 // loop_header
    %s9 = sphi 0, %s13
    %p10 = scmp.ge.s32.totalorder %s9, 6
    %s16 = sphi 0, %s28
    %s17 = sphi 0, %s24
    %s18 = sphi 0, %s16
    %s19 = sphi 0, %s17
    %s20 = sphi 0, %s18
    %s21 = sphi 0, %s19
    %s31 = sphi 0, %s33
    %s34 = sphi 0, %s31
    %s35 = sphi 0, %s34
    %s51 = sphi 0, %s35
    %s55 = sphi 0, %s55
    %s57 = sphi 0, %s55
    %s58 = sphi 0, %s57
    %s72 = sphi 0, %s58
    %s76 = sphi 0, %s76
    %s78 = sphi 0, %s76
    %s79 = sphi 0, %s78
    %s93 = sphi 0, %s79
    %s101 = sphi 0, %s103
    %s104 = sphi 0, %s101
    %s105 = sphi 0, %s104
    %s121 = sphi 0, %s105
  $region4: #{_lambda_.8} parent=0 // loop_header_branch
    %12 = sbr.rel (%p10) target = $region8
  $region5: #{_lambda_.8} parent=0 // loop_body
    %s14 = ssub.s32 %s9, 1
    %s15 = ssub.s32 %s9, 2
    %s22 = sadd.s32 1, %s17
    %p23 = scmp.ge.s32.totalorder %s22, 2
    %s24 = scalar_select %p23, 0, %s22
    %s25 = sadd.s32 1, %s16
    %s26 = scalar_select %p23, %s25, %s16
    %p27 = scmp.ge.s32.totalorder %s26, 2
    %s28 = scalar_select %p27, 0, %s26
    %s29 = ssub.s32 %s16, %s28
    %p30 = scmp.eq.s32.totalorder %s29, 0
    %s32 = sadd.s32 %s31, 1
    %s33 = scalar_select %p30, %s31, %s32
    %p36 = pneg %p30
    %p37 = scmp.eq.s32.totalorder %s9, 3
    %p38 = por %p36, %p37
    %p39 = scmp.ne.s32.totalorder %s31, %s34
    %p40 = scmp.eq.s32.totalorder %s9, 0
    %p41 = por %p39, %p40
    %p42 = scmp.ne.s32.totalorder %s31, %s34
    %p43 = scmp.eq.s32.totalorder %s14, 3
    %p44 = por %p42, %p43
    %p45 = scmp.ne.s32.totalorder %s34, %s35
    %p46 = scmp.eq.s32.totalorder %s14, 0
    %p47 = por %p45, %p46
    %p48 = scmp.ne.s32.totalorder %s34, %s35
    %p49 = scmp.eq.s32.totalorder %s15, 3
    %p50 = por %p48, %p49
    %p52 = scmp.ne.s32.totalorder %s35, %s51
    %p53 = scmp.eq.s32.totalorder %s15, 0
    %p54 = por %p52, %p53
    %s56 = sadd.s32 %s55, 1
    %p59 = scmp.eq.s32.totalorder %s9, 3
    %p60 = scmp.ne.s32.totalorder %s55, %s57
    %p61 = scmp.eq.s32.totalorder %s9, 0
    %p62 = por %p60, %p61
    %p63 = scmp.ne.s32.totalorder %s55, %s57
    %p64 = scmp.eq.s32.totalorder %s14, 3
    %p65 = por %p63, %p64
    %p66 = scmp.ne.s32.totalorder %s57, %s58
    %p67 = scmp.eq.s32.totalorder %s14, 0
    %p68 = por %p66, %p67
    %p69 = scmp.ne.s32.totalorder %s57, %s58
    %p70 = scmp.eq.s32.totalorder %s15, 3
    %p71 = por %p69, %p70
    %p73 = scmp.ne.s32.totalorder %s58, %s72
    %p74 = scmp.eq.s32.totalorder %s15, 0
    %p75 = por %p73, %p74
    %s77 = sadd.s32 %s76, 1
    %p80 = scmp.eq.s32.totalorder %s9, 3
    %p81 = scmp.ne.s32.totalorder %s76, %s78
    %p82 = scmp.eq.s32.totalorder %s9, 0
    %p83 = por %p81, %p82
    %p84 = scmp.ne.s32.totalorder %s76, %s78
    %p85 = scmp.eq.s32.totalorder %s14, 3
    %p86 = por %p84, %p85
    %p87 = scmp.ne.s32.totalorder %s78, %s79
    %p88 = scmp.eq.s32.totalorder %s14, 0
    %p89 = por %p87, %p88
    %p90 = scmp.ne.s32.totalorder %s78, %s79
    %p91 = scmp.eq.s32.totalorder %s15, 3
    %p92 = por %p90, %p91
    %p94 = scmp.ne.s32.totalorder %s79, %s93
    %p95 = scmp.eq.s32.totalorder %s15, 0
    %p96 = por %p94, %p95
    %s97 = ssub.s32 %s16, %s28
    %s98 = ssub.s32 %s17, %s24
    %s99 = sor.u32 %s97, %s98
    %p100 = scmp.eq.s32.totalorder %s99, 0
    %s102 = sadd.s32 %s101, 1
    %s103 = scalar_select %p100, %s101, %s102
    %p106 = pneg %p100
    %p107 = scmp.eq.s32.totalorder %s9, 3
    %p108 = por %p106, %p107
    %p109 = scmp.ne.s32.totalorder %s101, %s104
    %p110 = scmp.eq.s32.totalorder %s9, 0
    %p111 = por %p109, %p110
    %p112 = scmp.ne.s32.totalorder %s101, %s104
    %p113 = scmp.eq.s32.totalorder %s14, 3
    %p114 = por %p112, %p113
    %p115 = scmp.ne.s32.totalorder %s104, %s105
    %p116 = scmp.eq.s32.totalorder %s14, 0
    %p117 = por %p115, %p116
    %p118 = scmp.ne.s32.totalorder %s104, %s105
    %p119 = scmp.eq.s32.totalorder %s15, 3
    %p120 = por %p118, %p119
    %p122 = scmp.ne.s32.totalorder %s105, %s121
    %p123 = scmp.eq.s32.totalorder %s15, 0
    %p124 = por %p122, %p123
    %p125 = scmp.le.s32.totalorder 1, %s9
    %p126 = scmp.lt.s32.totalorder %s9, 5
    %p127 = pnand %p125, %p126
    %p128 = pneg %p127
    // Predicated region
    $region9: #{_lambda_.8} parent=5 // pred_check
      _
    $region10: #{_lambda_.8} parent=5 // pred_check_branch
      %130 = sbr.rel (%p127) target = $region12
    $region11: #{_lambda_.8} parent=5 // pred_region
      %s131 = ssub.s32 %s9, 1
      // Predicated region
      $region13: #{_lambda_.8} parent=11 // pred_check
        %p132 = pneg %p68
      $region14: #{_lambda_.8} parent=11 // pred_check_branch
        %134 = sbr.rel (%p132) target = $region16
      $region15: #{_lambda_.8} parent=11 // pred_region
        _
      $region16: #{_lambda_.8} parent=11 // pred_fallthru
        _
      // Predicated region
      $region17: #{_lambda_.8} parent=11 // pred_check
        %p135 = pneg %p89
      $region18: #{_lambda_.8} parent=11 // pred_check_branch
        %137 = sbr.rel (%p135) target = $region20
      $region19: #{_lambda_.8} parent=11 // pred_region
        _
      $region20: #{_lambda_.8} parent=11 // pred_fallthru
        _
    $region12: #{_lambda_.8} parent=5 // pred_fallthru
      _
    %p138 = scmp.lt.s32.totalorder %s9, 4
    // Predicated region
    $region21: #{_lambda_.8} parent=5 // pred_check
      %p139 = pneg %p138
    $region22: #{_lambda_.8} parent=5 // pred_check_branch
      %141 = sbr.rel (%p139) target = $region24
    $region23: #{_lambda_.8} parent=5 // pred_region
      // Predicated region
      $region25: #{_lambda_.8} parent=23 // pred_check
        %p142 = pneg %p41
      $region26: #{_lambda_.8} parent=23 // pred_check_branch
        %144 = sbr.rel (%p142) target = $region28
      $region27: #{_lambda_.8} parent=23 // pred_region
        %p145 = scmp.lt.s32.totalorder %s16, 1
        %s146 = scalar_select %p145, %s16, 1
        %s147 = smul.addr %s146, 72
        %s148 = smul.addr %s147, 4
        %s149 = scalar_lea.vmem %s0, %s148
      $region28: #{_lambda_.8} parent=23 // pred_fallthru
        _
    $region24: #{_lambda_.8} parent=5 // pred_fallthru
      _
    %p150 = scmp.le.s32.totalorder 1, %s9
    %p151 = scmp.lt.s32.totalorder %s9, 5
    %p152 = pnand %p150, %p151
    %p153 = pneg %p152
    // Predicated region
    $region29: #{_lambda_.8} parent=5 // pred_check
      _
    $region30: #{_lambda_.8} parent=5 // pred_check_branch
      %155 = sbr.rel (%p152) target = $region32
    $region31: #{_lambda_.8} parent=5 // pred_region
      %s156 = ssub.s32 %s9, 1
      %p157 = scmp.lt.s32.totalorder %s18, 1
      %s158 = scalar_select %p157, %s18, 1
      %s159 = smul.addr %s158, 72
      %s160 = smul.addr %s159, 4
      %s161 = scalar_lea.vmem %s0, %s160
      %p162 = pneg %p47
      %p163 = pneg %p44
      %p164 = pneg %p68
      %p165 = pneg %p65
      %p166 = pneg %p89
      %p167 = pneg %p86
      %p168 = pneg %p117
      %p169 = pneg %p114
      %s170 = smul.u32 4, %s19
      %p171 = scmp.lt.s32.totalorder %s18, 1
      %s172 = scalar_select %p171, %s18, 1
      %p173 = scmp.lt.s32.totalorder %s170, 7
      %s174 = scalar_select %p173, %s170, 7
      %s175 = smul.addr %s172, 8
      %s176 = sadd.s32 %s174, %s175
      %s177 = smul.addr %s176, 4
      %s178 = scalar_lea.vmem %s3, %s177
      %p179 = scmp.lt.s32.totalorder %s18, 1
      %s180 = scalar_select %p179, %s18, 1
      %s181 = smul.addr %s180, 72
      %s182 = smul.addr %s181, 4
      %s183 = scalar_lea.vmem %s0, %s182
      %s184 = smul.u32 4, %s19
      %p185 = scmp.lt.s32.totalorder %s18, 1
      %s186 = scalar_select %p185, %s18, 1
      %p187 = scmp.lt.s32.totalorder %s184, 7
      %s188 = scalar_select %p187, %s184, 7
      %s189 = smul.addr %s186, 8
      %s190 = sadd.s32 %s188, %s189
      %s191 = smul.addr %s190, 4
      %s192 = scalar_lea.vmem %s3, %s191
      %s193 = smul.u32 4, %s19
      %s195 = smul.u32 %s19, 4
      %s196 = smul.u32 %s195, 8
      %s197 = smul.addr %s196, 4
      %s198 = scalar_lea.vmem %s183, %s197
      %v199 = vld [vmem:[%s198] sm:$0xf]
      %v200 = vld [vmem:[%s198 + $0x20] sm:$0xf]
      %v201 = vld [vmem:[%s198 + $0x40] sm:$0xf]
      %v202 = vld [vmem:[%s198 + $0x60] sm:$0xf]
      %v203 = vld [vmem:[%s198 + $0x4] sm:$0xf]
      %v204 = vld [vmem:[%s198 + $0x24] sm:$0xf]
      %v205 = vld [vmem:[%s198 + $0x44] sm:$0xf]
      %v206 = vld [vmem:[%s198 + $0x64] sm:$0xf]
      %v207 = vld [vmem:[%s198 + $0x10] sm:$0x1]
      %v208 = vld [vmem:[%s198 + $0x30] sm:$0x1]
      %v209 = vld [vmem:[%s198 + $0x50] sm:$0x1]
      %v210 = vld [vmem:[%s198 + $0x70] sm:$0x1]
      %vm211 = vsmask.f32 3328
      %vm212 = vsmask.f32 7440
      %vm213 = vmor %vm211, %vm212
      %v215 = vshrl.u32 %v199, 16
      %v217 = vrot.slane %v215, 4
      %v218 = vshll.u32 %v199, 16
      %v220 = vrot.slane %v218, 5
      %v221 = vor.u32 %v217, %v220
      %v222 = vrot.slane %v221, 4
      %v224 = vshll.u32 %v207, 16
      %v226 = vrot.slane %v224, 5
      %v227 = vsel %vm213, %v222, %v226
      %v229 = vshrl.u32 %v200, 16
      %v231 = vrot.slane %v229, 4
      %v232 = vshll.u32 %v200, 16
      %v234 = vrot.slane %v232, 5
      %v235 = vor.u32 %v231, %v234
      %v236 = vrot.slane %v235, 4
      %v238 = vshll.u32 %v208, 16
      %v240 = vrot.slane %v238, 5
      %v241 = vsel %vm213, %v236, %v240
      %v243 = vshrl.u32 %v201, 16
      %v245 = vrot.slane %v243, 4
      %v246 = vshll.u32 %v201, 16
      %v248 = vrot.slane %v246, 5
      %v249 = vor.u32 %v245, %v248
      %v250 = vrot.slane %v249, 4
      %v252 = vshll.u32 %v209, 16
      %v254 = vrot.slane %v252, 5
      %v255 = vsel %vm213, %v250, %v254
      %v257 = vshrl.u32 %v202, 16
      %v259 = vrot.slane %v257, 4
      %v260 = vshll.u32 %v202, 16
      %v262 = vrot.slane %v260, 5
      %v263 = vor.u32 %v259, %v262
      %v264 = vrot.slane %v263, 4
      %v266 = vshll.u32 %v210, 16
      %v268 = vrot.slane %v266, 5
      %v269 = vsel %vm213, %v264, %v268
      %v270 = vld [vmem:[%s198 + $0x8] sm:$0xf]
      %v271 = vld [vmem:[%s198 + $0x28] sm:$0xf]
      %v272 = vld [vmem:[%s198 + $0x48] sm:$0xf]
      %v273 = vld [vmem:[%s198 + $0x68] sm:$0xf]
      %v274 = vld [vmem:[%s198 + $0xc] sm:$0xf]
      %v275 = vld [vmem:[%s198 + $0x2c] sm:$0xf]
      %v276 = vld [vmem:[%s198 + $0x4c] sm:$0xf]
      %v277 = vld [vmem:[%s198 + $0x6c] sm:$0xf]
      %v278 = vld [vmem:[%s198 + $0x18] sm:$0x1]
      %v279 = vld [vmem:[%s198 + $0x38] sm:$0x1]
      %v280 = vld [vmem:[%s198 + $0x58] sm:$0x1]
      %v281 = vld [vmem:[%s198 + $0x78] sm:$0x1]
      %v283 = vshrl.u32 %v270, 16
      %v285 = vrot.slane %v283, 4
      %v286 = vshll.u32 %v270, 16
      %v288 = vrot.slane %v286, 5
      %v289 = vor.u32 %v285, %v288
      %v290 = vrot.slane %v289, 4
      %v292 = vshll.u32 %v278, 16
      %v294 = vrot.slane %v292, 5
      %v295 = vsel %vm213, %v290, %v294
      %v297 = vshrl.u32 %v271, 16
      %v299 = vrot.slane %v297, 4
      %v300 = vshll.u32 %v271, 16
      %v302 = vrot.slane %v300, 5
      %v303 = vor.u32 %v299, %v302
      %v304 = vrot.slane %v303, 4
      %v306 = vshll.u32 %v279, 16
      %v308 = vrot.slane %v306, 5
      %v309 = vsel %vm213, %v304, %v308
      %v311 = vshrl.u32 %v272, 16
      %v313 = vrot.slane %v311, 4
      %v314 = vshll.u32 %v272, 16
      %v316 = vrot.slane %v314, 5
      %v317 = vor.u32 %v313, %v316
      %v318 = vrot.slane %v317, 4
      %v320 = vshll.u32 %v280, 16
      %v322 = vrot.slane %v320, 5
      %v323 = vsel %vm213, %v318, %v322
      %v325 = vshrl.u32 %v273, 16
      %v327 = vrot.slane %v325, 4
      %v328 = vshll.u32 %v273, 16
      %v330 = vrot.slane %v328, 5
      %v331 = vor.u32 %v327, %v330
      %v332 = vrot.slane %v331, 4
      %v334 = vshll.u32 %v281, 16
      %v336 = vrot.slane %v334, 5
      %v337 = vsel %vm213, %v332, %v336
      %s338 = sadd.s32 %s195, 1
      %s339 = smul.u32 %s338, 8
      %s340 = smul.addr %s339, 4
      %s341 = scalar_lea.vmem %s183, %s340
      %v342 = vld [vmem:[%s341] sm:$0xf]
      %v343 = vld [vmem:[%s341 + $0x20] sm:$0xf]
      %v344 = vld [vmem:[%s341 + $0x40] sm:$0xf]
      %v345 = vld [vmem:[%s341 + $0x60] sm:$0xf]
      %v346 = vld [vmem:[%s341 + $0x4] sm:$0xf]
      %v347 = vld [vmem:[%s341 + $0x24] sm:$0xf]
      %v348 = vld [vmem:[%s341 + $0x44] sm:$0xf]
      %v349 = vld [vmem:[%s341 + $0x64] sm:$0xf]
      %v350 = vld [vmem:[%s341 + $0x10] sm:$0x1]
      %v351 = vld [vmem:[%s341 + $0x30] sm:$0x1]
      %v352 = vld [vmem:[%s341 + $0x50] sm:$0x1]
      %v353 = vld [vmem:[%s341 + $0x70] sm:$0x1]
      %v355 = vshrl.u32 %v342, 16
      %v357 = vrot.slane %v355, 4
      %v358 = vshll.u32 %v342, 16
      %v360 = vrot.slane %v358, 5
      %v361 = vor.u32 %v357, %v360
      %v362 = vrot.slane %v361, 4
      %v364 = vshll.u32 %v350, 16
      %v366 = vrot.slane %v364, 5
      %v367 = vsel %vm213, %v362, %v366
      %v369 = vshrl.u32 %v343, 16
      %v371 = vrot.slane %v369, 4
      %v372 = vshll.u32 %v343, 16
      %v374 = vrot.slane %v372, 5
      %v375 = vor.u32 %v371, %v374
      %v376 = vrot.slane %v375, 4
      %v378 = vshll.u32 %v351, 16
      %v380 = vrot.slane %v378, 5
      %v381 = vsel %vm213, %v376, %v380
      %v383 = vshrl.u32 %v344, 16
      %v385 = vrot.slane %v383, 4
      %v386 = vshll.u32 %v344, 16
      %v388 = vrot.slane %v386, 5
      %v389 = vor.u32 %v385, %v388
      %v390 = vrot.slane %v389, 4
      %v392 = vshll.u32 %v352, 16
      %v394 = vrot.slane %v392, 5
      %v395 = vsel %vm213, %v390, %v394
      %v397 = vshrl.u32 %v345, 16
      %v399 = vrot.slane %v397, 4
      %v400 = vshll.u32 %v345, 16
      %v402 = vrot.slane %v400, 5
      %v403 = vor.u32 %v399, %v402
      %v404 = vrot.slane %v403, 4
      %v406 = vshll.u32 %v353, 16
      %v408 = vrot.slane %v406, 5
      %v409 = vsel %vm213, %v404, %v408
      %v414 = vunpack.c.l.b16 %v199
      %v415 = vunpack.c.l.b16 %v200
      %v416 = vunpack.c.l.b16 %v201
      %v417 = vunpack.c.l.b16 %v202
      %v418 = vpack.c.b16 %v415, %v414
      %v419 = vpack.c.b16 %v417, %v416
      %v426 = vunpack.c.l.b16 %v203
      %v427 = vunpack.c.l.b16 %v204
      %v428 = vunpack.c.l.b16 %v205
      %v429 = vunpack.c.l.b16 %v206
      %v430 = vpack.c.b16 %v427, %v426
      %v431 = vpack.c.b16 %v429, %v428
      %v434 = vunpack.c.l.b16 %v227
      %v435 = vunpack.c.l.b16 %v241
      %v436 = vunpack.c.l.b16 %v255
      %v437 = vunpack.c.l.b16 %v269
      %v438 = vpack.c.b16 %v435, %v434
      %v439 = vpack.c.b16 %v437, %v436
      %v446 = vunpack.c.l.b16 %v270
      %v447 = vunpack.c.l.b16 %v271
      %v448 = vunpack.c.l.b16 %v272
      %v449 = vunpack.c.l.b16 %v273
      %v450 = vpack.c.b16 %v447, %v446
      %v451 = vpack.c.b16 %v449, %v448
      %v458 = vunpack.c.l.b16 %v274
      %v459 = vunpack.c.l.b16 %v275
      %v460 = vunpack.c.l.b16 %v276
      %v461 = vunpack.c.l.b16 %v277
      %v462 = vpack.c.b16 %v459, %v458
      %v463 = vpack.c.b16 %v461, %v460
      %v466 = vunpack.c.l.b16 %v295
      %v467 = vunpack.c.l.b16 %v309
      %v468 = vunpack.c.l.b16 %v323
      %v469 = vunpack.c.l.b16 %v337
      %v470 = vpack.c.b16 %v467, %v466
      %v471 = vpack.c.b16 %v469, %v468
      %v478 = vunpack.c.l.b16 %v342
      %v479 = vunpack.c.l.b16 %v343
      %v480 = vunpack.c.l.b16 %v344
      %v481 = vunpack.c.l.b16 %v345
      %v482 = vpack.c.b16 %v479, %v478
      %v483 = vpack.c.b16 %v481, %v480
      %v490 = vunpack.c.l.b16 %v346
      %v491 = vunpack.c.l.b16 %v347
      %v492 = vunpack.c.l.b16 %v348
      %v493 = vunpack.c.l.b16 %v349
      %v494 = vpack.c.b16 %v491, %v490
      %v495 = vpack.c.b16 %v493, %v492
      %v498 = vunpack.c.l.b16 %v367
      %v499 = vunpack.c.l.b16 %v381
      %v500 = vunpack.c.l.b16 %v395
      %v501 = vunpack.c.l.b16 %v409
      %v502 = vpack.c.b16 %v499, %v498
      %v503 = vpack.c.b16 %v501, %v500
      %v506 = vld [vmem:[%s1] sm:$0xf]
      %v507 = vld [vmem:[%s1 + $0x4] sm:$0xf]
      %v508 = vld [vmem:[%s1 + $0x8] sm:$0xf]
      %v509 = vld [vmem:[%s1 + $0xc] sm:$0xf]
      %v510 = vld [vmem:[%s1 + $0x10] sm:$0xf]
      %v511 = vld [vmem:[%s1 + $0x14] sm:$0xf]
      %v512 = vld [vmem:[%s1 + $0x18] sm:$0xf]
      %v513 = vld [vmem:[%s1 + $0x1c] sm:$0xf]
      %v514 = vld [vmem:[%s1 + $0x20] sm:$0xf]
      %v515 = vld [vmem:[%s1 + $0x24] sm:$0xf]
      %v516 = vld [vmem:[%s1 + $0x28] sm:$0xf]
      %v517 = vld [vmem:[%s1 + $0x2c] sm:$0xf]
      %v518 = vld [vmem:[%s1 + $0x30] sm:$0xf]
      %v519 = vld [vmem:[%s1 + $0x34] sm:$0xf]
      %v520 = vld [vmem:[%s1 + $0x38] sm:$0xf]
      %v521 = vld [vmem:[%s1 + $0x3c] sm:$0xf]
      %v522 = vld [vmem:[%s1 + $0x40] sm:$0xf]
      %v523 = vld [vmem:[%s1 + $0x44] sm:$0xf]
      %v524 = vld [vmem:[%s1 + $0x48] sm:$0xf]
      %v525 = vld [vmem:[%s1 + $0x4c] sm:$0xf]
      %v526 = vld [vmem:[%s1 + $0x50] sm:$0xf]
      %v527 = vld [vmem:[%s1 + $0x54] sm:$0xf]
      %v528 = vld [vmem:[%s1 + $0x58] sm:$0xf]
      %v529 = vld [vmem:[%s1 + $0x5c] sm:$0xf]
      %v530 = vld [vmem:[%s1 + $0x60] sm:$0xf]
      %v531 = vld [vmem:[%s1 + $0x64] sm:$0xf]
      %v532 = vld [vmem:[%s1 + $0x68] sm:$0xf]
      %v533 = vld [vmem:[%s1 + $0x6c] sm:$0xf]
      %v534 = vld [vmem:[%s1 + $0x70] sm:$0xf]
      %v535 = vld [vmem:[%s1 + $0x74] sm:$0xf]
      %v536 = vld [vmem:[%s1 + $0x78] sm:$0xf]
      %v537 = vld [vmem:[%s1 + $0x7c] sm:$0xf]
      %v538 = vld [vmem:[%s1 + $0x80] sm:$0xf]
      %v539 = vld [vmem:[%s1 + $0x84] sm:$0xf]
      %v540 = vld [vmem:[%s1 + $0x88] sm:$0xf]
      %v541 = vld [vmem:[%s1 + $0x8c] sm:$0xf]
      %v542 = vld [vmem:[%s1 + $0x90] sm:$0xf]
      %v543 = vld [vmem:[%s1 + $0x94] sm:$0xf]
      %v544 = vld [vmem:[%s1 + $0x98] sm:$0xf]
      %v545 = vld [vmem:[%s1 + $0x9c] sm:$0xf]
      %v546 = vld [vmem:[%s1 + $0xa0] sm:$0xf]
      %v547 = vld [vmem:[%s1 + $0xa4] sm:$0xf]
      %v548 = vld [vmem:[%s1 + $0xa8] sm:$0xf]
      %v549 = vld [vmem:[%s1 + $0xac] sm:$0xf]
      %v550 = vld [vmem:[%s1 + $0xb0] sm:$0xf]
      %v551 = vld [vmem:[%s1 + $0xb4] sm:$0xf]
      %v552 = vld [vmem:[%s1 + $0xb8] sm:$0xf]
      %v553 = vld [vmem:[%s1 + $0xbc] sm:$0xf]
      %v554 = vld [vmem:[%s1 + $0xc0] sm:$0xf]
      %v555 = vld [vmem:[%s1 + $0xc4] sm:$0xf]
      %v556 = vld [vmem:[%s1 + $0xc8] sm:$0xf]
      %v557 = vld [vmem:[%s1 + $0xcc] sm:$0xf]
      %v558 = vld [vmem:[%s1 + $0xd0] sm:$0xf]
      %v559 = vld [vmem:[%s1 + $0xd4] sm:$0xf]
      %v560 = vld [vmem:[%s1 + $0xd8] sm:$0xf]
      %v561 = vld [vmem:[%s1 + $0xdc] sm:$0xf]
      %v562 = vld [vmem:[%s1 + $0xe0] sm:$0xf]
      %v563 = vld [vmem:[%s1 + $0xe4] sm:$0xf]
      %v564 = vld [vmem:[%s1 + $0xe8] sm:$0xf]
      %v565 = vld [vmem:[%s1 + $0xec] sm:$0xf]
      %v566 = vld [vmem:[%s1 + $0xf0] sm:$0xf]
      %v567 = vld [vmem:[%s1 + $0xf4] sm:$0xf]
      %v568 = vld [vmem:[%s1 + $0xf8] sm:$0xf]
      %v569 = vld [vmem:[%s1 + $0xfc] sm:$0xf]
      %v570 = vld [vmem:[%s1 + $0x100] sm:$0xf]
      %v571 = vld [vmem:[%s1 + $0x104] sm:$0xf]
      %v572 = vld [vmem:[%s1 + $0x108] sm:$0xf]
      %v573 = vld [vmem:[%s1 + $0x10c] sm:$0xf]
      %v574 = vld [vmem:[%s1 + $0x110] sm:$0xf]
      %v575 = vld [vmem:[%s1 + $0x114] sm:$0xf]
      %v576 = vld [vmem:[%s1 + $0x118] sm:$0xf]
      %v577 = vld [vmem:[%s1 + $0x11c] sm:$0xf]
      %v578 = vld [vmem:[%s1 + $0x120] sm:$0xf]
      %v579 = vld [vmem:[%s1 + $0x124] sm:$0xf]
      %v580 = vld [vmem:[%s1 + $0x128] sm:$0xf]
      %v581 = vld [vmem:[%s1 + $0x12c] sm:$0xf]
      %v582 = vld [vmem:[%s1 + $0x130] sm:$0xf]
      %v583 = vld [vmem:[%s1 + $0x134] sm:$0xf]
      %v584 = vld [vmem:[%s1 + $0x138] sm:$0xf]
      %v585 = vld [vmem:[%s1 + $0x13c] sm:$0xf]
      %v586 = vld [vmem:[%s1 + $0x140] sm:$0xf]
      %v587 = vld [vmem:[%s1 + $0x144] sm:$0xf]
      %v588 = vld [vmem:[%s1 + $0x148] sm:$0xf]
      %v589 = vld [vmem:[%s1 + $0x14c] sm:$0xf]
      %v590 = vld [vmem:[%s1 + $0x150] sm:$0xf]
      %v591 = vld [vmem:[%s1 + $0x154] sm:$0xf]
      %v592 = vld [vmem:[%s1 + $0x158] sm:$0xf]
      %v593 = vld [vmem:[%s1 + $0x15c] sm:$0xf]
      %v594 = vld [vmem:[%s1 + $0x160] sm:$0xf]
      %v595 = vld [vmem:[%s1 + $0x164] sm:$0xf]
      %v596 = vld [vmem:[%s1 + $0x168] sm:$0xf]
      %v597 = vld [vmem:[%s1 + $0x16c] sm:$0xf]
      %v598 = vld [vmem:[%s1 + $0x170] sm:$0xf]
      %v599 = vld [vmem:[%s1 + $0x174] sm:$0xf]
      %v600 = vld [vmem:[%s1 + $0x178] sm:$0xf]
      %v601 = vld [vmem:[%s1 + $0x17c] sm:$0xf]
      %v602 = vld [vmem:[%s1 + $0x180] sm:$0xf]
      %v603 = vld [vmem:[%s1 + $0x184] sm:$0xf]
      %v604 = vld [vmem:[%s1 + $0x188] sm:$0xf]
      %v605 = vld [vmem:[%s1 + $0x18c] sm:$0xf]
      %v606 = vld [vmem:[%s1 + $0x190] sm:$0xf]
      %v607 = vld [vmem:[%s1 + $0x194] sm:$0xf]
      %v608 = vld [vmem:[%s1 + $0x198] sm:$0xf]
      %v609 = vld [vmem:[%s1 + $0x19c] sm:$0xf]
      %v610 = vld [vmem:[%s1 + $0x1a0] sm:$0xf]
      %v611 = vld [vmem:[%s1 + $0x1a4] sm:$0xf]
      %v612 = vld [vmem:[%s1 + $0x1a8] sm:$0xf]
      %v613 = vld [vmem:[%s1 + $0x1ac] sm:$0xf]
      %v614 = vld [vmem:[%s1 + $0x1b0] sm:$0xf]
      %v615 = vld [vmem:[%s1 + $0x1b4] sm:$0xf]
      %v616 = vld [vmem:[%s1 + $0x1b8] sm:$0xf]
      %v617 = vld [vmem:[%s1 + $0x1bc] sm:$0xf]
      %v618 = vld [vmem:[%s1 + $0x1c0] sm:$0xf]
      %v619 = vld [vmem:[%s1 + $0x1c4] sm:$0xf]
      %v620 = vld [vmem:[%s1 + $0x1c8] sm:$0xf]
      %v621 = vld [vmem:[%s1 + $0x1cc] sm:$0xf]
      %v622 = vld [vmem:[%s1 + $0x1d0] sm:$0xf]
      %v623 = vld [vmem:[%s1 + $0x1d4] sm:$0xf]
      %v624 = vld [vmem:[%s1 + $0x1d8] sm:$0xf]
      %v625 = vld [vmem:[%s1 + $0x1dc] sm:$0xf]
      %v626 = vld [vmem:[%s1 + $0x1e0] sm:$0xf]
      %v627 = vld [vmem:[%s1 + $0x1e4] sm:$0xf]
      %v628 = vld [vmem:[%s1 + $0x1e8] sm:$0xf]
      %v629 = vld [vmem:[%s1 + $0x1ec] sm:$0xf]
      %v630 = vld [vmem:[%s1 + $0x1f0] sm:$0xf]
      %v631 = vld [vmem:[%s1 + $0x1f4] sm:$0xf]
      %v632 = vld [vmem:[%s1 + $0x1f8] sm:$0xf]
      %v633 = vld [vmem:[%s1 + $0x1fc] sm:$0xf]
      %v634 = vld [vmem:[%s1 + $0x200] sm:$0xf]
      %v635 = vld [vmem:[%s1 + $0x204] sm:$0xf]
      %v636 = vld [vmem:[%s1 + $0x208] sm:$0xf]
      %v637 = vld [vmem:[%s1 + $0x20c] sm:$0xf]
      %v638 = vld [vmem:[%s1 + $0x210] sm:$0xf]
      %v639 = vld [vmem:[%s1 + $0x214] sm:$0xf]
      %v640 = vld [vmem:[%s1 + $0x218] sm:$0xf]
      %v641 = vld [vmem:[%s1 + $0x21c] sm:$0xf]
      %v642 = vld [vmem:[%s1 + $0x220] sm:$0xf]
      %v643 = vld [vmem:[%s1 + $0x224] sm:$0xf]
      %v644 = vld [vmem:[%s1 + $0x228] sm:$0xf]
      %v645 = vld [vmem:[%s1 + $0x22c] sm:$0xf]
      %v646 = vld [vmem:[%s1 + $0x230] sm:$0xf]
      %v647 = vld [vmem:[%s1 + $0x234] sm:$0xf]
      %v648 = vld [vmem:[%s1 + $0x238] sm:$0xf]
      %v649 = vld [vmem:[%s1 + $0x23c] sm:$0xf]
      %v650 = vld [vmem:[%s2] sm:$0x1]
      %v652 = vlaneseq
      %v653 = vshrl.u32 %v652, 7
      %v654 = vsub.s32 0, %v653
      %v655 = vrot.slane %v650, %v654
      %v801 = vunpack.c.l.b16 %v506
      %v802 = vunpack.c.l.b16 %v507
      %v803 = vunpack.c.l.b16 %v508
      %v804 = vunpack.c.l.b16 %v509
      %v805 = vunpack.c.l.b16 %v510
      %v806 = vunpack.c.l.b16 %v511
      %v807 = vunpack.c.l.b16 %v512
      %v808 = vunpack.c.l.b16 %v513
      %v809 = vunpack.c.l.b16 %v514
      %v810 = vunpack.c.l.b16 %v515
      %v811 = vunpack.c.l.b16 %v516
      %v812 = vunpack.c.l.b16 %v517
      %v813 = vunpack.c.l.b16 %v518
      %v814 = vunpack.c.l.b16 %v519
      %v815 = vunpack.c.l.b16 %v520
      %v816 = vunpack.c.l.b16 %v521
      %v817 = vunpack.c.l.b16 %v522
      %v818 = vunpack.c.l.b16 %v523
      %v819 = vunpack.c.l.b16 %v524
      %v820 = vunpack.c.l.b16 %v525
      %v821 = vunpack.c.l.b16 %v526
      %v822 = vunpack.c.l.b16 %v527
      %v823 = vunpack.c.l.b16 %v528
      %v824 = vunpack.c.l.b16 %v529
      %v825 = vunpack.c.l.b16 %v530
      %v826 = vunpack.c.l.b16 %v531
      %v827 = vunpack.c.l.b16 %v532
      %v828 = vunpack.c.l.b16 %v533
      %v829 = vunpack.c.l.b16 %v534
      %v830 = vunpack.c.l.b16 %v535
      %v831 = vunpack.c.l.b16 %v536
      %v832 = vunpack.c.l.b16 %v537
      %v833 = vunpack.c.l.b16 %v538
      %v834 = vunpack.c.l.b16 %v539
      %v835 = vunpack.c.l.b16 %v540
      %v836 = vunpack.c.l.b16 %v541
      %v837 = vunpack.c.l.b16 %v542
      %v838 = vunpack.c.l.b16 %v543
      %v839 = vunpack.c.l.b16 %v544
      %v840 = vunpack.c.l.b16 %v545
      %v841 = vunpack.c.l.b16 %v546
      %v842 = vunpack.c.l.b16 %v547
      %v843 = vunpack.c.l.b16 %v548
      %v844 = vunpack.c.l.b16 %v549
      %v845 = vunpack.c.l.b16 %v550
      %v846 = vunpack.c.l.b16 %v551
      %v847 = vunpack.c.l.b16 %v552
      %v848 = vunpack.c.l.b16 %v553
      %v849 = vunpack.c.l.b16 %v554
      %v850 = vunpack.c.l.b16 %v555
      %v851 = vunpack.c.l.b16 %v556
      %v852 = vunpack.c.l.b16 %v557
      %v853 = vunpack.c.l.b16 %v558
      %v854 = vunpack.c.l.b16 %v559
      %v855 = vunpack.c.l.b16 %v560
      %v856 = vunpack.c.l.b16 %v561
      %v857 = vunpack.c.l.b16 %v562
      %v858 = vunpack.c.l.b16 %v563
      %v859 = vunpack.c.l.b16 %v564
      %v860 = vunpack.c.l.b16 %v565
      %v861 = vunpack.c.l.b16 %v566
      %v862 = vunpack.c.l.b16 %v567
      %v863 = vunpack.c.l.b16 %v568
      %v864 = vunpack.c.l.b16 %v569
      %v865 = vunpack.c.l.b16 %v570
      %v866 = vunpack.c.l.b16 %v571
      %v867 = vunpack.c.l.b16 %v572
      %v868 = vunpack.c.l.b16 %v573
      %v869 = vunpack.c.l.b16 %v574
      %v870 = vunpack.c.l.b16 %v575
      %v871 = vunpack.c.l.b16 %v576
      %v872 = vunpack.c.l.b16 %v577
      %v873 = vunpack.c.l.b16 %v578
      %v874 = vunpack.c.l.b16 %v579
      %v875 = vunpack.c.l.b16 %v580
      %v876 = vunpack.c.l.b16 %v581
      %v877 = vunpack.c.l.b16 %v582
      %v878 = vunpack.c.l.b16 %v583
      %v879 = vunpack.c.l.b16 %v584
      %v880 = vunpack.c.l.b16 %v585
      %v881 = vunpack.c.l.b16 %v586
      %v882 = vunpack.c.l.b16 %v587
      %v883 = vunpack.c.l.b16 %v588
      %v884 = vunpack.c.l.b16 %v589
      %v885 = vunpack.c.l.b16 %v590
      %v886 = vunpack.c.l.b16 %v591
      %v887 = vunpack.c.l.b16 %v592
      %v888 = vunpack.c.l.b16 %v593
      %v889 = vunpack.c.l.b16 %v594
      %v890 = vunpack.c.l.b16 %v595
      %v891 = vunpack.c.l.b16 %v596
      %v892 = vunpack.c.l.b16 %v597
      %v893 = vunpack.c.l.b16 %v598
      %v894 = vunpack.c.l.b16 %v599
      %v895 = vunpack.c.l.b16 %v600
      %v896 = vunpack.c.l.b16 %v601
      %v897 = vunpack.c.l.b16 %v602
      %v898 = vunpack.c.l.b16 %v603
      %v899 = vunpack.c.l.b16 %v604
      %v900 = vunpack.c.l.b16 %v605
      %v901 = vunpack.c.l.b16 %v606
      %v902 = vunpack.c.l.b16 %v607
      %v903 = vunpack.c.l.b16 %v608
      %v904 = vunpack.c.l.b16 %v609
      %v905 = vunpack.c.l.b16 %v610
      %v906 = vunpack.c.l.b16 %v611
      %v907 = vunpack.c.l.b16 %v612
      %v908 = vunpack.c.l.b16 %v613
      %v909 = vunpack.c.l.b16 %v614
      %v910 = vunpack.c.l.b16 %v615
      %v911 = vunpack.c.l.b16 %v616
      %v912 = vunpack.c.l.b16 %v617
      %v913 = vunpack.c.l.b16 %v618
      %v914 = vunpack.c.l.b16 %v619
      %v915 = vunpack.c.l.b16 %v620
      %v916 = vunpack.c.l.b16 %v621
      %v917 = vunpack.c.l.b16 %v622
      %v918 = vunpack.c.l.b16 %v623
      %v919 = vunpack.c.l.b16 %v624
      %v920 = vunpack.c.l.b16 %v625
      %v921 = vunpack.c.l.b16 %v626
      %v922 = vunpack.c.l.b16 %v627
      %v923 = vunpack.c.l.b16 %v628
      %v924 = vunpack.c.l.b16 %v629
      %v925 = vunpack.c.l.b16 %v630
      %v926 = vunpack.c.l.b16 %v631
      %v927 = vunpack.c.l.b16 %v632
      %v928 = vunpack.c.l.b16 %v633
      %v929 = vunpack.c.l.b16 %v634
      %v930 = vunpack.c.l.b16 %v635
      %v931 = vunpack.c.l.b16 %v636
      %v932 = vunpack.c.l.b16 %v637
      %v933 = vunpack.c.l.b16 %v638
      %v934 = vunpack.c.l.b16 %v639
      %v935 = vunpack.c.l.b16 %v640
      %v936 = vunpack.c.l.b16 %v641
      %v937 = vunpack.c.l.b16 %v642
      %v938 = vunpack.c.l.b16 %v643
      %v939 = vunpack.c.l.b16 %v644
      %v940 = vunpack.c.l.b16 %v645
      %v941 = vunpack.c.l.b16 %v646
      %v942 = vunpack.c.l.b16 %v647
      %v943 = vunpack.c.l.b16 %v648
      %v944 = vunpack.c.l.b16 %v649
      %v945 = vpack.c.b16 %v802, %v801
      %v946 = vpack.c.b16 %v804, %v803
      %v947 = vpack.c.b16 %v806, %v805
      %v948 = vpack.c.b16 %v808, %v807
      %v949 = vpack.c.b16 %v810, %v809
      %v950 = vpack.c.b16 %v812, %v811
      %v951 = vpack.c.b16 %v814, %v813
      %v952 = vpack.c.b16 %v816, %v815
      %v953 = vpack.c.b16 %v818, %v817
      %v954 = vpack.c.b16 %v820, %v819
      %v955 = vpack.c.b16 %v822, %v821
      %v956 = vpack.c.b16 %v824, %v823
      %v957 = vpack.c.b16 %v826, %v825
      %v958 = vpack.c.b16 %v828, %v827
      %v959 = vpack.c.b16 %v830, %v829
      %v960 = vpack.c.b16 %v832, %v831
      %v961 = vpack.c.b16 %v834, %v833
      %v962 = vpack.c.b16 %v836, %v835
      %v963 = vpack.c.b16 %v838, %v837
      %v964 = vpack.c.b16 %v840, %v839
      %v965 = vpack.c.b16 %v842, %v841
      %v966 = vpack.c.b16 %v844, %v843
      %v967 = vpack.c.b16 %v846, %v845
      %v968 = vpack.c.b16 %v848, %v847
      %v969 = vpack.c.b16 %v850, %v849
      %v970 = vpack.c.b16 %v852, %v851
      %v971 = vpack.c.b16 %v854, %v853
      %v972 = vpack.c.b16 %v856, %v855
      %v973 = vpack.c.b16 %v858, %v857
      %v974 = vpack.c.b16 %v860, %v859
      %v975 = vpack.c.b16 %v862, %v861
      %v976 = vpack.c.b16 %v864, %v863
      %v977 = vpack.c.b16 %v866, %v865
      %v978 = vpack.c.b16 %v868, %v867
      %v979 = vpack.c.b16 %v870, %v869
      %v980 = vpack.c.b16 %v872, %v871
      %v981 = vpack.c.b16 %v874, %v873
      %v982 = vpack.c.b16 %v876, %v875
      %v983 = vpack.c.b16 %v878, %v877
      %v984 = vpack.c.b16 %v880, %v879
      %v985 = vpack.c.b16 %v882, %v881
      %v986 = vpack.c.b16 %v884, %v883
      %v987 = vpack.c.b16 %v886, %v885
      %v988 = vpack.c.b16 %v888, %v887
      %v989 = vpack.c.b16 %v890, %v889
      %v990 = vpack.c.b16 %v892, %v891
      %v991 = vpack.c.b16 %v894, %v893
      %v992 = vpack.c.b16 %v896, %v895
      %v993 = vpack.c.b16 %v898, %v897
      %v994 = vpack.c.b16 %v900, %v899
      %v995 = vpack.c.b16 %v902, %v901
      %v996 = vpack.c.b16 %v904, %v903
      %v997 = vpack.c.b16 %v906, %v905
      %v998 = vpack.c.b16 %v908, %v907
      %v999 = vpack.c.b16 %v910, %v909
      %v1000 = vpack.c.b16 %v912, %v911
      %v1001 = vpack.c.b16 %v914, %v913
      %v1002 = vpack.c.b16 %v916, %v915
      %v1003 = vpack.c.b16 %v918, %v917
      %v1004 = vpack.c.b16 %v920, %v919
      %v1005 = vpack.c.b16 %v922, %v921
      %v1006 = vpack.c.b16 %v924, %v923
      %v1007 = vpack.c.b16 %v926, %v925
      %v1008 = vpack.c.b16 %v928, %v927
      %v1009 = vpack.c.b16 %v930, %v929
      %v1010 = vpack.c.b16 %v932, %v931
      %v1011 = vpack.c.b16 %v934, %v933
      %v1012 = vpack.c.b16 %v936, %v935
      %v1013 = vpack.c.b16 %v938, %v937
      %v1014 = vpack.c.b16 %v940, %v939
      %v1015 = vpack.c.b16 %v942, %v941
      %v1016 = vpack.c.b16 %v944, %v943
      %1089 = vmatprep.subr.bf16.mxu0 0
      %1090 = vmatpush1.bf16.msra.mxu0 %v952
      %1091 = vmatprep.subr.bf16.mxu0 0
      %1092 = vmatpush1.bf16.msra.mxu0 %v951
      %1093 = vmatprep.subr.bf16.mxu0 0
      %1094 = vmatpush1.bf16.msra.mxu0 %v950
      %1095 = vmatprep.subr.bf16.mxu0 0
      %1096 = vmatpush1.bf16.msra.mxu0 %v949
      %1097 = vmatprep.subr.bf16.mxu0 0
      %1098 = vmatpush1.bf16.msra.mxu0 %v948
      %1099 = vmatprep.subr.bf16.mxu0 0
      %1100 = vmatpush1.bf16.msra.mxu0 %v947
      %1101 = vmatprep.subr.bf16.mxu0 0
      %1102 = vmatpush1.bf16.msra.mxu0 %v946
      %1103 = vmatprep.subr.bf16.mxu0 0
      %1104 = vmatpush1.bf16.msra.mxu0 %v945
      %1105 = vmatprep.subr.bf16.mxu0 0
      %1106 = vmatpush2.bf16.msra.mxu0 %v960
      %1107 = vmatprep.subr.bf16.mxu0 0
      %1108 = vmatpush2.bf16.msra.mxu0 %v959
      %1109 = vmatprep.subr.bf16.mxu0 0
      %1110 = vmatpush2.bf16.msra.mxu0 %v958
      %1111 = vmatprep.subr.bf16.mxu0 0
      %1112 = vmatpush2.bf16.msra.mxu0 %v957
      %1113 = vmatprep.subr.bf16.mxu0 0
      %1114 = vmatpush2.bf16.msra.mxu0 %v956
      %1115 = vmatprep.subr.bf16.mxu0 0
      %1116 = vmatpush2.bf16.msra.mxu0 %v955
      %1117 = vmatprep.subr.bf16.mxu0 0
      %1118 = vmatpush2.bf16.msra.mxu0 %v954
      %1119 = vmatprep.subr.bf16.mxu0 0
      %1120 = vmatpush2.bf16.msra.mxu0 %v953
      %1121 = vmatprep.mubr.bf16.mxu0 %v430
      %1122 = vmatmul.mubr.bf16.gmra.mxu0 %v418
      %v1123 = vpop.f32.mrf.mxu0
      %v1124 = vadd.f32 %v655, %v1123
      %v1125 = vpop.f32.mrf.mxu0
      %v1126 = vpop.f32.mrf.mxu0
      %v1127 = vadd.f32 %v655, %v1126
      %v1128 = vpop.f32.mrf.mxu0
      %1129 = vmatprep.mubr.bf16.mxu0 %v431
      %1130 = vmatmul.mubr.bf16.gmra.mxu0 %v419
      %v1131 = vpop.f32.mrf.mxu0
      %v1132 = vadd.f32 %v655, %v1131
      %v1133 = vpop.f32.mrf.mxu0
      %v1134 = vpop.f32.mrf.mxu0
      %v1135 = vadd.f32 %v655, %v1134
      %v1136 = vpop.f32.mrf.mxu0
      %1137 = vdwg.mxu0
      %1138 = vmatprep.subr.bf16.mxu0 0
      %1139 = vmatpush1.bf16.msra.mxu0 %v968
      %1140 = vmatprep.subr.bf16.mxu0 0
      %1141 = vmatpush1.bf16.msra.mxu0 %v967
      %1142 = vmatprep.subr.bf16.mxu0 0
      %1143 = vmatpush1.bf16.msra.mxu0 %v966
      %1144 = vmatprep.subr.bf16.mxu0 0
      %1145 = vmatpush1.bf16.msra.mxu0 %v965
      %1146 = vmatprep.subr.bf16.mxu0 0
      %1147 = vmatpush1.bf16.msra.mxu0 %v964
      %1148 = vmatprep.subr.bf16.mxu0 0
      %1149 = vmatpush1.bf16.msra.mxu0 %v963
      %1150 = vmatprep.subr.bf16.mxu0 0
      %1151 = vmatpush1.bf16.msra.mxu0 %v962
      %1152 = vmatprep.subr.bf16.mxu0 0
      %1153 = vmatpush1.bf16.msra.mxu0 %v961
      %1154 = vmatprep.subr.bf16.mxu0 0
      %1155 = vmatpush2.bf16.msra.mxu0 %v976
      %1156 = vmatprep.subr.bf16.mxu0 0
      %1157 = vmatpush2.bf16.msra.mxu0 %v975
      %1158 = vmatprep.subr.bf16.mxu0 0
      %1159 = vmatpush2.bf16.msra.mxu0 %v974
      %1160 = vmatprep.subr.bf16.mxu0 0
      %1161 = vmatpush2.bf16.msra.mxu0 %v973
      %1162 = vmatprep.subr.bf16.mxu0 0
      %1163 = vmatpush2.bf16.msra.mxu0 %v972
      %1164 = vmatprep.subr.bf16.mxu0 0
      %1165 = vmatpush2.bf16.msra.mxu0 %v971
      %1166 = vmatprep.subr.bf16.mxu0 0
      %1167 = vmatpush2.bf16.msra.mxu0 %v970
      %1168 = vmatprep.subr.bf16.mxu0 0
      %1169 = vmatpush2.bf16.msra.mxu0 %v969
      %1170 = vmatprep.mubr.bf16.mxu0 %v450
      %1171 = vmatmul.mubr.bf16.gmra.mxu0 %v438
      %v1172 = vpop.f32.mrf.mxu0
      %v1173 = vadd.f32 %v1124, %v1172
      %v1174 = vpop.f32.mrf.mxu0
      %v1175 = vpop.f32.mrf.mxu0
      %v1176 = vadd.f32 %v1127, %v1175
      %v1177 = vpop.f32.mrf.mxu0
      %1178 = vmatprep.mubr.bf16.mxu0 %v451
      %1179 = vmatmul.mubr.bf16.gmra.mxu0 %v439
      %v1180 = vpop.f32.mrf.mxu0
      %v1181 = vadd.f32 %v1132, %v1180
      %v1182 = vpop.f32.mrf.mxu0
      %v1183 = vpop.f32.mrf.mxu0
      %v1184 = vadd.f32 %v1135, %v1183
      %v1185 = vpop.f32.mrf.mxu0
      %1186 = vdwg.mxu0
      %1187 = vmatprep.subr.bf16.mxu0 0
      %1188 = vmatpush1.bf16.msra.mxu0 %v984
      %1189 = vmatprep.subr.bf16.mxu0 0
      %1190 = vmatpush1.bf16.msra.mxu0 %v983
      %1191 = vmatprep.subr.bf16.mxu0 0
      %1192 = vmatpush1.bf16.msra.mxu0 %v982
      %1193 = vmatprep.subr.bf16.mxu0 0
      %1194 = vmatpush1.bf16.msra.mxu0 %v981
      %1195 = vmatprep.subr.bf16.mxu0 0
      %1196 = vmatpush1.bf16.msra.mxu0 %v980
      %1197 = vmatprep.subr.bf16.mxu0 0
      %1198 = vmatpush1.bf16.msra.mxu0 %v979
      %1199 = vmatprep.subr.bf16.mxu0 0
      %1200 = vmatpush1.bf16.msra.mxu0 %v978
      %1201 = vmatprep.subr.bf16.mxu0 0
      %1202 = vmatpush1.bf16.msra.mxu0 %v977
      %1203 = vmatprep.subr.bf16.mxu0 0
      %1204 = vmatpush2.bf16.msra.mxu0 %v992
      %1205 = vmatprep.subr.bf16.mxu0 0
      %1206 = vmatpush2.bf16.msra.mxu0 %v991
      %1207 = vmatprep.subr.bf16.mxu0 0
      %1208 = vmatpush2.bf16.msra.mxu0 %v990
      %1209 = vmatprep.subr.bf16.mxu0 0
      %1210 = vmatpush2.bf16.msra.mxu0 %v989
      %1211 = vmatprep.subr.bf16.mxu0 0
      %1212 = vmatpush2.bf16.msra.mxu0 %v988
      %1213 = vmatprep.subr.bf16.mxu0 0
      %1214 = vmatpush2.bf16.msra.mxu0 %v987
      %1215 = vmatprep.subr.bf16.mxu0 0
      %1216 = vmatpush2.bf16.msra.mxu0 %v986
      %1217 = vmatprep.subr.bf16.mxu0 0
      %1218 = vmatpush2.bf16.msra.mxu0 %v985
      %1219 = vmatprep.mubr.bf16.mxu0 %v470
      %1220 = vmatmul.mubr.bf16.gmra.mxu0 %v462
      %v1221 = vpop.f32.mrf.mxu0
      %v1222 = vadd.f32 %v1173, %v1221
      %v1223 = vpop.f32.mrf.mxu0
      %v1224 = vpop.f32.mrf.mxu0
      %v1225 = vadd.f32 %v1176, %v1224
      %v1226 = vpop.f32.mrf.mxu0
      %1227 = vmatprep.mubr.bf16.mxu0 %v471
      %1228 = vmatmul.mubr.bf16.gmra.mxu0 %v463
      %v1229 = vpop.f32.mrf.mxu0
      %v1230 = vadd.f32 %v1181, %v1229
      %v1231 = vpop.f32.mrf.mxu0
      %v1232 = vpop.f32.mrf.mxu0
      %v1233 = vadd.f32 %v1184, %v1232
      %v1234 = vpop.f32.mrf.mxu0
      %1235 = vdwg.mxu0
      %1236 = vmatprep.subr.bf16.mxu0 0
      %1237 = vmatpush1.bf16.msra.mxu0 %v1000
      %1238 = vmatprep.subr.bf16.mxu0 0
      %1239 = vmatpush1.bf16.msra.mxu0 %v999
      %1240 = vmatprep.subr.bf16.mxu0 0
      %1241 = vmatpush1.bf16.msra.mxu0 %v998
      %1242 = vmatprep.subr.bf16.mxu0 0
      %1243 = vmatpush1.bf16.msra.mxu0 %v997
      %1244 = vmatprep.subr.bf16.mxu0 0
      %1245 = vmatpush1.bf16.msra.mxu0 %v996
      %1246 = vmatprep.subr.bf16.mxu0 0
      %1247 = vmatpush1.bf16.msra.mxu0 %v995
      %1248 = vmatprep.subr.bf16.mxu0 0
      %1249 = vmatpush1.bf16.msra.mxu0 %v994
      %1250 = vmatprep.subr.bf16.mxu0 0
      %1251 = vmatpush1.bf16.msra.mxu0 %v993
      %1252 = vmatprep.subr.bf16.mxu0 0
      %1253 = vmatpush2.bf16.msra.mxu0 %v1008
      %1254 = vmatprep.subr.bf16.mxu0 0
      %1255 = vmatpush2.bf16.msra.mxu0 %v1007
      %1256 = vmatprep.subr.bf16.mxu0 0
      %1257 = vmatpush2.bf16.msra.mxu0 %v1006
      %1258 = vmatprep.subr.bf16.mxu0 0
      %1259 = vmatpush2.bf16.msra.mxu0 %v1005
      %1260 = vmatprep.subr.bf16.mxu0 0
      %1261 = vmatpush2.bf16.msra.mxu0 %v1004
      %1262 = vmatprep.subr.bf16.mxu0 0
      %1263 = vmatpush2.bf16.msra.mxu0 %v1003
      %1264 = vmatprep.subr.bf16.mxu0 0
      %1265 = vmatpush2.bf16.msra.mxu0 %v1002
      %1266 = vmatprep.subr.bf16.mxu0 0
      %1267 = vmatpush2.bf16.msra.mxu0 %v1001
      %1268 = vmatprep.mubr.bf16.mxu0 %v494
      %1269 = vmatmul.mubr.bf16.gmra.mxu0 %v482
      %v1270 = vpop.f32.mrf.mxu0
      %v1271 = vadd.f32 %v1222, %v1270
      %v1272 = vpop.f32.mrf.mxu0
      %v1273 = vpop.f32.mrf.mxu0
      %v1274 = vadd.f32 %v1225, %v1273
      %v1275 = vpop.f32.mrf.mxu0
      %1276 = vmatprep.mubr.bf16.mxu0 %v495
      %1277 = vmatmul.mubr.bf16.gmra.mxu0 %v483
      %v1278 = vpop.f32.mrf.mxu0
      %v1279 = vadd.f32 %v1230, %v1278
      %v1280 = vpop.f32.mrf.mxu0
      %v1281 = vpop.f32.mrf.mxu0
      %v1282 = vadd.f32 %v1233, %v1281
      %v1283 = vpop.f32.mrf.mxu0
      %1284 = vdwg.mxu0
      %1285 = vmatprep.subr.bf16.mxu0 0
      %1286 = vmatpush1.bf16.msra.mxu0 %v1016
      %1287 = vmatprep.subr.bf16.mxu0 0
      %1288 = vmatpush1.bf16.msra.mxu0 %v1015
      %1289 = vmatprep.subr.bf16.mxu0 0
      %1290 = vmatpush1.bf16.msra.mxu0 %v1014
      %1291 = vmatprep.subr.bf16.mxu0 0
      %1292 = vmatpush1.bf16.msra.mxu0 %v1013
      %1293 = vmatprep.subr.bf16.mxu0 0
      %1294 = vmatpush1.bf16.msra.mxu0 %v1012
      %1295 = vmatprep.subr.bf16.mxu0 0
      %1296 = vmatpush1.bf16.msra.mxu0 %v1011
      %1297 = vmatprep.subr.bf16.mxu0 0
      %1298 = vmatpush1.bf16.msra.mxu0 %v1010
      %1299 = vmatprep.subr.bf16.mxu0 0
      %1300 = vmatpush1.bf16.msra.mxu0 %v1009
      %1301 = vmatprep.subr.bf16.mxu0 0
      %1302 = vmatpush2.bf16.msra.mxu0 0
      %1303 = vmatprep.subr.bf16.mxu0 0
      %1304 = vmatpush2.bf16.msra.mxu0 0
      %1305 = vmatprep.subr.bf16.mxu0 0
      %1306 = vmatpush2.bf16.msra.mxu0 0
      %1307 = vmatprep.subr.bf16.mxu0 0
      %1308 = vmatpush2.bf16.msra.mxu0 0
      %1309 = vmatprep.subr.bf16.mxu0 0
      %1310 = vmatpush2.bf16.msra.mxu0 0
      %1311 = vmatprep.subr.bf16.mxu0 0
      %1312 = vmatpush2.bf16.msra.mxu0 0
      %1313 = vmatprep.subr.bf16.mxu0 0
      %1314 = vmatpush2.bf16.msra.mxu0 0
      %1315 = vmatprep.subr.bf16.mxu0 0
      %1316 = vmatpush2.bf16.msra.mxu0 0
      %1317 = vmatprep.mubr.bf16.mxu0 0
      %1318 = vmatmul.mubr.bf16.gmra.mxu0 %v502
      %v1319 = vpop.f32.mrf.mxu0
      %v1320 = vadd.f32 %v1271, %v1319
      %v1321 = vpop.f32.mrf.mxu0
      %v1322 = vpop.f32.mrf.mxu0
      %v1323 = vadd.f32 %v1274, %v1322
      %v1324 = vpop.f32.mrf.mxu0
      %1325 = vmatprep.mubr.bf16.mxu0 0
      %1326 = vmatmul.mubr.bf16.gmra.mxu0 %v503
      %v1327 = vpop.f32.mrf.mxu0
      %v1328 = vadd.f32 %v1279, %v1327
      %v1329 = vpop.f32.mrf.mxu0
      %v1330 = vpop.f32.mrf.mxu0
      %v1331 = vadd.f32 %v1282, %v1330
      %v1332 = vpop.f32.mrf.mxu0
      %1333 = vdwg.mxu0
      %v1334 = vand.u32 2147483647, %v1320
      %v1335 = vand.u32 2147483647, %v1323
      %v1336 = vand.u32 2147483647, %v1328
      %v1337 = vand.u32 2147483647, %v1331
      %v1338 = vsub.f32 0.0, %v1334
      %v1339 = vsub.f32 0.0, %v1335
      %v1340 = vsub.f32 0.0, %v1336
      %v1341 = vsub.f32 0.0, %v1337
      %v1342 = vmul.f32 %v1338, 1.442695
      %v1343 = vpow.pop %v1342
      %v1344 = vmul.f32 %v1339, 1.442695
      %v1345 = vpow.pop %v1344
      %v1346 = vmul.f32 %v1340, 1.442695
      %v1347 = vpow.pop %v1346
      %v1348 = vmul.f32 %v1341, 1.442695
      %v1349 = vpow.pop %v1348
      %v1350 = vadd.f32 %v1343, 1.0
      %v1351 = vadd.f32 %v1345, 1.0
      %v1352 = vadd.f32 %v1347, 1.0
      %v1353 = vadd.f32 %v1349, 1.0
      %v1354 = vrcp.pop %v1350
      %v1355 = vrcp.pop %v1351
      %v1356 = vrcp.pop %v1352
      %v1357 = vrcp.pop %v1353
      %vm1358 = vcmp.ge.f32.partialorder %v1320, 0.0
      %vm1359 = vcmp.ge.f32.partialorder %v1323, 0.0
      %vm1360 = vcmp.ge.f32.partialorder %v1328, 0.0
      %vm1361 = vcmp.ge.f32.partialorder %v1331, 0.0
      %v1362 = vmul.f32 %v1343, %v1354
      %v1363 = vmul.f32 %v1345, %v1355
      %v1364 = vmul.f32 %v1347, %v1356
      %v1365 = vmul.f32 %v1349, %v1357
      %v1366 = vsel %vm1358, %v1354, %v1362
      %v1367 = vsel %vm1359, %v1355, %v1363
      %v1368 = vsel %vm1360, %v1356, %v1364
      %v1369 = vsel %vm1361, %v1357, %v1365
      %v1370 = vmul.f32 %v1320, %v1366
      %v1371 = vmul.f32 %v1323, %v1367
      %v1372 = vmul.f32 %v1328, %v1368
      %v1373 = vmul.f32 %v1331, %v1369
      %v1374 = vpack.c.bf16 %v1371, %v1370
      %v1375 = vpack.c.bf16 %v1373, %v1372
      %v1378 = vunpack.c.l.b16 %v1374
      %v1379 = vunpack.c.h.b16 %v1374
      %v1380 = vunpack.c.l.b16 %v1375
      %v1381 = vunpack.c.h.b16 %v1375
      %v1382 = vpack.c.b16 %v1378, %v1378
      %v1383 = vpack.c.b16 %v1379, %v1379
      %v1384 = vpack.c.b16 %v1380, %v1380
      %v1385 = vpack.c.b16 %v1381, %v1381
      %1390 = vst [vmem:[%s192] sm:$0xf] %v1382
      %1391 = vst [vmem:[%s192 + $0x4] sm:$0xf] %v1383
      %1392 = vst [vmem:[%s192 + $0x8] sm:$0xf] %v1384
      %1393 = vst [vmem:[%s192 + $0xc] sm:$0xf] %v1385
      %s1394 = smul.u32 4, %s19
      %p1395 = scmp.lt.s32.totalorder %s18, 1
      %s1396 = scalar_select %p1395, %s18, 1
      %p1397 = scmp.lt.s32.totalorder %s1394, 7
      %s1398 = scalar_select %p1397, %s1394, 7
      %s1399 = smul.addr %s1396, 8
      %s1400 = sadd.s32 %s1398, %s1399
      %s1401 = smul.addr %s1400, 4
      %s1402 = scalar_lea.vmem %s3, %s1401
      // Predicated region
      $region33: #{_lambda_.8} parent=31 // pred_check
        %p1403 = pneg %p114
      $region34: #{_lambda_.8} parent=31 // pred_check_branch
        %1405 = sbr.rel (%p1403) target = $region36
      $region35: #{_lambda_.8} parent=31 // pred_region
        %s1406 = smul.u32 4, %s19
      $region36: #{_lambda_.8} parent=31 // pred_fallthru
        _
    $region32: #{_lambda_.8} parent=5 // pred_fallthru
      _
    %p1407 = scmp.le.s32.totalorder 2, %s9
    // Predicated region
    $region37: #{_lambda_.8} parent=5 // pred_check
      %p1408 = pneg %p1407
    $region38: #{_lambda_.8} parent=5 // pred_check_branch
      %1410 = sbr.rel (%p1408) target = $region40
    $region39: #{_lambda_.8} parent=5 // pred_region
      %s1411 = ssub.s32 %s9, 2
      // Predicated region
      $region41: #{_lambda_.8} parent=39 // pred_check
        %p1412 = pneg %p120
      $region42: #{_lambda_.8} parent=39 // pred_check_branch
        %1414 = sbr.rel (%p1412) target = $region44
      $region43: #{_lambda_.8} parent=39 // pred_region
        %s1415 = smul.u32 4, %s21
        %p1416 = scmp.lt.s32.totalorder %s20, 1
        %s1417 = scalar_select %p1416, %s20, 1
        %p1418 = scmp.lt.s32.totalorder %s1415, 7
        %s1419 = scalar_select %p1418, %s1415, 7
        %s1420 = smul.addr %s1417, 8
        %s1421 = sadd.s32 %s1419, %s1420
        %s1422 = smul.addr %s1421, 4
        %s1423 = scalar_lea.vmem %s3, %s1422
      $region44: #{_lambda_.8} parent=39 // pred_fallthru
        _
    $region40: #{_lambda_.8} parent=5 // pred_fallthru
      _
  $region6: #{_lambda_.8} parent=0 // loop_footer
    %s13 = sadd.s32 1, %s9
  $region7: #{_lambda_.8} parent=0 // loop_footer_branch
    %8 = sbr.rel target = $region3
  $region8: #{_lambda_.8} parent=0 // loop_exit
    _

// kernel: _lambda_.9
$region0: #{_lambda_.9}
  #allocation0 [shape = 'u32[]', space=smem, size = 0x4, offset = 0x4, fixed_abs, tag = 'smem constant byte address 0x4 - core index']
  #allocation1 [shape = 'u32[144,128]{1,0:T(1,128)}', space=vmem, size = 0x12000, scoped, tag = 'internal scratch']
  %s0 = inlined_call_operand.vmem [shape: bf16[2,10,10,128], index: 0, kind: input, shape index: {}]
  %s1 = inlined_call_operand.vmem [shape: bf16[1152,128], index: 1, kind: input, shape index: {}]
  %s2 = inlined_call_operand.vmem [shape: f32[1,128], index: 2, kind: input, shape index: {}]
  %s3 = inlined_call_operand.vmem [shape: bf16[2,8,8,128], index: 3, kind: output, shape index: {}]
  %s4 = sld [smem:[#allocation0]]
  $region45: #{_lambda_.9} parent=0
    _
  %s6 = ssub.s32 1, %s4
  %s7 = scalar_select 0, %s6, %s4
  loop: start=0, step=1, limit=6
  $region2: #{_lambda_.9} parent=0 // loop_pre_header
    _
  $region3: #{_lambda_.9} parent=0 // loop_header
    %s9 = sphi 0, %s13
    %p10 = scmp.ge.s32.totalorder %s9, 6
    %s16 = sphi 0, %s28
    %s17 = sphi 0, %s24
    %s18 = sphi 0, %s16
    %s19 = sphi 0, %s17
    %s20 = sphi 0, %s18
    %s21 = sphi 0, %s19
    %s31 = sphi 0, %s33
    %s34 = sphi 0, %s31
    %s35 = sphi 0, %s34
    %s51 = sphi 0, %s35
    %s55 = sphi 0, %s55
    %s57 = sphi 0, %s55
    %s58 = sphi 0, %s57
    %s72 = sphi 0, %s58
    %s76 = sphi 0, %s76
    %s78 = sphi 0, %s76
    %s79 = sphi 0, %s78
    %s93 = sphi 0, %s79
    %s101 = sphi 0, %s103
    %s104 = sphi 0, %s101
    %s105 = sphi 0, %s104
    %s121 = sphi 0, %s105
  $region4: #{_lambda_.9} parent=0 // loop_header_branch
    %12 = sbr.rel (%p10) target = $region8
  $region5: #{_lambda_.9} parent=0 // loop_body
    %s14 = ssub.s32 %s9, 1
    %s15 = ssub.s32 %s9, 2
    %s22 = sadd.s32 1, %s17
    %p23 = scmp.ge.s32.totalorder %s22, 2
    %s24 = scalar_select %p23, 0, %s22
    %s25 = sadd.s32 1, %s16
    %s26 = scalar_select %p23, %s25, %s16
    %p27 = scmp.ge.s32.totalorder %s26, 2
    %s28 = scalar_select %p27, 0, %s26
    %s29 = ssub.s32 %s16, %s28
    %p30 = scmp.eq.s32.totalorder %s29, 0
    %s32 = sadd.s32 %s31, 1
    %s33 = scalar_select %p30, %s31, %s32
    %p36 = pneg %p30
    %p37 = scmp.eq.s32.totalorder %s9, 3
    %p38 = por %p36, %p37
    %p39 = scmp.ne.s32.totalorder %s31, %s34
    %p40 = scmp.eq.s32.totalorder %s9, 0
    %p41 = por %p39, %p40
    %p42 = scmp.ne.s32.totalorder %s31, %s34
    %p43 = scmp.eq.s32.totalorder %s14, 3
    %p44 = por %p42, %p43
    %p45 = scmp.ne.s32.totalorder %s34, %s35
    %p46 = scmp.eq.s32.totalorder %s14, 0
    %p47 = por %p45, %p46
    %p48 = scmp.ne.s32.totalorder %s34, %s35
    %p49 = scmp.eq.s32.totalorder %s15, 3
    %p50 = por %p48, %p49
    %p52 = scmp.ne.s32.totalorder %s35, %s51
    %p53 = scmp.eq.s32.totalorder %s15, 0
    %p54 = por %p52, %p53
    %s56 = sadd.s32 %s55, 1
    %p59 = scmp.eq.s32.totalorder %s9, 3
    %p60 = scmp.ne.s32.totalorder %s55, %s57
    %p61 = scmp.eq.s32.totalorder %s9, 0
    %p62 = por %p60, %p61
    %p63 = scmp.ne.s32.totalorder %s55, %s57
    %p64 = scmp.eq.s32.totalorder %s14, 3
    %p65 = por %p63, %p64
    %p66 = scmp.ne.s32.totalorder %s57, %s58
    %p67 = scmp.eq.s32.totalorder %s14, 0
    %p68 = por %p66, %p67
    %p69 = scmp.ne.s32.totalorder %s57, %s58
    %p70 = scmp.eq.s32.totalorder %s15, 3
    %p71 = por %p69, %p70
    %p73 = scmp.ne.s32.totalorder %s58, %s72
    %p74 = scmp.eq.s32.totalorder %s15, 0
    %p75 = por %p73, %p74
    %s77 = sadd.s32 %s76, 1
    %p80 = scmp.eq.s32.totalorder %s9, 3
    %p81 = scmp.ne.s32.totalorder %s76, %s78
    %p82 = scmp.eq.s32.totalorder %s9, 0
    %p83 = por %p81, %p82
    %p84 = scmp.ne.s32.totalorder %s76, %s78
    %p85 = scmp.eq.s32.totalorder %s14, 3
    %p86 = por %p84, %p85
    %p87 = scmp.ne.s32.totalorder %s78, %s79
    %p88 = scmp.eq.s32.totalorder %s14, 0
    %p89 = por %p87, %p88
    %p90 = scmp.ne.s32.totalorder %s78, %s79
    %p91 = scmp.eq.s32.totalorder %s15, 3
    %p92 = por %p90, %p91
    %p94 = scmp.ne.s32.totalorder %s79, %s93
    %p95 = scmp.eq.s32.totalorder %s15, 0
    %p96 = por %p94, %p95
    %s97 = ssub.s32 %s16, %s28
    %s98 = ssub.s32 %s17, %s24
    %s99 = sor.u32 %s97, %s98
    %p100 = scmp.eq.s32.totalorder %s99, 0
    %s102 = sadd.s32 %s101, 1
    %s103 = scalar_select %p100, %s101, %s102
    %p106 = pneg %p100
    %p107 = scmp.eq.s32.totalorder %s9, 3
    %p108 = por %p106, %p107
    %p109 = scmp.ne.s32.totalorder %s101, %s104
    %p110 = scmp.eq.s32.totalorder %s9, 0
    %p111 = por %p109, %p110
    %p112 = scmp.ne.s32.totalorder %s101, %s104
    %p113 = scmp.eq.s32.totalorder %s14, 3
    %p114 = por %p112, %p113
    %p115 = scmp.ne.s32.totalorder %s104, %s105
    %p116 = scmp.eq.s32.totalorder %s14, 0
    %p117 = por %p115, %p116
    %p118 = scmp.ne.s32.totalorder %s104, %s105
    %p119 = scmp.eq.s32.totalorder %s15, 3
    %p120 = por %p118, %p119
    %p122 = scmp.ne.s32.totalorder %s105, %s121
    %p123 = scmp.eq.s32.totalorder %s15, 0
    %p124 = por %p122, %p123
    %p125 = scmp.le.s32.totalorder 1, %s9
    %p126 = scmp.lt.s32.totalorder %s9, 5
    %p127 = pnand %p125, %p126
    %p128 = pneg %p127
    // Predicated region
    $region9: #{_lambda_.9} parent=5 // pred_check
      _
    $region10: #{_lambda_.9} parent=5 // pred_check_branch
      %130 = sbr.rel (%p127) target = $region12
    $region11: #{_lambda_.9} parent=5 // pred_region
      %s131 = ssub.s32 %s9, 1
      // Predicated region
      $region13: #{_lambda_.9} parent=11 // pred_check
        %p132 = pneg %p68
      $region14: #{_lambda_.9} parent=11 // pred_check_branch
        %134 = sbr.rel (%p132) target = $region16
      $region15: #{_lambda_.9} parent=11 // pred_region
        _
      $region16: #{_lambda_.9} parent=11 // pred_fallthru
        _
      // Predicated region
      $region17: #{_lambda_.9} parent=11 // pred_check
        %p135 = pneg %p89
      $region18: #{_lambda_.9} parent=11 // pred_check_branch
        %137 = sbr.rel (%p135) target = $region20
      $region19: #{_lambda_.9} parent=11 // pred_region
        _
      $region20: #{_lambda_.9} parent=11 // pred_fallthru
        _
    $region12: #{_lambda_.9} parent=5 // pred_fallthru
      _
    %p138 = scmp.lt.s32.totalorder %s9, 4
    // Predicated region
    $region21: #{_lambda_.9} parent=5 // pred_check
      %p139 = pneg %p138
    $region22: #{_lambda_.9} parent=5 // pred_check_branch
      %141 = sbr.rel (%p139) target = $region24
    $region23: #{_lambda_.9} parent=5 // pred_region
      // Predicated region
      $region25: #{_lambda_.9} parent=23 // pred_check
        %p142 = pneg %p41
      $region26: #{_lambda_.9} parent=23 // pred_check_branch
        %144 = sbr.rel (%p142) target = $region28
      $region27: #{_lambda_.9} parent=23 // pred_region
        %p145 = scmp.lt.s32.totalorder %s16, 1
        %s146 = scalar_select %p145, %s16, 1
        %s147 = smul.addr %s146, 20
        %s148 = smul.addr %s147, 4
        %s149 = scalar_lea.vmem %s0, %s148
      $region28: #{_lambda_.9} parent=23 // pred_fallthru
        _
    $region24: #{_lambda_.9} parent=5 // pred_fallthru
      _
    %p150 = scmp.le.s32.totalorder 1, %s9
    %p151 = scmp.lt.s32.totalorder %s9, 5
    %p152 = pnand %p150, %p151
    %p153 = pneg %p152
    // Predicated region
    $region29: #{_lambda_.9} parent=5 // pred_check
      _
    $region30: #{_lambda_.9} parent=5 // pred_check_branch
      %155 = sbr.rel (%p152) target = $region32
    $region31: #{_lambda_.9} parent=5 // pred_region
      %s156 = ssub.s32 %s9, 1
      %p157 = scmp.lt.s32.totalorder %s18, 1
      %s158 = scalar_select %p157, %s18, 1
      %s159 = smul.addr %s158, 20
      %s160 = smul.addr %s159, 4
      %s161 = scalar_lea.vmem %s0, %s160
      %p162 = pneg %p47
      %p163 = pneg %p44
      %p164 = pneg %p68
      %p165 = pneg %p65
      %p166 = pneg %p89
      %p167 = pneg %p86
      %p168 = pneg %p117
      %p169 = pneg %p114
      %s170 = smul.u32 4, %s19
      %p171 = scmp.lt.s32.totalorder %s18, 1
      %s172 = scalar_select %p171, %s18, 1
      %p173 = scmp.lt.s32.totalorder %s170, 7
      %s174 = scalar_select %p173, %s170, 7
      %s175 = smul.addr %s172, 8
      %s176 = sadd.s32 %s174, %s175
      %s177 = smul.addr %s176, 4
      %s178 = scalar_lea.vmem %s3, %s177
      %p179 = scmp.lt.s32.totalorder %s18, 1
      %s180 = scalar_select %p179, %s18, 1
      %s181 = smul.addr %s180, 20
      %s182 = smul.addr %s181, 4
      %s183 = scalar_lea.vmem %s0, %s182
      %s184 = smul.u32 4, %s19
      %p185 = scmp.lt.s32.totalorder %s18, 1
      %s186 = scalar_select %p185, %s18, 1
      %p187 = scmp.lt.s32.totalorder %s184, 7
      %s188 = scalar_select %p187, %s184, 7
      %s189 = smul.addr %s186, 8
      %s190 = sadd.s32 %s188, %s189
      %s191 = smul.addr %s190, 4
      %s192 = scalar_lea.vmem %s3, %s191
      %s193 = smul.u32 4, %s19
      %s195 = smul.u32 %s19, 4
      %s196 = smul.u32 %s195, 2
      %s197 = smul.addr %s196, 4
      %s198 = scalar_lea.vmem %s183, %s197
      %v199 = vld [vmem:[%s198] sm:$0xf]
      %v200 = vld [vmem:[%s198 + $0x8] sm:$0xf]
      %v201 = vld [vmem:[%s198 + $0x10] sm:$0xf]
      %v202 = vld [vmem:[%s198 + $0x18] sm:$0xf]
      %v203 = vld [vmem:[%s198 + $0x4] sm:$0x1]
      %v204 = vld [vmem:[%s198 + $0xc] sm:$0x1]
      %v205 = vld [vmem:[%s198 + $0x14] sm:$0x1]
      %v206 = vld [vmem:[%s198 + $0x1c] sm:$0x1]
      %vm207 = vsmask.f32 3328
      %vm208 = vsmask.f32 7440
      %vm209 = vmor %vm207, %vm208
      %v211 = vshrl.u32 %v199, 16
      %v213 = vrot.slane %v211, 4
      %v214 = vshll.u32 %v199, 16
      %v216 = vrot.slane %v214, 5
      %v217 = vor.u32 %v213, %v216
      %v218 = vrot.slane %v217, 4
      %v220 = vshll.u32 %v203, 16
      %v222 = vrot.slane %v220, 5
      %v223 = vsel %vm209, %v218, %v222
      %v225 = vshrl.u32 %v200, 16
      %v227 = vrot.slane %v225, 4
      %v228 = vshll.u32 %v200, 16
      %v230 = vrot.slane %v228, 5
      %v231 = vor.u32 %v227, %v230
      %v232 = vrot.slane %v231, 4
      %v234 = vshll.u32 %v204, 16
      %v236 = vrot.slane %v234, 5
      %v237 = vsel %vm209, %v232, %v236
      %v239 = vshrl.u32 %v201, 16
      %v241 = vrot.slane %v239, 4
      %v242 = vshll.u32 %v201, 16
      %v244 = vrot.slane %v242, 5
      %v245 = vor.u32 %v241, %v244
      %v246 = vrot.slane %v245, 4
      %v248 = vshll.u32 %v205, 16
      %v250 = vrot.slane %v248, 5
      %v251 = vsel %vm209, %v246, %v250
      %v253 = vshrl.u32 %v202, 16
      %v255 = vrot.slane %v253, 4
      %v256 = vshll.u32 %v202, 16
      %v258 = vrot.slane %v256, 5
      %v259 = vor.u32 %v255, %v258
      %v260 = vrot.slane %v259, 4
      %v262 = vshll.u32 %v206, 16
      %v264 = vrot.slane %v262, 5
      %v265 = vsel %vm209, %v260, %v264
      %v266 = vld [vmem:[%s198] sm:$0xe]
      %v267 = vld [vmem:[%s198 + $0x8] sm:$0xe]
      %v268 = vld [vmem:[%s198 + $0x10] sm:$0xe]
      %v269 = vld [vmem:[%s198 + $0x18] sm:$0xe]
      %vm278 = vcmask 1042432
      %vm279 = vcmask 1046532
      %vm280 = vmor %vm278, %vm279
      %v281 = vrot.slane %v266, 5
      %v282 = vrot.slane %v281, 4
      %v283 = vrot.slane %v203, 5
      %v284 = vsel %vm280, %v282, %v283
      %v285 = vrot.slane %v267, 5
      %v286 = vrot.slane %v285, 4
      %v287 = vrot.slane %v204, 5
      %v288 = vsel %vm280, %v286, %v287
      %v289 = vrot.slane %v268, 5
      %v290 = vrot.slane %v289, 4
      %v291 = vrot.slane %v205, 5
      %v292 = vsel %vm280, %v290, %v291
      %v293 = vrot.slane %v269, 5
      %v294 = vrot.slane %v293, 4
      %v295 = vrot.slane %v206, 5
      %v296 = vsel %vm280, %v294, %v295
      %s297 = sadd.s32 %s195, 1
      %s298 = smul.u32 %s297, 2
      %s299 = smul.addr %s298, 4
      %s300 = scalar_lea.vmem %s183, %s299
      %v301 = vld [vmem:[%s300] sm:$0xf]
      %v302 = vld [vmem:[%s300 + $0x8] sm:$0xf]
      %v303 = vld [vmem:[%s300 + $0x10] sm:$0xf]
      %v304 = vld [vmem:[%s300 + $0x18] sm:$0xf]
      %v305 = vld [vmem:[%s300 + $0x4] sm:$0x1]
      %v306 = vld [vmem:[%s300 + $0xc] sm:$0x1]
      %v307 = vld [vmem:[%s300 + $0x14] sm:$0x1]
      %v308 = vld [vmem:[%s300 + $0x1c] sm:$0x1]
      %v310 = vshrl.u32 %v301, 16
      %v312 = vrot.slane %v310, 4
      %v313 = vshll.u32 %v301, 16
      %v315 = vrot.slane %v313, 5
      %v316 = vor.u32 %v312, %v315
      %v317 = vrot.slane %v316, 4
      %v319 = vshll.u32 %v305, 16
      %v321 = vrot.slane %v319, 5
      %v322 = vsel %vm209, %v317, %v321
      %v324 = vshrl.u32 %v302, 16
      %v326 = vrot.slane %v324, 4
      %v327 = vshll.u32 %v302, 16
      %v329 = vrot.slane %v327, 5
      %v330 = vor.u32 %v326, %v329
      %v331 = vrot.slane %v330, 4
      %v333 = vshll.u32 %v306, 16
      %v335 = vrot.slane %v333, 5
      %v336 = vsel %vm209, %v331, %v335
      %v338 = vshrl.u32 %v303, 16
      %v340 = vrot.slane %v338, 4
      %v341 = vshll.u32 %v303, 16
      %v343 = vrot.slane %v341, 5
      %v344 = vor.u32 %v340, %v343
      %v345 = vrot.slane %v344, 4
      %v347 = vshll.u32 %v307, 16
      %v349 = vrot.slane %v347, 5
      %v350 = vsel %vm209, %v345, %v349
      %v352 = vshrl.u32 %v304, 16
      %v354 = vrot.slane %v352, 4
      %v355 = vshll.u32 %v304, 16
      %v357 = vrot.slane %v355, 5
      %v358 = vor.u32 %v354, %v357
      %v359 = vrot.slane %v358, 4
      %v361 = vshll.u32 %v308, 16
      %v363 = vrot.slane %v361, 5
      %v364 = vsel %vm209, %v359, %v363
      %v365 = vld [vmem:[%s300] sm:$0xe]
      %v366 = vld [vmem:[%s300 + $0x8] sm:$0xe]
      %v367 = vld [vmem:[%s300 + $0x10] sm:$0xe]
      %v368 = vld [vmem:[%s300 + $0x18] sm:$0xe]
      %v377 = vrot.slane %v365, 5
      %v378 = vrot.slane %v377, 4
      %v379 = vrot.slane %v305, 5
      %v380 = vsel %vm280, %v378, %v379
      %v381 = vrot.slane %v366, 5
      %v382 = vrot.slane %v381, 4
      %v383 = vrot.slane %v306, 5
      %v384 = vsel %vm280, %v382, %v383
      %v385 = vrot.slane %v367, 5
      %v386 = vrot.slane %v385, 4
      %v387 = vrot.slane %v307, 5
      %v388 = vsel %vm280, %v386, %v387
      %v389 = vrot.slane %v368, 5
      %v390 = vrot.slane %v389, 4
      %v391 = vrot.slane %v308, 5
      %v392 = vsel %vm280, %v390, %v391
      %s393 = sadd.s32 %s195, 2
      %s394 = smul.u32 %s393, 2
      %s395 = smul.addr %s394, 4
      %s396 = scalar_lea.vmem %s183, %s395
      %v397 = vld [vmem:[%s396] sm:$0xf]
      %v398 = vld [vmem:[%s396 + $0x8] sm:$0xf]
      %v399 = vld [vmem:[%s396 + $0x10] sm:$0xf]
      %v400 = vld [vmem:[%s396 + $0x18] sm:$0xf]
      %v401 = vld [vmem:[%s396 + $0x4] sm:$0x1]
      %v402 = vld [vmem:[%s396 + $0xc] sm:$0x1]
      %v403 = vld [vmem:[%s396 + $0x14] sm:$0x1]
      %v404 = vld [vmem:[%s396 + $0x1c] sm:$0x1]
      %v406 = vshrl.u32 %v397, 16
      %v408 = vrot.slane %v406, 4
      %v409 = vshll.u32 %v397, 16
      %v411 = vrot.slane %v409, 5
      %v412 = vor.u32 %v408, %v411
      %v413 = vrot.slane %v412, 4
      %v415 = vshll.u32 %v401, 16
      %v417 = vrot.slane %v415, 5
      %v418 = vsel %vm209, %v413, %v417
      %v420 = vshrl.u32 %v398, 16
      %v422 = vrot.slane %v420, 4
      %v423 = vshll.u32 %v398, 16
      %v425 = vrot.slane %v423, 5
      %v426 = vor.u32 %v422, %v425
      %v427 = vrot.slane %v426, 4
      %v429 = vshll.u32 %v402, 16
      %v431 = vrot.slane %v429, 5
      %v432 = vsel %vm209, %v427, %v431
      %v434 = vshrl.u32 %v399, 16
      %v436 = vrot.slane %v434, 4
      %v437 = vshll.u32 %v399, 16
      %v439 = vrot.slane %v437, 5
      %v440 = vor.u32 %v436, %v439
      %v441 = vrot.slane %v440, 4
      %v443 = vshll.u32 %v403, 16
      %v445 = vrot.slane %v443, 5
      %v446 = vsel %vm209, %v441, %v445
      %v448 = vshrl.u32 %v400, 16
      %v450 = vrot.slane %v448, 4
      %v451 = vshll.u32 %v400, 16
      %v453 = vrot.slane %v451, 5
      %v454 = vor.u32 %v450, %v453
      %v455 = vrot.slane %v454, 4
      %v457 = vshll.u32 %v404, 16
      %v459 = vrot.slane %v457, 5
      %v460 = vsel %vm209, %v455, %v459
      %v461 = vld [vmem:[%s396] sm:$0xe]
      %v462 = vld [vmem:[%s396 + $0x8] sm:$0xe]
      %v463 = vld [vmem:[%s396 + $0x10] sm:$0xe]
      %v464 = vld [vmem:[%s396 + $0x18] sm:$0xe]
      %v473 = vrot.slane %v461, 5
      %v474 = vrot.slane %v473, 4
      %v475 = vrot.slane %v401, 5
      %v476 = vsel %vm280, %v474, %v475
      %v477 = vrot.slane %v462, 5
      %v478 = vrot.slane %v477, 4
      %v479 = vrot.slane %v402, 5
      %v480 = vsel %vm280, %v478, %v479
      %v481 = vrot.slane %v463, 5
      %v482 = vrot.slane %v481, 4
      %v483 = vrot.slane %v403, 5
      %v484 = vsel %vm280, %v482, %v483
      %v485 = vrot.slane %v464, 5
      %v486 = vrot.slane %v485, 4
      %v487 = vrot.slane %v404, 5
      %v488 = vsel %vm280, %v486, %v487
      %v493 = vunpack.c.l.b16 %v199
      %v494 = vunpack.c.l.b16 %v200
      %v495 = vunpack.c.l.b16 %v201
      %v496 = vunpack.c.l.b16 %v202
      %v497 = vpack.c.b16 %v494, %v493
      %v498 = vpack.c.b16 %v496, %v495
      %v501 = vunpack.c.l.b16 %v223
      %v502 = vunpack.c.l.b16 %v237
      %v503 = vunpack.c.l.b16 %v251
      %v504 = vunpack.c.l.b16 %v265
      %v505 = vpack.c.b16 %v502, %v501
      %v506 = vpack.c.b16 %v504, %v503
      %v509 = vunpack.c.l.b16 %v284
      %v510 = vunpack.c.l.b16 %v288
      %v511 = vunpack.c.l.b16 %v292
      %v512 = vunpack.c.l.b16 %v296
      %v513 = vpack.c.b16 %v510, %v509
      %v514 = vpack.c.b16 %v512, %v511
      %v521 = vunpack.c.l.b16 %v301
      %v522 = vunpack.c.l.b16 %v302
      %v523 = vunpack.c.l.b16 %v303
      %v524 = vunpack.c.l.b16 %v304
      %v525 = vpack.c.b16 %v522, %v521
      %v526 = vpack.c.b16 %v524, %v523
      %v529 = vunpack.c.l.b16 %v322
      %v530 = vunpack.c.l.b16 %v336
      %v531 = vunpack.c.l.b16 %v350
      %v532 = vunpack.c.l.b16 %v364
      %v533 = vpack.c.b16 %v530, %v529
      %v534 = vpack.c.b16 %v532, %v531
      %v537 = vunpack.c.l.b16 %v380
      %v538 = vunpack.c.l.b16 %v384
      %v539 = vunpack.c.l.b16 %v388
      %v540 = vunpack.c.l.b16 %v392
      %v541 = vpack.c.b16 %v538, %v537
      %v542 = vpack.c.b16 %v540, %v539
      %v549 = vunpack.c.l.b16 %v397
      %v550 = vunpack.c.l.b16 %v398
      %v551 = vunpack.c.l.b16 %v399
      %v552 = vunpack.c.l.b16 %v400
      %v553 = vpack.c.b16 %v550, %v549
      %v554 = vpack.c.b16 %v552, %v551
      %v557 = vunpack.c.l.b16 %v418
      %v558 = vunpack.c.l.b16 %v432
      %v559 = vunpack.c.l.b16 %v446
      %v560 = vunpack.c.l.b16 %v460
      %v561 = vpack.c.b16 %v558, %v557
      %v562 = vpack.c.b16 %v560, %v559
      %v565 = vunpack.c.l.b16 %v476
      %v566 = vunpack.c.l.b16 %v480
      %v567 = vunpack.c.l.b16 %v484
      %v568 = vunpack.c.l.b16 %v488
      %v569 = vpack.c.b16 %v566, %v565
      %v570 = vpack.c.b16 %v568, %v567
      %v573 = vld [vmem:[%s1] sm:$0xf]
      %v574 = vld [vmem:[%s1 + $0x4] sm:$0xf]
      %v575 = vld [vmem:[%s1 + $0x8] sm:$0xf]
      %v576 = vld [vmem:[%s1 + $0xc] sm:$0xf]
      %v577 = vld [vmem:[%s1 + $0x10] sm:$0xf]
      %v578 = vld [vmem:[%s1 + $0x14] sm:$0xf]
      %v579 = vld [vmem:[%s1 + $0x18] sm:$0xf]
      %v580 = vld [vmem:[%s1 + $0x1c] sm:$0xf]
      %v581 = vld [vmem:[%s1 + $0x20] sm:$0xf]
      %v582 = vld [vmem:[%s1 + $0x24] sm:$0xf]
      %v583 = vld [vmem:[%s1 + $0x28] sm:$0xf]
      %v584 = vld [vmem:[%s1 + $0x2c] sm:$0xf]
      %v585 = vld [vmem:[%s1 + $0x30] sm:$0xf]
      %v586 = vld [vmem:[%s1 + $0x34] sm:$0xf]
      %v587 = vld [vmem:[%s1 + $0x38] sm:$0xf]
      %v588 = vld [vmem:[%s1 + $0x3c] sm:$0xf]
      %v589 = vld [vmem:[%s1 + $0x40] sm:$0xf]
      %v590 = vld [vmem:[%s1 + $0x44] sm:$0xf]
      %v591 = vld [vmem:[%s1 + $0x48] sm:$0xf]
      %v592 = vld [vmem:[%s1 + $0x4c] sm:$0xf]
      %v593 = vld [vmem:[%s1 + $0x50] sm:$0xf]
      %v594 = vld [vmem:[%s1 + $0x54] sm:$0xf]
      %v595 = vld [vmem:[%s1 + $0x58] sm:$0xf]
      %v596 = vld [vmem:[%s1 + $0x5c] sm:$0xf]
      %v597 = vld [vmem:[%s1 + $0x60] sm:$0xf]
      %v598 = vld [vmem:[%s1 + $0x64] sm:$0xf]
      %v599 = vld [vmem:[%s1 + $0x68] sm:$0xf]
      %v600 = vld [vmem:[%s1 + $0x6c] sm:$0xf]
      %v601 = vld [vmem:[%s1 + $0x70] sm:$0xf]
      %v602 = vld [vmem:[%s1 + $0x74] sm:$0xf]
      %v603 = vld [vmem:[%s1 + $0x78] sm:$0xf]
      %v604 = vld [vmem:[%s1 + $0x7c] sm:$0xf]
      %v605 = vld [vmem:[%s1 + $0x80] sm:$0xf]
      %v606 = vld [vmem:[%s1 + $0x84] sm:$0xf]
      %v607 = vld [vmem:[%s1 + $0x88] sm:$0xf]
      %v608 = vld [vmem:[%s1 + $0x8c] sm:$0xf]
      %v609 = vld [vmem:[%s1 + $0x90] sm:$0xf]
      %v610 = vld [vmem:[%s1 + $0x94] sm:$0xf]
      %v611 = vld [vmem:[%s1 + $0x98] sm:$0xf]
      %v612 = vld [vmem:[%s1 + $0x9c] sm:$0xf]
      %v613 = vld [vmem:[%s1 + $0xa0] sm:$0xf]
      %v614 = vld [vmem:[%s1 + $0xa4] sm:$0xf]
      %v615 = vld [vmem:[%s1 + $0xa8] sm:$0xf]
      %v616 = vld [vmem:[%s1 + $0xac] sm:$0xf]
      %v617 = vld [vmem:[%s1 + $0xb0] sm:$0xf]
      %v618 = vld [vmem:[%s1 + $0xb4] sm:$0xf]
      %v619 = vld [vmem:[%s1 + $0xb8] sm:$0xf]
      %v620 = vld [vmem:[%s1 + $0xbc] sm:$0xf]
      %v621 = vld [vmem:[%s1 + $0xc0] sm:$0xf]
      %v622 = vld [vmem:[%s1 + $0xc4] sm:$0xf]
      %v623 = vld [vmem:[%s1 + $0xc8] sm:$0xf]
      %v624 = vld [vmem:[%s1 + $0xcc] sm:$0xf]
      %v625 = vld [vmem:[%s1 + $0xd0] sm:$0xf]
      %v626 = vld [vmem:[%s1 + $0xd4] sm:$0xf]
      %v627 = vld [vmem:[%s1 + $0xd8] sm:$0xf]
      %v628 = vld [vmem:[%s1 + $0xdc] sm:$0xf]
      %v629 = vld [vmem:[%s1 + $0xe0] sm:$0xf]
      %v630 = vld [vmem:[%s1 + $0xe4] sm:$0xf]
      %v631 = vld [vmem:[%s1 + $0xe8] sm:$0xf]
      %v632 = vld [vmem:[%s1 + $0xec] sm:$0xf]
      %v633 = vld [vmem:[%s1 + $0xf0] sm:$0xf]
      %v634 = vld [vmem:[%s1 + $0xf4] sm:$0xf]
      %v635 = vld [vmem:[%s1 + $0xf8] sm:$0xf]
      %v636 = vld [vmem:[%s1 + $0xfc] sm:$0xf]
      %v637 = vld [vmem:[%s1 + $0x100] sm:$0xf]
      %v638 = vld [vmem:[%s1 + $0x104] sm:$0xf]
      %v639 = vld [vmem:[%s1 + $0x108] sm:$0xf]
      %v640 = vld [vmem:[%s1 + $0x10c] sm:$0xf]
      %v641 = vld [vmem:[%s1 + $0x110] sm:$0xf]
      %v642 = vld [vmem:[%s1 + $0x114] sm:$0xf]
      %v643 = vld [vmem:[%s1 + $0x118] sm:$0xf]
      %v644 = vld [vmem:[%s1 + $0x11c] sm:$0xf]
      %v645 = vld [vmem:[%s1 + $0x120] sm:$0xf]
      %v646 = vld [vmem:[%s1 + $0x124] sm:$0xf]
      %v647 = vld [vmem:[%s1 + $0x128] sm:$0xf]
      %v648 = vld [vmem:[%s1 + $0x12c] sm:$0xf]
      %v649 = vld [vmem:[%s1 + $0x130] sm:$0xf]
      %v650 = vld [vmem:[%s1 + $0x134] sm:$0xf]
      %v651 = vld [vmem:[%s1 + $0x138] sm:$0xf]
      %v652 = vld [vmem:[%s1 + $0x13c] sm:$0xf]
      %v653 = vld [vmem:[%s1 + $0x140] sm:$0xf]
      %v654 = vld [vmem:[%s1 + $0x144] sm:$0xf]
      %v655 = vld [vmem:[%s1 + $0x148] sm:$0xf]
      %v656 = vld [vmem:[%s1 + $0x14c] sm:$0xf]
      %v657 = vld [vmem:[%s1 + $0x150] sm:$0xf]
      %v658 = vld [vmem:[%s1 + $0x154] sm:$0xf]
      %v659 = vld [vmem:[%s1 + $0x158] sm:$0xf]
      %v660 = vld [vmem:[%s1 + $0x15c] sm:$0xf]
      %v661 = vld [vmem:[%s1 + $0x160] sm:$0xf]
      %v662 = vld [vmem:[%s1 + $0x164] sm:$0xf]
      %v663 = vld [vmem:[%s1 + $0x168] sm:$0xf]
      %v664 = vld [vmem:[%s1 + $0x16c] sm:$0xf]
      %v665 = vld [vmem:[%s1 + $0x170] sm:$0xf]
      %v666 = vld [vmem:[%s1 + $0x174] sm:$0xf]
      %v667 = vld [vmem:[%s1 + $0x178] sm:$0xf]
      %v668 = vld [vmem:[%s1 + $0x17c] sm:$0xf]
      %v669 = vld [vmem:[%s1 + $0x180] sm:$0xf]
      %v670 = vld [vmem:[%s1 + $0x184] sm:$0xf]
      %v671 = vld [vmem:[%s1 + $0x188] sm:$0xf]
      %v672 = vld [vmem:[%s1 + $0x18c] sm:$0xf]
      %v673 = vld [vmem:[%s1 + $0x190] sm:$0xf]
      %v674 = vld [vmem:[%s1 + $0x194] sm:$0xf]
      %v675 = vld [vmem:[%s1 + $0x198] sm:$0xf]
      %v676 = vld [vmem:[%s1 + $0x19c] sm:$0xf]
      %v677 = vld [vmem:[%s1 + $0x1a0] sm:$0xf]
      %v678 = vld [vmem:[%s1 + $0x1a4] sm:$0xf]
      %v679 = vld [vmem:[%s1 + $0x1a8] sm:$0xf]
      %v680 = vld [vmem:[%s1 + $0x1ac] sm:$0xf]
      %v681 = vld [vmem:[%s1 + $0x1b0] sm:$0xf]
      %v682 = vld [vmem:[%s1 + $0x1b4] sm:$0xf]
      %v683 = vld [vmem:[%s1 + $0x1b8] sm:$0xf]
      %v684 = vld [vmem:[%s1 + $0x1bc] sm:$0xf]
      %v685 = vld [vmem:[%s1 + $0x1c0] sm:$0xf]
      %v686 = vld [vmem:[%s1 + $0x1c4] sm:$0xf]
      %v687 = vld [vmem:[%s1 + $0x1c8] sm:$0xf]
      %v688 = vld [vmem:[%s1 + $0x1cc] sm:$0xf]
      %v689 = vld [vmem:[%s1 + $0x1d0] sm:$0xf]
      %v690 = vld [vmem:[%s1 + $0x1d4] sm:$0xf]
      %v691 = vld [vmem:[%s1 + $0x1d8] sm:$0xf]
      %v692 = vld [vmem:[%s1 + $0x1dc] sm:$0xf]
      %v693 = vld [vmem:[%s1 + $0x1e0] sm:$0xf]
      %v694 = vld [vmem:[%s1 + $0x1e4] sm:$0xf]
      %v695 = vld [vmem:[%s1 + $0x1e8] sm:$0xf]
      %v696 = vld [vmem:[%s1 + $0x1ec] sm:$0xf]
      %v697 = vld [vmem:[%s1 + $0x1f0] sm:$0xf]
      %v698 = vld [vmem:[%s1 + $0x1f4] sm:$0xf]
      %v699 = vld [vmem:[%s1 + $0x1f8] sm:$0xf]
      %v700 = vld [vmem:[%s1 + $0x1fc] sm:$0xf]
      %v701 = vld [vmem:[%s1 + $0x200] sm:$0xf]
      %v702 = vld [vmem:[%s1 + $0x204] sm:$0xf]
      %v703 = vld [vmem:[%s1 + $0x208] sm:$0xf]
      %v704 = vld [vmem:[%s1 + $0x20c] sm:$0xf]
      %v705 = vld [vmem:[%s1 + $0x210] sm:$0xf]
      %v706 = vld [vmem:[%s1 + $0x214] sm:$0xf]
      %v707 = vld [vmem:[%s1 + $0x218] sm:$0xf]
      %v708 = vld [vmem:[%s1 + $0x21c] sm:$0xf]
      %v709 = vld [vmem:[%s1 + $0x220] sm:$0xf]
      %v710 = vld [vmem:[%s1 + $0x224] sm:$0xf]
      %v711 = vld [vmem:[%s1 + $0x228] sm:$0xf]
      %v712 = vld [vmem:[%s1 + $0x22c] sm:$0xf]
      %v713 = vld [vmem:[%s1 + $0x230] sm:$0xf]
      %v714 = vld [vmem:[%s1 + $0x234] sm:$0xf]
      %v715 = vld [vmem:[%s1 + $0x238] sm:$0xf]
      %v716 = vld [vmem:[%s1 + $0x23c] sm:$0xf]
      %v717 = vld [vmem:[%s2] sm:$0x1]
      %v719 = vlaneseq
      %v720 = vshrl.u32 %v719, 7
      %v721 = vsub.s32 0, %v720
      %v722 = vrot.slane %v717, %v721
      %v868 = vunpack.c.l.b16 %v573
      %v869 = vunpack.c.l.b16 %v574
      %v870 = vunpack.c.l.b16 %v575
      %v871 = vunpack.c.l.b16 %v576
      %v872 = vunpack.c.l.b16 %v577
      %v873 = vunpack.c.l.b16 %v578
      %v874 = vunpack.c.l.b16 %v579
      %v875 = vunpack.c.l.b16 %v580
      %v876 = vunpack.c.l.b16 %v581
      %v877 = vunpack.c.l.b16 %v582
      %v878 = vunpack.c.l.b16 %v583
      %v879 = vunpack.c.l.b16 %v584
      %v880 = vunpack.c.l.b16 %v585
      %v881 = vunpack.c.l.b16 %v586
      %v882 = vunpack.c.l.b16 %v587
      %v883 = vunpack.c.l.b16 %v588
      %v884 = vunpack.c.l.b16 %v589
      %v885 = vunpack.c.l.b16 %v590
      %v886 = vunpack.c.l.b16 %v591
      %v887 = vunpack.c.l.b16 %v592
      %v888 = vunpack.c.l.b16 %v593
      %v889 = vunpack.c.l.b16 %v594
      %v890 = vunpack.c.l.b16 %v595
      %v891 = vunpack.c.l.b16 %v596
      %v892 = vunpack.c.l.b16 %v597
      %v893 = vunpack.c.l.b16 %v598
      %v894 = vunpack.c.l.b16 %v599
      %v895 = vunpack.c.l.b16 %v600
      %v896 = vunpack.c.l.b16 %v601
      %v897 = vunpack.c.l.b16 %v602
      %v898 = vunpack.c.l.b16 %v603
      %v899 = vunpack.c.l.b16 %v604
      %v900 = vunpack.c.l.b16 %v605
      %v901 = vunpack.c.l.b16 %v606
      %v902 = vunpack.c.l.b16 %v607
      %v903 = vunpack.c.l.b16 %v608
      %v904 = vunpack.c.l.b16 %v609
      %v905 = vunpack.c.l.b16 %v610
      %v906 = vunpack.c.l.b16 %v611
      %v907 = vunpack.c.l.b16 %v612
      %v908 = vunpack.c.l.b16 %v613
      %v909 = vunpack.c.l.b16 %v614
      %v910 = vunpack.c.l.b16 %v615
      %v911 = vunpack.c.l.b16 %v616
      %v912 = vunpack.c.l.b16 %v617
      %v913 = vunpack.c.l.b16 %v618
      %v914 = vunpack.c.l.b16 %v619
      %v915 = vunpack.c.l.b16 %v620
      %v916 = vunpack.c.l.b16 %v621
      %v917 = vunpack.c.l.b16 %v622
      %v918 = vunpack.c.l.b16 %v623
      %v919 = vunpack.c.l.b16 %v624
      %v920 = vunpack.c.l.b16 %v625
      %v921 = vunpack.c.l.b16 %v626
      %v922 = vunpack.c.l.b16 %v627
      %v923 = vunpack.c.l.b16 %v628
      %v924 = vunpack.c.l.b16 %v629
      %v925 = vunpack.c.l.b16 %v630
      %v926 = vunpack.c.l.b16 %v631
      %v927 = vunpack.c.l.b16 %v632
      %v928 = vunpack.c.l.b16 %v633
      %v929 = vunpack.c.l.b16 %v634
      %v930 = vunpack.c.l.b16 %v635
      %v931 = vunpack.c.l.b16 %v636
      %v932 = vunpack.c.l.b16 %v637
      %v933 = vunpack.c.l.b16 %v638
      %v934 = vunpack.c.l.b16 %v639
      %v935 = vunpack.c.l.b16 %v640
      %v936 = vunpack.c.l.b16 %v641
      %v937 = vunpack.c.l.b16 %v642
      %v938 = vunpack.c.l.b16 %v643
      %v939 = vunpack.c.l.b16 %v644
      %v940 = vunpack.c.l.b16 %v645
      %v941 = vunpack.c.l.b16 %v646
      %v942 = vunpack.c.l.b16 %v647
      %v943 = vunpack.c.l.b16 %v648
      %v944 = vunpack.c.l.b16 %v649
      %v945 = vunpack.c.l.b16 %v650
      %v946 = vunpack.c.l.b16 %v651
      %v947 = vunpack.c.l.b16 %v652
      %v948 = vunpack.c.l.b16 %v653
      %v949 = vunpack.c.l.b16 %v654
      %v950 = vunpack.c.l.b16 %v655
      %v951 = vunpack.c.l.b16 %v656
      %v952 = vunpack.c.l.b16 %v657
      %v953 = vunpack.c.l.b16 %v658
      %v954 = vunpack.c.l.b16 %v659
      %v955 = vunpack.c.l.b16 %v660
      %v956 = vunpack.c.l.b16 %v661
      %v957 = vunpack.c.l.b16 %v662
      %v958 = vunpack.c.l.b16 %v663
      %v959 = vunpack.c.l.b16 %v664
      %v960 = vunpack.c.l.b16 %v665
      %v961 = vunpack.c.l.b16 %v666
      %v962 = vunpack.c.l.b16 %v667
      %v963 = vunpack.c.l.b16 %v668
      %v964 = vunpack.c.l.b16 %v669
      %v965 = vunpack.c.l.b16 %v670
      %v966 = vunpack.c.l.b16 %v671
      %v967 = vunpack.c.l.b16 %v672
      %v968 = vunpack.c.l.b16 %v673
      %v969 = vunpack.c.l.b16 %v674
      %v970 = vunpack.c.l.b16 %v675
      %v971 = vunpack.c.l.b16 %v676
      %v972 = vunpack.c.l.b16 %v677
      %v973 = vunpack.c.l.b16 %v678
      %v974 = vunpack.c.l.b16 %v679
      %v975 = vunpack.c.l.b16 %v680
      %v976 = vunpack.c.l.b16 %v681
      %v977 = vunpack.c.l.b16 %v682
      %v978 = vunpack.c.l.b16 %v683
      %v979 = vunpack.c.l.b16 %v684
      %v980 = vunpack.c.l.b16 %v685
      %v981 = vunpack.c.l.b16 %v686
      %v982 = vunpack.c.l.b16 %v687
      %v983 = vunpack.c.l.b16 %v688
      %v984 = vunpack.c.l.b16 %v689
      %v985 = vunpack.c.l.b16 %v690
      %v986 = vunpack.c.l.b16 %v691
      %v987 = vunpack.c.l.b16 %v692
      %v988 = vunpack.c.l.b16 %v693
      %v989 = vunpack.c.l.b16 %v694
      %v990 = vunpack.c.l.b16 %v695
      %v991 = vunpack.c.l.b16 %v696
      %v992 = vunpack.c.l.b16 %v697
      %v993 = vunpack.c.l.b16 %v698
      %v994 = vunpack.c.l.b16 %v699
      %v995 = vunpack.c.l.b16 %v700
      %v996 = vunpack.c.l.b16 %v701
      %v997 = vunpack.c.l.b16 %v702
      %v998 = vunpack.c.l.b16 %v703
      %v999 = vunpack.c.l.b16 %v704
      %v1000 = vunpack.c.l.b16 %v705
      %v1001 = vunpack.c.l.b16 %v706
      %v1002 = vunpack.c.l.b16 %v707
      %v1003 = vunpack.c.l.b16 %v708
      %v1004 = vunpack.c.l.b16 %v709
      %v1005 = vunpack.c.l.b16 %v710
      %v1006 = vunpack.c.l.b16 %v711
      %v1007 = vunpack.c.l.b16 %v712
      %v1008 = vunpack.c.l.b16 %v713
      %v1009 = vunpack.c.l.b16 %v714
      %v1010 = vunpack.c.l.b16 %v715
      %v1011 = vunpack.c.l.b16 %v716
      %v1012 = vpack.c.b16 %v869, %v868
      %v1013 = vpack.c.b16 %v871, %v870
      %v1014 = vpack.c.b16 %v873, %v872
      %v1015 = vpack.c.b16 %v875, %v874
      %v1016 = vpack.c.b16 %v877, %v876
      %v1017 = vpack.c.b16 %v879, %v878
      %v1018 = vpack.c.b16 %v881, %v880
      %v1019 = vpack.c.b16 %v883, %v882
      %v1020 = vpack.c.b16 %v885, %v884
      %v1021 = vpack.c.b16 %v887, %v886
      %v1022 = vpack.c.b16 %v889, %v888
      %v1023 = vpack.c.b16 %v891, %v890
      %v1024 = vpack.c.b16 %v893, %v892
      %v1025 = vpack.c.b16 %v895, %v894
      %v1026 = vpack.c.b16 %v897, %v896
      %v1027 = vpack.c.b16 %v899, %v898
      %v1028 = vpack.c.b16 %v901, %v900
      %v1029 = vpack.c.b16 %v903, %v902
      %v1030 = vpack.c.b16 %v905, %v904
      %v1031 = vpack.c.b16 %v907, %v906
      %v1032 = vpack.c.b16 %v909, %v908
      %v1033 = vpack.c.b16 %v911, %v910
      %v1034 = vpack.c.b16 %v913, %v912
      %v1035 = vpack.c.b16 %v915, %v914
      %v1036 = vpack.c.b16 %v917, %v916
      %v1037 = vpack.c.b16 %v919, %v918
      %v1038 = vpack.c.b16 %v921, %v920
      %v1039 = vpack.c.b16 %v923, %v922
      %v1040 = vpack.c.b16 %v925, %v924
      %v1041 = vpack.c.b16 %v927, %v926
      %v1042 = vpack.c.b16 %v929, %v928
      %v1043 = vpack.c.b16 %v931, %v930
      %v1044 = vpack.c.b16 %v933, %v932
      %v1045 = vpack.c.b16 %v935, %v934
      %v1046 = vpack.c.b16 %v937, %v936
      %v1047 = vpack.c.b16 %v939, %v938
      %v1048 = vpack.c.b16 %v941, %v940
      %v1049 = vpack.c.b16 %v943, %v942
      %v1050 = vpack.c.b16 %v945, %v944
      %v1051 = vpack.c.b16 %v947, %v946
      %v1052 = vpack.c.b16 %v949, %v948
      %v1053 = vpack.c.b16 %v951, %v950
      %v1054 = vpack.c.b16 %v953, %v952
      %v1055 = vpack.c.b16 %v955, %v954
      %v1056 = vpack.c.b16 %v957, %v956
      %v1057 = vpack.c.b16 %v959, %v958
      %v1058 = vpack.c.b16 %v961, %v960
      %v1059 = vpack.c.b16 %v963, %v962
      %v1060 = vpack.c.b16 %v965, %v964
      %v1061 = vpack.c.b16 %v967, %v966
      %v1062 = vpack.c.b16 %v969, %v968
      %v1063 = vpack.c.b16 %v971, %v970
      %v1064 = vpack.c.b16 %v973, %v972
      %v1065 = vpack.c.b16 %v975, %v974
      %v1066 = vpack.c.b16 %v977, %v976
      %v1067 = vpack.c.b16 %v979, %v978
      %v1068 = vpack.c.b16 %v981, %v980
      %v1069 = vpack.c.b16 %v983, %v982
      %v1070 = vpack.c.b16 %v985, %v984
      %v1071 = vpack.c.b16 %v987, %v986
      %v1072 = vpack.c.b16 %v989, %v988
      %v1073 = vpack.c.b16 %v991, %v990
      %v1074 = vpack.c.b16 %v993, %v992
      %v1075 = vpack.c.b16 %v995, %v994
      %v1076 = vpack.c.b16 %v997, %v996
      %v1077 = vpack.c.b16 %v999, %v998
      %v1078 = vpack.c.b16 %v1001, %v1000
      %v1079 = vpack.c.b16 %v1003, %v1002
      %v1080 = vpack.c.b16 %v1005, %v1004
      %v1081 = vpack.c.b16 %v1007, %v1006
      %v1082 = vpack.c.b16 %v1009, %v1008
      %v1083 = vpack.c.b16 %v1011, %v1010
      %1156 = vmatprep.subr.bf16.mxu0 0
      %1157 = vmatpush1.bf16.msra.mxu0 %v1019
      %1158 = vmatprep.subr.bf16.mxu0 0
      %1159 = vmatpush1.bf16.msra.mxu0 %v1018
      %1160 = vmatprep.subr.bf16.mxu0 0
      %1161 = vmatpush1.bf16.msra.mxu0 %v1017
      %1162 = vmatprep.subr.bf16.mxu0 0
      %1163 = vmatpush1.bf16.msra.mxu0 %v1016
      %1164 = vmatprep.subr.bf16.mxu0 0
      %1165 = vmatpush1.bf16.msra.mxu0 %v1015
      %1166 = vmatprep.subr.bf16.mxu0 0
      %1167 = vmatpush1.bf16.msra.mxu0 %v1014
      %1168 = vmatprep.subr.bf16.mxu0 0
      %1169 = vmatpush1.bf16.msra.mxu0 %v1013
      %1170 = vmatprep.subr.bf16.mxu0 0
      %1171 = vmatpush1.bf16.msra.mxu0 %v1012
      %1172 = vmatprep.subr.bf16.mxu0 0
      %1173 = vmatpush2.bf16.msra.mxu0 %v1027
      %1174 = vmatprep.subr.bf16.mxu0 0
      %1175 = vmatpush2.bf16.msra.mxu0 %v1026
      %1176 = vmatprep.subr.bf16.mxu0 0
      %1177 = vmatpush2.bf16.msra.mxu0 %v1025
      %1178 = vmatprep.subr.bf16.mxu0 0
      %1179 = vmatpush2.bf16.msra.mxu0 %v1024
      %1180 = vmatprep.subr.bf16.mxu0 0
      %1181 = vmatpush2.bf16.msra.mxu0 %v1023
      %1182 = vmatprep.subr.bf16.mxu0 0
      %1183 = vmatpush2.bf16.msra.mxu0 %v1022
      %1184 = vmatprep.subr.bf16.mxu0 0
      %1185 = vmatpush2.bf16.msra.mxu0 %v1021
      %1186 = vmatprep.subr.bf16.mxu0 0
      %1187 = vmatpush2.bf16.msra.mxu0 %v1020
      %1188 = vmatprep.mubr.bf16.mxu0 %v505
      %1189 = vmatmul.mubr.bf16.gmra.mxu0 %v497
      %v1190 = vpop.f32.mrf.mxu0
      %v1191 = vadd.f32 %v722, %v1190
      %v1192 = vpop.f32.mrf.mxu0
      %v1193 = vpop.f32.mrf.mxu0
      %v1194 = vadd.f32 %v722, %v1193
      %v1195 = vpop.f32.mrf.mxu0
      %1196 = vmatprep.mubr.bf16.mxu0 %v506
      %1197 = vmatmul.mubr.bf16.gmra.mxu0 %v498
      %v1198 = vpop.f32.mrf.mxu0
      %v1199 = vadd.f32 %v722, %v1198
      %v1200 = vpop.f32.mrf.mxu0
      %v1201 = vpop.f32.mrf.mxu0
      %v1202 = vadd.f32 %v722, %v1201
      %v1203 = vpop.f32.mrf.mxu0
      %1204 = vdwg.mxu0
      %1205 = vmatprep.subr.bf16.mxu0 0
      %1206 = vmatpush1.bf16.msra.mxu0 %v1035
      %1207 = vmatprep.subr.bf16.mxu0 0
      %1208 = vmatpush1.bf16.msra.mxu0 %v1034
      %1209 = vmatprep.subr.bf16.mxu0 0
      %1210 = vmatpush1.bf16.msra.mxu0 %v1033
      %1211 = vmatprep.subr.bf16.mxu0 0
      %1212 = vmatpush1.bf16.msra.mxu0 %v1032
      %1213 = vmatprep.subr.bf16.mxu0 0
      %1214 = vmatpush1.bf16.msra.mxu0 %v1031
      %1215 = vmatprep.subr.bf16.mxu0 0
      %1216 = vmatpush1.bf16.msra.mxu0 %v1030
      %1217 = vmatprep.subr.bf16.mxu0 0
      %1218 = vmatpush1.bf16.msra.mxu0 %v1029
      %1219 = vmatprep.subr.bf16.mxu0 0
      %1220 = vmatpush1.bf16.msra.mxu0 %v1028
      %1221 = vmatprep.subr.bf16.mxu0 0
      %1222 = vmatpush2.bf16.msra.mxu0 %v1043
      %1223 = vmatprep.subr.bf16.mxu0 0
      %1224 = vmatpush2.bf16.msra.mxu0 %v1042
      %1225 = vmatprep.subr.bf16.mxu0 0
      %1226 = vmatpush2.bf16.msra.mxu0 %v1041
      %1227 = vmatprep.subr.bf16.mxu0 0
      %1228 = vmatpush2.bf16.msra.mxu0 %v1040
      %1229 = vmatprep.subr.bf16.mxu0 0
      %1230 = vmatpush2.bf16.msra.mxu0 %v1039
      %1231 = vmatprep.subr.bf16.mxu0 0
      %1232 = vmatpush2.bf16.msra.mxu0 %v1038
      %1233 = vmatprep.subr.bf16.mxu0 0
      %1234 = vmatpush2.bf16.msra.mxu0 %v1037
      %1235 = vmatprep.subr.bf16.mxu0 0
      %1236 = vmatpush2.bf16.msra.mxu0 %v1036
      %1237 = vmatprep.mubr.bf16.mxu0 %v525
      %1238 = vmatmul.mubr.bf16.gmra.mxu0 %v513
      %v1239 = vpop.f32.mrf.mxu0
      %v1240 = vadd.f32 %v1191, %v1239
      %v1241 = vpop.f32.mrf.mxu0
      %v1242 = vpop.f32.mrf.mxu0
      %v1243 = vadd.f32 %v1194, %v1242
      %v1244 = vpop.f32.mrf.mxu0
      %1245 = vmatprep.mubr.bf16.mxu0 %v526
      %1246 = vmatmul.mubr.bf16.gmra.mxu0 %v514
      %v1247 = vpop.f32.mrf.mxu0
      %v1248 = vadd.f32 %v1199, %v1247
      %v1249 = vpop.f32.mrf.mxu0
      %v1250 = vpop.f32.mrf.mxu0
      %v1251 = vadd.f32 %v1202, %v1250
      %v1252 = vpop.f32.mrf.mxu0
      %1253 = vdwg.mxu0
      %1254 = vmatprep.subr.bf16.mxu0 0
      %1255 = vmatpush1.bf16.msra.mxu0 %v1051
      %1256 = vmatprep.subr.bf16.mxu0 0
      %1257 = vmatpush1.bf16.msra.mxu0 %v1050
      %1258 = vmatprep.subr.bf16.mxu0 0
      %1259 = vmatpush1.bf16.msra.mxu0 %v1049
      %1260 = vmatprep.subr.bf16.mxu0 0
      %1261 = vmatpush1.bf16.msra.mxu0 %v1048
      %1262 = vmatprep.subr.bf16.mxu0 0
      %1263 = vmatpush1.bf16.msra.mxu0 %v1047
      %1264 = vmatprep.subr.bf16.mxu0 0
      %1265 = vmatpush1.bf16.msra.mxu0 %v1046
      %1266 = vmatprep.subr.bf16.mxu0 0
      %1267 = vmatpush1.bf16.msra.mxu0 %v1045
      %1268 = vmatprep.subr.bf16.mxu0 0
      %1269 = vmatpush1.bf16.msra.mxu0 %v1044
      %1270 = vmatprep.subr.bf16.mxu0 0
      %1271 = vmatpush2.bf16.msra.mxu0 %v1059
      %1272 = vmatprep.subr.bf16.mxu0 0
      %1273 = vmatpush2.bf16.msra.mxu0 %v1058
      %1274 = vmatprep.subr.bf16.mxu0 0
      %1275 = vmatpush2.bf16.msra.mxu0 %v1057
      %1276 = vmatprep.subr.bf16.mxu0 0
      %1277 = vmatpush2.bf16.msra.mxu0 %v1056
      %1278 = vmatprep.subr.bf16.mxu0 0
      %1279 = vmatpush2.bf16.msra.mxu0 %v1055
      %1280 = vmatprep.subr.bf16.mxu0 0
      %1281 = vmatpush2.bf16.msra.mxu0 %v1054
      %1282 = vmatprep.subr.bf16.mxu0 0
      %1283 = vmatpush2.bf16.msra.mxu0 %v1053
      %1284 = vmatprep.subr.bf16.mxu0 0
      %1285 = vmatpush2.bf16.msra.mxu0 %v1052
      %1286 = vmatprep.mubr.bf16.mxu0 %v541
      %1287 = vmatmul.mubr.bf16.gmra.mxu0 %v533
      %v1288 = vpop.f32.mrf.mxu0
      %v1289 = vadd.f32 %v1240, %v1288
      %v1290 = vpop.f32.mrf.mxu0
      %v1291 = vpop.f32.mrf.mxu0
      %v1292 = vadd.f32 %v1243, %v1291
      %v1293 = vpop.f32.mrf.mxu0
      %1294 = vmatprep.mubr.bf16.mxu0 %v542
      %1295 = vmatmul.mubr.bf16.gmra.mxu0 %v534
      %v1296 = vpop.f32.mrf.mxu0
      %v1297 = vadd.f32 %v1248, %v1296
      %v1298 = vpop.f32.mrf.mxu0
      %v1299 = vpop.f32.mrf.mxu0
      %v1300 = vadd.f32 %v1251, %v1299
      %v1301 = vpop.f32.mrf.mxu0
      %1302 = vdwg.mxu0
      %1303 = vmatprep.subr.bf16.mxu0 0
      %1304 = vmatpush1.bf16.msra.mxu0 %v1067
      %1305 = vmatprep.subr.bf16.mxu0 0
      %1306 = vmatpush1.bf16.msra.mxu0 %v1066
      %1307 = vmatprep.subr.bf16.mxu0 0
      %1308 = vmatpush1.bf16.msra.mxu0 %v1065
      %1309 = vmatprep.subr.bf16.mxu0 0
      %1310 = vmatpush1.bf16.msra.mxu0 %v1064
      %1311 = vmatprep.subr.bf16.mxu0 0
      %1312 = vmatpush1.bf16.msra.mxu0 %v1063
      %1313 = vmatprep.subr.bf16.mxu0 0
      %1314 = vmatpush1.bf16.msra.mxu0 %v1062
      %1315 = vmatprep.subr.bf16.mxu0 0
      %1316 = vmatpush1.bf16.msra.mxu0 %v1061
      %1317 = vmatprep.subr.bf16.mxu0 0
      %1318 = vmatpush1.bf16.msra.mxu0 %v1060
      %1319 = vmatprep.subr.bf16.mxu0 0
      %1320 = vmatpush2.bf16.msra.mxu0 %v1075
      %1321 = vmatprep.subr.bf16.mxu0 0
      %1322 = vmatpush2.bf16.msra.mxu0 %v1074
      %1323 = vmatprep.subr.bf16.mxu0 0
      %1324 = vmatpush2.bf16.msra.mxu0 %v1073
      %1325 = vmatprep.subr.bf16.mxu0 0
      %1326 = vmatpush2.bf16.msra.mxu0 %v1072
      %1327 = vmatprep.subr.bf16.mxu0 0
      %1328 = vmatpush2.bf16.msra.mxu0 %v1071
      %1329 = vmatprep.subr.bf16.mxu0 0
      %1330 = vmatpush2.bf16.msra.mxu0 %v1070
      %1331 = vmatprep.subr.bf16.mxu0 0
      %1332 = vmatpush2.bf16.msra.mxu0 %v1069
      %1333 = vmatprep.subr.bf16.mxu0 0
      %1334 = vmatpush2.bf16.msra.mxu0 %v1068
      %1335 = vmatprep.mubr.bf16.mxu0 %v561
      %1336 = vmatmul.mubr.bf16.gmra.mxu0 %v553
      %v1337 = vpop.f32.mrf.mxu0
      %v1338 = vadd.f32 %v1289, %v1337
      %v1339 = vpop.f32.mrf.mxu0
      %v1340 = vpop.f32.mrf.mxu0
      %v1341 = vadd.f32 %v1292, %v1340
      %v1342 = vpop.f32.mrf.mxu0
      %1343 = vmatprep.mubr.bf16.mxu0 %v562
      %1344 = vmatmul.mubr.bf16.gmra.mxu0 %v554
      %v1345 = vpop.f32.mrf.mxu0
      %v1346 = vadd.f32 %v1297, %v1345
      %v1347 = vpop.f32.mrf.mxu0
      %v1348 = vpop.f32.mrf.mxu0
      %v1349 = vadd.f32 %v1300, %v1348
      %v1350 = vpop.f32.mrf.mxu0
      %1351 = vdwg.mxu0
      %1352 = vmatprep.subr.bf16.mxu0 0
      %1353 = vmatpush1.bf16.msra.mxu0 %v1083
      %1354 = vmatprep.subr.bf16.mxu0 0
      %1355 = vmatpush1.bf16.msra.mxu0 %v1082
      %1356 = vmatprep.subr.bf16.mxu0 0
      %1357 = vmatpush1.bf16.msra.mxu0 %v1081
      %1358 = vmatprep.subr.bf16.mxu0 0
      %1359 = vmatpush1.bf16.msra.mxu0 %v1080
      %1360 = vmatprep.subr.bf16.mxu0 0
      %1361 = vmatpush1.bf16.msra.mxu0 %v1079
      %1362 = vmatprep.subr.bf16.mxu0 0
      %1363 = vmatpush1.bf16.msra.mxu0 %v1078
      %1364 = vmatprep.subr.bf16.mxu0 0
      %1365 = vmatpush1.bf16.msra.mxu0 %v1077
      %1366 = vmatprep.subr.bf16.mxu0 0
      %1367 = vmatpush1.bf16.msra.mxu0 %v1076
      %1368 = vmatprep.subr.bf16.mxu0 0
      %1369 = vmatpush2.bf16.msra.mxu0 0
      %1370 = vmatprep.subr.bf16.mxu0 0
      %1371 = vmatpush2.bf16.msra.mxu0 0
      %1372 = vmatprep.subr.bf16.mxu0 0
      %1373 = vmatpush2.bf16.msra.mxu0 0
      %1374 = vmatprep.subr.bf16.mxu0 0
      %1375 = vmatpush2.bf16.msra.mxu0 0
      %1376 = vmatprep.subr.bf16.mxu0 0
      %1377 = vmatpush2.bf16.msra.mxu0 0
      %1378 = vmatprep.subr.bf16.mxu0 0
      %1379 = vmatpush2.bf16.msra.mxu0 0
      %1380 = vmatprep.subr.bf16.mxu0 0
      %1381 = vmatpush2.bf16.msra.mxu0 0
      %1382 = vmatprep.subr.bf16.mxu0 0
      %1383 = vmatpush2.bf16.msra.mxu0 0
      %1384 = vmatprep.mubr.bf16.mxu0 0
      %1385 = vmatmul.mubr.bf16.gmra.mxu0 %v569
      %v1386 = vpop.f32.mrf.mxu0
      %v1387 = vadd.f32 %v1338, %v1386
      %v1388 = vpop.f32.mrf.mxu0
      %v1389 = vpop.f32.mrf.mxu0
      %v1390 = vadd.f32 %v1341, %v1389
      %v1391 = vpop.f32.mrf.mxu0
      %1392 = vmatprep.mubr.bf16.mxu0 0
      %1393 = vmatmul.mubr.bf16.gmra.mxu0 %v570
      %v1394 = vpop.f32.mrf.mxu0
      %v1395 = vadd.f32 %v1346, %v1394
      %v1396 = vpop.f32.mrf.mxu0
      %v1397 = vpop.f32.mrf.mxu0
      %v1398 = vadd.f32 %v1349, %v1397
      %v1399 = vpop.f32.mrf.mxu0
      %1400 = vdwg.mxu0
      %v1401 = vand.u32 2147483647, %v1387
      %v1402 = vand.u32 2147483647, %v1390
      %v1403 = vand.u32 2147483647, %v1395
      %v1404 = vand.u32 2147483647, %v1398
      %v1405 = vsub.f32 0.0, %v1401
      %v1406 = vsub.f32 0.0, %v1402
      %v1407 = vsub.f32 0.0, %v1403
      %v1408 = vsub.f32 0.0, %v1404
      %v1409 = vmul.f32 %v1405, 1.442695
      %v1410 = vpow.pop %v1409
      %v1411 = vmul.f32 %v1406, 1.442695
      %v1412 = vpow.pop %v1411
      %v1413 = vmul.f32 %v1407, 1.442695
      %v1414 = vpow.pop %v1413
      %v1415 = vmul.f32 %v1408, 1.442695
      %v1416 = vpow.pop %v1415
      %v1417 = vadd.f32 %v1410, 1.0
      %v1418 = vadd.f32 %v1412, 1.0
      %v1419 = vadd.f32 %v1414, 1.0
      %v1420 = vadd.f32 %v1416, 1.0
      %v1421 = vrcp.pop %v1417
      %v1422 = vrcp.pop %v1418
      %v1423 = vrcp.pop %v1419
      %v1424 = vrcp.pop %v1420
      %vm1425 = vcmp.ge.f32.partialorder %v1387, 0.0
      %vm1426 = vcmp.ge.f32.partialorder %v1390, 0.0
      %vm1427 = vcmp.ge.f32.partialorder %v1395, 0.0
      %vm1428 = vcmp.ge.f32.partialorder %v1398, 0.0
      %v1429 = vmul.f32 %v1410, %v1421
      %v1430 = vmul.f32 %v1412, %v1422
      %v1431 = vmul.f32 %v1414, %v1423
      %v1432 = vmul.f32 %v1416, %v1424
      %v1433 = vsel %vm1425, %v1421, %v1429
      %v1434 = vsel %vm1426, %v1422, %v1430
      %v1435 = vsel %vm1427, %v1423, %v1431
      %v1436 = vsel %vm1428, %v1424, %v1432
      %v1437 = vmul.f32 %v1387, %v1433
      %v1438 = vmul.f32 %v1390, %v1434
      %v1439 = vmul.f32 %v1395, %v1435
      %v1440 = vmul.f32 %v1398, %v1436
      %v1441 = vpack.c.bf16 %v1438, %v1437
      %v1442 = vpack.c.bf16 %v1440, %v1439
      %v1445 = vunpack.c.l.b16 %v1441
      %v1446 = vunpack.c.h.b16 %v1441
      %v1447 = vunpack.c.l.b16 %v1442
      %v1448 = vunpack.c.h.b16 %v1442
      %v1449 = vpack.c.b16 %v1445, %v1445
      %v1450 = vpack.c.b16 %v1446, %v1446
      %v1451 = vpack.c.b16 %v1447, %v1447
      %v1452 = vpack.c.b16 %v1448, %v1448
      %1457 = vst [vmem:[%s192] sm:$0xf] %v1449
      %1458 = vst [vmem:[%s192 + $0x4] sm:$0xf] %v1450
      %1459 = vst [vmem:[%s192 + $0x8] sm:$0xf] %v1451
      %1460 = vst [vmem:[%s192 + $0xc] sm:$0xf] %v1452
      %s1461 = smul.u32 4, %s19
      %p1462 = scmp.lt.s32.totalorder %s18, 1
      %s1463 = scalar_select %p1462, %s18, 1
      %p1464 = scmp.lt.s32.totalorder %s1461, 7
      %s1465 = scalar_select %p1464, %s1461, 7
      %s1466 = smul.addr %s1463, 8
      %s1467 = sadd.s32 %s1465, %s1466
      %s1468 = smul.addr %s1467, 4
      %s1469 = scalar_lea.vmem %s3, %s1468
      // Predicated region
      $region33: #{_lambda_.9} parent=31 // pred_check
        %p1470 = pneg %p114
      $region34: #{_lambda_.9} parent=31 // pred_check_branch
        %1472 = sbr.rel (%p1470) target = $region36
      $region35: #{_lambda_.9} parent=31 // pred_region
        %s1473 = smul.u32 4, %s19
      $region36: #{_lambda_.9} parent=31 // pred_fallthru
        _
    $region32: #{_lambda_.9} parent=5 // pred_fallthru
      _
    %p1474 = scmp.le.s32.totalorder 2, %s9
    // Predicated region
    $region37: #{_lambda_.9} parent=5 // pred_check
      %p1475 = pneg %p1474
    $region38: #{_lambda_.9} parent=5 // pred_check_branch
      %1477 = sbr.rel (%p1475) target = $region40
    $region39: #{_lambda_.9} parent=5 // pred_region
      %s1478 = ssub.s32 %s9, 2
      // Predicated region
      $region41: #{_lambda_.9} parent=39 // pred_check
        %p1479 = pneg %p120
      $region42: #{_lambda_.9} parent=39 // pred_check_branch
        %1481 = sbr.rel (%p1479) target = $region44
      $region43: #{_lambda_.9} parent=39 // pred_region
        %s1482 = smul.u32 4, %s21
        %p1483 = scmp.lt.s32.totalorder %s20, 1
        %s1484 = scalar_select %p1483, %s20, 1
        %p1485 = scmp.lt.s32.totalorder %s1482, 7
        %s1486 = scalar_select %p1485, %s1482, 7
        %s1487 = smul.addr %s1484, 8
        %s1488 = sadd.s32 %s1486, %s1487
        %s1489 = smul.addr %s1488, 4
        %s1490 = scalar_lea.vmem %s3, %s1489
      $region44: #{_lambda_.9} parent=39 // pred_fallthru
        _
    $region40: #{_lambda_.9} parent=5 // pred_fallthru
      _
  $region6: #{_lambda_.9} parent=0 // loop_footer
    %s13 = sadd.s32 1, %s9
  $region7: #{_lambda_.9} parent=0 // loop_footer_branch
    %8 = sbr.rel target = $region3
  $region8: #{_lambda_.9} parent=0 // loop_exit
    _

// kernel: _lambda_.10
$region0: #{_lambda_.10}
  #allocation0 [shape = 'u32[]', space=smem, size = 0x4, offset = 0x4, fixed_abs, tag = 'smem constant byte address 0x4 - core index']
  #allocation1 [shape = 'u32[144,128]{1,0:T(1,128)}', space=vmem, size = 0x12000, scoped, tag = 'internal scratch']
  %s0 = inlined_call_operand.vmem [shape: bf16[8,2,4,256], index: 0, kind: input, shape index: {}]
  %s1 = inlined_call_operand.vmem [shape: bf16[8,4,128], index: 1, kind: output, shape index: {}]
  %s2 = sld [smem:[#allocation0]]
  $region37: #{_lambda_.10} parent=0
    _
  %s4 = ssub.s32 1, %s2
  %s5 = scalar_select 0, %s4, %s2
  loop: start=0, step=1, limit=4
  $region2: #{_lambda_.10} parent=0 // loop_pre_header
    _
  $region3: #{_lambda_.10} parent=0 // loop_header
    %s7 = sphi 0, %s11
    %p8 = scmp.ge.s32.totalorder %s7, 4
    %s17 = sphi 0, %s19
    %s20 = sphi 0, %s17
    %s21 = sphi 0, %s20
    %s37 = sphi 0, %s21
    %s43 = sphi 0, %s45
    %s46 = sphi 0, %s43
    %s47 = sphi 0, %s46
    %s63 = sphi 0, %s47
  $region4: #{_lambda_.10} parent=0 // loop_header_branch
    %10 = sbr.rel (%p8) target = $region8
  $region5: #{_lambda_.10} parent=0 // loop_body
    %s12 = ssub.s32 %s7, 1
    %s13 = ssub.s32 %s7, 2
    %s14 = sadd.s32 %s7, 1
    %s15 = ssub.s32 %s7, %s14
    %p16 = scmp.eq.s32.totalorder %s15, 0
    %s18 = sadd.s32 %s17, 1
    %s19 = scalar_select %p16, %s17, %s18
    %p22 = pneg %p16
    %p23 = scmp.eq.s32.totalorder %s7, 1
    %p24 = por %p22, %p23
    %p25 = scmp.ne.s32.totalorder %s17, %s20
    %p26 = scmp.eq.s32.totalorder %s7, 0
    %p27 = por %p25, %p26
    %p28 = scmp.ne.s32.totalorder %s17, %s20
    %p29 = scmp.eq.s32.totalorder %s12, 1
    %p30 = por %p28, %p29
    %p31 = scmp.ne.s32.totalorder %s20, %s21
    %p32 = scmp.eq.s32.totalorder %s12, 0
    %p33 = por %p31, %p32
    %p34 = scmp.ne.s32.totalorder %s20, %s21
    %p35 = scmp.eq.s32.totalorder %s13, 1
    %p36 = por %p34, %p35
    %p38 = scmp.ne.s32.totalorder %s21, %s37
    %p39 = scmp.eq.s32.totalorder %s13, 0
    %p40 = por %p38, %p39
    %s41 = ssub.s32 %s7, %s14
    %p42 = scmp.eq.s32.totalorder %s41, 0
    %s44 = sadd.s32 %s43, 1
    %s45 = scalar_select %p42, %s43, %s44
    %p48 = pneg %p42
    %p49 = scmp.eq.s32.totalorder %s7, 1
    %p50 = por %p48, %p49
    %p51 = scmp.ne.s32.totalorder %s43, %s46
    %p52 = scmp.eq.s32.totalorder %s7, 0
    %p53 = por %p51, %p52
    %p54 = scmp.ne.s32.totalorder %s43, %s46
    %p55 = scmp.eq.s32.totalorder %s12, 1
    %p56 = por %p54, %p55
    %p57 = scmp.ne.s32.totalorder %s46, %s47
    %p58 = scmp.eq.s32.totalorder %s12, 0
    %p59 = por %p57, %p58
    %p60 = scmp.ne.s32.totalorder %s46, %s47
    %p61 = scmp.eq.s32.totalorder %s13, 1
    %p62 = por %p60, %p61
    %p64 = scmp.ne.s32.totalorder %s47, %s63
    %p65 = scmp.eq.s32.totalorder %s13, 0
    %p66 = por %p64, %p65
    %p67 = scmp.le.s32.totalorder 1, %s7
    %p68 = scmp.lt.s32.totalorder %s7, 3
    %p69 = pnand %p67, %p68
    %p70 = pneg %p69
    // Predicated region
    $region9: #{_lambda_.10} parent=5 // pred_check
      _
    $region10: #{_lambda_.10} parent=5 // pred_check_branch
      %72 = sbr.rel (%p69) target = $region12
    $region11: #{_lambda_.10} parent=5 // pred_region
      %s73 = ssub.s32 %s7, 1
    $region12: #{_lambda_.10} parent=5 // pred_fallthru
      _
    %p74 = scmp.lt.s32.totalorder %s7, 2
    // Predicated region
    $region13: #{_lambda_.10} parent=5 // pred_check
      %p75 = pneg %p74
    $region14: #{_lambda_.10} parent=5 // pred_check_branch
      %77 = sbr.rel (%p75) target = $region16
    $region15: #{_lambda_.10} parent=5 // pred_region
      // Predicated region
      $region17: #{_lambda_.10} parent=15 // pred_check
        %p78 = pneg %p27
      $region18: #{_lambda_.10} parent=15 // pred_check_branch
        %80 = sbr.rel (%p78) target = $region20
      $region19: #{_lambda_.10} parent=15 // pred_region
        %s81 = smul.u32 4, %s7
        %p82 = scmp.lt.s32.totalorder %s81, 7
        %s83 = scalar_select %p82, %s81, 7
        %s84 = smul.addr %s83, 4
        %s85 = smul.addr %s84, 2
        %s86 = scalar_lea.vmem %s0, %s85
        %s87 = smul.u32 4, %s7
      $region20: #{_lambda_.10} parent=15 // pred_fallthru
        _
    $region16: #{_lambda_.10} parent=5 // pred_fallthru
      _
    %p88 = scmp.le.s32.totalorder 1, %s7
    %p89 = scmp.lt.s32.totalorder %s7, 3
    %p90 = pnand %p88, %p89
    %p91 = pneg %p90
    // Predicated region
    $region21: #{_lambda_.10} parent=5 // pred_check
      _
    $region22: #{_lambda_.10} parent=5 // pred_check_branch
      %93 = sbr.rel (%p90) target = $region24
    $region23: #{_lambda_.10} parent=5 // pred_region
      %s94 = ssub.s32 %s7, 1
      %s95 = smul.u32 4, %s12
      %p96 = scmp.lt.s32.totalorder %s95, 7
      %s97 = scalar_select %p96, %s95, 7
      %s98 = smul.addr %s97, 4
      %s99 = smul.addr %s98, 2
      %s100 = scalar_lea.vmem %s0, %s99
      %p101 = pneg %p33
      %p102 = pneg %p30
      %p103 = pneg %p59
      %p104 = pneg %p56
      %s105 = smul.u32 4, %s12
      %p106 = scmp.lt.s32.totalorder %s105, 7
      %s107 = scalar_select %p106, %s105, 7
      %s108 = smul.addr %s107, 2
      %s109 = scalar_lea.vmem %s1, %s108
      %s110 = smul.u32 4, %s12
      %p111 = scmp.lt.s32.totalorder %s110, 7
      %s112 = scalar_select %p111, %s110, 7
      %s113 = smul.addr %s112, 4
      %s114 = smul.addr %s113, 2
      %s115 = scalar_lea.vmem %s0, %s114
      %s116 = smul.u32 4, %s12
      %s117 = smul.u32 4, %s12
      %p118 = scmp.lt.s32.totalorder %s117, 7
      %s119 = scalar_select %p118, %s117, 7
      %s120 = smul.addr %s119, 2
      %s121 = scalar_lea.vmem %s1, %s120
      %s122 = smul.u32 4, %s12
      %v123 = vld [vmem:[%s115] sm:$0xf]
      %v124 = vld [vmem:[%s115 + $0x4] sm:$0xf]
      %v125 = vld [vmem:[%s115 + $0x8] sm:$0xf]
      %v126 = vld [vmem:[%s115 + $0xc] sm:$0xf]
      %v127 = vld [vmem:[%s115 + $0x10] sm:$0xf]
      %v128 = vld [vmem:[%s115 + $0x14] sm:$0xf]
      %v129 = vld [vmem:[%s115 + $0x18] sm:$0xf]
      %v130 = vld [vmem:[%s115 + $0x1c] sm:$0xf]
      %v131 = vmax.bf16 %v123, %v124
      %v132 = vmax.bf16 %v125, %v126
      %v133 = vmax.bf16 %v127, %v128
      %v134 = vmax.bf16 %v129, %v130
      %v139 = vrot.slane %v131, 2
      %v140 = vrot.slane %v132, 2
      %v141 = vrot.slane %v133, 2
      %v142 = vrot.slane %v134, 2
      %v147 = vmax.bf16 %v131, %v139
      %v148 = vmax.bf16 %v132, %v140
      %v149 = vmax.bf16 %v133, %v141
      %v150 = vmax.bf16 %v134, %v142
      %151 = vst [vmem:[%s121] sm:$0x3] %v147
      %152 = vst [vmem:[%s121 + $0x2] sm:$0x3] %v148
      %153 = vst [vmem:[%s121 + $0x4] sm:$0x3] %v149
      %154 = vst [vmem:[%s121 + $0x6] sm:$0x3] %v150
      %s155 = smul.u32 4, %s12
      %p156 = scmp.lt.s32.totalorder %s155, 7
      %s157 = scalar_select %p156, %s155, 7
      %s158 = smul.addr %s157, 2
      %s159 = scalar_lea.vmem %s1, %s158
      // Predicated region
      $region25: #{_lambda_.10} parent=23 // pred_check
        %p160 = pneg %p56
      $region26: #{_lambda_.10} parent=23 // pred_check_branch
        %162 = sbr.rel (%p160) target = $region28
      $region27: #{_lambda_.10} parent=23 // pred_region
        %s163 = smul.u32 4, %s12
      $region28: #{_lambda_.10} parent=23 // pred_fallthru
        _
    $region24: #{_lambda_.10} parent=5 // pred_fallthru
      _
    %p164 = scmp.le.s32.totalorder 2, %s7
    // Predicated region
    $region29: #{_lambda_.10} parent=5 // pred_check
      %p165 = pneg %p164
    $region30: #{_lambda_.10} parent=5 // pred_check_branch
      %167 = sbr.rel (%p165) target = $region32
    $region31: #{_lambda_.10} parent=5 // pred_region
      %s168 = ssub.s32 %s7, 2
      // Predicated region
      $region33: #{_lambda_.10} parent=31 // pred_check
        %p169 = pneg %p62
      $region34: #{_lambda_.10} parent=31 // pred_check_branch
        %171 = sbr.rel (%p169) target = $region36
      $region35: #{_lambda_.10} parent=31 // pred_region
        %s172 = smul.u32 4, %s13
        %p173 = scmp.lt.s32.totalorder %s172, 7
        %s174 = scalar_select %p173, %s172, 7
        %s175 = smul.addr %s174, 2
        %s176 = scalar_lea.vmem %s1, %s175
      $region36: #{_lambda_.10} parent=31 // pred_fallthru
        _
    $region32: #{_lambda_.10} parent=5 // pred_fallthru
      _
  $region6: #{_lambda_.10} parent=0 // loop_footer
    %s11 = sadd.s32 1, %s7
  $region7: #{_lambda_.10} parent=0 // loop_footer_branch
    %6 = sbr.rel target = $region3
  $region8: #{_lambda_.10} parent=0 // loop_exit
    _

// kernel: _lambda_.12
$region0: #{_lambda_.12}
  #allocation0 [shape = 'u32[]', space=smem, size = 0x4, offset = 0x4, fixed_abs, tag = 'smem constant byte address 0x4 - core index']
  #allocation1 [shape = 'u32[144,128]{1,0:T(1,128)}', space=vmem, size = 0x12000, scoped, tag = 'internal scratch']
  %s0 = inlined_call_operand.vmem [shape: bf16[4,2,2,256], index: 0, kind: input, shape index: {}]
  %s1 = inlined_call_operand.vmem [shape: bf16[4,2,128], index: 1, kind: output, shape index: {}]
  %s2 = sld [smem:[#allocation0]]
  $region37: #{_lambda_.12} parent=0
    _
  %s4 = ssub.s32 1, %s2
  %s5 = scalar_select 0, %s4, %s2
  loop: start=0, step=1, limit=4
  $region2: #{_lambda_.12} parent=0 // loop_pre_header
    _
  $region3: #{_lambda_.12} parent=0 // loop_header
    %s7 = sphi 0, %s11
    %p8 = scmp.ge.s32.totalorder %s7, 4
    %s17 = sphi 0, %s19
    %s20 = sphi 0, %s17
    %s21 = sphi 0, %s20
    %s37 = sphi 0, %s21
    %s43 = sphi 0, %s45
    %s46 = sphi 0, %s43
    %s47 = sphi 0, %s46
    %s63 = sphi 0, %s47
  $region4: #{_lambda_.12} parent=0 // loop_header_branch
    %10 = sbr.rel (%p8) target = $region8
  $region5: #{_lambda_.12} parent=0 // loop_body
    %s12 = ssub.s32 %s7, 1
    %s13 = ssub.s32 %s7, 2
    %s14 = sadd.s32 %s7, 1
    %s15 = ssub.s32 %s7, %s14
    %p16 = scmp.eq.s32.totalorder %s15, 0
    %s18 = sadd.s32 %s17, 1
    %s19 = scalar_select %p16, %s17, %s18
    %p22 = pneg %p16
    %p23 = scmp.eq.s32.totalorder %s7, 1
    %p24 = por %p22, %p23
    %p25 = scmp.ne.s32.totalorder %s17, %s20
    %p26 = scmp.eq.s32.totalorder %s7, 0
    %p27 = por %p25, %p26
    %p28 = scmp.ne.s32.totalorder %s17, %s20
    %p29 = scmp.eq.s32.totalorder %s12, 1
    %p30 = por %p28, %p29
    %p31 = scmp.ne.s32.totalorder %s20, %s21
    %p32 = scmp.eq.s32.totalorder %s12, 0
    %p33 = por %p31, %p32
    %p34 = scmp.ne.s32.totalorder %s20, %s21
    %p35 = scmp.eq.s32.totalorder %s13, 1
    %p36 = por %p34, %p35
    %p38 = scmp.ne.s32.totalorder %s21, %s37
    %p39 = scmp.eq.s32.totalorder %s13, 0
    %p40 = por %p38, %p39
    %s41 = ssub.s32 %s7, %s14
    %p42 = scmp.eq.s32.totalorder %s41, 0
    %s44 = sadd.s32 %s43, 1
    %s45 = scalar_select %p42, %s43, %s44
    %p48 = pneg %p42
    %p49 = scmp.eq.s32.totalorder %s7, 1
    %p50 = por %p48, %p49
    %p51 = scmp.ne.s32.totalorder %s43, %s46
    %p52 = scmp.eq.s32.totalorder %s7, 0
    %p53 = por %p51, %p52
    %p54 = scmp.ne.s32.totalorder %s43, %s46
    %p55 = scmp.eq.s32.totalorder %s12, 1
    %p56 = por %p54, %p55
    %p57 = scmp.ne.s32.totalorder %s46, %s47
    %p58 = scmp.eq.s32.totalorder %s12, 0
    %p59 = por %p57, %p58
    %p60 = scmp.ne.s32.totalorder %s46, %s47
    %p61 = scmp.eq.s32.totalorder %s13, 1
    %p62 = por %p60, %p61
    %p64 = scmp.ne.s32.totalorder %s47, %s63
    %p65 = scmp.eq.s32.totalorder %s13, 0
    %p66 = por %p64, %p65
    %p67 = scmp.le.s32.totalorder 1, %s7
    %p68 = scmp.lt.s32.totalorder %s7, 3
    %p69 = pnand %p67, %p68
    %p70 = pneg %p69
    // Predicated region
    $region9: #{_lambda_.12} parent=5 // pred_check
      _
    $region10: #{_lambda_.12} parent=5 // pred_check_branch
      %72 = sbr.rel (%p69) target = $region12
    $region11: #{_lambda_.12} parent=5 // pred_region
      %s73 = ssub.s32 %s7, 1
    $region12: #{_lambda_.12} parent=5 // pred_fallthru
      _
    %p74 = scmp.lt.s32.totalorder %s7, 2
    // Predicated region
    $region13: #{_lambda_.12} parent=5 // pred_check
      %p75 = pneg %p74
    $region14: #{_lambda_.12} parent=5 // pred_check_branch
      %77 = sbr.rel (%p75) target = $region16
    $region15: #{_lambda_.12} parent=5 // pred_region
      // Predicated region
      $region17: #{_lambda_.12} parent=15 // pred_check
        %p78 = pneg %p27
      $region18: #{_lambda_.12} parent=15 // pred_check_branch
        %80 = sbr.rel (%p78) target = $region20
      $region19: #{_lambda_.12} parent=15 // pred_region
        %s81 = smul.u32 2, %s7
        %p82 = scmp.lt.s32.totalorder %s81, 3
        %s83 = scalar_select %p82, %s81, 3
        %s84 = smul.addr %s83, 4
        %s85 = scalar_lea.vmem %s0, %s84
        %s86 = smul.u32 2, %s7
      $region20: #{_lambda_.12} parent=15 // pred_fallthru
        _
    $region16: #{_lambda_.12} parent=5 // pred_fallthru
      _
    %p87 = scmp.le.s32.totalorder 1, %s7
    %p88 = scmp.lt.s32.totalorder %s7, 3
    %p89 = pnand %p87, %p88
    %p90 = pneg %p89
    // Predicated region
    $region21: #{_lambda_.12} parent=5 // pred_check
      _
    $region22: #{_lambda_.12} parent=5 // pred_check_branch
      %92 = sbr.rel (%p89) target = $region24
    $region23: #{_lambda_.12} parent=5 // pred_region
      %s93 = ssub.s32 %s7, 1
      %s94 = smul.u32 2, %s12
      %p95 = scmp.lt.s32.totalorder %s94, 3
      %s96 = scalar_select %p95, %s94, 3
      %s97 = smul.addr %s96, 4
      %s98 = scalar_lea.vmem %s0, %s97
      %p99 = pneg %p33
      %p100 = pneg %p30
      %p101 = pneg %p59
      %p102 = pneg %p56
      %s103 = smul.u32 2, %s12
      %p104 = scmp.lt.s32.totalorder %s103, 3
      %s105 = scalar_select %p104, %s103, 3
      %s106 = scalar_lea.vmem %s1, %s105
      %s107 = smul.u32 2, %s12
      %p108 = scmp.lt.s32.totalorder %s107, 3
      %s109 = scalar_select %p108, %s107, 3
      %s110 = smul.addr %s109, 4
      %s111 = scalar_lea.vmem %s0, %s110
      %s112 = smul.u32 2, %s12
      %s113 = smul.u32 2, %s12
      %p114 = scmp.lt.s32.totalorder %s113, 3
      %s115 = scalar_select %p114, %s113, 3
      %s116 = scalar_lea.vmem %s1, %s115
      %s117 = smul.u32 2, %s12
      %v118 = vld [vmem:[%s111] sm:$0x3]
      %v119 = vld [vmem:[%s111 + $0x2] sm:$0x3]
      %v120 = vld [vmem:[%s111 + $0x4] sm:$0x3]
      %v121 = vld [vmem:[%s111 + $0x6] sm:$0x3]
      %v122 = vmax.bf16 %v118, %v119
      %v123 = vmax.bf16 %v120, %v121
      %v126 = vrot.slane %v122, 1
      %v127 = vrot.slane %v123, 1
      %v130 = vmax.bf16 %v122, %v126
      %v131 = vmax.bf16 %v123, %v127
      %132 = vst [vmem:[%s116] sm:$0x1] %v130
      %133 = vst [vmem:[%s116 + $0x1] sm:$0x1] %v131
      %s134 = smul.u32 2, %s12
      %p135 = scmp.lt.s32.totalorder %s134, 3
      %s136 = scalar_select %p135, %s134, 3
      %s137 = scalar_lea.vmem %s1, %s136
      // Predicated region
      $region25: #{_lambda_.12} parent=23 // pred_check
        %p138 = pneg %p56
      $region26: #{_lambda_.12} parent=23 // pred_check_branch
        %140 = sbr.rel (%p138) target = $region28
      $region27: #{_lambda_.12} parent=23 // pred_region
        %s141 = smul.u32 2, %s12
      $region28: #{_lambda_.12} parent=23 // pred_fallthru
        _
    $region24: #{_lambda_.12} parent=5 // pred_fallthru
      _
    %p142 = scmp.le.s32.totalorder 2, %s7
    // Predicated region
    $region29: #{_lambda_.12} parent=5 // pred_check
      %p143 = pneg %p142
    $region30: #{_lambda_.12} parent=5 // pred_check_branch
      %145 = sbr.rel (%p143) target = $region32
    $region31: #{_lambda_.12} parent=5 // pred_region
      %s146 = ssub.s32 %s7, 2
      // Predicated region
      $region33: #{_lambda_.12} parent=31 // pred_check
        %p147 = pneg %p62
      $region34: #{_lambda_.12} parent=31 // pred_check_branch
        %149 = sbr.rel (%p147) target = $region36
      $region35: #{_lambda_.12} parent=31 // pred_region
        %s150 = smul.u32 2, %s13
        %p151 = scmp.lt.s32.totalorder %s150, 3
        %s152 = scalar_select %p151, %s150, 3
        %s153 = scalar_lea.vmem %s1, %s152
      $region36: #{_lambda_.12} parent=31 // pred_fallthru
        _
    $region32: #{_lambda_.12} parent=5 // pred_fallthru
      _
  $region6: #{_lambda_.12} parent=0 // loop_footer
    %s11 = sadd.s32 1, %s7
  $region7: #{_lambda_.12} parent=0 // loop_footer_branch
    %6 = sbr.rel target = $region3
  $region8: #{_lambda_.12} parent=0 // loop_exit
    _

// kernel: _lambda_.11
$region0: #{_lambda_.11}
  #allocation0 [shape = 'u32[]', space=smem, size = 0x4, offset = 0x4, fixed_abs, tag = 'smem constant byte address 0x4 - core index']
  #allocation1 [shape = 'u32[144,128]{1,0:T(1,128)}', space=vmem, size = 0x12000, scoped, tag = 'internal scratch']
  %s0 = inlined_call_operand.vmem [shape: bf16[2,6,6,128], index: 0, kind: input, shape index: {}]
  %s1 = inlined_call_operand.vmem [shape: bf16[1152,128], index: 1, kind: input, shape index: {}]
  %s2 = inlined_call_operand.vmem [shape: f32[1,128], index: 2, kind: input, shape index: {}]
  %s3 = inlined_call_operand.vmem [shape: bf16[2,4,4,128], index: 3, kind: output, shape index: {}]
  %s4 = sld [smem:[#allocation0]]
  $region45: #{_lambda_.11} parent=0
    _
  %s6 = ssub.s32 1, %s4
  %s7 = scalar_select 0, %s6, %s4
  loop: start=0, step=1, limit=4
  $region2: #{_lambda_.11} parent=0 // loop_pre_header
    _
  $region3: #{_lambda_.11} parent=0 // loop_header
    %s9 = sphi 0, %s13
    %p10 = scmp.ge.s32.totalorder %s9, 4
    %s16 = sphi 0, %s28
    %s17 = sphi 0, %s24
    %s18 = sphi 0, %s16
    %s19 = sphi 0, %s17
    %s20 = sphi 0, %s18
    %s21 = sphi 0, %s19
    %s31 = sphi 0, %s33
    %s34 = sphi 0, %s31
    %s35 = sphi 0, %s34
    %s51 = sphi 0, %s35
    %s55 = sphi 0, %s55
    %s57 = sphi 0, %s55
    %s58 = sphi 0, %s57
    %s72 = sphi 0, %s58
    %s76 = sphi 0, %s76
    %s78 = sphi 0, %s76
    %s79 = sphi 0, %s78
    %s93 = sphi 0, %s79
    %s101 = sphi 0, %s103
    %s104 = sphi 0, %s101
    %s105 = sphi 0, %s104
    %s121 = sphi 0, %s105
  $region4: #{_lambda_.11} parent=0 // loop_header_branch
    %12 = sbr.rel (%p10) target = $region8
  $region5: #{_lambda_.11} parent=0 // loop_body
    %s14 = ssub.s32 %s9, 1
    %s15 = ssub.s32 %s9, 2
    %s22 = sadd.s32 1, %s17
    %p23 = scmp.ge.s32.totalorder %s22, 1
    %s24 = scalar_select %p23, 0, %s22
    %s25 = sadd.s32 1, %s16
    %s26 = scalar_select %p23, %s25, %s16
    %p27 = scmp.ge.s32.totalorder %s26, 2
    %s28 = scalar_select %p27, 0, %s26
    %s29 = ssub.s32 %s16, %s28
    %p30 = scmp.eq.s32.totalorder %s29, 0
    %s32 = sadd.s32 %s31, 1
    %s33 = scalar_select %p30, %s31, %s32
    %p36 = pneg %p30
    %p37 = scmp.eq.s32.totalorder %s9, 1
    %p38 = por %p36, %p37
    %p39 = scmp.ne.s32.totalorder %s31, %s34
    %p40 = scmp.eq.s32.totalorder %s9, 0
    %p41 = por %p39, %p40
    %p42 = scmp.ne.s32.totalorder %s31, %s34
    %p43 = scmp.eq.s32.totalorder %s14, 1
    %p44 = por %p42, %p43
    %p45 = scmp.ne.s32.totalorder %s34, %s35
    %p46 = scmp.eq.s32.totalorder %s14, 0
    %p47 = por %p45, %p46
    %p48 = scmp.ne.s32.totalorder %s34, %s35
    %p49 = scmp.eq.s32.totalorder %s15, 1
    %p50 = por %p48, %p49
    %p52 = scmp.ne.s32.totalorder %s35, %s51
    %p53 = scmp.eq.s32.totalorder %s15, 0
    %p54 = por %p52, %p53
    %s56 = sadd.s32 %s55, 1
    %p59 = scmp.eq.s32.totalorder %s9, 1
    %p60 = scmp.ne.s32.totalorder %s55, %s57
    %p61 = scmp.eq.s32.totalorder %s9, 0
    %p62 = por %p60, %p61
    %p63 = scmp.ne.s32.totalorder %s55, %s57
    %p64 = scmp.eq.s32.totalorder %s14, 1
    %p65 = por %p63, %p64
    %p66 = scmp.ne.s32.totalorder %s57, %s58
    %p67 = scmp.eq.s32.totalorder %s14, 0
    %p68 = por %p66, %p67
    %p69 = scmp.ne.s32.totalorder %s57, %s58
    %p70 = scmp.eq.s32.totalorder %s15, 1
    %p71 = por %p69, %p70
    %p73 = scmp.ne.s32.totalorder %s58, %s72
    %p74 = scmp.eq.s32.totalorder %s15, 0
    %p75 = por %p73, %p74
    %s77 = sadd.s32 %s76, 1
    %p80 = scmp.eq.s32.totalorder %s9, 1
    %p81 = scmp.ne.s32.totalorder %s76, %s78
    %p82 = scmp.eq.s32.totalorder %s9, 0
    %p83 = por %p81, %p82
    %p84 = scmp.ne.s32.totalorder %s76, %s78
    %p85 = scmp.eq.s32.totalorder %s14, 1
    %p86 = por %p84, %p85
    %p87 = scmp.ne.s32.totalorder %s78, %s79
    %p88 = scmp.eq.s32.totalorder %s14, 0
    %p89 = por %p87, %p88
    %p90 = scmp.ne.s32.totalorder %s78, %s79
    %p91 = scmp.eq.s32.totalorder %s15, 1
    %p92 = por %p90, %p91
    %p94 = scmp.ne.s32.totalorder %s79, %s93
    %p95 = scmp.eq.s32.totalorder %s15, 0
    %p96 = por %p94, %p95
    %s97 = ssub.s32 %s16, %s28
    %s98 = ssub.s32 %s17, %s24
    %s99 = sor.u32 %s97, %s98
    %p100 = scmp.eq.s32.totalorder %s99, 0
    %s102 = sadd.s32 %s101, 1
    %s103 = scalar_select %p100, %s101, %s102
    %p106 = pneg %p100
    %p107 = scmp.eq.s32.totalorder %s9, 1
    %p108 = por %p106, %p107
    %p109 = scmp.ne.s32.totalorder %s101, %s104
    %p110 = scmp.eq.s32.totalorder %s9, 0
    %p111 = por %p109, %p110
    %p112 = scmp.ne.s32.totalorder %s101, %s104
    %p113 = scmp.eq.s32.totalorder %s14, 1
    %p114 = por %p112, %p113
    %p115 = scmp.ne.s32.totalorder %s104, %s105
    %p116 = scmp.eq.s32.totalorder %s14, 0
    %p117 = por %p115, %p116
    %p118 = scmp.ne.s32.totalorder %s104, %s105
    %p119 = scmp.eq.s32.totalorder %s15, 1
    %p120 = por %p118, %p119
    %p122 = scmp.ne.s32.totalorder %s105, %s121
    %p123 = scmp.eq.s32.totalorder %s15, 0
    %p124 = por %p122, %p123
    %p125 = scmp.le.s32.totalorder 1, %s9
    %p126 = scmp.lt.s32.totalorder %s9, 3
    %p127 = pnand %p125, %p126
    %p128 = pneg %p127
    // Predicated region
    $region9: #{_lambda_.11} parent=5 // pred_check
      _
    $region10: #{_lambda_.11} parent=5 // pred_check_branch
      %130 = sbr.rel (%p127) target = $region12
    $region11: #{_lambda_.11} parent=5 // pred_region
      %s131 = ssub.s32 %s9, 1
      // Predicated region
      $region13: #{_lambda_.11} parent=11 // pred_check
        %p132 = pneg %p68
      $region14: #{_lambda_.11} parent=11 // pred_check_branch
        %134 = sbr.rel (%p132) target = $region16
      $region15: #{_lambda_.11} parent=11 // pred_region
        _
      $region16: #{_lambda_.11} parent=11 // pred_fallthru
        _
      // Predicated region
      $region17: #{_lambda_.11} parent=11 // pred_check
        %p135 = pneg %p89
      $region18: #{_lambda_.11} parent=11 // pred_check_branch
        %137 = sbr.rel (%p135) target = $region20
      $region19: #{_lambda_.11} parent=11 // pred_region
        _
      $region20: #{_lambda_.11} parent=11 // pred_fallthru
        _
    $region12: #{_lambda_.11} parent=5 // pred_fallthru
      _
    %p138 = scmp.lt.s32.totalorder %s9, 2
    // Predicated region
    $region21: #{_lambda_.11} parent=5 // pred_check
      %p139 = pneg %p138
    $region22: #{_lambda_.11} parent=5 // pred_check_branch
      %141 = sbr.rel (%p139) target = $region24
    $region23: #{_lambda_.11} parent=5 // pred_region
      // Predicated region
      $region25: #{_lambda_.11} parent=23 // pred_check
        %p142 = pneg %p41
      $region26: #{_lambda_.11} parent=23 // pred_check_branch
        %144 = sbr.rel (%p142) target = $region28
      $region27: #{_lambda_.11} parent=23 // pred_region
        %p145 = scmp.lt.s32.totalorder %s16, 1
        %s146 = scalar_select %p145, %s16, 1
        %s147 = smul.addr %s146, 6
        %s148 = smul.addr %s147, 4
        %s149 = scalar_lea.vmem %s0, %s148
      $region28: #{_lambda_.11} parent=23 // pred_fallthru
        _
    $region24: #{_lambda_.11} parent=5 // pred_fallthru
      _
    %p150 = scmp.le.s32.totalorder 1, %s9
    %p151 = scmp.lt.s32.totalorder %s9, 3
    %p152 = pnand %p150, %p151
    %p153 = pneg %p152
    // Predicated region
    $region29: #{_lambda_.11} parent=5 // pred_check
      _
    $region30: #{_lambda_.11} parent=5 // pred_check_branch
      %155 = sbr.rel (%p152) target = $region32
    $region31: #{_lambda_.11} parent=5 // pred_region
      %s156 = ssub.s32 %s9, 1
      %p157 = scmp.lt.s32.totalorder %s18, 1
      %s158 = scalar_select %p157, %s18, 1
      %s159 = smul.addr %s158, 6
      %s160 = smul.addr %s159, 4
      %s161 = scalar_lea.vmem %s0, %s160
      %p162 = pneg %p47
      %p163 = pneg %p44
      %p164 = pneg %p68
      %p165 = pneg %p65
      %p166 = pneg %p89
      %p167 = pneg %p86
      %p168 = pneg %p117
      %p169 = pneg %p114
      %s170 = smul.u32 4, %s19
      %p171 = scmp.lt.s32.totalorder %s18, 1
      %s172 = scalar_select %p171, %s18, 1
      %p173 = scmp.lt.s32.totalorder %s170, 3
      %s174 = scalar_select %p173, %s170, 3
      %s175 = smul.addr %s172, 4
      %s176 = sadd.s32 %s174, %s175
      %s177 = smul.addr %s176, 2
      %s178 = scalar_lea.vmem %s3, %s177
      %p179 = scmp.lt.s32.totalorder %s18, 1
      %s180 = scalar_select %p179, %s18, 1
      %s181 = smul.addr %s180, 6
      %s182 = smul.addr %s181, 4
      %s183 = scalar_lea.vmem %s0, %s182
      %s184 = smul.u32 4, %s19
      %p185 = scmp.lt.s32.totalorder %s18, 1
      %s186 = scalar_select %p185, %s18, 1
      %p187 = scmp.lt.s32.totalorder %s184, 3
      %s188 = scalar_select %p187, %s184, 3
      %s189 = smul.addr %s186, 4
      %s190 = sadd.s32 %s188, %s189
      %s191 = smul.addr %s190, 2
      %s192 = scalar_lea.vmem %s3, %s191
      %s193 = smul.u32 4, %s19
      %s195 = smul.u32 %s19, 4
      %s196 = smul.addr %s195, 4
      %s197 = scalar_lea.vmem %s183, %s196
      %v198 = vld [vmem:[%s197] sm:$0x3]
      %v199 = vld [vmem:[%s197 + $0x4] sm:$0x3]
      %v200 = vld [vmem:[%s197 + $0x8] sm:$0x3]
      %v201 = vld [vmem:[%s197 + $0xc] sm:$0x3]
      %v202 = vld [vmem:[%s197] sm:$0x7]
      %v203 = vld [vmem:[%s197 + $0x4] sm:$0x7]
      %v204 = vld [vmem:[%s197 + $0x8] sm:$0x7]
      %v205 = vld [vmem:[%s197 + $0xc] sm:$0x7]
      %v211 = vunpack.c.l.s4 1983009808
      %v212 = vunpack.c.0.s8 %v211
      %v213 = vlaneseq
      %v214 = vshrl.u32 %v213, 7
      %v215 = vsub.s32 %v212, %v214
      %v216 = vrot.slane %v202, %v215
      %v217 = vcombine.high %v216, %v216
      %v219 = vunpack.c.l.s4 1983009808
      %v220 = vunpack.c.0.s8 %v219
      %v221 = vlaneseq
      %v222 = vshrl.u32 %v221, 7
      %v223 = vsub.s32 %v220, %v222
      %v224 = vrot.slane %v203, %v223
      %v225 = vcombine.high %v224, %v224
      %v227 = vunpack.c.l.s4 1983009808
      %v228 = vunpack.c.0.s8 %v227
      %v229 = vlaneseq
      %v230 = vshrl.u32 %v229, 7
      %v231 = vsub.s32 %v228, %v230
      %v232 = vrot.slane %v204, %v231
      %v233 = vcombine.high %v232, %v232
      %v235 = vunpack.c.l.s4 1983009808
      %v236 = vunpack.c.0.s8 %v235
      %v237 = vlaneseq
      %v238 = vshrl.u32 %v237, 7
      %v239 = vsub.s32 %v236, %v238
      %v240 = vrot.slane %v205, %v239
      %v241 = vcombine.high %v240, %v240
      %vm242 = vsmask.f32 1280
      %vm243 = vsmask.f32 3336
      %vm244 = vmor %vm242, %vm243
      %vm245 = vsmask.f32 5392
      %vm246 = vmor %vm244, %vm245
      %vm247 = vsmask.f32 7448
      %vm248 = vmor %vm246, %vm247
      %v250 = vshrl.u32 %v216, 16
      %v252 = vrot.slane %v250, 6
      %v253 = vshll.u32 %v216, 16
      %v255 = vrot.slane %v253, 7
      %v256 = vor.u32 %v252, %v255
      %v257 = vrot.slane %v256, 2
      %v259 = vshll.u32 %v217, 16
      %v261 = vrot.slane %v259, 7
      %v262 = vsel %vm248, %v257, %v261
      %v264 = vshrl.u32 %v224, 16
      %v266 = vrot.slane %v264, 6
      %v267 = vshll.u32 %v224, 16
      %v269 = vrot.slane %v267, 7
      %v270 = vor.u32 %v266, %v269
      %v271 = vrot.slane %v270, 2
      %v273 = vshll.u32 %v225, 16
      %v275 = vrot.slane %v273, 7
      %v276 = vsel %vm248, %v271, %v275
      %v278 = vshrl.u32 %v232, 16
      %v280 = vrot.slane %v278, 6
      %v281 = vshll.u32 %v232, 16
      %v283 = vrot.slane %v281, 7
      %v284 = vor.u32 %v280, %v283
      %v285 = vrot.slane %v284, 2
      %v287 = vshll.u32 %v233, 16
      %v289 = vrot.slane %v287, 7
      %v290 = vsel %vm248, %v285, %v289
      %v292 = vshrl.u32 %v240, 16
      %v294 = vrot.slane %v292, 6
      %v295 = vshll.u32 %v240, 16
      %v297 = vrot.slane %v295, 7
      %v298 = vor.u32 %v294, %v297
      %v299 = vrot.slane %v298, 2
      %v301 = vshll.u32 %v241, 16
      %v303 = vrot.slane %v301, 7
      %v304 = vsel %vm248, %v299, %v303
      %v305 = vld [vmem:[%s197] sm:$0x6]
      %v306 = vld [vmem:[%s197 + $0x4] sm:$0x6]
      %v307 = vld [vmem:[%s197 + $0x8] sm:$0x6]
      %v308 = vld [vmem:[%s197 + $0xc] sm:$0x6]
      %v314 = vunpack.c.l.s4 1983009808
      %v315 = vunpack.c.0.s8 %v314
      %v316 = vlaneseq
      %v317 = vshrl.u32 %v316, 7
      %v318 = vsub.s32 %v315, %v317
      %v319 = vrot.slane %v305, %v318
      %v320 = vcombine.high %v319, %v319
      %v322 = vunpack.c.l.s4 1983009808
      %v323 = vunpack.c.0.s8 %v322
      %v324 = vlaneseq
      %v325 = vshrl.u32 %v324, 7
      %v326 = vsub.s32 %v323, %v325
      %v327 = vrot.slane %v306, %v326
      %v328 = vcombine.high %v327, %v327
      %v330 = vunpack.c.l.s4 1983009808
      %v331 = vunpack.c.0.s8 %v330
      %v332 = vlaneseq
      %v333 = vshrl.u32 %v332, 7
      %v334 = vsub.s32 %v331, %v333
      %v335 = vrot.slane %v307, %v334
      %v336 = vcombine.high %v335, %v335
      %v338 = vunpack.c.l.s4 1983009808
      %v339 = vunpack.c.0.s8 %v338
      %v340 = vlaneseq
      %v341 = vshrl.u32 %v340, 7
      %v342 = vsub.s32 %v339, %v341
      %v343 = vrot.slane %v308, %v342
      %v344 = vcombine.high %v343, %v343
      %vm345 = vcmask 1040384
      %vm346 = vcmask 1042434
      %vm347 = vmor %vm345, %vm346
      %vm348 = vcmask 1044484
      %vm349 = vmor %vm347, %vm348
      %vm350 = vcmask 1046534
      %vm351 = vmor %vm349, %vm350
      %v352 = vrot.slane %v319, 7
      %v353 = vrot.slane %v352, 2
      %v354 = vrot.slane %v320, 7
      %v355 = vsel %vm351, %v353, %v354
      %v356 = vrot.slane %v327, 7
      %v357 = vrot.slane %v356, 2
      %v358 = vrot.slane %v328, 7
      %v359 = vsel %vm351, %v357, %v358
      %v360 = vrot.slane %v335, 7
      %v361 = vrot.slane %v360, 2
      %v362 = vrot.slane %v336, 7
      %v363 = vsel %vm351, %v361, %v362
      %v364 = vrot.slane %v343, 7
      %v365 = vrot.slane %v364, 2
      %v366 = vrot.slane %v344, 7
      %v367 = vsel %vm351, %v365, %v366
      %s368 = sadd.s32 %s195, 1
      %s369 = smul.addr %s368, 4
      %s370 = scalar_lea.vmem %s183, %s369
      %v371 = vld [vmem:[%s370] sm:$0x3]
      %v372 = vld [vmem:[%s370 + $0x4] sm:$0x3]
      %v373 = vld [vmem:[%s370 + $0x8] sm:$0x3]
      %v374 = vld [vmem:[%s370 + $0xc] sm:$0x3]
      %v375 = vld [vmem:[%s370] sm:$0x7]
      %v376 = vld [vmem:[%s370 + $0x4] sm:$0x7]
      %v377 = vld [vmem:[%s370 + $0x8] sm:$0x7]
      %v378 = vld [vmem:[%s370 + $0xc] sm:$0x7]
      %v384 = vunpack.c.l.s4 1983009808
      %v385 = vunpack.c.0.s8 %v384
      %v386 = vlaneseq
      %v387 = vshrl.u32 %v386, 7
      %v388 = vsub.s32 %v385, %v387
      %v389 = vrot.slane %v375, %v388
      %v390 = vcombine.high %v389, %v389
      %v392 = vunpack.c.l.s4 1983009808
      %v393 = vunpack.c.0.s8 %v392
      %v394 = vlaneseq
      %v395 = vshrl.u32 %v394, 7
      %v396 = vsub.s32 %v393, %v395
      %v397 = vrot.slane %v376, %v396
      %v398 = vcombine.high %v397, %v397
      %v400 = vunpack.c.l.s4 1983009808
      %v401 = vunpack.c.0.s8 %v400
      %v402 = vlaneseq
      %v403 = vshrl.u32 %v402, 7
      %v404 = vsub.s32 %v401, %v403
      %v405 = vrot.slane %v377, %v404
      %v406 = vcombine.high %v405, %v405
      %v408 = vunpack.c.l.s4 1983009808
      %v409 = vunpack.c.0.s8 %v408
      %v410 = vlaneseq
      %v411 = vshrl.u32 %v410, 7
      %v412 = vsub.s32 %v409, %v411
      %v413 = vrot.slane %v378, %v412
      %v414 = vcombine.high %v413, %v413
      %v416 = vshrl.u32 %v389, 16
      %v418 = vrot.slane %v416, 6
      %v419 = vshll.u32 %v389, 16
      %v421 = vrot.slane %v419, 7
      %v422 = vor.u32 %v418, %v421
      %v423 = vrot.slane %v422, 2
      %v425 = vshll.u32 %v390, 16
      %v427 = vrot.slane %v425, 7
      %v428 = vsel %vm248, %v423, %v427
      %v430 = vshrl.u32 %v397, 16
      %v432 = vrot.slane %v430, 6
      %v433 = vshll.u32 %v397, 16
      %v435 = vrot.slane %v433, 7
      %v436 = vor.u32 %v432, %v435
      %v437 = vrot.slane %v436, 2
      %v439 = vshll.u32 %v398, 16
      %v441 = vrot.slane %v439, 7
      %v442 = vsel %vm248, %v437, %v441
      %v444 = vshrl.u32 %v405, 16
      %v446 = vrot.slane %v444, 6
      %v447 = vshll.u32 %v405, 16
      %v449 = vrot.slane %v447, 7
      %v450 = vor.u32 %v446, %v449
      %v451 = vrot.slane %v450, 2
      %v453 = vshll.u32 %v406, 16
      %v455 = vrot.slane %v453, 7
      %v456 = vsel %vm248, %v451, %v455
      %v458 = vshrl.u32 %v413, 16
      %v460 = vrot.slane %v458, 6
      %v461 = vshll.u32 %v413, 16
      %v463 = vrot.slane %v461, 7
      %v464 = vor.u32 %v460, %v463
      %v465 = vrot.slane %v464, 2
      %v467 = vshll.u32 %v414, 16
      %v469 = vrot.slane %v467, 7
      %v470 = vsel %vm248, %v465, %v469
      %v471 = vld [vmem:[%s370] sm:$0x6]
      %v472 = vld [vmem:[%s370 + $0x4] sm:$0x6]
      %v473 = vld [vmem:[%s370 + $0x8] sm:$0x6]
      %v474 = vld [vmem:[%s370 + $0xc] sm:$0x6]
      %v480 = vunpack.c.l.s4 1983009808
      %v481 = vunpack.c.0.s8 %v480
      %v482 = vlaneseq
      %v483 = vshrl.u32 %v482, 7
      %v484 = vsub.s32 %v481, %v483
      %v485 = vrot.slane %v471, %v484
      %v486 = vcombine.high %v485, %v485
      %v488 = vunpack.c.l.s4 1983009808
      %v489 = vunpack.c.0.s8 %v488
      %v490 = vlaneseq
      %v491 = vshrl.u32 %v490, 7
      %v492 = vsub.s32 %v489, %v491
      %v493 = vrot.slane %v472, %v492
      %v494 = vcombine.high %v493, %v493
      %v496 = vunpack.c.l.s4 1983009808
      %v497 = vunpack.c.0.s8 %v496
      %v498 = vlaneseq
      %v499 = vshrl.u32 %v498, 7
      %v500 = vsub.s32 %v497, %v499
      %v501 = vrot.slane %v473, %v500
      %v502 = vcombine.high %v501, %v501
      %v504 = vunpack.c.l.s4 1983009808
      %v505 = vunpack.c.0.s8 %v504
      %v506 = vlaneseq
      %v507 = vshrl.u32 %v506, 7
      %v508 = vsub.s32 %v505, %v507
      %v509 = vrot.slane %v474, %v508
      %v510 = vcombine.high %v509, %v509
      %v511 = vrot.slane %v485, 7
      %v512 = vrot.slane %v511, 2
      %v513 = vrot.slane %v486, 7
      %v514 = vsel %vm351, %v512, %v513
      %v515 = vrot.slane %v493, 7
      %v516 = vrot.slane %v515, 2
      %v517 = vrot.slane %v494, 7
      %v518 = vsel %vm351, %v516, %v517
      %v519 = vrot.slane %v501, 7
      %v520 = vrot.slane %v519, 2
      %v521 = vrot.slane %v502, 7
      %v522 = vsel %vm351, %v520, %v521
      %v523 = vrot.slane %v509, 7
      %v524 = vrot.slane %v523, 2
      %v525 = vrot.slane %v510, 7
      %v526 = vsel %vm351, %v524, %v525
      %s527 = sadd.s32 %s195, 2
      %s528 = smul.addr %s527, 4
      %s529 = scalar_lea.vmem %s183, %s528
      %v530 = vld [vmem:[%s529] sm:$0x3]
      %v531 = vld [vmem:[%s529 + $0x4] sm:$0x3]
      %v532 = vld [vmem:[%s529 + $0x8] sm:$0x3]
      %v533 = vld [vmem:[%s529 + $0xc] sm:$0x3]
      %v534 = vld [vmem:[%s529] sm:$0x7]
      %v535 = vld [vmem:[%s529 + $0x4] sm:$0x7]
      %v536 = vld [vmem:[%s529 + $0x8] sm:$0x7]
      %v537 = vld [vmem:[%s529 + $0xc] sm:$0x7]
      %v543 = vunpack.c.l.s4 1983009808
      %v544 = vunpack.c.0.s8 %v543
      %v545 = vlaneseq
      %v546 = vshrl.u32 %v545, 7
      %v547 = vsub.s32 %v544, %v546
      %v548 = vrot.slane %v534, %v547
      %v549 = vcombine.high %v548, %v548
      %v551 = vunpack.c.l.s4 1983009808
      %v552 = vunpack.c.0.s8 %v551
      %v553 = vlaneseq
      %v554 = vshrl.u32 %v553, 7
      %v555 = vsub.s32 %v552, %v554
      %v556 = vrot.slane %v535, %v555
      %v557 = vcombine.high %v556, %v556
      %v559 = vunpack.c.l.s4 1983009808
      %v560 = vunpack.c.0.s8 %v559
      %v561 = vlaneseq
      %v562 = vshrl.u32 %v561, 7
      %v563 = vsub.s32 %v560, %v562
      %v564 = vrot.slane %v536, %v563
      %v565 = vcombine.high %v564, %v564
      %v567 = vunpack.c.l.s4 1983009808
      %v568 = vunpack.c.0.s8 %v567
      %v569 = vlaneseq
      %v570 = vshrl.u32 %v569, 7
      %v571 = vsub.s32 %v568, %v570
      %v572 = vrot.slane %v537, %v571
      %v573 = vcombine.high %v572, %v572
      %v575 = vshrl.u32 %v548, 16
      %v577 = vrot.slane %v575, 6
      %v578 = vshll.u32 %v548, 16
      %v580 = vrot.slane %v578, 7
      %v581 = vor.u32 %v577, %v580
      %v582 = vrot.slane %v581, 2
      %v584 = vshll.u32 %v549, 16
      %v586 = vrot.slane %v584, 7
      %v587 = vsel %vm248, %v582, %v586
      %v589 = vshrl.u32 %v556, 16
      %v591 = vrot.slane %v589, 6
      %v592 = vshll.u32 %v556, 16
      %v594 = vrot.slane %v592, 7
      %v595 = vor.u32 %v591, %v594
      %v596 = vrot.slane %v595, 2
      %v598 = vshll.u32 %v557, 16
      %v600 = vrot.slane %v598, 7
      %v601 = vsel %vm248, %v596, %v600
      %v603 = vshrl.u32 %v564, 16
      %v605 = vrot.slane %v603, 6
      %v606 = vshll.u32 %v564, 16
      %v608 = vrot.slane %v606, 7
      %v609 = vor.u32 %v605, %v608
      %v610 = vrot.slane %v609, 2
      %v612 = vshll.u32 %v565, 16
      %v614 = vrot.slane %v612, 7
      %v615 = vsel %vm248, %v610, %v614
      %v617 = vshrl.u32 %v572, 16
      %v619 = vrot.slane %v617, 6
      %v620 = vshll.u32 %v572, 16
      %v622 = vrot.slane %v620, 7
      %v623 = vor.u32 %v619, %v622
      %v624 = vrot.slane %v623, 2
      %v626 = vshll.u32 %v573, 16
      %v628 = vrot.slane %v626, 7
      %v629 = vsel %vm248, %v624, %v628
      %v630 = vld [vmem:[%s529] sm:$0x6]
      %v631 = vld [vmem:[%s529 + $0x4] sm:$0x6]
      %v632 = vld [vmem:[%s529 + $0x8] sm:$0x6]
      %v633 = vld [vmem:[%s529 + $0xc] sm:$0x6]
      %v639 = vunpack.c.l.s4 1983009808
      %v640 = vunpack.c.0.s8 %v639
      %v641 = vlaneseq
      %v642 = vshrl.u32 %v641, 7
      %v643 = vsub.s32 %v640, %v642
      %v644 = vrot.slane %v630, %v643
      %v645 = vcombine.high %v644, %v644
      %v647 = vunpack.c.l.s4 1983009808
      %v648 = vunpack.c.0.s8 %v647
      %v649 = vlaneseq
      %v650 = vshrl.u32 %v649, 7
      %v651 = vsub.s32 %v648, %v650
      %v652 = vrot.slane %v631, %v651
      %v653 = vcombine.high %v652, %v652
      %v655 = vunpack.c.l.s4 1983009808
      %v656 = vunpack.c.0.s8 %v655
      %v657 = vlaneseq
      %v658 = vshrl.u32 %v657, 7
      %v659 = vsub.s32 %v656, %v658
      %v660 = vrot.slane %v632, %v659
      %v661 = vcombine.high %v660, %v660
      %v663 = vunpack.c.l.s4 1983009808
      %v664 = vunpack.c.0.s8 %v663
      %v665 = vlaneseq
      %v666 = vshrl.u32 %v665, 7
      %v667 = vsub.s32 %v664, %v666
      %v668 = vrot.slane %v633, %v667
      %v669 = vcombine.high %v668, %v668
      %v670 = vrot.slane %v644, 7
      %v671 = vrot.slane %v670, 2
      %v672 = vrot.slane %v645, 7
      %v673 = vsel %vm351, %v671, %v672
      %v674 = vrot.slane %v652, 7
      %v675 = vrot.slane %v674, 2
      %v676 = vrot.slane %v653, 7
      %v677 = vsel %vm351, %v675, %v676
      %v678 = vrot.slane %v660, 7
      %v679 = vrot.slane %v678, 2
      %v680 = vrot.slane %v661, 7
      %v681 = vsel %vm351, %v679, %v680
      %v682 = vrot.slane %v668, 7
      %v683 = vrot.slane %v682, 2
      %v684 = vrot.slane %v669, 7
      %v685 = vsel %vm351, %v683, %v684
      %v690 = vcombine.low %v198, %v199
      %v691 = vcombine.low %v200, %v201
      %v693 = vunpack.c.l.s4 1983009808
      %v694 = vunpack.c.0.s8 %v693
      %v695 = vlaneseq
      %v696 = vshrl.u32 %v695, 7
      %v697 = vsub.s32 %v694, %v696
      %v698 = vrot.slane %v690, %v697
      %v700 = vunpack.c.l.s4 1983009808
      %v701 = vunpack.c.0.s8 %v700
      %v702 = vlaneseq
      %v703 = vshrl.u32 %v702, 7
      %v704 = vsub.s32 %v701, %v703
      %v705 = vrot.slane %v691, %v704
      %v706 = vcombine.low %v698, %v705
      %v708 = vcombine.low %v262, %v276
      %v709 = vcombine.low %v290, %v304
      %v711 = vunpack.c.l.s4 1983009808
      %v712 = vunpack.c.0.s8 %v711
      %v713 = vlaneseq
      %v714 = vshrl.u32 %v713, 7
      %v715 = vsub.s32 %v712, %v714
      %v716 = vrot.slane %v708, %v715
      %v718 = vunpack.c.l.s4 1983009808
      %v719 = vunpack.c.0.s8 %v718
      %v720 = vlaneseq
      %v721 = vshrl.u32 %v720, 7
      %v722 = vsub.s32 %v719, %v721
      %v723 = vrot.slane %v709, %v722
      %v724 = vcombine.low %v716, %v723
      %v726 = vcombine.low %v355, %v359
      %v727 = vcombine.low %v363, %v367
      %v729 = vunpack.c.l.s4 1983009808
      %v730 = vunpack.c.0.s8 %v729
      %v731 = vlaneseq
      %v732 = vshrl.u32 %v731, 7
      %v733 = vsub.s32 %v730, %v732
      %v734 = vrot.slane %v726, %v733
      %v736 = vunpack.c.l.s4 1983009808
      %v737 = vunpack.c.0.s8 %v736
      %v738 = vlaneseq
      %v739 = vshrl.u32 %v738, 7
      %v740 = vsub.s32 %v737, %v739
      %v741 = vrot.slane %v727, %v740
      %v742 = vcombine.low %v734, %v741
      %v748 = vcombine.low %v371, %v372
      %v749 = vcombine.low %v373, %v374
      %v751 = vunpack.c.l.s4 1983009808
      %v752 = vunpack.c.0.s8 %v751
      %v753 = vlaneseq
      %v754 = vshrl.u32 %v753, 7
      %v755 = vsub.s32 %v752, %v754
      %v756 = vrot.slane %v748, %v755
      %v758 = vunpack.c.l.s4 1983009808
      %v759 = vunpack.c.0.s8 %v758
      %v760 = vlaneseq
      %v761 = vshrl.u32 %v760, 7
      %v762 = vsub.s32 %v759, %v761
      %v763 = vrot.slane %v749, %v762
      %v764 = vcombine.low %v756, %v763
      %v766 = vcombine.low %v428, %v442
      %v767 = vcombine.low %v456, %v470
      %v769 = vunpack.c.l.s4 1983009808
      %v770 = vunpack.c.0.s8 %v769
      %v771 = vlaneseq
      %v772 = vshrl.u32 %v771, 7
      %v773 = vsub.s32 %v770, %v772
      %v774 = vrot.slane %v766, %v773
      %v776 = vunpack.c.l.s4 1983009808
      %v777 = vunpack.c.0.s8 %v776
      %v778 = vlaneseq
      %v779 = vshrl.u32 %v778, 7
      %v780 = vsub.s32 %v777, %v779
      %v781 = vrot.slane %v767, %v780
      %v782 = vcombine.low %v774, %v781
      %v784 = vcombine.low %v514, %v518
      %v785 = vcombine.low %v522, %v526
      %v787 = vunpack.c.l.s4 1983009808
      %v788 = vunpack.c.0.s8 %v787
      %v789 = vlaneseq
      %v790 = vshrl.u32 %v789, 7
      %v791 = vsub.s32 %v788, %v790
      %v792 = vrot.slane %v784, %v791
      %v794 = vunpack.c.l.s4 1983009808
      %v795 = vunpack.c.0.s8 %v794
      %v796 = vlaneseq
      %v797 = vshrl.u32 %v796, 7
      %v798 = vsub.s32 %v795, %v797
      %v799 = vrot.slane %v785, %v798
      %v800 = vcombine.low %v792, %v799
      %v806 = vcombine.low %v530, %v531
      %v807 = vcombine.low %v532, %v533
      %v809 = vunpack.c.l.s4 1983009808
      %v810 = vunpack.c.0.s8 %v809
      %v811 = vlaneseq
      %v812 = vshrl.u32 %v811, 7
      %v813 = vsub.s32 %v810, %v812
      %v814 = vrot.slane %v806, %v813
      %v816 = vunpack.c.l.s4 1983009808
      %v817 = vunpack.c.0.s8 %v816
      %v818 = vlaneseq
      %v819 = vshrl.u32 %v818, 7
      %v820 = vsub.s32 %v817, %v819
      %v821 = vrot.slane %v807, %v820
      %v822 = vcombine.low %v814, %v821
      %v824 = vcombine.low %v587, %v601
      %v825 = vcombine.low %v615, %v629
      %v827 = vunpack.c.l.s4 1983009808
      %v828 = vunpack.c.0.s8 %v827
      %v829 = vlaneseq
      %v830 = vshrl.u32 %v829, 7
      %v831 = vsub.s32 %v828, %v830
      %v832 = vrot.slane %v824, %v831
      %v834 = vunpack.c.l.s4 1983009808
      %v835 = vunpack.c.0.s8 %v834
      %v836 = vlaneseq
      %v837 = vshrl.u32 %v836, 7
      %v838 = vsub.s32 %v835, %v837
      %v839 = vrot.slane %v825, %v838
      %v840 = vcombine.low %v832, %v839
      %v842 = vcombine.low %v673, %v677
      %v843 = vcombine.low %v681, %v685
      %v845 = vunpack.c.l.s4 1983009808
      %v846 = vunpack.c.0.s8 %v845
      %v847 = vlaneseq
      %v848 = vshrl.u32 %v847, 7
      %v849 = vsub.s32 %v846, %v848
      %v850 = vrot.slane %v842, %v849
      %v852 = vunpack.c.l.s4 1983009808
      %v853 = vunpack.c.0.s8 %v852
      %v854 = vlaneseq
      %v855 = vshrl.u32 %v854, 7
      %v856 = vsub.s32 %v853, %v855
      %v857 = vrot.slane %v843, %v856
      %v858 = vcombine.low %v850, %v857
      %v860 = vld [vmem:[%s1] sm:$0xf]
      %v861 = vld [vmem:[%s1 + $0x4] sm:$0xf]
      %v862 = vld [vmem:[%s1 + $0x8] sm:$0xf]
      %v863 = vld [vmem:[%s1 + $0xc] sm:$0xf]
      %v864 = vld [vmem:[%s1 + $0x10] sm:$0xf]
      %v865 = vld [vmem:[%s1 + $0x14] sm:$0xf]
      %v866 = vld [vmem:[%s1 + $0x18] sm:$0xf]
      %v867 = vld [vmem:[%s1 + $0x1c] sm:$0xf]
      %v868 = vld [vmem:[%s1 + $0x20] sm:$0xf]
      %v869 = vld [vmem:[%s1 + $0x24] sm:$0xf]
      %v870 = vld [vmem:[%s1 + $0x28] sm:$0xf]
      %v871 = vld [vmem:[%s1 + $0x2c] sm:$0xf]
      %v872 = vld [vmem:[%s1 + $0x30] sm:$0xf]
      %v873 = vld [vmem:[%s1 + $0x34] sm:$0xf]
      %v874 = vld [vmem:[%s1 + $0x38] sm:$0xf]
      %v875 = vld [vmem:[%s1 + $0x3c] sm:$0xf]
      %v876 = vld [vmem:[%s1 + $0x40] sm:$0xf]
      %v877 = vld [vmem:[%s1 + $0x44] sm:$0xf]
      %v878 = vld [vmem:[%s1 + $0x48] sm:$0xf]
      %v879 = vld [vmem:[%s1 + $0x4c] sm:$0xf]
      %v880 = vld [vmem:[%s1 + $0x50] sm:$0xf]
      %v881 = vld [vmem:[%s1 + $0x54] sm:$0xf]
      %v882 = vld [vmem:[%s1 + $0x58] sm:$0xf]
      %v883 = vld [vmem:[%s1 + $0x5c] sm:$0xf]
      %v884 = vld [vmem:[%s1 + $0x60] sm:$0xf]
      %v885 = vld [vmem:[%s1 + $0x64] sm:$0xf]
      %v886 = vld [vmem:[%s1 + $0x68] sm:$0xf]
      %v887 = vld [vmem:[%s1 + $0x6c] sm:$0xf]
      %v888 = vld [vmem:[%s1 + $0x70] sm:$0xf]
      %v889 = vld [vmem:[%s1 + $0x74] sm:$0xf]
      %v890 = vld [vmem:[%s1 + $0x78] sm:$0xf]
      %v891 = vld [vmem:[%s1 + $0x7c] sm:$0xf]
      %v892 = vld [vmem:[%s1 + $0x80] sm:$0xf]
      %v893 = vld [vmem:[%s1 + $0x84] sm:$0xf]
      %v894 = vld [vmem:[%s1 + $0x88] sm:$0xf]
      %v895 = vld [vmem:[%s1 + $0x8c] sm:$0xf]
      %v896 = vld [vmem:[%s1 + $0x90] sm:$0xf]
      %v897 = vld [vmem:[%s1 + $0x94] sm:$0xf]
      %v898 = vld [vmem:[%s1 + $0x98] sm:$0xf]
      %v899 = vld [vmem:[%s1 + $0x9c] sm:$0xf]
      %v900 = vld [vmem:[%s1 + $0xa0] sm:$0xf]
      %v901 = vld [vmem:[%s1 + $0xa4] sm:$0xf]
      %v902 = vld [vmem:[%s1 + $0xa8] sm:$0xf]
      %v903 = vld [vmem:[%s1 + $0xac] sm:$0xf]
      %v904 = vld [vmem:[%s1 + $0xb0] sm:$0xf]
      %v905 = vld [vmem:[%s1 + $0xb4] sm:$0xf]
      %v906 = vld [vmem:[%s1 + $0xb8] sm:$0xf]
      %v907 = vld [vmem:[%s1 + $0xbc] sm:$0xf]
      %v908 = vld [vmem:[%s1 + $0xc0] sm:$0xf]
      %v909 = vld [vmem:[%s1 + $0xc4] sm:$0xf]
      %v910 = vld [vmem:[%s1 + $0xc8] sm:$0xf]
      %v911 = vld [vmem:[%s1 + $0xcc] sm:$0xf]
      %v912 = vld [vmem:[%s1 + $0xd0] sm:$0xf]
      %v913 = vld [vmem:[%s1 + $0xd4] sm:$0xf]
      %v914 = vld [vmem:[%s1 + $0xd8] sm:$0xf]
      %v915 = vld [vmem:[%s1 + $0xdc] sm:$0xf]
      %v916 = vld [vmem:[%s1 + $0xe0] sm:$0xf]
      %v917 = vld [vmem:[%s1 + $0xe4] sm:$0xf]
      %v918 = vld [vmem:[%s1 + $0xe8] sm:$0xf]
      %v919 = vld [vmem:[%s1 + $0xec] sm:$0xf]
      %v920 = vld [vmem:[%s1 + $0xf0] sm:$0xf]
      %v921 = vld [vmem:[%s1 + $0xf4] sm:$0xf]
      %v922 = vld [vmem:[%s1 + $0xf8] sm:$0xf]
      %v923 = vld [vmem:[%s1 + $0xfc] sm:$0xf]
      %v924 = vld [vmem:[%s1 + $0x100] sm:$0xf]
      %v925 = vld [vmem:[%s1 + $0x104] sm:$0xf]
      %v926 = vld [vmem:[%s1 + $0x108] sm:$0xf]
      %v927 = vld [vmem:[%s1 + $0x10c] sm:$0xf]
      %v928 = vld [vmem:[%s1 + $0x110] sm:$0xf]
      %v929 = vld [vmem:[%s1 + $0x114] sm:$0xf]
      %v930 = vld [vmem:[%s1 + $0x118] sm:$0xf]
      %v931 = vld [vmem:[%s1 + $0x11c] sm:$0xf]
      %v932 = vld [vmem:[%s1 + $0x120] sm:$0xf]
      %v933 = vld [vmem:[%s1 + $0x124] sm:$0xf]
      %v934 = vld [vmem:[%s1 + $0x128] sm:$0xf]
      %v935 = vld [vmem:[%s1 + $0x12c] sm:$0xf]
      %v936 = vld [vmem:[%s1 + $0x130] sm:$0xf]
      %v937 = vld [vmem:[%s1 + $0x134] sm:$0xf]
      %v938 = vld [vmem:[%s1 + $0x138] sm:$0xf]
      %v939 = vld [vmem:[%s1 + $0x13c] sm:$0xf]
      %v940 = vld [vmem:[%s1 + $0x140] sm:$0xf]
      %v941 = vld [vmem:[%s1 + $0x144] sm:$0xf]
      %v942 = vld [vmem:[%s1 + $0x148] sm:$0xf]
      %v943 = vld [vmem:[%s1 + $0x14c] sm:$0xf]
      %v944 = vld [vmem:[%s1 + $0x150] sm:$0xf]
      %v945 = vld [vmem:[%s1 + $0x154] sm:$0xf]
      %v946 = vld [vmem:[%s1 + $0x158] sm:$0xf]
      %v947 = vld [vmem:[%s1 + $0x15c] sm:$0xf]
      %v948 = vld [vmem:[%s1 + $0x160] sm:$0xf]
      %v949 = vld [vmem:[%s1 + $0x164] sm:$0xf]
      %v950 = vld [vmem:[%s1 + $0x168] sm:$0xf]
      %v951 = vld [vmem:[%s1 + $0x16c] sm:$0xf]
      %v952 = vld [vmem:[%s1 + $0x170] sm:$0xf]
      %v953 = vld [vmem:[%s1 + $0x174] sm:$0xf]
      %v954 = vld [vmem:[%s1 + $0x178] sm:$0xf]
      %v955 = vld [vmem:[%s1 + $0x17c] sm:$0xf]
      %v956 = vld [vmem:[%s1 + $0x180] sm:$0xf]
      %v957 = vld [vmem:[%s1 + $0x184] sm:$0xf]
      %v958 = vld [vmem:[%s1 + $0x188] sm:$0xf]
      %v959 = vld [vmem:[%s1 + $0x18c] sm:$0xf]
      %v960 = vld [vmem:[%s1 + $0x190] sm:$0xf]
      %v961 = vld [vmem:[%s1 + $0x194] sm:$0xf]
      %v962 = vld [vmem:[%s1 + $0x198] sm:$0xf]
      %v963 = vld [vmem:[%s1 + $0x19c] sm:$0xf]
      %v964 = vld [vmem:[%s1 + $0x1a0] sm:$0xf]
      %v965 = vld [vmem:[%s1 + $0x1a4] sm:$0xf]
      %v966 = vld [vmem:[%s1 + $0x1a8] sm:$0xf]
      %v967 = vld [vmem:[%s1 + $0x1ac] sm:$0xf]
      %v968 = vld [vmem:[%s1 + $0x1b0] sm:$0xf]
      %v969 = vld [vmem:[%s1 + $0x1b4] sm:$0xf]
      %v970 = vld [vmem:[%s1 + $0x1b8] sm:$0xf]
      %v971 = vld [vmem:[%s1 + $0x1bc] sm:$0xf]
      %v972 = vld [vmem:[%s1 + $0x1c0] sm:$0xf]
      %v973 = vld [vmem:[%s1 + $0x1c4] sm:$0xf]
      %v974 = vld [vmem:[%s1 + $0x1c8] sm:$0xf]
      %v975 = vld [vmem:[%s1 + $0x1cc] sm:$0xf]
      %v976 = vld [vmem:[%s1 + $0x1d0] sm:$0xf]
      %v977 = vld [vmem:[%s1 + $0x1d4] sm:$0xf]
      %v978 = vld [vmem:[%s1 + $0x1d8] sm:$0xf]
      %v979 = vld [vmem:[%s1 + $0x1dc] sm:$0xf]
      %v980 = vld [vmem:[%s1 + $0x1e0] sm:$0xf]
      %v981 = vld [vmem:[%s1 + $0x1e4] sm:$0xf]
      %v982 = vld [vmem:[%s1 + $0x1e8] sm:$0xf]
      %v983 = vld [vmem:[%s1 + $0x1ec] sm:$0xf]
      %v984 = vld [vmem:[%s1 + $0x1f0] sm:$0xf]
      %v985 = vld [vmem:[%s1 + $0x1f4] sm:$0xf]
      %v986 = vld [vmem:[%s1 + $0x1f8] sm:$0xf]
      %v987 = vld [vmem:[%s1 + $0x1fc] sm:$0xf]
      %v988 = vld [vmem:[%s1 + $0x200] sm:$0xf]
      %v989 = vld [vmem:[%s1 + $0x204] sm:$0xf]
      %v990 = vld [vmem:[%s1 + $0x208] sm:$0xf]
      %v991 = vld [vmem:[%s1 + $0x20c] sm:$0xf]
      %v992 = vld [vmem:[%s1 + $0x210] sm:$0xf]
      %v993 = vld [vmem:[%s1 + $0x214] sm:$0xf]
      %v994 = vld [vmem:[%s1 + $0x218] sm:$0xf]
      %v995 = vld [vmem:[%s1 + $0x21c] sm:$0xf]
      %v996 = vld [vmem:[%s1 + $0x220] sm:$0xf]
      %v997 = vld [vmem:[%s1 + $0x224] sm:$0xf]
      %v998 = vld [vmem:[%s1 + $0x228] sm:$0xf]
      %v999 = vld [vmem:[%s1 + $0x22c] sm:$0xf]
      %v1000 = vld [vmem:[%s1 + $0x230] sm:$0xf]
      %v1001 = vld [vmem:[%s1 + $0x234] sm:$0xf]
      %v1002 = vld [vmem:[%s1 + $0x238] sm:$0xf]
      %v1003 = vld [vmem:[%s1 + $0x23c] sm:$0xf]
      %v1004 = vld [vmem:[%s2] sm:$0x1]
      %v1006 = vlaneseq
      %v1007 = vshrl.u32 %v1006, 7
      %v1008 = vsub.s32 0, %v1007
      %v1009 = vrot.slane %v1004, %v1008
      %v1155 = vunpack.c.l.b16 %v860
      %v1156 = vunpack.c.l.b16 %v861
      %v1157 = vunpack.c.l.b16 %v862
      %v1158 = vunpack.c.l.b16 %v863
      %v1159 = vunpack.c.l.b16 %v864
      %v1160 = vunpack.c.l.b16 %v865
      %v1161 = vunpack.c.l.b16 %v866
      %v1162 = vunpack.c.l.b16 %v867
      %v1163 = vunpack.c.l.b16 %v868
      %v1164 = vunpack.c.l.b16 %v869
      %v1165 = vunpack.c.l.b16 %v870
      %v1166 = vunpack.c.l.b16 %v871
      %v1167 = vunpack.c.l.b16 %v872
      %v1168 = vunpack.c.l.b16 %v873
      %v1169 = vunpack.c.l.b16 %v874
      %v1170 = vunpack.c.l.b16 %v875
      %v1171 = vunpack.c.l.b16 %v876
      %v1172 = vunpack.c.l.b16 %v877
      %v1173 = vunpack.c.l.b16 %v878
      %v1174 = vunpack.c.l.b16 %v879
      %v1175 = vunpack.c.l.b16 %v880
      %v1176 = vunpack.c.l.b16 %v881
      %v1177 = vunpack.c.l.b16 %v882
      %v1178 = vunpack.c.l.b16 %v883
      %v1179 = vunpack.c.l.b16 %v884
      %v1180 = vunpack.c.l.b16 %v885
      %v1181 = vunpack.c.l.b16 %v886
      %v1182 = vunpack.c.l.b16 %v887
      %v1183 = vunpack.c.l.b16 %v888
      %v1184 = vunpack.c.l.b16 %v889
      %v1185 = vunpack.c.l.b16 %v890
      %v1186 = vunpack.c.l.b16 %v891
      %v1187 = vunpack.c.l.b16 %v892
      %v1188 = vunpack.c.l.b16 %v893
      %v1189 = vunpack.c.l.b16 %v894
      %v1190 = vunpack.c.l.b16 %v895
      %v1191 = vunpack.c.l.b16 %v896
      %v1192 = vunpack.c.l.b16 %v897
      %v1193 = vunpack.c.l.b16 %v898
      %v1194 = vunpack.c.l.b16 %v899
      %v1195 = vunpack.c.l.b16 %v900
      %v1196 = vunpack.c.l.b16 %v901
      %v1197 = vunpack.c.l.b16 %v902
      %v1198 = vunpack.c.l.b16 %v903
      %v1199 = vunpack.c.l.b16 %v904
      %v1200 = vunpack.c.l.b16 %v905
      %v1201 = vunpack.c.l.b16 %v906
      %v1202 = vunpack.c.l.b16 %v907
      %v1203 = vunpack.c.l.b16 %v908
      %v1204 = vunpack.c.l.b16 %v909
      %v1205 = vunpack.c.l.b16 %v910
      %v1206 = vunpack.c.l.b16 %v911
      %v1207 = vunpack.c.l.b16 %v912
      %v1208 = vunpack.c.l.b16 %v913
      %v1209 = vunpack.c.l.b16 %v914
      %v1210 = vunpack.c.l.b16 %v915
      %v1211 = vunpack.c.l.b16 %v916
      %v1212 = vunpack.c.l.b16 %v917
      %v1213 = vunpack.c.l.b16 %v918
      %v1214 = vunpack.c.l.b16 %v919
      %v1215 = vunpack.c.l.b16 %v920
      %v1216 = vunpack.c.l.b16 %v921
      %v1217 = vunpack.c.l.b16 %v922
      %v1218 = vunpack.c.l.b16 %v923
      %v1219 = vunpack.c.l.b16 %v924
      %v1220 = vunpack.c.l.b16 %v925
      %v1221 = vunpack.c.l.b16 %v926
      %v1222 = vunpack.c.l.b16 %v927
      %v1223 = vunpack.c.l.b16 %v928
      %v1224 = vunpack.c.l.b16 %v929
      %v1225 = vunpack.c.l.b16 %v930
      %v1226 = vunpack.c.l.b16 %v931
      %v1227 = vunpack.c.l.b16 %v932
      %v1228 = vunpack.c.l.b16 %v933
      %v1229 = vunpack.c.l.b16 %v934
      %v1230 = vunpack.c.l.b16 %v935
      %v1231 = vunpack.c.l.b16 %v936
      %v1232 = vunpack.c.l.b16 %v937
      %v1233 = vunpack.c.l.b16 %v938
      %v1234 = vunpack.c.l.b16 %v939
      %v1235 = vunpack.c.l.b16 %v940
      %v1236 = vunpack.c.l.b16 %v941
      %v1237 = vunpack.c.l.b16 %v942
      %v1238 = vunpack.c.l.b16 %v943
      %v1239 = vunpack.c.l.b16 %v944
      %v1240 = vunpack.c.l.b16 %v945
      %v1241 = vunpack.c.l.b16 %v946
      %v1242 = vunpack.c.l.b16 %v947
      %v1243 = vunpack.c.l.b16 %v948
      %v1244 = vunpack.c.l.b16 %v949
      %v1245 = vunpack.c.l.b16 %v950
      %v1246 = vunpack.c.l.b16 %v951
      %v1247 = vunpack.c.l.b16 %v952
      %v1248 = vunpack.c.l.b16 %v953
      %v1249 = vunpack.c.l.b16 %v954
      %v1250 = vunpack.c.l.b16 %v955
      %v1251 = vunpack.c.l.b16 %v956
      %v1252 = vunpack.c.l.b16 %v957
      %v1253 = vunpack.c.l.b16 %v958
      %v1254 = vunpack.c.l.b16 %v959
      %v1255 = vunpack.c.l.b16 %v960
      %v1256 = vunpack.c.l.b16 %v961
      %v1257 = vunpack.c.l.b16 %v962
      %v1258 = vunpack.c.l.b16 %v963
      %v1259 = vunpack.c.l.b16 %v964
      %v1260 = vunpack.c.l.b16 %v965
      %v1261 = vunpack.c.l.b16 %v966
      %v1262 = vunpack.c.l.b16 %v967
      %v1263 = vunpack.c.l.b16 %v968
      %v1264 = vunpack.c.l.b16 %v969
      %v1265 = vunpack.c.l.b16 %v970
      %v1266 = vunpack.c.l.b16 %v971
      %v1267 = vunpack.c.l.b16 %v972
      %v1268 = vunpack.c.l.b16 %v973
      %v1269 = vunpack.c.l.b16 %v974
      %v1270 = vunpack.c.l.b16 %v975
      %v1271 = vunpack.c.l.b16 %v976
      %v1272 = vunpack.c.l.b16 %v977
      %v1273 = vunpack.c.l.b16 %v978
      %v1274 = vunpack.c.l.b16 %v979
      %v1275 = vunpack.c.l.b16 %v980
      %v1276 = vunpack.c.l.b16 %v981
      %v1277 = vunpack.c.l.b16 %v982
      %v1278 = vunpack.c.l.b16 %v983
      %v1279 = vunpack.c.l.b16 %v984
      %v1280 = vunpack.c.l.b16 %v985
      %v1281 = vunpack.c.l.b16 %v986
      %v1282 = vunpack.c.l.b16 %v987
      %v1283 = vunpack.c.l.b16 %v988
      %v1284 = vunpack.c.l.b16 %v989
      %v1285 = vunpack.c.l.b16 %v990
      %v1286 = vunpack.c.l.b16 %v991
      %v1287 = vunpack.c.l.b16 %v992
      %v1288 = vunpack.c.l.b16 %v993
      %v1289 = vunpack.c.l.b16 %v994
      %v1290 = vunpack.c.l.b16 %v995
      %v1291 = vunpack.c.l.b16 %v996
      %v1292 = vunpack.c.l.b16 %v997
      %v1293 = vunpack.c.l.b16 %v998
      %v1294 = vunpack.c.l.b16 %v999
      %v1295 = vunpack.c.l.b16 %v1000
      %v1296 = vunpack.c.l.b16 %v1001
      %v1297 = vunpack.c.l.b16 %v1002
      %v1298 = vunpack.c.l.b16 %v1003
      %v1299 = vpack.c.b16 %v1156, %v1155
      %v1300 = vpack.c.b16 %v1158, %v1157
      %v1301 = vpack.c.b16 %v1160, %v1159
      %v1302 = vpack.c.b16 %v1162, %v1161
      %v1303 = vpack.c.b16 %v1164, %v1163
      %v1304 = vpack.c.b16 %v1166, %v1165
      %v1305 = vpack.c.b16 %v1168, %v1167
      %v1306 = vpack.c.b16 %v1170, %v1169
      %v1307 = vpack.c.b16 %v1172, %v1171
      %v1308 = vpack.c.b16 %v1174, %v1173
      %v1309 = vpack.c.b16 %v1176, %v1175
      %v1310 = vpack.c.b16 %v1178, %v1177
      %v1311 = vpack.c.b16 %v1180, %v1179
      %v1312 = vpack.c.b16 %v1182, %v1181
      %v1313 = vpack.c.b16 %v1184, %v1183
      %v1314 = vpack.c.b16 %v1186, %v1185
      %v1315 = vpack.c.b16 %v1188, %v1187
      %v1316 = vpack.c.b16 %v1190, %v1189
      %v1317 = vpack.c.b16 %v1192, %v1191
      %v1318 = vpack.c.b16 %v1194, %v1193
      %v1319 = vpack.c.b16 %v1196, %v1195
      %v1320 = vpack.c.b16 %v1198, %v1197
      %v1321 = vpack.c.b16 %v1200, %v1199
      %v1322 = vpack.c.b16 %v1202, %v1201
      %v1323 = vpack.c.b16 %v1204, %v1203
      %v1324 = vpack.c.b16 %v1206, %v1205
      %v1325 = vpack.c.b16 %v1208, %v1207
      %v1326 = vpack.c.b16 %v1210, %v1209
      %v1327 = vpack.c.b16 %v1212, %v1211
      %v1328 = vpack.c.b16 %v1214, %v1213
      %v1329 = vpack.c.b16 %v1216, %v1215
      %v1330 = vpack.c.b16 %v1218, %v1217
      %v1331 = vpack.c.b16 %v1220, %v1219
      %v1332 = vpack.c.b16 %v1222, %v1221
      %v1333 = vpack.c.b16 %v1224, %v1223
      %v1334 = vpack.c.b16 %v1226, %v1225
      %v1335 = vpack.c.b16 %v1228, %v1227
      %v1336 = vpack.c.b16 %v1230, %v1229
      %v1337 = vpack.c.b16 %v1232, %v1231
      %v1338 = vpack.c.b16 %v1234, %v1233
      %v1339 = vpack.c.b16 %v1236, %v1235
      %v1340 = vpack.c.b16 %v1238, %v1237
      %v1341 = vpack.c.b16 %v1240, %v1239
      %v1342 = vpack.c.b16 %v1242, %v1241
      %v1343 = vpack.c.b16 %v1244, %v1243
      %v1344 = vpack.c.b16 %v1246, %v1245
      %v1345 = vpack.c.b16 %v1248, %v1247
      %v1346 = vpack.c.b16 %v1250, %v1249
      %v1347 = vpack.c.b16 %v1252, %v1251
      %v1348 = vpack.c.b16 %v1254, %v1253
      %v1349 = vpack.c.b16 %v1256, %v1255
      %v1350 = vpack.c.b16 %v1258, %v1257
      %v1351 = vpack.c.b16 %v1260, %v1259
      %v1352 = vpack.c.b16 %v1262, %v1261
      %v1353 = vpack.c.b16 %v1264, %v1263
      %v1354 = vpack.c.b16 %v1266, %v1265
      %v1355 = vpack.c.b16 %v1268, %v1267
      %v1356 = vpack.c.b16 %v1270, %v1269
      %v1357 = vpack.c.b16 %v1272, %v1271
      %v1358 = vpack.c.b16 %v1274, %v1273
      %v1359 = vpack.c.b16 %v1276, %v1275
      %v1360 = vpack.c.b16 %v1278, %v1277
      %v1361 = vpack.c.b16 %v1280, %v1279
      %v1362 = vpack.c.b16 %v1282, %v1281
      %v1363 = vpack.c.b16 %v1284, %v1283
      %v1364 = vpack.c.b16 %v1286, %v1285
      %v1365 = vpack.c.b16 %v1288, %v1287
      %v1366 = vpack.c.b16 %v1290, %v1289
      %v1367 = vpack.c.b16 %v1292, %v1291
      %v1368 = vpack.c.b16 %v1294, %v1293
      %v1369 = vpack.c.b16 %v1296, %v1295
      %v1370 = vpack.c.b16 %v1298, %v1297
      %1443 = vmatprep.subr.bf16.mxu0 0
      %1444 = vmatpush1.bf16.msra.mxu0 %v1306
      %1445 = vmatprep.subr.bf16.mxu0 0
      %1446 = vmatpush1.bf16.msra.mxu0 %v1305
      %1447 = vmatprep.subr.bf16.mxu0 0
      %1448 = vmatpush1.bf16.msra.mxu0 %v1304
      %1449 = vmatprep.subr.bf16.mxu0 0
      %1450 = vmatpush1.bf16.msra.mxu0 %v1303
      %1451 = vmatprep.subr.bf16.mxu0 0
      %1452 = vmatpush1.bf16.msra.mxu0 %v1302
      %1453 = vmatprep.subr.bf16.mxu0 0
      %1454 = vmatpush1.bf16.msra.mxu0 %v1301
      %1455 = vmatprep.subr.bf16.mxu0 0
      %1456 = vmatpush1.bf16.msra.mxu0 %v1300
      %1457 = vmatprep.subr.bf16.mxu0 0
      %1458 = vmatpush1.bf16.msra.mxu0 %v1299
      %1459 = vmatprep.subr.bf16.mxu0 0
      %1460 = vmatpush2.bf16.msra.mxu0 %v1314
      %1461 = vmatprep.subr.bf16.mxu0 0
      %1462 = vmatpush2.bf16.msra.mxu0 %v1313
      %1463 = vmatprep.subr.bf16.mxu0 0
      %1464 = vmatpush2.bf16.msra.mxu0 %v1312
      %1465 = vmatprep.subr.bf16.mxu0 0
      %1466 = vmatpush2.bf16.msra.mxu0 %v1311
      %1467 = vmatprep.subr.bf16.mxu0 0
      %1468 = vmatpush2.bf16.msra.mxu0 %v1310
      %1469 = vmatprep.subr.bf16.mxu0 0
      %1470 = vmatpush2.bf16.msra.mxu0 %v1309
      %1471 = vmatprep.subr.bf16.mxu0 0
      %1472 = vmatpush2.bf16.msra.mxu0 %v1308
      %1473 = vmatprep.subr.bf16.mxu0 0
      %1474 = vmatpush2.bf16.msra.mxu0 %v1307
      %1475 = vmatprep.mubr.bf16.mxu0 %v724
      %1476 = vmatmul.mubr.bf16.gmra.mxu0 %v706
      %v1477 = vpop.f32.mrf.mxu0
      %v1478 = vadd.f32 %v1009, %v1477
      %v1479 = vpop.f32.mrf.mxu0
      %v1480 = vpop.f32.mrf.mxu0
      %v1481 = vadd.f32 %v1009, %v1480
      %v1482 = vpop.f32.mrf.mxu0
      %1483 = vdwg.mxu0
      %1484 = vmatprep.subr.bf16.mxu0 0
      %1485 = vmatpush1.bf16.msra.mxu0 %v1322
      %1486 = vmatprep.subr.bf16.mxu0 0
      %1487 = vmatpush1.bf16.msra.mxu0 %v1321
      %1488 = vmatprep.subr.bf16.mxu0 0
      %1489 = vmatpush1.bf16.msra.mxu0 %v1320
      %1490 = vmatprep.subr.bf16.mxu0 0
      %1491 = vmatpush1.bf16.msra.mxu0 %v1319
      %1492 = vmatprep.subr.bf16.mxu0 0
      %1493 = vmatpush1.bf16.msra.mxu0 %v1318
      %1494 = vmatprep.subr.bf16.mxu0 0
      %1495 = vmatpush1.bf16.msra.mxu0 %v1317
      %1496 = vmatprep.subr.bf16.mxu0 0
      %1497 = vmatpush1.bf16.msra.mxu0 %v1316
      %1498 = vmatprep.subr.bf16.mxu0 0
      %1499 = vmatpush1.bf16.msra.mxu0 %v1315
      %1500 = vmatprep.subr.bf16.mxu0 0
      %1501 = vmatpush2.bf16.msra.mxu0 %v1330
      %1502 = vmatprep.subr.bf16.mxu0 0
      %1503 = vmatpush2.bf16.msra.mxu0 %v1329
      %1504 = vmatprep.subr.bf16.mxu0 0
      %1505 = vmatpush2.bf16.msra.mxu0 %v1328
      %1506 = vmatprep.subr.bf16.mxu0 0
      %1507 = vmatpush2.bf16.msra.mxu0 %v1327
      %1508 = vmatprep.subr.bf16.mxu0 0
      %1509 = vmatpush2.bf16.msra.mxu0 %v1326
      %1510 = vmatprep.subr.bf16.mxu0 0
      %1511 = vmatpush2.bf16.msra.mxu0 %v1325
      %1512 = vmatprep.subr.bf16.mxu0 0
      %1513 = vmatpush2.bf16.msra.mxu0 %v1324
      %1514 = vmatprep.subr.bf16.mxu0 0
      %1515 = vmatpush2.bf16.msra.mxu0 %v1323
      %1516 = vmatprep.mubr.bf16.mxu0 %v764
      %1517 = vmatmul.mubr.bf16.gmra.mxu0 %v742
      %v1518 = vpop.f32.mrf.mxu0
      %v1519 = vadd.f32 %v1478, %v1518
      %v1520 = vpop.f32.mrf.mxu0
      %v1521 = vpop.f32.mrf.mxu0
      %v1522 = vadd.f32 %v1481, %v1521
      %v1523 = vpop.f32.mrf.mxu0
      %1524 = vdwg.mxu0
      %1525 = vmatprep.subr.bf16.mxu0 0
      %1526 = vmatpush1.bf16.msra.mxu0 %v1338
      %1527 = vmatprep.subr.bf16.mxu0 0
      %1528 = vmatpush1.bf16.msra.mxu0 %v1337
      %1529 = vmatprep.subr.bf16.mxu0 0
      %1530 = vmatpush1.bf16.msra.mxu0 %v1336
      %1531 = vmatprep.subr.bf16.mxu0 0
      %1532 = vmatpush1.bf16.msra.mxu0 %v1335
      %1533 = vmatprep.subr.bf16.mxu0 0
      %1534 = vmatpush1.bf16.msra.mxu0 %v1334
      %1535 = vmatprep.subr.bf16.mxu0 0
      %1536 = vmatpush1.bf16.msra.mxu0 %v1333
      %1537 = vmatprep.subr.bf16.mxu0 0
      %1538 = vmatpush1.bf16.msra.mxu0 %v1332
      %1539 = vmatprep.subr.bf16.mxu0 0
      %1540 = vmatpush1.bf16.msra.mxu0 %v1331
      %1541 = vmatprep.subr.bf16.mxu0 0
      %1542 = vmatpush2.bf16.msra.mxu0 %v1346
      %1543 = vmatprep.subr.bf16.mxu0 0
      %1544 = vmatpush2.bf16.msra.mxu0 %v1345
      %1545 = vmatprep.subr.bf16.mxu0 0
      %1546 = vmatpush2.bf16.msra.mxu0 %v1344
      %1547 = vmatprep.subr.bf16.mxu0 0
      %1548 = vmatpush2.bf16.msra.mxu0 %v1343
      %1549 = vmatprep.subr.bf16.mxu0 0
      %1550 = vmatpush2.bf16.msra.mxu0 %v1342
      %1551 = vmatprep.subr.bf16.mxu0 0
      %1552 = vmatpush2.bf16.msra.mxu0 %v1341
      %1553 = vmatprep.subr.bf16.mxu0 0
      %1554 = vmatpush2.bf16.msra.mxu0 %v1340
      %1555 = vmatprep.subr.bf16.mxu0 0
      %1556 = vmatpush2.bf16.msra.mxu0 %v1339
      %1557 = vmatprep.mubr.bf16.mxu0 %v800
      %1558 = vmatmul.mubr.bf16.gmra.mxu0 %v782
      %v1559 = vpop.f32.mrf.mxu0
      %v1560 = vadd.f32 %v1519, %v1559
      %v1561 = vpop.f32.mrf.mxu0
      %v1562 = vpop.f32.mrf.mxu0
      %v1563 = vadd.f32 %v1522, %v1562
      %v1564 = vpop.f32.mrf.mxu0
      %1565 = vdwg.mxu0
      %1566 = vmatprep.subr.bf16.mxu0 0
      %1567 = vmatpush1.bf16.msra.mxu0 %v1354
      %1568 = vmatprep.subr.bf16.mxu0 0
      %1569 = vmatpush1.bf16.msra.mxu0 %v1353
      %1570 = vmatprep.subr.bf16.mxu0 0
      %1571 = vmatpush1.bf16.msra.mxu0 %v1352
      %1572 = vmatprep.subr.bf16.mxu0 0
      %1573 = vmatpush1.bf16.msra.mxu0 %v1351
      %1574 = vmatprep.subr.bf16.mxu0 0
      %1575 = vmatpush1.bf16.msra.mxu0 %v1350
      %1576 = vmatprep.subr.bf16.mxu0 0
      %1577 = vmatpush1.bf16.msra.mxu0 %v1349
      %1578 = vmatprep.subr.bf16.mxu0 0
      %1579 = vmatpush1.bf16.msra.mxu0 %v1348
      %1580 = vmatprep.subr.bf16.mxu0 0
      %1581 = vmatpush1.bf16.msra.mxu0 %v1347
      %1582 = vmatprep.subr.bf16.mxu0 0
      %1583 = vmatpush2.bf16.msra.mxu0 %v1362
      %1584 = vmatprep.subr.bf16.mxu0 0
      %1585 = vmatpush2.bf16.msra.mxu0 %v1361
      %1586 = vmatprep.subr.bf16.mxu0 0
      %1587 = vmatpush2.bf16.msra.mxu0 %v1360
      %1588 = vmatprep.subr.bf16.mxu0 0
      %1589 = vmatpush2.bf16.msra.mxu0 %v1359
      %1590 = vmatprep.subr.bf16.mxu0 0
      %1591 = vmatpush2.bf16.msra.mxu0 %v1358
      %1592 = vmatprep.subr.bf16.mxu0 0
      %1593 = vmatpush2.bf16.msra.mxu0 %v1357
      %1594 = vmatprep.subr.bf16.mxu0 0
      %1595 = vmatpush2.bf16.msra.mxu0 %v1356
      %1596 = vmatprep.subr.bf16.mxu0 0
      %1597 = vmatpush2.bf16.msra.mxu0 %v1355
      %1598 = vmatprep.mubr.bf16.mxu0 %v840
      %1599 = vmatmul.mubr.bf16.gmra.mxu0 %v822
      %v1600 = vpop.f32.mrf.mxu0
      %v1601 = vadd.f32 %v1560, %v1600
      %v1602 = vpop.f32.mrf.mxu0
      %v1603 = vpop.f32.mrf.mxu0
      %v1604 = vadd.f32 %v1563, %v1603
      %v1605 = vpop.f32.mrf.mxu0
      %1606 = vdwg.mxu0
      %1607 = vmatprep.subr.bf16.mxu0 0
      %1608 = vmatpush1.bf16.msra.mxu0 %v1370
      %1609 = vmatprep.subr.bf16.mxu0 0
      %1610 = vmatpush1.bf16.msra.mxu0 %v1369
      %1611 = vmatprep.subr.bf16.mxu0 0
      %1612 = vmatpush1.bf16.msra.mxu0 %v1368
      %1613 = vmatprep.subr.bf16.mxu0 0
      %1614 = vmatpush1.bf16.msra.mxu0 %v1367
      %1615 = vmatprep.subr.bf16.mxu0 0
      %1616 = vmatpush1.bf16.msra.mxu0 %v1366
      %1617 = vmatprep.subr.bf16.mxu0 0
      %1618 = vmatpush1.bf16.msra.mxu0 %v1365
      %1619 = vmatprep.subr.bf16.mxu0 0
      %1620 = vmatpush1.bf16.msra.mxu0 %v1364
      %1621 = vmatprep.subr.bf16.mxu0 0
      %1622 = vmatpush1.bf16.msra.mxu0 %v1363
      %1623 = vmatprep.subr.bf16.mxu0 0
      %1624 = vmatpush2.bf16.msra.mxu0 0
      %1625 = vmatprep.subr.bf16.mxu0 0
      %1626 = vmatpush2.bf16.msra.mxu0 0
      %1627 = vmatprep.subr.bf16.mxu0 0
      %1628 = vmatpush2.bf16.msra.mxu0 0
      %1629 = vmatprep.subr.bf16.mxu0 0
      %1630 = vmatpush2.bf16.msra.mxu0 0
      %1631 = vmatprep.subr.bf16.mxu0 0
      %1632 = vmatpush2.bf16.msra.mxu0 0
      %1633 = vmatprep.subr.bf16.mxu0 0
      %1634 = vmatpush2.bf16.msra.mxu0 0
      %1635 = vmatprep.subr.bf16.mxu0 0
      %1636 = vmatpush2.bf16.msra.mxu0 0
      %1637 = vmatprep.subr.bf16.mxu0 0
      %1638 = vmatpush2.bf16.msra.mxu0 0
      %1639 = vmatprep.mubr.bf16.mxu0 0
      %1640 = vmatmul.mubr.bf16.gmra.mxu0 %v858
      %v1641 = vpop.f32.mrf.mxu0
      %v1642 = vadd.f32 %v1601, %v1641
      %v1643 = vpop.f32.mrf.mxu0
      %v1644 = vpop.f32.mrf.mxu0
      %v1645 = vadd.f32 %v1604, %v1644
      %v1646 = vpop.f32.mrf.mxu0
      %1647 = vdwg.mxu0
      %v1648 = vand.u32 2147483647, %v1642
      %v1649 = vand.u32 2147483647, %v1645
      %v1650 = vsub.f32 0.0, %v1648
      %v1651 = vsub.f32 0.0, %v1649
      %v1652 = vmul.f32 %v1650, 1.442695
      %v1653 = vpow.pop %v1652
      %v1654 = vmul.f32 %v1651, 1.442695
      %v1655 = vpow.pop %v1654
      %v1656 = vadd.f32 %v1653, 1.0
      %v1657 = vadd.f32 %v1655, 1.0
      %v1658 = vrcp.pop %v1656
      %v1659 = vrcp.pop %v1657
      %vm1660 = vcmp.ge.f32.partialorder %v1642, 0.0
      %vm1661 = vcmp.ge.f32.partialorder %v1645, 0.0
      %v1662 = vmul.f32 %v1653, %v1658
      %v1663 = vmul.f32 %v1655, %v1659
      %v1664 = vsel %vm1660, %v1658, %v1662
      %v1665 = vsel %vm1661, %v1659, %v1663
      %v1666 = vmul.f32 %v1642, %v1664
      %v1667 = vmul.f32 %v1645, %v1665
      %v1668 = vpack.c.bf16 %v1667, %v1666
      %v1670 = vcombine.high %v1668, %v1668
      %v1672 = vunpack.c.l.s4 1983009808
      %v1673 = vunpack.c.0.s8 %v1672
      %v1674 = vlaneseq
      %v1675 = vshrl.u32 %v1674, 7
      %v1676 = vsub.s32 %v1673, %v1675
      %v1677 = vrot.slane %v1668, %v1676
      %v1679 = vunpack.c.l.s4 1983009808
      %v1680 = vunpack.c.0.s8 %v1679
      %v1681 = vlaneseq
      %v1682 = vshrl.u32 %v1681, 7
      %v1683 = vsub.s32 %v1680, %v1682
      %v1684 = vrot.slane %v1670, %v1683
      %v1685 = vcombine.high %v1677, %v1677
      %v1686 = vcombine.high %v1684, %v1684
      %1691 = vst [vmem:[%s192] sm:$0x3] %v1677
      %1692 = vst [vmem:[%s192 + $0x2] sm:$0x3] %v1685
      %1693 = vst [vmem:[%s192 + $0x4] sm:$0x3] %v1684
      %1694 = vst [vmem:[%s192 + $0x6] sm:$0x3] %v1686
      %s1695 = smul.u32 4, %s19
      %p1696 = scmp.lt.s32.totalorder %s18, 1
      %s1697 = scalar_select %p1696, %s18, 1
      %p1698 = scmp.lt.s32.totalorder %s1695, 3
      %s1699 = scalar_select %p1698, %s1695, 3
      %s1700 = smul.addr %s1697, 4
      %s1701 = sadd.s32 %s1699, %s1700
      %s1702 = smul.addr %s1701, 2
      %s1703 = scalar_lea.vmem %s3, %s1702
      // Predicated region
      $region33: #{_lambda_.11} parent=31 // pred_check
        %p1704 = pneg %p114
      $region34: #{_lambda_.11} parent=31 // pred_check_branch
        %1706 = sbr.rel (%p1704) target = $region36
      $region35: #{_lambda_.11} parent=31 // pred_region
        %s1707 = smul.u32 4, %s19
      $region36: #{_lambda_.11} parent=31 // pred_fallthru
        _
    $region32: #{_lambda_.11} parent=5 // pred_fallthru
      _
    %p1708 = scmp.le.s32.totalorder 2, %s9
    // Predicated region
    $region37: #{_lambda_.11} parent=5 // pred_check
      %p1709 = pneg %p1708
    $region38: #{_lambda_.11} parent=5 // pred_check_branch
      %1711 = sbr.rel (%p1709) target = $region40
    $region39: #{_lambda_.11} parent=5 // pred_region
      %s1712 = ssub.s32 %s9, 2
      // Predicated region
      $region41: #{_lambda_.11} parent=39 // pred_check
        %p1713 = pneg %p120
      $region42: #{_lambda_.11} parent=39 // pred_check_branch
        %1715 = sbr.rel (%p1713) target = $region44
      $region43: #{_lambda_.11} parent=39 // pred_region
        %s1716 = smul.u32 4, %s21
        %p1717 = scmp.lt.s32.totalorder %s20, 1
        %s1718 = scalar_select %p1717, %s20, 1
        %p1719 = scmp.lt.s32.totalorder %s1716, 3
        %s1720 = scalar_select %p1719, %s1716, 3
        %s1721 = smul.addr %s1718, 4
        %s1722 = sadd.s32 %s1720, %s1721
        %s1723 = smul.addr %s1722, 2
        %s1724 = scalar_lea.vmem %s3, %s1723
      $region44: #{_lambda_.11} parent=39 // pred_fallthru
        _
    $region40: #{_lambda_.11} parent=5 // pred_fallthru
      _
  $region6: #{_lambda_.11} parent=0 // loop_footer
    %s13 = sadd.s32 1, %s9
  $region7: #{_lambda_.11} parent=0 // loop_footer_branch
    %8 = sbr.rel target = $region3
  $region8: #{_lambda_.11} parent=0 // loop_exit
    _

// kernel: _lambda_.13
$region0: #{_lambda_.13}
  #allocation0 [shape = 'u32[]', space=smem, size = 0x4, offset = 0x4, fixed_abs, tag = 'smem constant byte address 0x4 - core index']
  #allocation1 [shape = 'u32[144,128]{1,0:T(1,128)}', space=vmem, size = 0x12000, scoped, tag = 'internal scratch']
  %s0 = inlined_call_operand.vmem [shape: bf16[2,4,4,128], index: 0, kind: input, shape index: {}]
  %s1 = inlined_call_operand.vmem [shape: bf16[1152,128], index: 1, kind: input, shape index: {}]
  %s2 = inlined_call_operand.vmem [shape: f32[1,128], index: 2, kind: input, shape index: {}]
  %s3 = inlined_call_operand.vmem [shape: bf16[2,2,2,128], index: 3, kind: output, shape index: {}]
  %s4 = sld [smem:[#allocation0]]
  $region45: #{_lambda_.13} parent=0
    _
  %s6 = ssub.s32 1, %s4
  %s7 = scalar_select 0, %s6, %s4
  loop: start=0, step=1, limit=4
  $region2: #{_lambda_.13} parent=0 // loop_pre_header
    _
  $region3: #{_lambda_.13} parent=0 // loop_header
    %s9 = sphi 0, %s13
    %p10 = scmp.ge.s32.totalorder %s9, 4
    %s16 = sphi 0, %s28
    %s17 = sphi 0, %s24
    %s18 = sphi 0, %s16
    %s19 = sphi 0, %s17
    %s20 = sphi 0, %s18
    %s21 = sphi 0, %s19
    %s31 = sphi 0, %s33
    %s34 = sphi 0, %s31
    %s35 = sphi 0, %s34
    %s51 = sphi 0, %s35
    %s55 = sphi 0, %s55
    %s57 = sphi 0, %s55
    %s58 = sphi 0, %s57
    %s72 = sphi 0, %s58
    %s76 = sphi 0, %s76
    %s78 = sphi 0, %s76
    %s79 = sphi 0, %s78
    %s93 = sphi 0, %s79
    %s101 = sphi 0, %s103
    %s104 = sphi 0, %s101
    %s105 = sphi 0, %s104
    %s121 = sphi 0, %s105
  $region4: #{_lambda_.13} parent=0 // loop_header_branch
    %12 = sbr.rel (%p10) target = $region8
  $region5: #{_lambda_.13} parent=0 // loop_body
    %s14 = ssub.s32 %s9, 1
    %s15 = ssub.s32 %s9, 2
    %s22 = sadd.s32 1, %s17
    %p23 = scmp.ge.s32.totalorder %s22, 1
    %s24 = scalar_select %p23, 0, %s22
    %s25 = sadd.s32 1, %s16
    %s26 = scalar_select %p23, %s25, %s16
    %p27 = scmp.ge.s32.totalorder %s26, 2
    %s28 = scalar_select %p27, 0, %s26
    %s29 = ssub.s32 %s16, %s28
    %p30 = scmp.eq.s32.totalorder %s29, 0
    %s32 = sadd.s32 %s31, 1
    %s33 = scalar_select %p30, %s31, %s32
    %p36 = pneg %p30
    %p37 = scmp.eq.s32.totalorder %s9, 1
    %p38 = por %p36, %p37
    %p39 = scmp.ne.s32.totalorder %s31, %s34
    %p40 = scmp.eq.s32.totalorder %s9, 0
    %p41 = por %p39, %p40
    %p42 = scmp.ne.s32.totalorder %s31, %s34
    %p43 = scmp.eq.s32.totalorder %s14, 1
    %p44 = por %p42, %p43
    %p45 = scmp.ne.s32.totalorder %s34, %s35
    %p46 = scmp.eq.s32.totalorder %s14, 0
    %p47 = por %p45, %p46
    %p48 = scmp.ne.s32.totalorder %s34, %s35
    %p49 = scmp.eq.s32.totalorder %s15, 1
    %p50 = por %p48, %p49
    %p52 = scmp.ne.s32.totalorder %s35, %s51
    %p53 = scmp.eq.s32.totalorder %s15, 0
    %p54 = por %p52, %p53
    %s56 = sadd.s32 %s55, 1
    %p59 = scmp.eq.s32.totalorder %s9, 1
    %p60 = scmp.ne.s32.totalorder %s55, %s57
    %p61 = scmp.eq.s32.totalorder %s9, 0
    %p62 = por %p60, %p61
    %p63 = scmp.ne.s32.totalorder %s55, %s57
    %p64 = scmp.eq.s32.totalorder %s14, 1
    %p65 = por %p63, %p64
    %p66 = scmp.ne.s32.totalorder %s57, %s58
    %p67 = scmp.eq.s32.totalorder %s14, 0
    %p68 = por %p66, %p67
    %p69 = scmp.ne.s32.totalorder %s57, %s58
    %p70 = scmp.eq.s32.totalorder %s15, 1
    %p71 = por %p69, %p70
    %p73 = scmp.ne.s32.totalorder %s58, %s72
    %p74 = scmp.eq.s32.totalorder %s15, 0
    %p75 = por %p73, %p74
    %s77 = sadd.s32 %s76, 1
    %p80 = scmp.eq.s32.totalorder %s9, 1
    %p81 = scmp.ne.s32.totalorder %s76, %s78
    %p82 = scmp.eq.s32.totalorder %s9, 0
    %p83 = por %p81, %p82
    %p84 = scmp.ne.s32.totalorder %s76, %s78
    %p85 = scmp.eq.s32.totalorder %s14, 1
    %p86 = por %p84, %p85
    %p87 = scmp.ne.s32.totalorder %s78, %s79
    %p88 = scmp.eq.s32.totalorder %s14, 0
    %p89 = por %p87, %p88
    %p90 = scmp.ne.s32.totalorder %s78, %s79
    %p91 = scmp.eq.s32.totalorder %s15, 1
    %p92 = por %p90, %p91
    %p94 = scmp.ne.s32.totalorder %s79, %s93
    %p95 = scmp.eq.s32.totalorder %s15, 0
    %p96 = por %p94, %p95
    %s97 = ssub.s32 %s16, %s28
    %s98 = ssub.s32 %s17, %s24
    %s99 = sor.u32 %s97, %s98
    %p100 = scmp.eq.s32.totalorder %s99, 0
    %s102 = sadd.s32 %s101, 1
    %s103 = scalar_select %p100, %s101, %s102
    %p106 = pneg %p100
    %p107 = scmp.eq.s32.totalorder %s9, 1
    %p108 = por %p106, %p107
    %p109 = scmp.ne.s32.totalorder %s101, %s104
    %p110 = scmp.eq.s32.totalorder %s9, 0
    %p111 = por %p109, %p110
    %p112 = scmp.ne.s32.totalorder %s101, %s104
    %p113 = scmp.eq.s32.totalorder %s14, 1
    %p114 = por %p112, %p113
    %p115 = scmp.ne.s32.totalorder %s104, %s105
    %p116 = scmp.eq.s32.totalorder %s14, 0
    %p117 = por %p115, %p116
    %p118 = scmp.ne.s32.totalorder %s104, %s105
    %p119 = scmp.eq.s32.totalorder %s15, 1
    %p120 = por %p118, %p119
    %p122 = scmp.ne.s32.totalorder %s105, %s121
    %p123 = scmp.eq.s32.totalorder %s15, 0
    %p124 = por %p122, %p123
    %p125 = scmp.le.s32.totalorder 1, %s9
    %p126 = scmp.lt.s32.totalorder %s9, 3
    %p127 = pnand %p125, %p126
    %p128 = pneg %p127
    // Predicated region
    $region9: #{_lambda_.13} parent=5 // pred_check
      _
    $region10: #{_lambda_.13} parent=5 // pred_check_branch
      %130 = sbr.rel (%p127) target = $region12
    $region11: #{_lambda_.13} parent=5 // pred_region
      %s131 = ssub.s32 %s9, 1
      // Predicated region
      $region13: #{_lambda_.13} parent=11 // pred_check
        %p132 = pneg %p68
      $region14: #{_lambda_.13} parent=11 // pred_check_branch
        %134 = sbr.rel (%p132) target = $region16
      $region15: #{_lambda_.13} parent=11 // pred_region
        _
      $region16: #{_lambda_.13} parent=11 // pred_fallthru
        _
      // Predicated region
      $region17: #{_lambda_.13} parent=11 // pred_check
        %p135 = pneg %p89
      $region18: #{_lambda_.13} parent=11 // pred_check_branch
        %137 = sbr.rel (%p135) target = $region20
      $region19: #{_lambda_.13} parent=11 // pred_region
        _
      $region20: #{_lambda_.13} parent=11 // pred_fallthru
        _
    $region12: #{_lambda_.13} parent=5 // pred_fallthru
      _
    %p138 = scmp.lt.s32.totalorder %s9, 2
    // Predicated region
    $region21: #{_lambda_.13} parent=5 // pred_check
      %p139 = pneg %p138
    $region22: #{_lambda_.13} parent=5 // pred_check_branch
      %141 = sbr.rel (%p139) target = $region24
    $region23: #{_lambda_.13} parent=5 // pred_region
      // Predicated region
      $region25: #{_lambda_.13} parent=23 // pred_check
        %p142 = pneg %p41
      $region26: #{_lambda_.13} parent=23 // pred_check_branch
        %144 = sbr.rel (%p142) target = $region28
      $region27: #{_lambda_.13} parent=23 // pred_region
        %p145 = scmp.lt.s32.totalorder %s16, 1
        %s146 = scalar_select %p145, %s16, 1
        %s147 = smul.addr %s146, 4
        %s148 = smul.addr %s147, 2
        %s149 = scalar_lea.vmem %s0, %s148
      $region28: #{_lambda_.13} parent=23 // pred_fallthru
        _
    $region24: #{_lambda_.13} parent=5 // pred_fallthru
      _
    %p150 = scmp.le.s32.totalorder 1, %s9
    %p151 = scmp.lt.s32.totalorder %s9, 3
    %p152 = pnand %p150, %p151
    %p153 = pneg %p152
    // Predicated region
    $region29: #{_lambda_.13} parent=5 // pred_check
      _
    $region30: #{_lambda_.13} parent=5 // pred_check_branch
      %155 = sbr.rel (%p152) target = $region32
    $region31: #{_lambda_.13} parent=5 // pred_region
      %s156 = ssub.s32 %s9, 1
      %p157 = scmp.lt.s32.totalorder %s18, 1
      %s158 = scalar_select %p157, %s18, 1
      %s159 = smul.addr %s158, 4
      %s160 = smul.addr %s159, 2
      %s161 = scalar_lea.vmem %s0, %s160
      %p162 = pneg %p47
      %p163 = pneg %p44
      %p164 = pneg %p68
      %p165 = pneg %p65
      %p166 = pneg %p89
      %p167 = pneg %p86
      %p168 = pneg %p117
      %p169 = pneg %p114
      %s170 = smul.u32 2, %s19
      %p171 = scmp.lt.s32.totalorder %s18, 1
      %s172 = scalar_select %p171, %s18, 1
      %p173 = scmp.lt.s32.totalorder %s170, 1
      %s174 = scalar_select %p173, %s170, 1
      %s175 = smul.addr %s172, 2
      %s176 = sadd.s32 %s174, %s175
      %s177 = scalar_lea.vmem %s3, %s176
      %p178 = scmp.lt.s32.totalorder %s18, 1
      %s179 = scalar_select %p178, %s18, 1
      %s180 = smul.addr %s179, 4
      %s181 = smul.addr %s180, 2
      %s182 = scalar_lea.vmem %s0, %s181
      %s183 = smul.u32 2, %s19
      %p184 = scmp.lt.s32.totalorder %s18, 1
      %s185 = scalar_select %p184, %s18, 1
      %p186 = scmp.lt.s32.totalorder %s183, 1
      %s187 = scalar_select %p186, %s183, 1
      %s188 = smul.addr %s185, 2
      %s189 = sadd.s32 %s187, %s188
      %s190 = scalar_lea.vmem %s3, %s189
      %s191 = smul.u32 2, %s19
      %s193 = smul.u32 %s19, 2
      %s194 = smul.addr %s193, 2
      %s195 = scalar_lea.vmem %s182, %s194
      %v196 = vld [vmem:[%s195] sm:$0x1]
      %v197 = vld [vmem:[%s195 + $0x2] sm:$0x1]
      %v198 = vld [vmem:[%s195] sm:$0x3]
      %v199 = vld [vmem:[%s195 + $0x2] sm:$0x3]
      %v203 = vunpack.c.l.s4 1966171168
      %v204 = vunpack.c.0.s8 %v203
      %v205 = vlaneseq
      %v206 = vshrl.u32 %v205, 7
      %v207 = vsub.s32 %v204, %v206
      %v208 = vrot.slane %v198, %v207
      %v209 = vcombine.high %v208, %v208
      %v211 = vunpack.c.l.s4 1966171168
      %v212 = vunpack.c.0.s8 %v211
      %v213 = vlaneseq
      %v214 = vshrl.u32 %v213, 7
      %v215 = vsub.s32 %v212, %v214
      %v216 = vrot.slane %v199, %v215
      %v217 = vcombine.high %v216, %v216
      %vm218 = vsmask.f32 256
      %vm219 = vsmask.f32 1284
      %vm220 = vmor %vm218, %vm219
      %vm221 = vsmask.f32 2312
      %vm222 = vmor %vm220, %vm221
      %vm223 = vsmask.f32 3340
      %vm224 = vmor %vm222, %vm223
      %vm225 = vsmask.f32 4368
      %vm226 = vmor %vm224, %vm225
      %vm227 = vsmask.f32 5396
      %vm228 = vmor %vm226, %vm227
      %vm229 = vsmask.f32 6424
      %vm230 = vmor %vm228, %vm229
      %vm231 = vsmask.f32 7452
      %vm232 = vmor %vm230, %vm231
      %v234 = vshrl.u32 %v208, 16
      %v236 = vrot.slane %v234, 7
      %v237 = vrot.slane %v236, 1
      %v239 = vshll.u32 %v209, 16
      %v241 = vsel %vm232, %v237, %v239
      %v243 = vshrl.u32 %v216, 16
      %v245 = vrot.slane %v243, 7
      %v246 = vrot.slane %v245, 1
      %v248 = vshll.u32 %v217, 16
      %v250 = vsel %vm232, %v246, %v248
      %v251 = vld [vmem:[%s195] sm:$0x2]
      %v252 = vld [vmem:[%s195 + $0x2] sm:$0x2]
      %v256 = vunpack.c.l.s4 1966171168
      %v257 = vunpack.c.0.s8 %v256
      %v258 = vlaneseq
      %v259 = vshrl.u32 %v258, 7
      %v260 = vsub.s32 %v257, %v259
      %v261 = vrot.slane %v251, %v260
      %v262 = vcombine.high %v261, %v261
      %v264 = vunpack.c.l.s4 1966171168
      %v265 = vunpack.c.0.s8 %v264
      %v266 = vlaneseq
      %v267 = vshrl.u32 %v266, 7
      %v268 = vsub.s32 %v265, %v267
      %v269 = vrot.slane %v252, %v268
      %v270 = vcombine.high %v269, %v269
      %s271 = sadd.s32 %s193, 1
      %s272 = smul.addr %s271, 2
      %s273 = scalar_lea.vmem %s182, %s272
      %v274 = vld [vmem:[%s273] sm:$0x1]
      %v275 = vld [vmem:[%s273 + $0x2] sm:$0x1]
      %v276 = vld [vmem:[%s273] sm:$0x3]
      %v277 = vld [vmem:[%s273 + $0x2] sm:$0x3]
      %v281 = vunpack.c.l.s4 1966171168
      %v282 = vunpack.c.0.s8 %v281
      %v283 = vlaneseq
      %v284 = vshrl.u32 %v283, 7
      %v285 = vsub.s32 %v282, %v284
      %v286 = vrot.slane %v276, %v285
      %v287 = vcombine.high %v286, %v286
      %v289 = vunpack.c.l.s4 1966171168
      %v290 = vunpack.c.0.s8 %v289
      %v291 = vlaneseq
      %v292 = vshrl.u32 %v291, 7
      %v293 = vsub.s32 %v290, %v292
      %v294 = vrot.slane %v277, %v293
      %v295 = vcombine.high %v294, %v294
      %v297 = vshrl.u32 %v286, 16
      %v299 = vrot.slane %v297, 7
      %v300 = vrot.slane %v299, 1
      %v302 = vshll.u32 %v287, 16
      %v304 = vsel %vm232, %v300, %v302
      %v306 = vshrl.u32 %v294, 16
      %v308 = vrot.slane %v306, 7
      %v309 = vrot.slane %v308, 1
      %v311 = vshll.u32 %v295, 16
      %v313 = vsel %vm232, %v309, %v311
      %v314 = vld [vmem:[%s273] sm:$0x2]
      %v315 = vld [vmem:[%s273 + $0x2] sm:$0x2]
      %v319 = vunpack.c.l.s4 1966171168
      %v320 = vunpack.c.0.s8 %v319
      %v321 = vlaneseq
      %v322 = vshrl.u32 %v321, 7
      %v323 = vsub.s32 %v320, %v322
      %v324 = vrot.slane %v314, %v323
      %v325 = vcombine.high %v324, %v324
      %v327 = vunpack.c.l.s4 1966171168
      %v328 = vunpack.c.0.s8 %v327
      %v329 = vlaneseq
      %v330 = vshrl.u32 %v329, 7
      %v331 = vsub.s32 %v328, %v330
      %v332 = vrot.slane %v315, %v331
      %v333 = vcombine.high %v332, %v332
      %s334 = sadd.s32 %s193, 2
      %s335 = smul.addr %s334, 2
      %s336 = scalar_lea.vmem %s182, %s335
      %v337 = vld [vmem:[%s336] sm:$0x1]
      %v338 = vld [vmem:[%s336 + $0x2] sm:$0x1]
      %v339 = vld [vmem:[%s336] sm:$0x3]
      %v340 = vld [vmem:[%s336 + $0x2] sm:$0x3]
      %v344 = vunpack.c.l.s4 1966171168
      %v345 = vunpack.c.0.s8 %v344
      %v346 = vlaneseq
      %v347 = vshrl.u32 %v346, 7
      %v348 = vsub.s32 %v345, %v347
      %v349 = vrot.slane %v339, %v348
      %v350 = vcombine.high %v349, %v349
      %v352 = vunpack.c.l.s4 1966171168
      %v353 = vunpack.c.0.s8 %v352
      %v354 = vlaneseq
      %v355 = vshrl.u32 %v354, 7
      %v356 = vsub.s32 %v353, %v355
      %v357 = vrot.slane %v340, %v356
      %v358 = vcombine.high %v357, %v357
      %v360 = vshrl.u32 %v349, 16
      %v362 = vrot.slane %v360, 7
      %v363 = vrot.slane %v362, 1
      %v365 = vshll.u32 %v350, 16
      %v367 = vsel %vm232, %v363, %v365
      %v369 = vshrl.u32 %v357, 16
      %v371 = vrot.slane %v369, 7
      %v372 = vrot.slane %v371, 1
      %v374 = vshll.u32 %v358, 16
      %v376 = vsel %vm232, %v372, %v374
      %v377 = vld [vmem:[%s336] sm:$0x2]
      %v378 = vld [vmem:[%s336 + $0x2] sm:$0x2]
      %v382 = vunpack.c.l.s4 1966171168
      %v383 = vunpack.c.0.s8 %v382
      %v384 = vlaneseq
      %v385 = vshrl.u32 %v384, 7
      %v386 = vsub.s32 %v383, %v385
      %v387 = vrot.slane %v377, %v386
      %v388 = vcombine.high %v387, %v387
      %v390 = vunpack.c.l.s4 1966171168
      %v391 = vunpack.c.0.s8 %v390
      %v392 = vlaneseq
      %v393 = vshrl.u32 %v392, 7
      %v394 = vsub.s32 %v391, %v393
      %v395 = vrot.slane %v378, %v394
      %v396 = vcombine.high %v395, %v395
      %v399 = vcombine.low %v196, %v197
      %v401 = vunpack.c.l.s4 1966171168
      %v402 = vunpack.c.0.s8 %v401
      %v403 = vlaneseq
      %v404 = vshrl.u32 %v403, 7
      %v405 = vsub.s32 %v402, %v404
      %v406 = vrot.slane %v399, %v405
      %v408 = vunpack.c.l.s4 1966171168
      %v409 = vunpack.c.0.s8 %v408
      %v410 = vlaneseq
      %v411 = vshrl.u32 %v410, 7
      %v412 = vsub.s32 %v409, %v411
      %v413 = vrot.slane %v406, %v412
      %v415 = vcombine.low %v241, %v250
      %v417 = vunpack.c.l.s4 1966171168
      %v418 = vunpack.c.0.s8 %v417
      %v419 = vlaneseq
      %v420 = vshrl.u32 %v419, 7
      %v421 = vsub.s32 %v418, %v420
      %v422 = vrot.slane %v415, %v421
      %v424 = vunpack.c.l.s4 1966171168
      %v425 = vunpack.c.0.s8 %v424
      %v426 = vlaneseq
      %v427 = vshrl.u32 %v426, 7
      %v428 = vsub.s32 %v425, %v427
      %v429 = vrot.slane %v422, %v428
      %v431 = vcombine.low %v262, %v270
      %v433 = vunpack.c.l.s4 1966171168
      %v434 = vunpack.c.0.s8 %v433
      %v435 = vlaneseq
      %v436 = vshrl.u32 %v435, 7
      %v437 = vsub.s32 %v434, %v436
      %v438 = vrot.slane %v431, %v437
      %v440 = vunpack.c.l.s4 1966171168
      %v441 = vunpack.c.0.s8 %v440
      %v442 = vlaneseq
      %v443 = vshrl.u32 %v442, 7
      %v444 = vsub.s32 %v441, %v443
      %v445 = vrot.slane %v438, %v444
      %v449 = vcombine.low %v274, %v275
      %v451 = vunpack.c.l.s4 1966171168
      %v452 = vunpack.c.0.s8 %v451
      %v453 = vlaneseq
      %v454 = vshrl.u32 %v453, 7
      %v455 = vsub.s32 %v452, %v454
      %v456 = vrot.slane %v449, %v455
      %v458 = vunpack.c.l.s4 1966171168
      %v459 = vunpack.c.0.s8 %v458
      %v460 = vlaneseq
      %v461 = vshrl.u32 %v460, 7
      %v462 = vsub.s32 %v459, %v461
      %v463 = vrot.slane %v456, %v462
      %v465 = vcombine.low %v304, %v313
      %v467 = vunpack.c.l.s4 1966171168
      %v468 = vunpack.c.0.s8 %v467
      %v469 = vlaneseq
      %v470 = vshrl.u32 %v469, 7
      %v471 = vsub.s32 %v468, %v470
      %v472 = vrot.slane %v465, %v471
      %v474 = vunpack.c.l.s4 1966171168
      %v475 = vunpack.c.0.s8 %v474
      %v476 = vlaneseq
      %v477 = vshrl.u32 %v476, 7
      %v478 = vsub.s32 %v475, %v477
      %v479 = vrot.slane %v472, %v478
      %v481 = vcombine.low %v325, %v333
      %v483 = vunpack.c.l.s4 1966171168
      %v484 = vunpack.c.0.s8 %v483
      %v485 = vlaneseq
      %v486 = vshrl.u32 %v485, 7
      %v487 = vsub.s32 %v484, %v486
      %v488 = vrot.slane %v481, %v487
      %v490 = vunpack.c.l.s4 1966171168
      %v491 = vunpack.c.0.s8 %v490
      %v492 = vlaneseq
      %v493 = vshrl.u32 %v492, 7
      %v494 = vsub.s32 %v491, %v493
      %v495 = vrot.slane %v488, %v494
      %v499 = vcombine.low %v337, %v338
      %v501 = vunpack.c.l.s4 1966171168
      %v502 = vunpack.c.0.s8 %v501
      %v503 = vlaneseq
      %v504 = vshrl.u32 %v503, 7
      %v505 = vsub.s32 %v502, %v504
      %v506 = vrot.slane %v499, %v505
      %v508 = vunpack.c.l.s4 1966171168
      %v509 = vunpack.c.0.s8 %v508
      %v510 = vlaneseq
      %v511 = vshrl.u32 %v510, 7
      %v512 = vsub.s32 %v509, %v511
      %v513 = vrot.slane %v506, %v512
      %v515 = vcombine.low %v367, %v376
      %v517 = vunpack.c.l.s4 1966171168
      %v518 = vunpack.c.0.s8 %v517
      %v519 = vlaneseq
      %v520 = vshrl.u32 %v519, 7
      %v521 = vsub.s32 %v518, %v520
      %v522 = vrot.slane %v515, %v521
      %v524 = vunpack.c.l.s4 1966171168
      %v525 = vunpack.c.0.s8 %v524
      %v526 = vlaneseq
      %v527 = vshrl.u32 %v526, 7
      %v528 = vsub.s32 %v525, %v527
      %v529 = vrot.slane %v522, %v528
      %v531 = vcombine.low %v388, %v396
      %v533 = vunpack.c.l.s4 1966171168
      %v534 = vunpack.c.0.s8 %v533
      %v535 = vlaneseq
      %v536 = vshrl.u32 %v535, 7
      %v537 = vsub.s32 %v534, %v536
      %v538 = vrot.slane %v531, %v537
      %v540 = vunpack.c.l.s4 1966171168
      %v541 = vunpack.c.0.s8 %v540
      %v542 = vlaneseq
      %v543 = vshrl.u32 %v542, 7
      %v544 = vsub.s32 %v541, %v543
      %v545 = vrot.slane %v538, %v544
      %v547 = vld [vmem:[%s1] sm:$0xf]
      %v548 = vld [vmem:[%s1 + $0x4] sm:$0xf]
      %v549 = vld [vmem:[%s1 + $0x8] sm:$0xf]
      %v550 = vld [vmem:[%s1 + $0xc] sm:$0xf]
      %v551 = vld [vmem:[%s1 + $0x10] sm:$0xf]
      %v552 = vld [vmem:[%s1 + $0x14] sm:$0xf]
      %v553 = vld [vmem:[%s1 + $0x18] sm:$0xf]
      %v554 = vld [vmem:[%s1 + $0x1c] sm:$0xf]
      %v555 = vld [vmem:[%s1 + $0x20] sm:$0xf]
      %v556 = vld [vmem:[%s1 + $0x24] sm:$0xf]
      %v557 = vld [vmem:[%s1 + $0x28] sm:$0xf]
      %v558 = vld [vmem:[%s1 + $0x2c] sm:$0xf]
      %v559 = vld [vmem:[%s1 + $0x30] sm:$0xf]
      %v560 = vld [vmem:[%s1 + $0x34] sm:$0xf]
      %v561 = vld [vmem:[%s1 + $0x38] sm:$0xf]
      %v562 = vld [vmem:[%s1 + $0x3c] sm:$0xf]
      %v563 = vld [vmem:[%s1 + $0x40] sm:$0xf]
      %v564 = vld [vmem:[%s1 + $0x44] sm:$0xf]
      %v565 = vld [vmem:[%s1 + $0x48] sm:$0xf]
      %v566 = vld [vmem:[%s1 + $0x4c] sm:$0xf]
      %v567 = vld [vmem:[%s1 + $0x50] sm:$0xf]
      %v568 = vld [vmem:[%s1 + $0x54] sm:$0xf]
      %v569 = vld [vmem:[%s1 + $0x58] sm:$0xf]
      %v570 = vld [vmem:[%s1 + $0x5c] sm:$0xf]
      %v571 = vld [vmem:[%s1 + $0x60] sm:$0xf]
      %v572 = vld [vmem:[%s1 + $0x64] sm:$0xf]
      %v573 = vld [vmem:[%s1 + $0x68] sm:$0xf]
      %v574 = vld [vmem:[%s1 + $0x6c] sm:$0xf]
      %v575 = vld [vmem:[%s1 + $0x70] sm:$0xf]
      %v576 = vld [vmem:[%s1 + $0x74] sm:$0xf]
      %v577 = vld [vmem:[%s1 + $0x78] sm:$0xf]
      %v578 = vld [vmem:[%s1 + $0x7c] sm:$0xf]
      %v579 = vld [vmem:[%s1 + $0x80] sm:$0xf]
      %v580 = vld [vmem:[%s1 + $0x84] sm:$0xf]
      %v581 = vld [vmem:[%s1 + $0x88] sm:$0xf]
      %v582 = vld [vmem:[%s1 + $0x8c] sm:$0xf]
      %v583 = vld [vmem:[%s1 + $0x90] sm:$0xf]
      %v584 = vld [vmem:[%s1 + $0x94] sm:$0xf]
      %v585 = vld [vmem:[%s1 + $0x98] sm:$0xf]
      %v586 = vld [vmem:[%s1 + $0x9c] sm:$0xf]
      %v587 = vld [vmem:[%s1 + $0xa0] sm:$0xf]
      %v588 = vld [vmem:[%s1 + $0xa4] sm:$0xf]
      %v589 = vld [vmem:[%s1 + $0xa8] sm:$0xf]
      %v590 = vld [vmem:[%s1 + $0xac] sm:$0xf]
      %v591 = vld [vmem:[%s1 + $0xb0] sm:$0xf]
      %v592 = vld [vmem:[%s1 + $0xb4] sm:$0xf]
      %v593 = vld [vmem:[%s1 + $0xb8] sm:$0xf]
      %v594 = vld [vmem:[%s1 + $0xbc] sm:$0xf]
      %v595 = vld [vmem:[%s1 + $0xc0] sm:$0xf]
      %v596 = vld [vmem:[%s1 + $0xc4] sm:$0xf]
      %v597 = vld [vmem:[%s1 + $0xc8] sm:$0xf]
      %v598 = vld [vmem:[%s1 + $0xcc] sm:$0xf]
      %v599 = vld [vmem:[%s1 + $0xd0] sm:$0xf]
      %v600 = vld [vmem:[%s1 + $0xd4] sm:$0xf]
      %v601 = vld [vmem:[%s1 + $0xd8] sm:$0xf]
      %v602 = vld [vmem:[%s1 + $0xdc] sm:$0xf]
      %v603 = vld [vmem:[%s1 + $0xe0] sm:$0xf]
      %v604 = vld [vmem:[%s1 + $0xe4] sm:$0xf]
      %v605 = vld [vmem:[%s1 + $0xe8] sm:$0xf]
      %v606 = vld [vmem:[%s1 + $0xec] sm:$0xf]
      %v607 = vld [vmem:[%s1 + $0xf0] sm:$0xf]
      %v608 = vld [vmem:[%s1 + $0xf4] sm:$0xf]
      %v609 = vld [vmem:[%s1 + $0xf8] sm:$0xf]
      %v610 = vld [vmem:[%s1 + $0xfc] sm:$0xf]
      %v611 = vld [vmem:[%s1 + $0x100] sm:$0xf]
      %v612 = vld [vmem:[%s1 + $0x104] sm:$0xf]
      %v613 = vld [vmem:[%s1 + $0x108] sm:$0xf]
      %v614 = vld [vmem:[%s1 + $0x10c] sm:$0xf]
      %v615 = vld [vmem:[%s1 + $0x110] sm:$0xf]
      %v616 = vld [vmem:[%s1 + $0x114] sm:$0xf]
      %v617 = vld [vmem:[%s1 + $0x118] sm:$0xf]
      %v618 = vld [vmem:[%s1 + $0x11c] sm:$0xf]
      %v619 = vld [vmem:[%s1 + $0x120] sm:$0xf]
      %v620 = vld [vmem:[%s1 + $0x124] sm:$0xf]
      %v621 = vld [vmem:[%s1 + $0x128] sm:$0xf]
      %v622 = vld [vmem:[%s1 + $0x12c] sm:$0xf]
      %v623 = vld [vmem:[%s1 + $0x130] sm:$0xf]
      %v624 = vld [vmem:[%s1 + $0x134] sm:$0xf]
      %v625 = vld [vmem:[%s1 + $0x138] sm:$0xf]
      %v626 = vld [vmem:[%s1 + $0x13c] sm:$0xf]
      %v627 = vld [vmem:[%s1 + $0x140] sm:$0xf]
      %v628 = vld [vmem:[%s1 + $0x144] sm:$0xf]
      %v629 = vld [vmem:[%s1 + $0x148] sm:$0xf]
      %v630 = vld [vmem:[%s1 + $0x14c] sm:$0xf]
      %v631 = vld [vmem:[%s1 + $0x150] sm:$0xf]
      %v632 = vld [vmem:[%s1 + $0x154] sm:$0xf]
      %v633 = vld [vmem:[%s1 + $0x158] sm:$0xf]
      %v634 = vld [vmem:[%s1 + $0x15c] sm:$0xf]
      %v635 = vld [vmem:[%s1 + $0x160] sm:$0xf]
      %v636 = vld [vmem:[%s1 + $0x164] sm:$0xf]
      %v637 = vld [vmem:[%s1 + $0x168] sm:$0xf]
      %v638 = vld [vmem:[%s1 + $0x16c] sm:$0xf]
      %v639 = vld [vmem:[%s1 + $0x170] sm:$0xf]
      %v640 = vld [vmem:[%s1 + $0x174] sm:$0xf]
      %v641 = vld [vmem:[%s1 + $0x178] sm:$0xf]
      %v642 = vld [vmem:[%s1 + $0x17c] sm:$0xf]
      %v643 = vld [vmem:[%s1 + $0x180] sm:$0xf]
      %v644 = vld [vmem:[%s1 + $0x184] sm:$0xf]
      %v645 = vld [vmem:[%s1 + $0x188] sm:$0xf]
      %v646 = vld [vmem:[%s1 + $0x18c] sm:$0xf]
      %v647 = vld [vmem:[%s1 + $0x190] sm:$0xf]
      %v648 = vld [vmem:[%s1 + $0x194] sm:$0xf]
      %v649 = vld [vmem:[%s1 + $0x198] sm:$0xf]
      %v650 = vld [vmem:[%s1 + $0x19c] sm:$0xf]
      %v651 = vld [vmem:[%s1 + $0x1a0] sm:$0xf]
      %v652 = vld [vmem:[%s1 + $0x1a4] sm:$0xf]
      %v653 = vld [vmem:[%s1 + $0x1a8] sm:$0xf]
      %v654 = vld [vmem:[%s1 + $0x1ac] sm:$0xf]
      %v655 = vld [vmem:[%s1 + $0x1b0] sm:$0xf]
      %v656 = vld [vmem:[%s1 + $0x1b4] sm:$0xf]
      %v657 = vld [vmem:[%s1 + $0x1b8] sm:$0xf]
      %v658 = vld [vmem:[%s1 + $0x1bc] sm:$0xf]
      %v659 = vld [vmem:[%s1 + $0x1c0] sm:$0xf]
      %v660 = vld [vmem:[%s1 + $0x1c4] sm:$0xf]
      %v661 = vld [vmem:[%s1 + $0x1c8] sm:$0xf]
      %v662 = vld [vmem:[%s1 + $0x1cc] sm:$0xf]
      %v663 = vld [vmem:[%s1 + $0x1d0] sm:$0xf]
      %v664 = vld [vmem:[%s1 + $0x1d4] sm:$0xf]
      %v665 = vld [vmem:[%s1 + $0x1d8] sm:$0xf]
      %v666 = vld [vmem:[%s1 + $0x1dc] sm:$0xf]
      %v667 = vld [vmem:[%s1 + $0x1e0] sm:$0xf]
      %v668 = vld [vmem:[%s1 + $0x1e4] sm:$0xf]
      %v669 = vld [vmem:[%s1 + $0x1e8] sm:$0xf]
      %v670 = vld [vmem:[%s1 + $0x1ec] sm:$0xf]
      %v671 = vld [vmem:[%s1 + $0x1f0] sm:$0xf]
      %v672 = vld [vmem:[%s1 + $0x1f4] sm:$0xf]
      %v673 = vld [vmem:[%s1 + $0x1f8] sm:$0xf]
      %v674 = vld [vmem:[%s1 + $0x1fc] sm:$0xf]
      %v675 = vld [vmem:[%s1 + $0x200] sm:$0xf]
      %v676 = vld [vmem:[%s1 + $0x204] sm:$0xf]
      %v677 = vld [vmem:[%s1 + $0x208] sm:$0xf]
      %v678 = vld [vmem:[%s1 + $0x20c] sm:$0xf]
      %v679 = vld [vmem:[%s1 + $0x210] sm:$0xf]
      %v680 = vld [vmem:[%s1 + $0x214] sm:$0xf]
      %v681 = vld [vmem:[%s1 + $0x218] sm:$0xf]
      %v682 = vld [vmem:[%s1 + $0x21c] sm:$0xf]
      %v683 = vld [vmem:[%s1 + $0x220] sm:$0xf]
      %v684 = vld [vmem:[%s1 + $0x224] sm:$0xf]
      %v685 = vld [vmem:[%s1 + $0x228] sm:$0xf]
      %v686 = vld [vmem:[%s1 + $0x22c] sm:$0xf]
      %v687 = vld [vmem:[%s1 + $0x230] sm:$0xf]
      %v688 = vld [vmem:[%s1 + $0x234] sm:$0xf]
      %v689 = vld [vmem:[%s1 + $0x238] sm:$0xf]
      %v690 = vld [vmem:[%s1 + $0x23c] sm:$0xf]
      %v691 = vld [vmem:[%s2] sm:$0x1]
      %v693 = vlaneseq
      %v694 = vshrl.u32 %v693, 7
      %v695 = vsub.s32 0, %v694
      %v696 = vrot.slane %v691, %v695
      %v842 = vunpack.c.l.b16 %v547
      %v843 = vunpack.c.l.b16 %v548
      %v844 = vunpack.c.l.b16 %v549
      %v845 = vunpack.c.l.b16 %v550
      %v846 = vunpack.c.l.b16 %v551
      %v847 = vunpack.c.l.b16 %v552
      %v848 = vunpack.c.l.b16 %v553
      %v849 = vunpack.c.l.b16 %v554
      %v850 = vunpack.c.l.b16 %v555
      %v851 = vunpack.c.l.b16 %v556
      %v852 = vunpack.c.l.b16 %v557
      %v853 = vunpack.c.l.b16 %v558
      %v854 = vunpack.c.l.b16 %v559
      %v855 = vunpack.c.l.b16 %v560
      %v856 = vunpack.c.l.b16 %v561
      %v857 = vunpack.c.l.b16 %v562
      %v858 = vunpack.c.l.b16 %v563
      %v859 = vunpack.c.l.b16 %v564
      %v860 = vunpack.c.l.b16 %v565
      %v861 = vunpack.c.l.b16 %v566
      %v862 = vunpack.c.l.b16 %v567
      %v863 = vunpack.c.l.b16 %v568
      %v864 = vunpack.c.l.b16 %v569
      %v865 = vunpack.c.l.b16 %v570
      %v866 = vunpack.c.l.b16 %v571
      %v867 = vunpack.c.l.b16 %v572
      %v868 = vunpack.c.l.b16 %v573
      %v869 = vunpack.c.l.b16 %v574
      %v870 = vunpack.c.l.b16 %v575
      %v871 = vunpack.c.l.b16 %v576
      %v872 = vunpack.c.l.b16 %v577
      %v873 = vunpack.c.l.b16 %v578
      %v874 = vunpack.c.l.b16 %v579
      %v875 = vunpack.c.l.b16 %v580
      %v876 = vunpack.c.l.b16 %v581
      %v877 = vunpack.c.l.b16 %v582
      %v878 = vunpack.c.l.b16 %v583
      %v879 = vunpack.c.l.b16 %v584
      %v880 = vunpack.c.l.b16 %v585
      %v881 = vunpack.c.l.b16 %v586
      %v882 = vunpack.c.l.b16 %v587
      %v883 = vunpack.c.l.b16 %v588
      %v884 = vunpack.c.l.b16 %v589
      %v885 = vunpack.c.l.b16 %v590
      %v886 = vunpack.c.l.b16 %v591
      %v887 = vunpack.c.l.b16 %v592
      %v888 = vunpack.c.l.b16 %v593
      %v889 = vunpack.c.l.b16 %v594
      %v890 = vunpack.c.l.b16 %v595
      %v891 = vunpack.c.l.b16 %v596
      %v892 = vunpack.c.l.b16 %v597
      %v893 = vunpack.c.l.b16 %v598
      %v894 = vunpack.c.l.b16 %v599
      %v895 = vunpack.c.l.b16 %v600
      %v896 = vunpack.c.l.b16 %v601
      %v897 = vunpack.c.l.b16 %v602
      %v898 = vunpack.c.l.b16 %v603
      %v899 = vunpack.c.l.b16 %v604
      %v900 = vunpack.c.l.b16 %v605
      %v901 = vunpack.c.l.b16 %v606
      %v902 = vunpack.c.l.b16 %v607
      %v903 = vunpack.c.l.b16 %v608
      %v904 = vunpack.c.l.b16 %v609
      %v905 = vunpack.c.l.b16 %v610
      %v906 = vunpack.c.l.b16 %v611
      %v907 = vunpack.c.l.b16 %v612
      %v908 = vunpack.c.l.b16 %v613
      %v909 = vunpack.c.l.b16 %v614
      %v910 = vunpack.c.l.b16 %v615
      %v911 = vunpack.c.l.b16 %v616
      %v912 = vunpack.c.l.b16 %v617
      %v913 = vunpack.c.l.b16 %v618
      %v914 = vunpack.c.l.b16 %v619
      %v915 = vunpack.c.l.b16 %v620
      %v916 = vunpack.c.l.b16 %v621
      %v917 = vunpack.c.l.b16 %v622
      %v918 = vunpack.c.l.b16 %v623
      %v919 = vunpack.c.l.b16 %v624
      %v920 = vunpack.c.l.b16 %v625
      %v921 = vunpack.c.l.b16 %v626
      %v922 = vunpack.c.l.b16 %v627
      %v923 = vunpack.c.l.b16 %v628
      %v924 = vunpack.c.l.b16 %v629
      %v925 = vunpack.c.l.b16 %v630
      %v926 = vunpack.c.l.b16 %v631
      %v927 = vunpack.c.l.b16 %v632
      %v928 = vunpack.c.l.b16 %v633
      %v929 = vunpack.c.l.b16 %v634
      %v930 = vunpack.c.l.b16 %v635
      %v931 = vunpack.c.l.b16 %v636
      %v932 = vunpack.c.l.b16 %v637
      %v933 = vunpack.c.l.b16 %v638
      %v934 = vunpack.c.l.b16 %v639
      %v935 = vunpack.c.l.b16 %v640
      %v936 = vunpack.c.l.b16 %v641
      %v937 = vunpack.c.l.b16 %v642
      %v938 = vunpack.c.l.b16 %v643
      %v939 = vunpack.c.l.b16 %v644
      %v940 = vunpack.c.l.b16 %v645
      %v941 = vunpack.c.l.b16 %v646
      %v942 = vunpack.c.l.b16 %v647
      %v943 = vunpack.c.l.b16 %v648
      %v944 = vunpack.c.l.b16 %v649
      %v945 = vunpack.c.l.b16 %v650
      %v946 = vunpack.c.l.b16 %v651
      %v947 = vunpack.c.l.b16 %v652
      %v948 = vunpack.c.l.b16 %v653
      %v949 = vunpack.c.l.b16 %v654
      %v950 = vunpack.c.l.b16 %v655
      %v951 = vunpack.c.l.b16 %v656
      %v952 = vunpack.c.l.b16 %v657
      %v953 = vunpack.c.l.b16 %v658
      %v954 = vunpack.c.l.b16 %v659
      %v955 = vunpack.c.l.b16 %v660
      %v956 = vunpack.c.l.b16 %v661
      %v957 = vunpack.c.l.b16 %v662
      %v958 = vunpack.c.l.b16 %v663
      %v959 = vunpack.c.l.b16 %v664
      %v960 = vunpack.c.l.b16 %v665
      %v961 = vunpack.c.l.b16 %v666
      %v962 = vunpack.c.l.b16 %v667
      %v963 = vunpack.c.l.b16 %v668
      %v964 = vunpack.c.l.b16 %v669
      %v965 = vunpack.c.l.b16 %v670
      %v966 = vunpack.c.l.b16 %v671
      %v967 = vunpack.c.l.b16 %v672
      %v968 = vunpack.c.l.b16 %v673
      %v969 = vunpack.c.l.b16 %v674
      %v970 = vunpack.c.l.b16 %v675
      %v971 = vunpack.c.l.b16 %v676
      %v972 = vunpack.c.l.b16 %v677
      %v973 = vunpack.c.l.b16 %v678
      %v974 = vunpack.c.l.b16 %v679
      %v975 = vunpack.c.l.b16 %v680
      %v976 = vunpack.c.l.b16 %v681
      %v977 = vunpack.c.l.b16 %v682
      %v978 = vunpack.c.l.b16 %v683
      %v979 = vunpack.c.l.b16 %v684
      %v980 = vunpack.c.l.b16 %v685
      %v981 = vunpack.c.l.b16 %v686
      %v982 = vunpack.c.l.b16 %v687
      %v983 = vunpack.c.l.b16 %v688
      %v984 = vunpack.c.l.b16 %v689
      %v985 = vunpack.c.l.b16 %v690
      %v986 = vpack.c.b16 %v843, %v842
      %v987 = vpack.c.b16 %v845, %v844
      %v988 = vpack.c.b16 %v847, %v846
      %v989 = vpack.c.b16 %v849, %v848
      %v990 = vpack.c.b16 %v851, %v850
      %v991 = vpack.c.b16 %v853, %v852
      %v992 = vpack.c.b16 %v855, %v854
      %v993 = vpack.c.b16 %v857, %v856
      %v994 = vpack.c.b16 %v859, %v858
      %v995 = vpack.c.b16 %v861, %v860
      %v996 = vpack.c.b16 %v863, %v862
      %v997 = vpack.c.b16 %v865, %v864
      %v998 = vpack.c.b16 %v867, %v866
      %v999 = vpack.c.b16 %v869, %v868
      %v1000 = vpack.c.b16 %v871, %v870
      %v1001 = vpack.c.b16 %v873, %v872
      %v1002 = vpack.c.b16 %v875, %v874
      %v1003 = vpack.c.b16 %v877, %v876
      %v1004 = vpack.c.b16 %v879, %v878
      %v1005 = vpack.c.b16 %v881, %v880
      %v1006 = vpack.c.b16 %v883, %v882
      %v1007 = vpack.c.b16 %v885, %v884
      %v1008 = vpack.c.b16 %v887, %v886
      %v1009 = vpack.c.b16 %v889, %v888
      %v1010 = vpack.c.b16 %v891, %v890
      %v1011 = vpack.c.b16 %v893, %v892
      %v1012 = vpack.c.b16 %v895, %v894
      %v1013 = vpack.c.b16 %v897, %v896
      %v1014 = vpack.c.b16 %v899, %v898
      %v1015 = vpack.c.b16 %v901, %v900
      %v1016 = vpack.c.b16 %v903, %v902
      %v1017 = vpack.c.b16 %v905, %v904
      %v1018 = vpack.c.b16 %v907, %v906
      %v1019 = vpack.c.b16 %v909, %v908
      %v1020 = vpack.c.b16 %v911, %v910
      %v1021 = vpack.c.b16 %v913, %v912
      %v1022 = vpack.c.b16 %v915, %v914
      %v1023 = vpack.c.b16 %v917, %v916
      %v1024 = vpack.c.b16 %v919, %v918
      %v1025 = vpack.c.b16 %v921, %v920
      %v1026 = vpack.c.b16 %v923, %v922
      %v1027 = vpack.c.b16 %v925, %v924
      %v1028 = vpack.c.b16 %v927, %v926
      %v1029 = vpack.c.b16 %v929, %v928
      %v1030 = vpack.c.b16 %v931, %v930
      %v1031 = vpack.c.b16 %v933, %v932
      %v1032 = vpack.c.b16 %v935, %v934
      %v1033 = vpack.c.b16 %v937, %v936
      %v1034 = vpack.c.b16 %v939, %v938
      %v1035 = vpack.c.b16 %v941, %v940
      %v1036 = vpack.c.b16 %v943, %v942
      %v1037 = vpack.c.b16 %v945, %v944
      %v1038 = vpack.c.b16 %v947, %v946
      %v1039 = vpack.c.b16 %v949, %v948
      %v1040 = vpack.c.b16 %v951, %v950
      %v1041 = vpack.c.b16 %v953, %v952
      %v1042 = vpack.c.b16 %v955, %v954
      %v1043 = vpack.c.b16 %v957, %v956
      %v1044 = vpack.c.b16 %v959, %v958
      %v1045 = vpack.c.b16 %v961, %v960
      %v1046 = vpack.c.b16 %v963, %v962
      %v1047 = vpack.c.b16 %v965, %v964
      %v1048 = vpack.c.b16 %v967, %v966
      %v1049 = vpack.c.b16 %v969, %v968
      %v1050 = vpack.c.b16 %v971, %v970
      %v1051 = vpack.c.b16 %v973, %v972
      %v1052 = vpack.c.b16 %v975, %v974
      %v1053 = vpack.c.b16 %v977, %v976
      %v1054 = vpack.c.b16 %v979, %v978
      %v1055 = vpack.c.b16 %v981, %v980
      %v1056 = vpack.c.b16 %v983, %v982
      %v1057 = vpack.c.b16 %v985, %v984
      %1130 = vmatprep.subr.bf16.mxu0 0
      %1131 = vmatpush1.bf16.msra.mxu0 %v993
      %1132 = vmatprep.subr.bf16.mxu0 0
      %1133 = vmatpush1.bf16.msra.mxu0 %v992
      %1134 = vmatprep.subr.bf16.mxu0 0
      %1135 = vmatpush1.bf16.msra.mxu0 %v991
      %1136 = vmatprep.subr.bf16.mxu0 0
      %1137 = vmatpush1.bf16.msra.mxu0 %v990
      %1138 = vmatprep.subr.bf16.mxu0 0
      %1139 = vmatpush1.bf16.msra.mxu0 %v989
      %1140 = vmatprep.subr.bf16.mxu0 0
      %1141 = vmatpush1.bf16.msra.mxu0 %v988
      %1142 = vmatprep.subr.bf16.mxu0 0
      %1143 = vmatpush1.bf16.msra.mxu0 %v987
      %1144 = vmatprep.subr.bf16.mxu0 0
      %1145 = vmatpush1.bf16.msra.mxu0 %v986
      %1146 = vmatprep.subr.bf16.mxu0 0
      %1147 = vmatpush2.bf16.msra.mxu0 %v1001
      %1148 = vmatprep.subr.bf16.mxu0 0
      %1149 = vmatpush2.bf16.msra.mxu0 %v1000
      %1150 = vmatprep.subr.bf16.mxu0 0
      %1151 = vmatpush2.bf16.msra.mxu0 %v999
      %1152 = vmatprep.subr.bf16.mxu0 0
      %1153 = vmatpush2.bf16.msra.mxu0 %v998
      %1154 = vmatprep.subr.bf16.mxu0 0
      %1155 = vmatpush2.bf16.msra.mxu0 %v997
      %1156 = vmatprep.subr.bf16.mxu0 0
      %1157 = vmatpush2.bf16.msra.mxu0 %v996
      %1158 = vmatprep.subr.bf16.mxu0 0
      %1159 = vmatpush2.bf16.msra.mxu0 %v995
      %1160 = vmatprep.subr.bf16.mxu0 0
      %1161 = vmatpush2.bf16.msra.mxu0 %v994
      %1162 = vmatprep.mubr.bf16.mxu0 %v429
      %1163 = vmatmul.mubr.bf16.gmra.mxu0 %v413
      %v1164 = vpop.f32.mrf.mxu0
      %v1165 = vadd.f32 %v696, %v1164
      %v1166 = vpop.f32.mrf.mxu0
      %v1167 = vpop.f32.mrf.mxu0
      %v1168 = vpop.f32.mrf.mxu0
      %1169 = vdwg.mxu0
      %1170 = vmatprep.subr.bf16.mxu0 0
      %1171 = vmatpush1.bf16.msra.mxu0 %v1009
      %1172 = vmatprep.subr.bf16.mxu0 0
      %1173 = vmatpush1.bf16.msra.mxu0 %v1008
      %1174 = vmatprep.subr.bf16.mxu0 0
      %1175 = vmatpush1.bf16.msra.mxu0 %v1007
      %1176 = vmatprep.subr.bf16.mxu0 0
      %1177 = vmatpush1.bf16.msra.mxu0 %v1006
      %1178 = vmatprep.subr.bf16.mxu0 0
      %1179 = vmatpush1.bf16.msra.mxu0 %v1005
      %1180 = vmatprep.subr.bf16.mxu0 0
      %1181 = vmatpush1.bf16.msra.mxu0 %v1004
      %1182 = vmatprep.subr.bf16.mxu0 0
      %1183 = vmatpush1.bf16.msra.mxu0 %v1003
      %1184 = vmatprep.subr.bf16.mxu0 0
      %1185 = vmatpush1.bf16.msra.mxu0 %v1002
      %1186 = vmatprep.subr.bf16.mxu0 0
      %1187 = vmatpush2.bf16.msra.mxu0 %v1017
      %1188 = vmatprep.subr.bf16.mxu0 0
      %1189 = vmatpush2.bf16.msra.mxu0 %v1016
      %1190 = vmatprep.subr.bf16.mxu0 0
      %1191 = vmatpush2.bf16.msra.mxu0 %v1015
      %1192 = vmatprep.subr.bf16.mxu0 0
      %1193 = vmatpush2.bf16.msra.mxu0 %v1014
      %1194 = vmatprep.subr.bf16.mxu0 0
      %1195 = vmatpush2.bf16.msra.mxu0 %v1013
      %1196 = vmatprep.subr.bf16.mxu0 0
      %1197 = vmatpush2.bf16.msra.mxu0 %v1012
      %1198 = vmatprep.subr.bf16.mxu0 0
      %1199 = vmatpush2.bf16.msra.mxu0 %v1011
      %1200 = vmatprep.subr.bf16.mxu0 0
      %1201 = vmatpush2.bf16.msra.mxu0 %v1010
      %1202 = vmatprep.mubr.bf16.mxu0 %v463
      %1203 = vmatmul.mubr.bf16.gmra.mxu0 %v445
      %v1204 = vpop.f32.mrf.mxu0
      %v1205 = vadd.f32 %v1165, %v1204
      %v1206 = vpop.f32.mrf.mxu0
      %v1207 = vpop.f32.mrf.mxu0
      %v1208 = vpop.f32.mrf.mxu0
      %1209 = vdwg.mxu0
      %1210 = vmatprep.subr.bf16.mxu0 0
      %1211 = vmatpush1.bf16.msra.mxu0 %v1025
      %1212 = vmatprep.subr.bf16.mxu0 0
      %1213 = vmatpush1.bf16.msra.mxu0 %v1024
      %1214 = vmatprep.subr.bf16.mxu0 0
      %1215 = vmatpush1.bf16.msra.mxu0 %v1023
      %1216 = vmatprep.subr.bf16.mxu0 0
      %1217 = vmatpush1.bf16.msra.mxu0 %v1022
      %1218 = vmatprep.subr.bf16.mxu0 0
      %1219 = vmatpush1.bf16.msra.mxu0 %v1021
      %1220 = vmatprep.subr.bf16.mxu0 0
      %1221 = vmatpush1.bf16.msra.mxu0 %v1020
      %1222 = vmatprep.subr.bf16.mxu0 0
      %1223 = vmatpush1.bf16.msra.mxu0 %v1019
      %1224 = vmatprep.subr.bf16.mxu0 0
      %1225 = vmatpush1.bf16.msra.mxu0 %v1018
      %1226 = vmatprep.subr.bf16.mxu0 0
      %1227 = vmatpush2.bf16.msra.mxu0 %v1033
      %1228 = vmatprep.subr.bf16.mxu0 0
      %1229 = vmatpush2.bf16.msra.mxu0 %v1032
      %1230 = vmatprep.subr.bf16.mxu0 0
      %1231 = vmatpush2.bf16.msra.mxu0 %v1031
      %1232 = vmatprep.subr.bf16.mxu0 0
      %1233 = vmatpush2.bf16.msra.mxu0 %v1030
      %1234 = vmatprep.subr.bf16.mxu0 0
      %1235 = vmatpush2.bf16.msra.mxu0 %v1029
      %1236 = vmatprep.subr.bf16.mxu0 0
      %1237 = vmatpush2.bf16.msra.mxu0 %v1028
      %1238 = vmatprep.subr.bf16.mxu0 0
      %1239 = vmatpush2.bf16.msra.mxu0 %v1027
      %1240 = vmatprep.subr.bf16.mxu0 0
      %1241 = vmatpush2.bf16.msra.mxu0 %v1026
      %1242 = vmatprep.mubr.bf16.mxu0 %v495
      %1243 = vmatmul.mubr.bf16.gmra.mxu0 %v479
      %v1244 = vpop.f32.mrf.mxu0
      %v1245 = vadd.f32 %v1205, %v1244
      %v1246 = vpop.f32.mrf.mxu0
      %v1247 = vpop.f32.mrf.mxu0
      %v1248 = vpop.f32.mrf.mxu0
      %1249 = vdwg.mxu0
      %1250 = vmatprep.subr.bf16.mxu0 0
      %1251 = vmatpush1.bf16.msra.mxu0 %v1041
      %1252 = vmatprep.subr.bf16.mxu0 0
      %1253 = vmatpush1.bf16.msra.mxu0 %v1040
      %1254 = vmatprep.subr.bf16.mxu0 0
      %1255 = vmatpush1.bf16.msra.mxu0 %v1039
      %1256 = vmatprep.subr.bf16.mxu0 0
      %1257 = vmatpush1.bf16.msra.mxu0 %v1038
      %1258 = vmatprep.subr.bf16.mxu0 0
      %1259 = vmatpush1.bf16.msra.mxu0 %v1037
      %1260 = vmatprep.subr.bf16.mxu0 0
      %1261 = vmatpush1.bf16.msra.mxu0 %v1036
      %1262 = vmatprep.subr.bf16.mxu0 0
      %1263 = vmatpush1.bf16.msra.mxu0 %v1035
      %1264 = vmatprep.subr.bf16.mxu0 0
      %1265 = vmatpush1.bf16.msra.mxu0 %v1034
      %1266 = vmatprep.subr.bf16.mxu0 0
      %1267 = vmatpush2.bf16.msra.mxu0 %v1049
      %1268 = vmatprep.subr.bf16.mxu0 0
      %1269 = vmatpush2.bf16.msra.mxu0 %v1048
      %1270 = vmatprep.subr.bf16.mxu0 0
      %1271 = vmatpush2.bf16.msra.mxu0 %v1047
      %1272 = vmatprep.subr.bf16.mxu0 0
      %1273 = vmatpush2.bf16.msra.mxu0 %v1046
      %1274 = vmatprep.subr.bf16.mxu0 0
      %1275 = vmatpush2.bf16.msra.mxu0 %v1045
      %1276 = vmatprep.subr.bf16.mxu0 0
      %1277 = vmatpush2.bf16.msra.mxu0 %v1044
      %1278 = vmatprep.subr.bf16.mxu0 0
      %1279 = vmatpush2.bf16.msra.mxu0 %v1043
      %1280 = vmatprep.subr.bf16.mxu0 0
      %1281 = vmatpush2.bf16.msra.mxu0 %v1042
      %1282 = vmatprep.mubr.bf16.mxu0 %v529
      %1283 = vmatmul.mubr.bf16.gmra.mxu0 %v513
      %v1284 = vpop.f32.mrf.mxu0
      %v1285 = vadd.f32 %v1245, %v1284
      %v1286 = vpop.f32.mrf.mxu0
      %v1287 = vpop.f32.mrf.mxu0
      %v1288 = vpop.f32.mrf.mxu0
      %1289 = vdwg.mxu0
      %1290 = vmatprep.subr.bf16.mxu0 0
      %1291 = vmatpush1.bf16.msra.mxu0 %v1057
      %1292 = vmatprep.subr.bf16.mxu0 0
      %1293 = vmatpush1.bf16.msra.mxu0 %v1056
      %1294 = vmatprep.subr.bf16.mxu0 0
      %1295 = vmatpush1.bf16.msra.mxu0 %v1055
      %1296 = vmatprep.subr.bf16.mxu0 0
      %1297 = vmatpush1.bf16.msra.mxu0 %v1054
      %1298 = vmatprep.subr.bf16.mxu0 0
      %1299 = vmatpush1.bf16.msra.mxu0 %v1053
      %1300 = vmatprep.subr.bf16.mxu0 0
      %1301 = vmatpush1.bf16.msra.mxu0 %v1052
      %1302 = vmatprep.subr.bf16.mxu0 0
      %1303 = vmatpush1.bf16.msra.mxu0 %v1051
      %1304 = vmatprep.subr.bf16.mxu0 0
      %1305 = vmatpush1.bf16.msra.mxu0 %v1050
      %1306 = vmatprep.subr.bf16.mxu0 0
      %1307 = vmatpush2.bf16.msra.mxu0 0
      %1308 = vmatprep.subr.bf16.mxu0 0
      %1309 = vmatpush2.bf16.msra.mxu0 0
      %1310 = vmatprep.subr.bf16.mxu0 0
      %1311 = vmatpush2.bf16.msra.mxu0 0
      %1312 = vmatprep.subr.bf16.mxu0 0
      %1313 = vmatpush2.bf16.msra.mxu0 0
      %1314 = vmatprep.subr.bf16.mxu0 0
      %1315 = vmatpush2.bf16.msra.mxu0 0
      %1316 = vmatprep.subr.bf16.mxu0 0
      %1317 = vmatpush2.bf16.msra.mxu0 0
      %1318 = vmatprep.subr.bf16.mxu0 0
      %1319 = vmatpush2.bf16.msra.mxu0 0
      %1320 = vmatprep.subr.bf16.mxu0 0
      %1321 = vmatpush2.bf16.msra.mxu0 0
      %1322 = vmatprep.mubr.bf16.mxu0 0
      %1323 = vmatmul.mubr.bf16.gmra.mxu0 %v545
      %v1324 = vpop.f32.mrf.mxu0
      %v1325 = vadd.f32 %v1285, %v1324
      %v1326 = vpop.f32.mrf.mxu0
      %v1327 = vpop.f32.mrf.mxu0
      %v1328 = vpop.f32.mrf.mxu0
      %1329 = vdwg.mxu0
      %v1330 = vand.u32 2147483647, %v1325
      %v1331 = vsub.f32 0.0, %v1330
      %v1332 = vmul.f32 %v1331, 1.442695
      %v1333 = vpow.pop %v1332
      %v1334 = vadd.f32 %v1333, 1.0
      %v1335 = vrcp.pop %v1334
      %vm1336 = vcmp.ge.f32.partialorder %v1325, 0.0
      %v1337 = vmul.f32 %v1333, %v1335
      %v1338 = vsel %vm1336, %v1335, %v1337
      %v1339 = vmul.f32 %v1325, %v1338
      %v1340 = vpack.c.bf16 %v1339, %v1339
      %v1343 = vunpack.c.l.s4 1966171168
      %v1344 = vunpack.c.0.s8 %v1343
      %v1345 = vlaneseq
      %v1346 = vshrl.u32 %v1345, 7
      %v1347 = vsub.s32 %v1344, %v1346
      %v1348 = vrot.slane %v1340, %v1347
      %v1349 = vcombine.high %v1348, %v1348
      %v1351 = vunpack.c.l.s4 1966171168
      %v1352 = vunpack.c.0.s8 %v1351
      %v1353 = vlaneseq
      %v1354 = vshrl.u32 %v1353, 7
      %v1355 = vsub.s32 %v1352, %v1354
      %v1356 = vrot.slane %v1348, %v1355
      %v1358 = vunpack.c.l.s4 1966171168
      %v1359 = vunpack.c.0.s8 %v1358
      %v1360 = vlaneseq
      %v1361 = vshrl.u32 %v1360, 7
      %v1362 = vsub.s32 %v1359, %v1361
      %v1363 = vrot.slane %v1349, %v1362
      %1366 = vst [vmem:[%s190] sm:$0x1] %v1356
      %1367 = vst [vmem:[%s190 + $0x1] sm:$0x1] %v1363
      %s1368 = smul.u32 2, %s19
      %p1369 = scmp.lt.s32.totalorder %s18, 1
      %s1370 = scalar_select %p1369, %s18, 1
      %p1371 = scmp.lt.s32.totalorder %s1368, 1
      %s1372 = scalar_select %p1371, %s1368, 1
      %s1373 = smul.addr %s1370, 2
      %s1374 = sadd.s32 %s1372, %s1373
      %s1375 = scalar_lea.vmem %s3, %s1374
      // Predicated region
      $region33: #{_lambda_.13} parent=31 // pred_check
        %p1376 = pneg %p114
      $region34: #{_lambda_.13} parent=31 // pred_check_branch
        %1378 = sbr.rel (%p1376) target = $region36
      $region35: #{_lambda_.13} parent=31 // pred_region
        %s1379 = smul.u32 2, %s19
      $region36: #{_lambda_.13} parent=31 // pred_fallthru
        _
    $region32: #{_lambda_.13} parent=5 // pred_fallthru
      _
    %p1380 = scmp.le.s32.totalorder 2, %s9
    // Predicated region
    $region37: #{_lambda_.13} parent=5 // pred_check
      %p1381 = pneg %p1380
    $region38: #{_lambda_.13} parent=5 // pred_check_branch
      %1383 = sbr.rel (%p1381) target = $region40
    $region39: #{_lambda_.13} parent=5 // pred_region
      %s1384 = ssub.s32 %s9, 2
      // Predicated region
      $region41: #{_lambda_.13} parent=39 // pred_check
        %p1385 = pneg %p120
      $region42: #{_lambda_.13} parent=39 // pred_check_branch
        %1387 = sbr.rel (%p1385) target = $region44
      $region43: #{_lambda_.13} parent=39 // pred_region
        %s1388 = smul.u32 2, %s21
        %p1389 = scmp.lt.s32.totalorder %s20, 1
        %s1390 = scalar_select %p1389, %s20, 1
        %p1391 = scmp.lt.s32.totalorder %s1388, 1
        %s1392 = scalar_select %p1391, %s1388, 1
        %s1393 = smul.addr %s1390, 2
        %s1394 = sadd.s32 %s1392, %s1393
        %s1395 = scalar_lea.vmem %s3, %s1394
      $region44: #{_lambda_.13} parent=39 // pred_fallthru
        _
    $region40: #{_lambda_.13} parent=5 // pred_fallthru
      _
  $region6: #{_lambda_.13} parent=0 // loop_footer
    %s13 = sadd.s32 1, %s9
  $region7: #{_lambda_.13} parent=0 // loop_footer_branch
    %8 = sbr.rel target = $region3
  $region8: #{_lambda_.13} parent=0 // loop_exit
    _

</llo_original>
